<compile_context>
chip_gen: v5e
topology: v5e:2x2
jax: 0.10.0
libtpu: 0.0.40
codegen_flags: <defaults>
</compile_context>

<pallas_src>
import jax
import jax.numpy as jnp
from jax import lax
from jax.experimental import pallas as pl
from jax.experimental.pallas import tpu as pltpu


LANE = 128  # TPU lane width: conv/head channel dims are zero-padded to this.


# ---------------- fused conv(5x5, pad=2) + bias + maxpool(2x2) kernel ----------------

def _conv_pool_kernel(x_ref, w_ref, b_ref, o_ref):
    """x: (4, t, K) bf16 phase-major im2col rows; w: (K, 128) bf16; b: (1, 128) f32.

    One matmul computes the convolution for this row tile; the 2x2 max-pool is
    a max over the 4 leading phase blocks (leading-axis reduce, no relayout).
    Bias is added post-pool (valid: bias is channel-constant).
    """
    ph, t, k = x_ref.shape
    x = x_ref[...].reshape(ph * t, k)
    y = jnp.dot(x, w_ref[...], preferred_element_type=jnp.float32)   # (4t, 128)
    y = y.reshape(ph, t, y.shape[-1]).max(axis=0)                     # 2x2 max-pool
    o_ref[...] = (y + b_ref[...]).astype(o_ref.dtype)


def _pick_row_tile(r2, cap=256):
    if r2 <= cap:
        return r2
    t = cap
    while r2 % t != 0:
        t //= 2
    return max(t, 8)


def conv5x5_pool2(xf, w_pad, b_pad, out_dtype=jnp.bfloat16):
    """xf: (4, R2, K) bf16, w_pad: (K, 128) bf16, b_pad: (1, 128) f32 -> (R2, 128)."""
    ph, r2, k = xf.shape
    assert ph == 4 and r2 % 8 == 0, (ph, r2)
    t = _pick_row_tile(r2)
    return pl.pallas_call(
        _conv_pool_kernel,
        out_shape=jax.ShapeDtypeStruct((r2, LANE), out_dtype),
        grid=(r2 // t,),
        in_specs=[
            pl.BlockSpec((4, t, k), lambda i: (0, i, 0)),
            pl.BlockSpec((k, LANE), lambda i: (0, 0)),     # weight stays VMEM-resident
            pl.BlockSpec((1, LANE), lambda i: (0, 0)),
        ],
        out_specs=pl.BlockSpec((t, LANE), lambda i: (i, 0)),
        compiler_params=pltpu.CompilerParams(dimension_semantics=("parallel",)),
    )(xf, w_pad, b_pad)


# ------------- fused conv3(5x5) + bias + maxpool(2x2) + 2-layer Linear head -------------

def _conv3_head_kernel(x_ref, w3_ref, b3_ref, w1_ref, b1_ref, w2_ref, b2_ref, o_ref):
    """x: (4, B*16, 800) bf16; w3: (800,128) bf16; w1: (2048,128) bf16; w2: (128,128) bf16.

    conv3 + pool runs as one matmul + leading-axis max; the pooled (B*16, 128)
    feature map is kept in-register/VMEM, rearranged to (B, 16*128) by
    lane-concatenating the 16 spatial positions (NHWC-flatten order, matching
    the prepped fc1 weight), and fed straight into the two head matmuls.
    """
    ph, r2, k3 = x_ref.shape
    b = o_ref.shape[0]
    s_per_img = r2 // b                                              # 4*4 = 16
    x = x_ref[...].reshape(ph * r2, k3)
    y = jnp.dot(x, w3_ref[...], preferred_element_type=jnp.float32)  # (4*r2, 128)
    y = y.reshape(ph, r2, LANE).max(axis=0) + b3_ref[...]            # (r2, 128) pooled
    y3 = y.reshape(b, s_per_img, LANE).astype(jnp.bfloat16)          # leading split only
    feat = jnp.concatenate([y3[:, s, :] for s in range(s_per_img)], axis=-1)  # (B, 2048)
    h = jnp.dot(feat, w1_ref[...], preferred_element_type=jnp.float32) + b1_ref[...]
    logits = (jnp.dot(h.astype(jnp.bfloat16), w2_ref[...],
                      preferred_element_type=jnp.float32) + b2_ref[...])
    o_ref[...] = logits.astype(o_ref.dtype)


def conv3_head(xf, w3, b3, w1, b1, w2, b2, batch):
    ph, r2, k3 = xf.shape
    return pl.pallas_call(
        _conv3_head_kernel,
        out_shape=jax.ShapeDtypeStruct((batch, LANE), jnp.float32),
        grid=(1,),
        in_specs=[
            pl.BlockSpec((ph, r2, k3), lambda i: (0, 0, 0)),
            pl.BlockSpec(w3.shape, lambda i: (0, 0)),
            pl.BlockSpec(b3.shape, lambda i: (0, 0)),
            pl.BlockSpec(w1.shape, lambda i: (0, 0)),
            pl.BlockSpec(b1.shape, lambda i: (0, 0)),
            pl.BlockSpec(w2.shape, lambda i: (0, 0)),
            pl.BlockSpec(b2.shape, lambda i: (0, 0)),
        ],
        out_specs=pl.BlockSpec((batch, LANE), lambda i: (0, 0)),
    )(xf, w3, b3, w1, b1, w2, b2)


# ------------------------------------ XLA glue ------------------------------------

def _im2col_pool_phases(x_nhwc):
    """(B, H, W, C) -> (4, B*(H//2)*(W//2), 25*C), phase-major.

    5x5 'same' (pad=2) taps folded into the contraction dim; the leading axis
    is the 2x2 pool phase (ph*2+pw), so the kernels' pool is a leading-axis max.
    """
    B, H, W, C = x_nhwc.shape
    H2, W2 = H // 2, W // 2
    xp = jnp.pad(x_nhwc, ((0, 0), (2, 2), (2, 2), (0, 0)))
    taps = [xp[:, kh:kh + H, kw:kw + W, :] for kh in range(5) for kw in range(5)]
    xf = jnp.concatenate(taps, axis=-1)                      # (B, H, W, 25C)
    xf = xf.reshape(B, H2, 2, W2, 2, 25 * C)
    xf = xf.transpose(2, 4, 0, 1, 3, 5)                      # (ph, pw, B, H2, W2, 25C)
    return xf.reshape(4, B * H2 * W2, 25 * C)


def prepare_params(params):
    """One-time (outside jit) weight prep: pad/transpose/permute + cast to bf16."""
    prep = {}
    for name in ("conv1", "conv2", "conv3"):
        w = params[name + "_w"]                               # (Cout, Cin, 5, 5) torch OIHW
        b = params[name + "_b"]
        cout, cin, kh, kw = w.shape
        k = kh * kw * cin
        kp = ((k + 15) // 16) * 16                            # 75 -> 80; 800 -> 800
        wf = jnp.transpose(w, (2, 3, 1, 0)).reshape(k, cout)  # (kh,kw,cin) major -> matches im2col
        wf = jnp.pad(wf, ((0, kp - k), (0, LANE - cout)))
        prep[name + "_w"] = wf.astype(jnp.bfloat16)
        prep[name + "_b"] = jnp.pad(b, (0, LANE - cout)).reshape(1, LANE).astype(jnp.float32)

    # fc1: torch (64, 1024), input index = c*16 + (h*4 + w).  Permute to NHWC-flatten
    # order (s = h*4+w major, channel minor), pad channels 64->128 (conv3 output is
    # 128-lane padded) and hidden 64->128 so both head matmuls are lane-dense.
    w1 = params["fc1_w"].reshape(64, 64, 16)                  # (hid, c, s)
    w1 = jnp.transpose(w1, (2, 1, 0))                         # (s, c, hid)
    w1 = jnp.pad(w1, ((0, 0), (0, LANE - 64), (0, LANE - 64)))
    prep["fc1_w"] = w1.reshape(16 * LANE, LANE).astype(jnp.bfloat16)      # (2048, 128)
    prep["fc1_b"] = jnp.pad(params["fc1_b"], (0, LANE - 64)).reshape(1, LANE).astype(jnp.float32)
    prep["fc2_w"] = jnp.pad(params["fc2_w"].T, ((0, LANE - 64), (0, LANE - 10))).astype(jnp.bfloat16)
    prep["fc2_b"] = jnp.pad(params["fc2_b"], (0, LANE - 10)).reshape(1, LANE).astype(jnp.float32)
    return prep


def init_params(key):
    """Deterministic parameters with the same shapes as the PyTorch module."""
    ks = jax.random.split(key, 10)

    def w(k, shape, scale):
        return (scale * jax.random.normal(k, shape)).astype(jnp.float32)

    return {
        "conv1_w": w(ks[0], (32, 3, 5, 5), 0.08),    # OIHW, like torch
        "conv1_b": w(ks[1], (32,), 0.05),
        "conv2_w": w(ks[2], (32, 32, 5, 5), 0.03),
        "conv2_b": w(ks[3], (32,), 0.05),
        "conv3_w": w(ks[4], (64, 32, 5, 5), 0.03),
        "conv3_b": w(ks[5], (64,), 0.05),
        "fc1_w": w(ks[6], (64, 64 * 4 * 4), 0.02),   # (out, in), like torch
        "fc1_b": w(ks[7], (64,), 0.05),
        "fc2_w": w(ks[8], (10, 64), 0.05),
        "fc2_b": w(ks[9], (10,), 0.05),
    }


@jax.jit
def my_cifar10_forward(x_nchw, prep):
    """Pallas implementation of MyCIFAR10.forward. Input is NCHW like PyTorch."""
    x = jnp.transpose(x_nchw, (0, 2, 3, 1)).astype(jnp.bfloat16)      # NHWC, bf16
    B = x.shape[0]

    # conv1 + pool, conv2 + pool (row-tiled, pipelined pallas_calls)
    for name, cout in (("conv1", 32), ("conv2", 32)):
        wp, bp = prep[name + "_w"], prep[name + "_b"]
        H2, W2 = x.shape[1] // 2, x.shape[2] // 2
        xf = _im2col_pool_phases(x)                                    # (4, R2, 25*Cin)
        if xf.shape[2] < wp.shape[0]:                                  # conv1: K 75 -> 80
            xf = jnp.pad(xf, ((0, 0), (0, 0), (0, wp.shape[0] - xf.shape[2])))
        y = conv5x5_pool2(xf, wp, bp)                                  # (R2, 128) bf16
        x = y[:, :cout].reshape(B, H2, W2, cout)                       # NHWC, pooled

    # conv3 + pool + Linear(1024,64) + Linear(64,10) fused in one pallas_call
    xf = _im2col_pool_phases(x)                                        # (4, B*16, 800)
    logits = conv3_head(xf, prep["conv3_w"], prep["conv3_b"],
                        prep["fc1_w"], prep["fc1_b"],
                        prep["fc2_w"], prep["fc2_b"], B)               # (B, 128)
    return logits[:, :10]


def _reference_forward(x_nchw, params):
    """Pure-JAX (XLA, f32) reference with identical semantics to the PyTorch model."""
    x = jnp.transpose(x_nchw, (0, 2, 3, 1)).astype(jnp.float32)
    for w_oihw, b in [(params["conv1_w"], params["conv1_b"]),
                      (params["conv2_w"], params["conv2_b"]),
                      (params["conv3_w"], params["conv3_b"])]:
        w_hwio = jnp.transpose(w_oihw, (2, 3, 1, 0))
        x = lax.conv_general_dilated(
            x, w_hwio, window_strides=(1, 1), padding=[(2, 2), (2, 2)],
            dimension_numbers=("NHWC", "HWIO", "NHWC")) + b
        B, H, W, C = x.shape
        x = x.reshape(B, H // 2, 2, W // 2, 2, C).max(axis=(2, 4))
    B = x.shape[0]
    feat = jnp.transpose(x, (0, 3, 1, 2)).reshape(B, -1)
    h = feat @ params["fc1_w"].T + params["fc1_b"]
    return h @ params["fc2_w"].T + params["fc2_b"]


if __name__ == "__main__":
    key = jax.random.PRNGKey(0)
    pkey, xkey = jax.random.split(key)
    params = init_params(pkey)
    prep = prepare_params(params)          # one-time padded/permuted bf16 weights
    # Spatial size 32 is required by Linear(64*4*4, 64); small batch = 2.
    x = jax.random.normal(xkey, (2, 3, 32, 32), dtype=jnp.float32)

    out = jax.block_until_ready(my_cifar10_forward(x, prep))
    assert out.shape == (2, 10), out.shape

    ref = jax.block_until_ready(_reference_forward(x, params))
    # bf16 matmul operands with f32 accumulation: tolerance loosened accordingly.
    assert jnp.allclose(out, ref, rtol=3e-2, atol=3e-2), \
        float(jnp.max(jnp.abs(out - ref)))

    print("KERNEL_OK")
</pallas_src>

<mosaic_0001>
module attributes {stable_mosaic.version = 11 : i64} {
  func.func @_conv_pool_kernel(%arg0: i32, %arg1: memref<4x256x80xbf16, #tpu.memory_space<vmem>>, %arg2: memref<80x128xbf16, #tpu.memory_space<vmem>>, %arg3: memref<1x128xf32, #tpu.memory_space<vmem>>, %arg4: memref<256x128xbf16, #tpu.memory_space<vmem>>) attributes {dimension_semantics = [#tpu.dimension_semantics<parallel>], iteration_bounds = array<i64: 2>, scalar_prefetch = 0 : i64, scratch_operands = 0 : i64, tpu.core_type = #tpu.core_type<tc>, window_params = [{transform_indices = @transform_0, window_bounds = array<i64: 4, 256, 80>}, {pipeline_mode = #tpu.pipeline_mode<synchronous>, transform_indices = @transform_1, window_bounds = array<i64: 80, 128>}, {pipeline_mode = #tpu.pipeline_mode<synchronous>, transform_indices = @transform_2, window_bounds = array<i64: 1, 128>}, {transform_indices = @transform_3, window_bounds = array<i64: 256, 128>}]} {
    %c0 = arith.constant 0 : index
    %c0_0 = arith.constant 0 : index
    %c0_1 = arith.constant 0 : index
    %0 = vector.load %arg1[%c0, %c0_0, %c0_1] : memref<4x256x80xbf16, #tpu.memory_space<vmem>>, vector<4x256x80xbf16>
    %1 = vector.shape_cast %0 : vector<4x256x80xbf16> to vector<1024x80xbf16>
    %c0_2 = arith.constant 0 : index
    %c0_3 = arith.constant 0 : index
    %2 = vector.load %arg2[%c0_2, %c0_3] : memref<80x128xbf16, #tpu.memory_space<vmem>>, vector<80x128xbf16>
    %cst = arith.constant dense<0.000000e+00> : vector<1024x128xf32>
    %3 = tpu.matmul %1, %2, %cst {dimension_numbers = #tpu.dot_dimension_numbers<[1], [0], [0], [1], [0, 0, 1, 1], [], []>} : vector<1024x80xbf16>, vector<80x128xbf16>, vector<1024x128xf32> -> vector<1024x128xf32>
    %4 = vector.shape_cast %3 : vector<1024x128xf32> to vector<4x256x128xf32>
    %cst_4 = arith.constant dense<0xFF800000> : vector<256x128xf32>
    %5 = vector.multi_reduction <maximumf>, %4, %cst_4 [0] : vector<4x256x128xf32> to vector<256x128xf32>
    %c0_5 = arith.constant 0 : index
    %c0_6 = arith.constant 0 : index
    %6 = vector.load %arg3[%c0_5, %c0_6] : memref<1x128xf32, #tpu.memory_space<vmem>>, vector<1x128xf32>
    %7 = vector.broadcast %6 : vector<1x128xf32> to vector<256x128xf32>
    %8 = arith.addf %5, %7 : vector<256x128xf32>
    %9 = arith.truncf %8 : vector<256x128xf32> to vector<256x128xbf16>
    %c0_7 = arith.constant 0 : index
    %c0_8 = arith.constant 0 : index
    %10 = vector.load %arg4[%c0_7, %c0_8] : memref<256x128xbf16, #tpu.memory_space<vmem>>, vector<256x128xbf16>
    tpu.vector_store %arg4[%c0_7, %c0_8], %9 {strides = array<i32>} : memref<256x128xbf16, #tpu.memory_space<vmem>>, vector<256x128xbf16>,
    return
  }
  func.func @transform_0(%arg0: i32) -> (i32, i32, i32) {
    %c0_i32 = arith.constant 0 : i32
    %c0_i32_0 = arith.constant 0 : i32
    %c0_i32_1 = arith.constant 0 : i32
    return %c0_i32, %arg0, %c0_i32_0 : i32, i32, i32
  }
  func.func @transform_1(%arg0: i32) -> (i32, i32) {
    %c0_i32 = arith.constant 0 : i32
    %c0_i32_0 = arith.constant 0 : i32
    %c0_i32_1 = arith.constant 0 : i32
    return %c0_i32, %c0_i32_0 : i32, i32
  }
  func.func @transform_2(%arg0: i32) -> (i32, i32) {
    %c0_i32 = arith.constant 0 : i32
    %c0_i32_0 = arith.constant 0 : i32
    %c0_i32_1 = arith.constant 0 : i32
    return %c0_i32, %c0_i32_0 : i32, i32
  }
  func.func @transform_3(%arg0: i32) -> (i32, i32) {
    %c0_i32 = arith.constant 0 : i32
    %c0_i32_0 = arith.constant 0 : i32
    return %arg0, %c0_i32 : i32, i32
  }
}

module attributes {stable_mosaic.version = 11 : i64} {
  func.func @_conv_pool_kernel(%arg0: i32, %arg1: memref<4x128x800xbf16, #tpu.memory_space<vmem>>, %arg2: memref<800x128xbf16, #tpu.memory_space<vmem>>, %arg3: memref<1x128xf32, #tpu.memory_space<vmem>>, %arg4: memref<128x128xbf16, #tpu.memory_space<vmem>>) attributes {dimension_semantics = [#tpu.dimension_semantics<parallel>], iteration_bounds = array<i64: 1>, scalar_prefetch = 0 : i64, scratch_operands = 0 : i64, tpu.core_type = #tpu.core_type<tc>, window_params = [{transform_indices = @transform_0, window_bounds = array<i64: 4, 128, 800>}, {pipeline_mode = #tpu.pipeline_mode<synchronous>, transform_indices = @transform_1, window_bounds = array<i64: 800, 128>}, {pipeline_mode = #tpu.pipeline_mode<synchronous>, transform_indices = @transform_2, window_bounds = array<i64: 1, 128>}, {transform_indices = @transform_3, window_bounds = array<i64: 128, 128>}]} {
    %c0 = arith.constant 0 : index
    %c0_0 = arith.constant 0 : index
    %c0_1 = arith.constant 0 : index
    %0 = vector.load %arg1[%c0, %c0_0, %c0_1] : memref<4x128x800xbf16, #tpu.memory_space<vmem>>, vector<4x128x800xbf16>
    %1 = vector.shape_cast %0 : vector<4x128x800xbf16> to vector<512x800xbf16>
    %c0_2 = arith.constant 0 : index
    %c0_3 = arith.constant 0 : index
    %2 = vector.load %arg2[%c0_2, %c0_3] : memref<800x128xbf16, #tpu.memory_space<vmem>>, vector<800x128xbf16>
    %cst = arith.constant dense<0.000000e+00> : vector<512x128xf32>
    %3 = tpu.matmul %1, %2, %cst {dimension_numbers = #tpu.dot_dimension_numbers<[1], [0], [0], [1], [0, 0, 1, 1], [], []>} : vector<512x800xbf16>, vector<800x128xbf16>, vector<512x128xf32> -> vector<512x128xf32>
    %4 = vector.shape_cast %3 : vector<512x128xf32> to vector<4x128x128xf32>
    %cst_4 = arith.constant dense<0xFF800000> : vector<128x128xf32>
    %5 = vector.multi_reduction <maximumf>, %4, %cst_4 [0] : vector<4x128x128xf32> to vector<128x128xf32>
    %c0_5 = arith.constant 0 : index
    %c0_6 = arith.constant 0 : index
    %6 = vector.load %arg3[%c0_5, %c0_6] : memref<1x128xf32, #tpu.memory_space<vmem>>, vector<1x128xf32>
    %7 = vector.broadcast %6 : vector<1x128xf32> to vector<128x128xf32>
    %8 = arith.addf %5, %7 : vector<128x128xf32>
    %9 = arith.truncf %8 : vector<128x128xf32> to vector<128x128xbf16>
    %c0_7 = arith.constant 0 : index
    %c0_8 = arith.constant 0 : index
    %10 = vector.load %arg4[%c0_7, %c0_8] : memref<128x128xbf16, #tpu.memory_space<vmem>>, vector<128x128xbf16>
    tpu.vector_store %arg4[%c0_7, %c0_8], %9 {strides = array<i32>} : memref<128x128xbf16, #tpu.memory_space<vmem>>, vector<128x128xbf16>,
    return
  }
  func.func @transform_0(%arg0: i32) -> (i32, i32, i32) {
    %c0_i32 = arith.constant 0 : i32
    %c0_i32_0 = arith.constant 0 : i32
    %c0_i32_1 = arith.constant 0 : i32
    return %c0_i32, %arg0, %c0_i32_0 : i32, i32, i32
  }
  func.func @transform_1(%arg0: i32) -> (i32, i32) {
    %c0_i32 = arith.constant 0 : i32
    %c0_i32_0 = arith.constant 0 : i32
    %c0_i32_1 = arith.constant 0 : i32
    return %c0_i32, %c0_i32_0 : i32, i32
  }
  func.func @transform_2(%arg0: i32) -> (i32, i32) {
    %c0_i32 = arith.constant 0 : i32
    %c0_i32_0 = arith.constant 0 : i32
    %c0_i32_1 = arith.constant 0 : i32
    return %c0_i32, %c0_i32_0 : i32, i32
  }
  func.func @transform_3(%arg0: i32) -> (i32, i32) {
    %c0_i32 = arith.constant 0 : i32
    %c0_i32_0 = arith.constant 0 : i32
    return %arg0, %c0_i32 : i32, i32
  }
}

module attributes {stable_mosaic.version = 11 : i64} {
  func.func @_conv3_head_kernel(%arg0: i32, %arg1: memref<4x32x800xbf16, #tpu.memory_space<vmem>>, %arg2: memref<800x128xbf16, #tpu.memory_space<vmem>>, %arg3: memref<1x128xf32, #tpu.memory_space<vmem>>, %arg4: memref<2048x128xbf16, #tpu.memory_space<vmem>>, %arg5: memref<1x128xf32, #tpu.memory_space<vmem>>, %arg6: memref<128x128xbf16, #tpu.memory_space<vmem>>, %arg7: memref<1x128xf32, #tpu.memory_space<vmem>>, %arg8: memref<2x128xf32, #tpu.memory_space<vmem>>) attributes {dimension_semantics = [#tpu.dimension_semantics<arbitrary>], iteration_bounds = array<i64: 1>, scalar_prefetch = 0 : i64, scratch_operands = 0 : i64, tpu.core_type = #tpu.core_type<tc>, window_params = [{pipeline_mode = #tpu.pipeline_mode<synchronous>, transform_indices = @transform_0, window_bounds = array<i64: 4, 32, 800>}, {pipeline_mode = #tpu.pipeline_mode<synchronous>, transform_indices = @transform_1, window_bounds = array<i64: 800, 128>}, {pipeline_mode = #tpu.pipeline_mode<synchronous>, transform_indices = @transform_2, window_bounds = array<i64: 1, 128>}, {pipeline_mode = #tpu.pipeline_mode<synchronous>, transform_indices = @transform_3, window_bounds = array<i64: 2048, 128>}, {pipeline_mode = #tpu.pipeline_mode<synchronous>, transform_indices = @transform_4, window_bounds = array<i64: 1, 128>}, {pipeline_mode = #tpu.pipeline_mode<synchronous>, transform_indices = @transform_5, window_bounds = array<i64: 128, 128>}, {pipeline_mode = #tpu.pipeline_mode<synchronous>, transform_indices = @transform_6, window_bounds = array<i64: 1, 128>}, {pipeline_mode = #tpu.pipeline_mode<synchronous>, transform_indices = @transform_7, window_bounds = array<i64: 2, 128>}]} {
    %c0 = arith.constant 0 : index
    %c0_0 = arith.constant 0 : index
    %c0_1 = arith.constant 0 : index
    %0 = vector.load %arg1[%c0, %c0_0, %c0_1] : memref<4x32x800xbf16, #tpu.memory_space<vmem>>, vector<4x32x800xbf16>
    %1 = vector.shape_cast %0 : vector<4x32x800xbf16> to vector<128x800xbf16>
    %c0_2 = arith.constant 0 : index
    %c0_3 = arith.constant 0 : index
    %2 = vector.load %arg2[%c0_2, %c0_3] : memref<800x128xbf16, #tpu.memory_space<vmem>>, vector<800x128xbf16>
    %cst = arith.constant dense<0.000000e+00> : vector<128x128xf32>
    %3 = tpu.matmul %1, %2, %cst {dimension_numbers = #tpu.dot_dimension_numbers<[1], [0], [0], [1], [0, 0, 1, 1], [], []>} : vector<128x800xbf16>, vector<800x128xbf16>, vector<128x128xf32> -> vector<128x128xf32>
    %4 = vector.shape_cast %3 : vector<128x128xf32> to vector<4x32x128xf32>
    %cst_4 = arith.constant dense<0xFF800000> : vector<32x128xf32>
    %5 = vector.multi_reduction <maximumf>, %4, %cst_4 [0] : vector<4x32x128xf32> to vector<32x128xf32>
    %c0_5 = arith.constant 0 : index
    %c0_6 = arith.constant 0 : index
    %6 = vector.load %arg3[%c0_5, %c0_6] : memref<1x128xf32, #tpu.memory_space<vmem>>, vector<1x128xf32>
    %7 = vector.broadcast %6 : vector<1x128xf32> to vector<32x128xf32>
    %8 = arith.addf %5, %7 : vector<32x128xf32>
    %9 = vector.shape_cast %8 : vector<32x128xf32> to vector<2x16x128xf32>
    %10 = arith.truncf %9 : vector<2x16x128xf32> to vector<2x16x128xbf16>
    %11 = vector.extract_strided_slice %10 {offsets = [0, 0, 0], sizes = [2, 1, 128], strides = [1, 1, 1]} : vector<2x16x128xbf16> to vector<2x1x128xbf16>
    %12 = vector.shape_cast %11 : vector<2x1x128xbf16> to vector<2x128xbf16>
    %13 = vector.extract_strided_slice %10 {offsets = [0, 1, 0], sizes = [2, 1, 128], strides = [1, 1, 1]} : vector<2x16x128xbf16> to vector<2x1x128xbf16>
    %14 = vector.shape_cast %13 : vector<2x1x128xbf16> to vector<2x128xbf16>
    %15 = vector.extract_strided_slice %10 {offsets = [0, 2, 0], sizes = [2, 1, 128], strides = [1, 1, 1]} : vector<2x16x128xbf16> to vector<2x1x128xbf16>
    %16 = vector.shape_cast %15 : vector<2x1x128xbf16> to vector<2x128xbf16>
    %17 = vector.extract_strided_slice %10 {offsets = [0, 3, 0], sizes = [2, 1, 128], strides = [1, 1, 1]} : vector<2x16x128xbf16> to vector<2x1x128xbf16>
    %18 = vector.shape_cast %17 : vector<2x1x128xbf16> to vector<2x128xbf16>
    %19 = vector.extract_strided_slice %10 {offsets = [0, 4, 0], sizes = [2, 1, 128], strides = [1, 1, 1]} : vector<2x16x128xbf16> to vector<2x1x128xbf16>
    %20 = vector.shape_cast %19 : vector<2x1x128xbf16> to vector<2x128xbf16>
    %21 = vector.extract_strided_slice %10 {offsets = [0, 5, 0], sizes = [2, 1, 128], strides = [1, 1, 1]} : vector<2x16x128xbf16> to vector<2x1x128xbf16>
    %22 = vector.shape_cast %21 : vector<2x1x128xbf16> to vector<2x128xbf16>
    %23 = vector.extract_strided_slice %10 {offsets = [0, 6, 0], sizes = [2, 1, 128], strides = [1, 1, 1]} : vector<2x16x128xbf16> to vector<2x1x128xbf16>
    %24 = vector.shape_cast %23 : vector<2x1x128xbf16> to vector<2x128xbf16>
    %25 = vector.extract_strided_slice %10 {offsets = [0, 7, 0], sizes = [2, 1, 128], strides = [1, 1, 1]} : vector<2x16x128xbf16> to vector<2x1x128xbf16>
    %26 = vector.shape_cast %25 : vector<2x1x128xbf16> to vector<2x128xbf16>
    %27 = vector.extract_strided_slice %10 {offsets = [0, 8, 0], sizes = [2, 1, 128], strides = [1, 1, 1]} : vector<2x16x128xbf16> to vector<2x1x128xbf16>
    %28 = vector.shape_cast %27 : vector<2x1x128xbf16> to vector<2x128xbf16>
    %29 = vector.extract_strided_slice %10 {offsets = [0, 9, 0], sizes = [2, 1, 128], strides = [1, 1, 1]} : vector<2x16x128xbf16> to vector<2x1x128xbf16>
    %30 = vector.shape_cast %29 : vector<2x1x128xbf16> to vector<2x128xbf16>
    %31 = vector.extract_strided_slice %10 {offsets = [0, 10, 0], sizes = [2, 1, 128], strides = [1, 1, 1]} : vector<2x16x128xbf16> to vector<2x1x128xbf16>
    %32 = vector.shape_cast %31 : vector<2x1x128xbf16> to vector<2x128xbf16>
    %33 = vector.extract_strided_slice %10 {offsets = [0, 11, 0], sizes = [2, 1, 128], strides = [1, 1, 1]} : vector<2x16x128xbf16> to vector<2x1x128xbf16>
    %34 = vector.shape_cast %33 : vector<2x1x128xbf16> to vector<2x128xbf16>
    %35 = vector.extract_strided_slice %10 {offsets = [0, 12, 0], sizes = [2, 1, 128], strides = [1, 1, 1]} : vector<2x16x128xbf16> to vector<2x1x128xbf16>
    %36 = vector.shape_cast %35 : vector<2x1x128xbf16> to vector<2x128xbf16>
    %37 = vector.extract_strided_slice %10 {offsets = [0, 13, 0], sizes = [2, 1, 128], strides = [1, 1, 1]} : vector<2x16x128xbf16> to vector<2x1x128xbf16>
    %38 = vector.shape_cast %37 : vector<2x1x128xbf16> to vector<2x128xbf16>
    %39 = vector.extract_strided_slice %10 {offsets = [0, 14, 0], sizes = [2, 1, 128], strides = [1, 1, 1]} : vector<2x16x128xbf16> to vector<2x1x128xbf16>
    %40 = vector.shape_cast %39 : vector<2x1x128xbf16> to vector<2x128xbf16>
    %41 = vector.extract_strided_slice %10 {offsets = [0, 15, 0], sizes = [2, 1, 128], strides = [1, 1, 1]} : vector<2x16x128xbf16> to vector<2x1x128xbf16>
    %42 = vector.shape_cast %41 : vector<2x1x128xbf16> to vector<2x128xbf16>
    %43 = tpu.concatenate %12, %14, %16, %18, %20, %22, %24, %26, %28, %30, %32, %34, %36, %38, %40, %42 in 1 : vector<2x128xbf16>, vector<2x128xbf16>, vector<2x128xbf16>, vector<2x128xbf16>, vector<2x128xbf16>, vector<2x128xbf16>, vector<2x128xbf16>, vector<2x128xbf16>, vector<2x128xbf16>, vector<2x128xbf16>, vector<2x128xbf16>, vector<2x128xbf16>, vector<2x128xbf16>, vector<2x128xbf16>, vector<2x128xbf16>, vector<2x128xbf16> -> vector<2x2048xbf16>
    %c0_7 = arith.constant 0 : index
    %c0_8 = arith.constant 0 : index
    %44 = vector.load %arg4[%c0_7, %c0_8] : memref<2048x128xbf16, #tpu.memory_space<vmem>>, vector<2048x128xbf16>
    %cst_9 = arith.constant dense<0.000000e+00> : vector<2x128xf32>
    %45 = tpu.matmul %43, %44, %cst_9 {dimension_numbers = #tpu.dot_dimension_numbers<[1], [0], [0], [1], [0, 0, 1, 1], [], []>} : vector<2x2048xbf16>, vector<2048x128xbf16>, vector<2x128xf32> -> vector<2x128xf32>
    %c0_10 = arith.constant 0 : index
    %c0_11 = arith.constant 0 : index
    %46 = vector.load %arg5[%c0_10, %c0_11] : memref<1x128xf32, #tpu.memory_space<vmem>>, vector<1x128xf32>
    %47 = vector.broadcast %46 : vector<1x128xf32> to vector<2x128xf32>
    %48 = arith.addf %45, %47 : vector<2x128xf32>
    %49 = arith.truncf %48 : vector<2x128xf32> to vector<2x128xbf16>
    %c0_12 = arith.constant 0 : index
    %c0_13 = arith.constant 0 : index
    %50 = vector.load %arg6[%c0_12, %c0_13] : memref<128x128xbf16, #tpu.memory_space<vmem>>, vector<128x128xbf16>
    %cst_14 = arith.constant dense<0.000000e+00> : vector<2x128xf32>
    %51 = tpu.matmul %49, %50, %cst_14 {dimension_numbers = #tpu.dot_dimension_numbers<[1], [0], [0], [1], [0, 0, 1, 1], [], []>} : vector<2x128xbf16>, vector<128x128xbf16>, vector<2x128xf32> -> vector<2x128xf32>
    %c0_15 = arith.constant 0 : index
    %c0_16 = arith.constant 0 : index
    %52 = vector.load %arg7[%c0_15, %c0_16] : memref<1x128xf32, #tpu.memory_space<vmem>>, vector<1x128xf32>
    %53 = vector.broadcast %52 : vector<1x128xf32> to vector<2x128xf32>
    %54 = arith.addf %51, %53 : vector<2x128xf32>
    %c0_17 = arith.constant 0 : index
    %c0_18 = arith.constant 0 : index
    %55 = vector.load %arg8[%c0_17, %c0_18] : memref<2x128xf32, #tpu.memory_space<vmem>>, vector<2x128xf32>
    tpu.vector_store %arg8[%c0_17, %c0_18], %54 {strides = array<i32>} : memref<2x128xf32, #tpu.memory_space<vmem>>, vector<2x128xf32>,
    return
  }
  func.func @transform_0(%arg0: i32) -> (i32, i32, i32) {
    %c0_i32 = arith.constant 0 : i32
    %c0_i32_0 = arith.constant 0 : i32
    %c0_i32_1 = arith.constant 0 : i32
    %c0_i32_2 = arith.constant 0 : i32
    return %c0_i32, %c0_i32_0, %c0_i32_1 : i32, i32, i32
  }
  func.func @transform_1(%arg0: i32) -> (i32, i32) {
    %c0_i32 = arith.constant 0 : i32
    %c0_i32_0 = arith.constant 0 : i32
    %c0_i32_1 = arith.constant 0 : i32
    return %c0_i32, %c0_i32_0 : i32, i32
  }
  func.func @transform_2(%arg0: i32) -> (i32, i32) {
    %c0_i32 = arith.constant 0 : i32
    %c0_i32_0 = arith.constant 0 : i32
    %c0_i32_1 = arith.constant 0 : i32
    return %c0_i32, %c0_i32_0 : i32, i32
  }
  func.func @transform_3(%arg0: i32) -> (i32, i32) {
    %c0_i32 = arith.constant 0 : i32
    %c0_i32_0 = arith.constant 0 : i32
    %c0_i32_1 = arith.constant 0 : i32
    return %c0_i32, %c0_i32_0 : i32, i32
  }
  func.func @transform_4(%arg0: i32) -> (i32, i32) {
    %c0_i32 = arith.constant 0 : i32
    %c0_i32_0 = arith.constant 0 : i32
    %c0_i32_1 = arith.constant 0 : i32
    return %c0_i32, %c0_i32_0 : i32, i32
  }
  func.func @transform_5(%arg0: i32) -> (i32, i32) {
    %c0_i32 = arith.constant 0 : i32
    %c0_i32_0 = arith.constant 0 : i32
    %c0_i32_1 = arith.constant 0 : i32
    return %c0_i32, %c0_i32_0 : i32, i32
  }
  func.func @transform_6(%arg0: i32) -> (i32, i32) {
    %c0_i32 = arith.constant 0 : i32
    %c0_i32_0 = arith.constant 0 : i32
    %c0_i32_1 = arith.constant 0 : i32
    return %c0_i32, %c0_i32_0 : i32, i32
  }
  func.func @transform_7(%arg0: i32) -> (i32, i32) {
    %c0_i32 = arith.constant 0 : i32
    %c0_i32_0 = arith.constant 0 : i32
    %c0_i32_1 = arith.constant 0 : i32
    return %c0_i32, %c0_i32_0 : i32, i32
  }
}

</mosaic_0001>

<llo_original>
// kernel: my_cifar10_forward.3
$region0: #{my_cifar10_forward.3}
  #allocation0 [shape = 'u32[]', space=smem, size = 0x4, offset = 0x4, fixed_abs, tag = 'smem constant byte address 0x4 - core index']
  #allocation1 [shape = 'u32[72,128]{1,0:T(1,128)}', space=vmem, size = 0x9000, scoped, tag = 'internal scratch']
  %s0 = inlined_call_operand.vmem [shape: bf16[4,512,80], index: 0, kind: input, shape index: {}]
  %s1 = inlined_call_operand.vmem [shape: bf16[80,128], index: 1, kind: input, shape index: {}]
  %s2 = inlined_call_operand.vmem [shape: f32[1,128], index: 2, kind: input, shape index: {}]
  %s3 = inlined_call_operand.vmem [shape: bf16[512,128], index: 3, kind: output, shape index: {}]
  %s4 = sld [smem:[#allocation0]]
  $region86: #{my_cifar10_forward.3} parent=0
    _
  %s6 = ssub.s32 1, %s4
  %s7 = scalar_select 0, %s6, %s4
  $region1: #{my_cifar10_forward.3} parent=0
    #allocation2 [shape = 'u8[524288]{0}', space=vmem, size = 0x80000, scoped, tag = 'input window, operand 0']
    loop: start=0, step=1, limit=4
    $region2: #{my_cifar10_forward.3} parent=1 // loop_pre_header
      _
    $region3: #{my_cifar10_forward.3} parent=1 // loop_header
      %s9 = sphi 0, %s13
      %p10 = scmp.ge.s32.totalorder %s9, 4
      %s19 = sphi 0, %s21
      %s22 = sphi 0, %s19
      %s23 = sphi 0, %s22
      %s39 = sphi 0, %s23
      %s43 = sphi 0, %s43
      %s45 = sphi 0, %s43
      %s46 = sphi 0, %s45
      %s60 = sphi 0, %s46
      %s64 = sphi 0, %s64
      %s66 = sphi 0, %s64
      %s67 = sphi 0, %s66
      %s81 = sphi 0, %s67
      %s87 = sphi 0, %s89
      %s90 = sphi 0, %s87
      %s91 = sphi 0, %s90
      %s107 = sphi 0, %s91
    $region4: #{my_cifar10_forward.3} parent=1 // loop_header_branch
      %12 = sbr.rel (%p10) target = $region8
    $region5: #{my_cifar10_forward.3} parent=1 // loop_body
      %s14 = ssub.s32 %s9, 1
      %s15 = ssub.s32 %s9, 2
      %s16 = sadd.s32 %s9, 1
      %s17 = ssub.s32 %s9, %s16
      %p18 = scmp.eq.s32.totalorder %s17, 0
      %s20 = sadd.s32 %s19, 1
      %s21 = scalar_select %p18, %s19, %s20
      %p24 = pneg %p18
      %p25 = scmp.eq.s32.totalorder %s9, 1
      %p26 = por %p24, %p25
      %p27 = scmp.ne.s32.totalorder %s19, %s22
      %p28 = scmp.eq.s32.totalorder %s9, 0
      %p29 = por %p27, %p28
      %p30 = scmp.ne.s32.totalorder %s19, %s22
      %p31 = scmp.eq.s32.totalorder %s14, 1
      %p32 = por %p30, %p31
      %p33 = scmp.ne.s32.totalorder %s22, %s23
      %p34 = scmp.eq.s32.totalorder %s14, 0
      %p35 = por %p33, %p34
      %p36 = scmp.ne.s32.totalorder %s22, %s23
      %p37 = scmp.eq.s32.totalorder %s15, 1
      %p38 = por %p36, %p37
      %p40 = scmp.ne.s32.totalorder %s23, %s39
      %p41 = scmp.eq.s32.totalorder %s15, 0
      %p42 = por %p40, %p41
      %s44 = sadd.s32 %s43, 1
      %p47 = scmp.eq.s32.totalorder %s9, 1
      %p48 = scmp.ne.s32.totalorder %s43, %s45
      %p49 = scmp.eq.s32.totalorder %s9, 0
      %p50 = por %p48, %p49
      %p51 = scmp.ne.s32.totalorder %s43, %s45
      %p52 = scmp.eq.s32.totalorder %s14, 1
      %p53 = por %p51, %p52
      %p54 = scmp.ne.s32.totalorder %s45, %s46
      %p55 = scmp.eq.s32.totalorder %s14, 0
      %p56 = por %p54, %p55
      %p57 = scmp.ne.s32.totalorder %s45, %s46
      %p58 = scmp.eq.s32.totalorder %s15, 1
      %p59 = por %p57, %p58
      %p61 = scmp.ne.s32.totalorder %s46, %s60
      %p62 = scmp.eq.s32.totalorder %s15, 0
      %p63 = por %p61, %p62
      %s65 = sadd.s32 %s64, 1
      %p68 = scmp.eq.s32.totalorder %s9, 1
      %p69 = scmp.ne.s32.totalorder %s64, %s66
      %p70 = scmp.eq.s32.totalorder %s9, 0
      %p71 = por %p69, %p70
      %p72 = scmp.ne.s32.totalorder %s64, %s66
      %p73 = scmp.eq.s32.totalorder %s14, 1
      %p74 = por %p72, %p73
      %p75 = scmp.ne.s32.totalorder %s66, %s67
      %p76 = scmp.eq.s32.totalorder %s14, 0
      %p77 = por %p75, %p76
      %p78 = scmp.ne.s32.totalorder %s66, %s67
      %p79 = scmp.eq.s32.totalorder %s15, 1
      %p80 = por %p78, %p79
      %p82 = scmp.ne.s32.totalorder %s67, %s81
      %p83 = scmp.eq.s32.totalorder %s15, 0
      %p84 = por %p82, %p83
      %s85 = ssub.s32 %s9, %s16
      %p86 = scmp.eq.s32.totalorder %s85, 0
      %s88 = sadd.s32 %s87, 1
      %s89 = scalar_select %p86, %s87, %s88
      %p92 = pneg %p86
      %p93 = scmp.eq.s32.totalorder %s9, 1
      %p94 = por %p92, %p93
      %p95 = scmp.ne.s32.totalorder %s87, %s90
      %p96 = scmp.eq.s32.totalorder %s9, 0
      %p97 = por %p95, %p96
      %p98 = scmp.ne.s32.totalorder %s87, %s90
      %p99 = scmp.eq.s32.totalorder %s14, 1
      %p100 = por %p98, %p99
      %p101 = scmp.ne.s32.totalorder %s90, %s91
      %p102 = scmp.eq.s32.totalorder %s14, 0
      %p103 = por %p101, %p102
      %p104 = scmp.ne.s32.totalorder %s90, %s91
      %p105 = scmp.eq.s32.totalorder %s15, 1
      %p106 = por %p104, %p105
      %p108 = scmp.ne.s32.totalorder %s91, %s107
      %p109 = scmp.eq.s32.totalorder %s15, 0
      %p110 = por %p108, %p109
      %p111 = scmp.le.s32.totalorder 1, %s9
      %p112 = scmp.lt.s32.totalorder %s9, 3
      %p113 = pnand %p111, %p112
      %p114 = pneg %p113
      // Predicated region
      $region9: #{my_cifar10_forward.3} parent=5 // pred_check
        _
      $region10: #{my_cifar10_forward.3} parent=5 // pred_check_branch
        %116 = sbr.rel (%p113) target = $region12
      $region11: #{my_cifar10_forward.3} parent=5 // pred_region
        %s117 = ssub.s32 %s9, 1
        // Predicated region
        $region13: #{my_cifar10_forward.3} parent=11 // pred_check
          %p118 = pneg %p56
        $region14: #{my_cifar10_forward.3} parent=11 // pred_check_branch
          %120 = sbr.rel (%p118) target = $region16
        $region15: #{my_cifar10_forward.3} parent=11 // pred_region
          _
        $region16: #{my_cifar10_forward.3} parent=11 // pred_fallthru
          _
        // Predicated region
        $region17: #{my_cifar10_forward.3} parent=11 // pred_check
          %p121 = pneg %p77
        $region18: #{my_cifar10_forward.3} parent=11 // pred_check_branch
          %123 = sbr.rel (%p121) target = $region20
        $region19: #{my_cifar10_forward.3} parent=11 // pred_region
          _
        $region20: #{my_cifar10_forward.3} parent=11 // pred_fallthru
          _
      $region12: #{my_cifar10_forward.3} parent=5 // pred_fallthru
        _
      %p124 = scmp.lt.s32.totalorder %s9, 2
      // Predicated region
      $region21: #{my_cifar10_forward.3} parent=5 // pred_check
        %p125 = pneg %p124
      $region22: #{my_cifar10_forward.3} parent=5 // pred_check_branch
        %127 = sbr.rel (%p125) target = $region24
      $region23: #{my_cifar10_forward.3} parent=5 // pred_region
        // Predicated region
        $region25: #{my_cifar10_forward.3} parent=23 // pred_check
          %p128 = pneg %p29
        $region26: #{my_cifar10_forward.3} parent=23 // pred_check_branch
          %130 = sbr.rel (%p128) target = $region28
        $region27: #{my_cifar10_forward.3} parent=23 // pred_region
          %s131 = sand.u32 %s19, 1
          %s132 = sand.u32 %s19, 1
          %s133 = smul.addr %s132, 512
          %s134 = scalar_lea.vmem [#allocation2], %s133
          %s135 = smul.u32 32, %s9
          %s136 = smul.addr %s135, 4
          %s137 = scalar_lea.vmem %s0, %s136
          // Predicated region
          $region29: #{my_cifar10_forward.3} parent=27 // pred_check
            _
          $region30: #{my_cifar10_forward.3} parent=27 // pred_check_branch
            %139 = sbr.rel (0) target = $region32
          $region31: #{my_cifar10_forward.3} parent=27 // pred_region
            // Predicated region
            $region33: #{my_cifar10_forward.3} parent=31 // pred_check
              _
            $region34: #{my_cifar10_forward.3} parent=31 // pred_check_branch
              %141 = sbr.rel target = $region36
            $region35: #{my_cifar10_forward.3} parent=31 // pred_region
              // Predicated region
              $region48: #{my_cifar10_forward.3} parent=35 // pred_check
                _
              $region49: #{my_cifar10_forward.3} parent=35 // pred_check_branch
                %411 = sbr.rel (0) target = $region51
              $region50: #{my_cifar10_forward.3} parent=35 // pred_region
                loop: start=0, step=1, limit=1
                $region52: #{my_cifar10_forward.3} parent=50 // loop_pre_header
                  _
                $region53: #{my_cifar10_forward.3} parent=50 // loop_header
                  %s413 = sphi 0, %s417
                  %p414 = scmp.ge.s32.totalorder %s413, 1
                  %s418 = sphi %s137, %s137
                  %s419 = sphi %s134, %s134
                $region54: #{my_cifar10_forward.3} parent=50 // loop_header_branch
                  %416 = sbr.rel (%p414) target = $region58
                $region55: #{my_cifar10_forward.3} parent=50 // loop_body
                  _
                $region56: #{my_cifar10_forward.3} parent=50 // loop_footer
                  %s417 = sadd.s32 1, %s413
                $region57: #{my_cifar10_forward.3} parent=50 // loop_footer_branch
                  %412 = sbr.rel target = $region53
                $region58: #{my_cifar10_forward.3} parent=50 // loop_exit
                  _
                %s421 = ssub.s32 16, 1
                loop: start=0, step=1, limit=1
                $region59: #{my_cifar10_forward.3} parent=50 // loop_pre_header
                  _
                $region60: #{my_cifar10_forward.3} parent=50 // loop_header
                  %s423 = sphi 0, %s427
                  %p424 = scmp.ge.s32.totalorder %s423, 1
                  %s428 = sphi %s137, %s137
                  %s429 = sphi %s134, %s134
                $region61: #{my_cifar10_forward.3} parent=50 // loop_header_branch
                  %426 = sbr.rel (%p424) target = $region65
                $region62: #{my_cifar10_forward.3} parent=50 // loop_body
                  %v430 = vld [vmem:[%s428] sm:%s421]
                  %431 = vst [vmem:[%s429] sm:%s421] %v430
                  %v432 = vld [vmem:[%s428 + $0x4] sm:%s421]
                  %433 = vst [vmem:[%s429 + $0x4] sm:%s421] %v432
                  %v434 = vld [vmem:[%s428 + $0x8] sm:%s421]
                  %435 = vst [vmem:[%s429 + $0x8] sm:%s421] %v434
                  %v436 = vld [vmem:[%s428 + $0xc] sm:%s421]
                  %437 = vst [vmem:[%s429 + $0xc] sm:%s421] %v436
                  %v438 = vld [vmem:[%s428 + $0x10] sm:%s421]
                  %439 = vst [vmem:[%s429 + $0x10] sm:%s421] %v438
                  %v440 = vld [vmem:[%s428 + $0x14] sm:%s421]
                  %441 = vst [vmem:[%s429 + $0x14] sm:%s421] %v440
                  %v442 = vld [vmem:[%s428 + $0x18] sm:%s421]
                  %443 = vst [vmem:[%s429 + $0x18] sm:%s421] %v442
                  %v444 = vld [vmem:[%s428 + $0x1c] sm:%s421]
                  %445 = vst [vmem:[%s429 + $0x1c] sm:%s421] %v444
                  %v446 = vld [vmem:[%s428 + $0x20] sm:%s421]
                  %447 = vst [vmem:[%s429 + $0x20] sm:%s421] %v446
                  %v448 = vld [vmem:[%s428 + $0x24] sm:%s421]
                  %449 = vst [vmem:[%s429 + $0x24] sm:%s421] %v448
                  %v450 = vld [vmem:[%s428 + $0x28] sm:%s421]
                  %451 = vst [vmem:[%s429 + $0x28] sm:%s421] %v450
                  %v452 = vld [vmem:[%s428 + $0x2c] sm:%s421]
                  %453 = vst [vmem:[%s429 + $0x2c] sm:%s421] %v452
                  %v454 = vld [vmem:[%s428 + $0x30] sm:%s421]
                  %455 = vst [vmem:[%s429 + $0x30] sm:%s421] %v454
                  %v456 = vld [vmem:[%s428 + $0x34] sm:%s421]
                  %457 = vst [vmem:[%s429 + $0x34] sm:%s421] %v456
                  %v458 = vld [vmem:[%s428 + $0x38] sm:%s421]
                  %459 = vst [vmem:[%s429 + $0x38] sm:%s421] %v458
                  %v460 = vld [vmem:[%s428 + $0x3c] sm:%s421]
                  %461 = vst [vmem:[%s429 + $0x3c] sm:%s421] %v460
                  %v462 = vld [vmem:[%s428 + $0x40] sm:%s421]
                  %463 = vst [vmem:[%s429 + $0x40] sm:%s421] %v462
                  %v464 = vld [vmem:[%s428 + $0x44] sm:%s421]
                  %465 = vst [vmem:[%s429 + $0x44] sm:%s421] %v464
                  %v466 = vld [vmem:[%s428 + $0x48] sm:%s421]
                  %467 = vst [vmem:[%s429 + $0x48] sm:%s421] %v466
                  %v468 = vld [vmem:[%s428 + $0x4c] sm:%s421]
                  %469 = vst [vmem:[%s429 + $0x4c] sm:%s421] %v468
                  %v470 = vld [vmem:[%s428 + $0x50] sm:%s421]
                  %471 = vst [vmem:[%s429 + $0x50] sm:%s421] %v470
                  %v472 = vld [vmem:[%s428 + $0x54] sm:%s421]
                  %473 = vst [vmem:[%s429 + $0x54] sm:%s421] %v472
                  %v474 = vld [vmem:[%s428 + $0x58] sm:%s421]
                  %475 = vst [vmem:[%s429 + $0x58] sm:%s421] %v474
                  %v476 = vld [vmem:[%s428 + $0x5c] sm:%s421]
                  %477 = vst [vmem:[%s429 + $0x5c] sm:%s421] %v476
                  %v478 = vld [vmem:[%s428 + $0x60] sm:%s421]
                  %479 = vst [vmem:[%s429 + $0x60] sm:%s421] %v478
                  %v480 = vld [vmem:[%s428 + $0x64] sm:%s421]
                  %481 = vst [vmem:[%s429 + $0x64] sm:%s421] %v480
                  %v482 = vld [vmem:[%s428 + $0x68] sm:%s421]
                  %483 = vst [vmem:[%s429 + $0x68] sm:%s421] %v482
                  %v484 = vld [vmem:[%s428 + $0x6c] sm:%s421]
                  %485 = vst [vmem:[%s429 + $0x6c] sm:%s421] %v484
                  %v486 = vld [vmem:[%s428 + $0x70] sm:%s421]
                  %487 = vst [vmem:[%s429 + $0x70] sm:%s421] %v486
                  %v488 = vld [vmem:[%s428 + $0x74] sm:%s421]
                  %489 = vst [vmem:[%s429 + $0x74] sm:%s421] %v488
                  %v490 = vld [vmem:[%s428 + $0x78] sm:%s421]
                  %491 = vst [vmem:[%s429 + $0x78] sm:%s421] %v490
                  %v492 = vld [vmem:[%s428 + $0x7c] sm:%s421]
                  %493 = vst [vmem:[%s429 + $0x7c] sm:%s421] %v492
                  %v494 = vld [vmem:[%s428 + $0x100] sm:%s421]
                  %495 = vst [vmem:[%s429 + $0x80] sm:%s421] %v494
                  %v496 = vld [vmem:[%s428 + $0x104] sm:%s421]
                  %497 = vst [vmem:[%s429 + $0x84] sm:%s421] %v496
                  %v498 = vld [vmem:[%s428 + $0x108] sm:%s421]
                  %499 = vst [vmem:[%s429 + $0x88] sm:%s421] %v498
                  %v500 = vld [vmem:[%s428 + $0x10c] sm:%s421]
                  %501 = vst [vmem:[%s429 + $0x8c] sm:%s421] %v500
                  %v502 = vld [vmem:[%s428 + $0x110] sm:%s421]
                  %503 = vst [vmem:[%s429 + $0x90] sm:%s421] %v502
                  %v504 = vld [vmem:[%s428 + $0x114] sm:%s421]
                  %505 = vst [vmem:[%s429 + $0x94] sm:%s421] %v504
                  %v506 = vld [vmem:[%s428 + $0x118] sm:%s421]
                  %507 = vst [vmem:[%s429 + $0x98] sm:%s421] %v506
                  %v508 = vld [vmem:[%s428 + $0x11c] sm:%s421]
                  %509 = vst [vmem:[%s429 + $0x9c] sm:%s421] %v508
                  %v510 = vld [vmem:[%s428 + $0x120] sm:%s421]
                  %511 = vst [vmem:[%s429 + $0xa0] sm:%s421] %v510
                  %v512 = vld [vmem:[%s428 + $0x124] sm:%s421]
                  %513 = vst [vmem:[%s429 + $0xa4] sm:%s421] %v512
                  %v514 = vld [vmem:[%s428 + $0x128] sm:%s421]
                  %515 = vst [vmem:[%s429 + $0xa8] sm:%s421] %v514
                  %v516 = vld [vmem:[%s428 + $0x12c] sm:%s421]
                  %517 = vst [vmem:[%s429 + $0xac] sm:%s421] %v516
                  %v518 = vld [vmem:[%s428 + $0x130] sm:%s421]
                  %519 = vst [vmem:[%s429 + $0xb0] sm:%s421] %v518
                  %v520 = vld [vmem:[%s428 + $0x134] sm:%s421]
                  %521 = vst [vmem:[%s429 + $0xb4] sm:%s421] %v520
                  %v522 = vld [vmem:[%s428 + $0x138] sm:%s421]
                  %523 = vst [vmem:[%s429 + $0xb8] sm:%s421] %v522
                  %v524 = vld [vmem:[%s428 + $0x13c] sm:%s421]
                  %525 = vst [vmem:[%s429 + $0xbc] sm:%s421] %v524
                  %v526 = vld [vmem:[%s428 + $0x140] sm:%s421]
                  %527 = vst [vmem:[%s429 + $0xc0] sm:%s421] %v526
                  %v528 = vld [vmem:[%s428 + $0x144] sm:%s421]
                  %529 = vst [vmem:[%s429 + $0xc4] sm:%s421] %v528
                  %v530 = vld [vmem:[%s428 + $0x148] sm:%s421]
                  %531 = vst [vmem:[%s429 + $0xc8] sm:%s421] %v530
                  %v532 = vld [vmem:[%s428 + $0x14c] sm:%s421]
                  %533 = vst [vmem:[%s429 + $0xcc] sm:%s421] %v532
                  %v534 = vld [vmem:[%s428 + $0x150] sm:%s421]
                  %535 = vst [vmem:[%s429 + $0xd0] sm:%s421] %v534
                  %v536 = vld [vmem:[%s428 + $0x154] sm:%s421]
                  %537 = vst [vmem:[%s429 + $0xd4] sm:%s421] %v536
                  %v538 = vld [vmem:[%s428 + $0x158] sm:%s421]
                  %539 = vst [vmem:[%s429 + $0xd8] sm:%s421] %v538
                  %v540 = vld [vmem:[%s428 + $0x15c] sm:%s421]
                  %541 = vst [vmem:[%s429 + $0xdc] sm:%s421] %v540
                  %v542 = vld [vmem:[%s428 + $0x160] sm:%s421]
                  %543 = vst [vmem:[%s429 + $0xe0] sm:%s421] %v542
                  %v544 = vld [vmem:[%s428 + $0x164] sm:%s421]
                  %545 = vst [vmem:[%s429 + $0xe4] sm:%s421] %v544
                  %v546 = vld [vmem:[%s428 + $0x168] sm:%s421]
                  %547 = vst [vmem:[%s429 + $0xe8] sm:%s421] %v546
                  %v548 = vld [vmem:[%s428 + $0x16c] sm:%s421]
                  %549 = vst [vmem:[%s429 + $0xec] sm:%s421] %v548
                  %v550 = vld [vmem:[%s428 + $0x170] sm:%s421]
                  %551 = vst [vmem:[%s429 + $0xf0] sm:%s421] %v550
                  %v552 = vld [vmem:[%s428 + $0x174] sm:%s421]
                  %553 = vst [vmem:[%s429 + $0xf4] sm:%s421] %v552
                  %v554 = vld [vmem:[%s428 + $0x178] sm:%s421]
                  %555 = vst [vmem:[%s429 + $0xf8] sm:%s421] %v554
                  %v556 = vld [vmem:[%s428 + $0x17c] sm:%s421]
                  %557 = vst [vmem:[%s429 + $0xfc] sm:%s421] %v556
                  %v558 = vld [vmem:[%s428 + $0x200] sm:%s421]
                  %559 = vst [vmem:[%s429 + $0x100] sm:%s421] %v558
                  %v560 = vld [vmem:[%s428 + $0x204] sm:%s421]
                  %561 = vst [vmem:[%s429 + $0x104] sm:%s421] %v560
                  %v562 = vld [vmem:[%s428 + $0x208] sm:%s421]
                  %563 = vst [vmem:[%s429 + $0x108] sm:%s421] %v562
                  %v564 = vld [vmem:[%s428 + $0x20c] sm:%s421]
                  %565 = vst [vmem:[%s429 + $0x10c] sm:%s421] %v564
                  %v566 = vld [vmem:[%s428 + $0x210] sm:%s421]
                  %567 = vst [vmem:[%s429 + $0x110] sm:%s421] %v566
                  %v568 = vld [vmem:[%s428 + $0x214] sm:%s421]
                  %569 = vst [vmem:[%s429 + $0x114] sm:%s421] %v568
                  %v570 = vld [vmem:[%s428 + $0x218] sm:%s421]
                  %571 = vst [vmem:[%s429 + $0x118] sm:%s421] %v570
                  %v572 = vld [vmem:[%s428 + $0x21c] sm:%s421]
                  %573 = vst [vmem:[%s429 + $0x11c] sm:%s421] %v572
                  %v574 = vld [vmem:[%s428 + $0x220] sm:%s421]
                  %575 = vst [vmem:[%s429 + $0x120] sm:%s421] %v574
                  %v576 = vld [vmem:[%s428 + $0x224] sm:%s421]
                  %577 = vst [vmem:[%s429 + $0x124] sm:%s421] %v576
                  %v578 = vld [vmem:[%s428 + $0x228] sm:%s421]
                  %579 = vst [vmem:[%s429 + $0x128] sm:%s421] %v578
                  %v580 = vld [vmem:[%s428 + $0x22c] sm:%s421]
                  %581 = vst [vmem:[%s429 + $0x12c] sm:%s421] %v580
                  %v582 = vld [vmem:[%s428 + $0x230] sm:%s421]
                  %583 = vst [vmem:[%s429 + $0x130] sm:%s421] %v582
                  %v584 = vld [vmem:[%s428 + $0x234] sm:%s421]
                  %585 = vst [vmem:[%s429 + $0x134] sm:%s421] %v584
                  %v586 = vld [vmem:[%s428 + $0x238] sm:%s421]
                  %587 = vst [vmem:[%s429 + $0x138] sm:%s421] %v586
                  %v588 = vld [vmem:[%s428 + $0x23c] sm:%s421]
                  %589 = vst [vmem:[%s429 + $0x13c] sm:%s421] %v588
                  %v590 = vld [vmem:[%s428 + $0x240] sm:%s421]
                  %591 = vst [vmem:[%s429 + $0x140] sm:%s421] %v590
                  %v592 = vld [vmem:[%s428 + $0x244] sm:%s421]
                  %593 = vst [vmem:[%s429 + $0x144] sm:%s421] %v592
                  %v594 = vld [vmem:[%s428 + $0x248] sm:%s421]
                  %595 = vst [vmem:[%s429 + $0x148] sm:%s421] %v594
                  %v596 = vld [vmem:[%s428 + $0x24c] sm:%s421]
                  %597 = vst [vmem:[%s429 + $0x14c] sm:%s421] %v596
                  %v598 = vld [vmem:[%s428 + $0x250] sm:%s421]
                  %599 = vst [vmem:[%s429 + $0x150] sm:%s421] %v598
                  %v600 = vld [vmem:[%s428 + $0x254] sm:%s421]
                  %601 = vst [vmem:[%s429 + $0x154] sm:%s421] %v600
                  %v602 = vld [vmem:[%s428 + $0x258] sm:%s421]
                  %603 = vst [vmem:[%s429 + $0x158] sm:%s421] %v602
                  %v604 = vld [vmem:[%s428 + $0x25c] sm:%s421]
                  %605 = vst [vmem:[%s429 + $0x15c] sm:%s421] %v604
                  %v606 = vld [vmem:[%s428 + $0x260] sm:%s421]
                  %607 = vst [vmem:[%s429 + $0x160] sm:%s421] %v606
                  %v608 = vld [vmem:[%s428 + $0x264] sm:%s421]
                  %609 = vst [vmem:[%s429 + $0x164] sm:%s421] %v608
                  %v610 = vld [vmem:[%s428 + $0x268] sm:%s421]
                  %611 = vst [vmem:[%s429 + $0x168] sm:%s421] %v610
                  %v612 = vld [vmem:[%s428 + $0x26c] sm:%s421]
                  %613 = vst [vmem:[%s429 + $0x16c] sm:%s421] %v612
                  %v614 = vld [vmem:[%s428 + $0x270] sm:%s421]
                  %615 = vst [vmem:[%s429 + $0x170] sm:%s421] %v614
                  %v616 = vld [vmem:[%s428 + $0x274] sm:%s421]
                  %617 = vst [vmem:[%s429 + $0x174] sm:%s421] %v616
                  %v618 = vld [vmem:[%s428 + $0x278] sm:%s421]
                  %619 = vst [vmem:[%s429 + $0x178] sm:%s421] %v618
                  %v620 = vld [vmem:[%s428 + $0x27c] sm:%s421]
                  %621 = vst [vmem:[%s429 + $0x17c] sm:%s421] %v620
                  %v622 = vld [vmem:[%s428 + $0x300] sm:%s421]
                  %623 = vst [vmem:[%s429 + $0x180] sm:%s421] %v622
                  %v624 = vld [vmem:[%s428 + $0x304] sm:%s421]
                  %625 = vst [vmem:[%s429 + $0x184] sm:%s421] %v624
                  %v626 = vld [vmem:[%s428 + $0x308] sm:%s421]
                  %627 = vst [vmem:[%s429 + $0x188] sm:%s421] %v626
                  %v628 = vld [vmem:[%s428 + $0x30c] sm:%s421]
                  %629 = vst [vmem:[%s429 + $0x18c] sm:%s421] %v628
                  %v630 = vld [vmem:[%s428 + $0x310] sm:%s421]
                  %631 = vst [vmem:[%s429 + $0x190] sm:%s421] %v630
                  %v632 = vld [vmem:[%s428 + $0x314] sm:%s421]
                  %633 = vst [vmem:[%s429 + $0x194] sm:%s421] %v632
                  %v634 = vld [vmem:[%s428 + $0x318] sm:%s421]
                  %635 = vst [vmem:[%s429 + $0x198] sm:%s421] %v634
                  %v636 = vld [vmem:[%s428 + $0x31c] sm:%s421]
                  %637 = vst [vmem:[%s429 + $0x19c] sm:%s421] %v636
                  %v638 = vld [vmem:[%s428 + $0x320] sm:%s421]
                  %639 = vst [vmem:[%s429 + $0x1a0] sm:%s421] %v638
                  %v640 = vld [vmem:[%s428 + $0x324] sm:%s421]
                  %641 = vst [vmem:[%s429 + $0x1a4] sm:%s421] %v640
                  %v642 = vld [vmem:[%s428 + $0x328] sm:%s421]
                  %643 = vst [vmem:[%s429 + $0x1a8] sm:%s421] %v642
                  %v644 = vld [vmem:[%s428 + $0x32c] sm:%s421]
                  %645 = vst [vmem:[%s429 + $0x1ac] sm:%s421] %v644
                  %v646 = vld [vmem:[%s428 + $0x330] sm:%s421]
                  %647 = vst [vmem:[%s429 + $0x1b0] sm:%s421] %v646
                  %v648 = vld [vmem:[%s428 + $0x334] sm:%s421]
                  %649 = vst [vmem:[%s429 + $0x1b4] sm:%s421] %v648
                  %v650 = vld [vmem:[%s428 + $0x338] sm:%s421]
                  %651 = vst [vmem:[%s429 + $0x1b8] sm:%s421] %v650
                  %v652 = vld [vmem:[%s428 + $0x33c] sm:%s421]
                  %653 = vst [vmem:[%s429 + $0x1bc] sm:%s421] %v652
                  %v654 = vld [vmem:[%s428 + $0x340] sm:%s421]
                  %655 = vst [vmem:[%s429 + $0x1c0] sm:%s421] %v654
                  %v656 = vld [vmem:[%s428 + $0x344] sm:%s421]
                  %657 = vst [vmem:[%s429 + $0x1c4] sm:%s421] %v656
                  %v658 = vld [vmem:[%s428 + $0x348] sm:%s421]
                  %659 = vst [vmem:[%s429 + $0x1c8] sm:%s421] %v658
                  %v660 = vld [vmem:[%s428 + $0x34c] sm:%s421]
                  %661 = vst [vmem:[%s429 + $0x1cc] sm:%s421] %v660
                  %v662 = vld [vmem:[%s428 + $0x350] sm:%s421]
                  %663 = vst [vmem:[%s429 + $0x1d0] sm:%s421] %v662
                  %v664 = vld [vmem:[%s428 + $0x354] sm:%s421]
                  %665 = vst [vmem:[%s429 + $0x1d4] sm:%s421] %v664
                  %v666 = vld [vmem:[%s428 + $0x358] sm:%s421]
                  %667 = vst [vmem:[%s429 + $0x1d8] sm:%s421] %v666
                  %v668 = vld [vmem:[%s428 + $0x35c] sm:%s421]
                  %669 = vst [vmem:[%s429 + $0x1dc] sm:%s421] %v668
                  %v670 = vld [vmem:[%s428 + $0x360] sm:%s421]
                  %671 = vst [vmem:[%s429 + $0x1e0] sm:%s421] %v670
                  %v672 = vld [vmem:[%s428 + $0x364] sm:%s421]
                  %673 = vst [vmem:[%s429 + $0x1e4] sm:%s421] %v672
                  %v674 = vld [vmem:[%s428 + $0x368] sm:%s421]
                  %675 = vst [vmem:[%s429 + $0x1e8] sm:%s421] %v674
                  %v676 = vld [vmem:[%s428 + $0x36c] sm:%s421]
                  %677 = vst [vmem:[%s429 + $0x1ec] sm:%s421] %v676
                  %v678 = vld [vmem:[%s428 + $0x370] sm:%s421]
                  %679 = vst [vmem:[%s429 + $0x1f0] sm:%s421] %v678
                  %v680 = vld [vmem:[%s428 + $0x374] sm:%s421]
                  %681 = vst [vmem:[%s429 + $0x1f4] sm:%s421] %v680
                  %v682 = vld [vmem:[%s428 + $0x378] sm:%s421]
                  %683 = vst [vmem:[%s429 + $0x1f8] sm:%s421] %v682
                  %v684 = vld [vmem:[%s428 + $0x37c] sm:%s421]
                  %685 = vst [vmem:[%s429 + $0x1fc] sm:%s421] %v684
                $region63: #{my_cifar10_forward.3} parent=50 // loop_footer
                  %s427 = sadd.s32 1, %s423
                $region64: #{my_cifar10_forward.3} parent=50 // loop_footer_branch
                  %422 = sbr.rel target = $region60
                $region65: #{my_cifar10_forward.3} parent=50 // loop_exit
                  _
              $region51: #{my_cifar10_forward.3} parent=35 // pred_fallthru
                _
            $region36: #{my_cifar10_forward.3} parent=31 // pred_fallthru
              _
            // Predicated region
            $region37: #{my_cifar10_forward.3} parent=31 // pred_check
              _
            $region38: #{my_cifar10_forward.3} parent=31 // pred_check_branch
              %143 = sbr.rel (0) target = $region40
            $region39: #{my_cifar10_forward.3} parent=31 // pred_region
              %s145 = ssub.s32 16, 1
              loop: start=0, step=1, limit=1
              $region41: #{my_cifar10_forward.3} parent=39 // loop_pre_header
                _
              $region42: #{my_cifar10_forward.3} parent=39 // loop_header
                %s147 = sphi 0, %s151
                %p148 = scmp.ge.s32.totalorder %s147, 1
                %s152 = sphi %s137, %s137
                %s153 = sphi %s134, %s134
              $region43: #{my_cifar10_forward.3} parent=39 // loop_header_branch
                %150 = sbr.rel (%p148) target = $region47
              $region44: #{my_cifar10_forward.3} parent=39 // loop_body
                %v154 = vld [vmem:[%s152] sm:%s145]
                %155 = vst [vmem:[%s153] sm:%s145] %v154
                %v156 = vld [vmem:[%s152 + $0x4] sm:%s145]
                %157 = vst [vmem:[%s153 + $0x4] sm:%s145] %v156
                %v158 = vld [vmem:[%s152 + $0x8] sm:%s145]
                %159 = vst [vmem:[%s153 + $0x8] sm:%s145] %v158
                %v160 = vld [vmem:[%s152 + $0xc] sm:%s145]
                %161 = vst [vmem:[%s153 + $0xc] sm:%s145] %v160
                %v162 = vld [vmem:[%s152 + $0x10] sm:%s145]
                %163 = vst [vmem:[%s153 + $0x10] sm:%s145] %v162
                %v164 = vld [vmem:[%s152 + $0x14] sm:%s145]
                %165 = vst [vmem:[%s153 + $0x14] sm:%s145] %v164
                %v166 = vld [vmem:[%s152 + $0x18] sm:%s145]
                %167 = vst [vmem:[%s153 + $0x18] sm:%s145] %v166
                %v168 = vld [vmem:[%s152 + $0x1c] sm:%s145]
                %169 = vst [vmem:[%s153 + $0x1c] sm:%s145] %v168
                %v170 = vld [vmem:[%s152 + $0x20] sm:%s145]
                %171 = vst [vmem:[%s153 + $0x20] sm:%s145] %v170
                %v172 = vld [vmem:[%s152 + $0x24] sm:%s145]
                %173 = vst [vmem:[%s153 + $0x24] sm:%s145] %v172
                %v174 = vld [vmem:[%s152 + $0x28] sm:%s145]
                %175 = vst [vmem:[%s153 + $0x28] sm:%s145] %v174
                %v176 = vld [vmem:[%s152 + $0x2c] sm:%s145]
                %177 = vst [vmem:[%s153 + $0x2c] sm:%s145] %v176
                %v178 = vld [vmem:[%s152 + $0x30] sm:%s145]
                %179 = vst [vmem:[%s153 + $0x30] sm:%s145] %v178
                %v180 = vld [vmem:[%s152 + $0x34] sm:%s145]
                %181 = vst [vmem:[%s153 + $0x34] sm:%s145] %v180
                %v182 = vld [vmem:[%s152 + $0x38] sm:%s145]
                %183 = vst [vmem:[%s153 + $0x38] sm:%s145] %v182
                %v184 = vld [vmem:[%s152 + $0x3c] sm:%s145]
                %185 = vst [vmem:[%s153 + $0x3c] sm:%s145] %v184
                %v186 = vld [vmem:[%s152 + $0x40] sm:%s145]
                %187 = vst [vmem:[%s153 + $0x40] sm:%s145] %v186
                %v188 = vld [vmem:[%s152 + $0x44] sm:%s145]
                %189 = vst [vmem:[%s153 + $0x44] sm:%s145] %v188
                %v190 = vld [vmem:[%s152 + $0x48] sm:%s145]
                %191 = vst [vmem:[%s153 + $0x48] sm:%s145] %v190
                %v192 = vld [vmem:[%s152 + $0x4c] sm:%s145]
                %193 = vst [vmem:[%s153 + $0x4c] sm:%s145] %v192
                %v194 = vld [vmem:[%s152 + $0x50] sm:%s145]
                %195 = vst [vmem:[%s153 + $0x50] sm:%s145] %v194
                %v196 = vld [vmem:[%s152 + $0x54] sm:%s145]
                %197 = vst [vmem:[%s153 + $0x54] sm:%s145] %v196
                %v198 = vld [vmem:[%s152 + $0x58] sm:%s145]
                %199 = vst [vmem:[%s153 + $0x58] sm:%s145] %v198
                %v200 = vld [vmem:[%s152 + $0x5c] sm:%s145]
                %201 = vst [vmem:[%s153 + $0x5c] sm:%s145] %v200
                %v202 = vld [vmem:[%s152 + $0x60] sm:%s145]
                %203 = vst [vmem:[%s153 + $0x60] sm:%s145] %v202
                %v204 = vld [vmem:[%s152 + $0x64] sm:%s145]
                %205 = vst [vmem:[%s153 + $0x64] sm:%s145] %v204
                %v206 = vld [vmem:[%s152 + $0x68] sm:%s145]
                %207 = vst [vmem:[%s153 + $0x68] sm:%s145] %v206
                %v208 = vld [vmem:[%s152 + $0x6c] sm:%s145]
                %209 = vst [vmem:[%s153 + $0x6c] sm:%s145] %v208
                %v210 = vld [vmem:[%s152 + $0x70] sm:%s145]
                %211 = vst [vmem:[%s153 + $0x70] sm:%s145] %v210
                %v212 = vld [vmem:[%s152 + $0x74] sm:%s145]
                %213 = vst [vmem:[%s153 + $0x74] sm:%s145] %v212
                %v214 = vld [vmem:[%s152 + $0x78] sm:%s145]
                %215 = vst [vmem:[%s153 + $0x78] sm:%s145] %v214
                %v216 = vld [vmem:[%s152 + $0x7c] sm:%s145]
                %217 = vst [vmem:[%s153 + $0x7c] sm:%s145] %v216
                %v218 = vld [vmem:[%s152 + $0x100] sm:%s145]
                %219 = vst [vmem:[%s153 + $0x80] sm:%s145] %v218
                %v220 = vld [vmem:[%s152 + $0x104] sm:%s145]
                %221 = vst [vmem:[%s153 + $0x84] sm:%s145] %v220
                %v222 = vld [vmem:[%s152 + $0x108] sm:%s145]
                %223 = vst [vmem:[%s153 + $0x88] sm:%s145] %v222
                %v224 = vld [vmem:[%s152 + $0x10c] sm:%s145]
                %225 = vst [vmem:[%s153 + $0x8c] sm:%s145] %v224
                %v226 = vld [vmem:[%s152 + $0x110] sm:%s145]
                %227 = vst [vmem:[%s153 + $0x90] sm:%s145] %v226
                %v228 = vld [vmem:[%s152 + $0x114] sm:%s145]
                %229 = vst [vmem:[%s153 + $0x94] sm:%s145] %v228
                %v230 = vld [vmem:[%s152 + $0x118] sm:%s145]
                %231 = vst [vmem:[%s153 + $0x98] sm:%s145] %v230
                %v232 = vld [vmem:[%s152 + $0x11c] sm:%s145]
                %233 = vst [vmem:[%s153 + $0x9c] sm:%s145] %v232
                %v234 = vld [vmem:[%s152 + $0x120] sm:%s145]
                %235 = vst [vmem:[%s153 + $0xa0] sm:%s145] %v234
                %v236 = vld [vmem:[%s152 + $0x124] sm:%s145]
                %237 = vst [vmem:[%s153 + $0xa4] sm:%s145] %v236
                %v238 = vld [vmem:[%s152 + $0x128] sm:%s145]
                %239 = vst [vmem:[%s153 + $0xa8] sm:%s145] %v238
                %v240 = vld [vmem:[%s152 + $0x12c] sm:%s145]
                %241 = vst [vmem:[%s153 + $0xac] sm:%s145] %v240
                %v242 = vld [vmem:[%s152 + $0x130] sm:%s145]
                %243 = vst [vmem:[%s153 + $0xb0] sm:%s145] %v242
                %v244 = vld [vmem:[%s152 + $0x134] sm:%s145]
                %245 = vst [vmem:[%s153 + $0xb4] sm:%s145] %v244
                %v246 = vld [vmem:[%s152 + $0x138] sm:%s145]
                %247 = vst [vmem:[%s153 + $0xb8] sm:%s145] %v246
                %v248 = vld [vmem:[%s152 + $0x13c] sm:%s145]
                %249 = vst [vmem:[%s153 + $0xbc] sm:%s145] %v248
                %v250 = vld [vmem:[%s152 + $0x140] sm:%s145]
                %251 = vst [vmem:[%s153 + $0xc0] sm:%s145] %v250
                %v252 = vld [vmem:[%s152 + $0x144] sm:%s145]
                %253 = vst [vmem:[%s153 + $0xc4] sm:%s145] %v252
                %v254 = vld [vmem:[%s152 + $0x148] sm:%s145]
                %255 = vst [vmem:[%s153 + $0xc8] sm:%s145] %v254
                %v256 = vld [vmem:[%s152 + $0x14c] sm:%s145]
                %257 = vst [vmem:[%s153 + $0xcc] sm:%s145] %v256
                %v258 = vld [vmem:[%s152 + $0x150] sm:%s145]
                %259 = vst [vmem:[%s153 + $0xd0] sm:%s145] %v258
                %v260 = vld [vmem:[%s152 + $0x154] sm:%s145]
                %261 = vst [vmem:[%s153 + $0xd4] sm:%s145] %v260
                %v262 = vld [vmem:[%s152 + $0x158] sm:%s145]
                %263 = vst [vmem:[%s153 + $0xd8] sm:%s145] %v262
                %v264 = vld [vmem:[%s152 + $0x15c] sm:%s145]
                %265 = vst [vmem:[%s153 + $0xdc] sm:%s145] %v264
                %v266 = vld [vmem:[%s152 + $0x160] sm:%s145]
                %267 = vst [vmem:[%s153 + $0xe0] sm:%s145] %v266
                %v268 = vld [vmem:[%s152 + $0x164] sm:%s145]
                %269 = vst [vmem:[%s153 + $0xe4] sm:%s145] %v268
                %v270 = vld [vmem:[%s152 + $0x168] sm:%s145]
                %271 = vst [vmem:[%s153 + $0xe8] sm:%s145] %v270
                %v272 = vld [vmem:[%s152 + $0x16c] sm:%s145]
                %273 = vst [vmem:[%s153 + $0xec] sm:%s145] %v272
                %v274 = vld [vmem:[%s152 + $0x170] sm:%s145]
                %275 = vst [vmem:[%s153 + $0xf0] sm:%s145] %v274
                %v276 = vld [vmem:[%s152 + $0x174] sm:%s145]
                %277 = vst [vmem:[%s153 + $0xf4] sm:%s145] %v276
                %v278 = vld [vmem:[%s152 + $0x178] sm:%s145]
                %279 = vst [vmem:[%s153 + $0xf8] sm:%s145] %v278
                %v280 = vld [vmem:[%s152 + $0x17c] sm:%s145]
                %281 = vst [vmem:[%s153 + $0xfc] sm:%s145] %v280
                %v282 = vld [vmem:[%s152 + $0x200] sm:%s145]
                %283 = vst [vmem:[%s153 + $0x100] sm:%s145] %v282
                %v284 = vld [vmem:[%s152 + $0x204] sm:%s145]
                %285 = vst [vmem:[%s153 + $0x104] sm:%s145] %v284
                %v286 = vld [vmem:[%s152 + $0x208] sm:%s145]
                %287 = vst [vmem:[%s153 + $0x108] sm:%s145] %v286
                %v288 = vld [vmem:[%s152 + $0x20c] sm:%s145]
                %289 = vst [vmem:[%s153 + $0x10c] sm:%s145] %v288
                %v290 = vld [vmem:[%s152 + $0x210] sm:%s145]
                %291 = vst [vmem:[%s153 + $0x110] sm:%s145] %v290
                %v292 = vld [vmem:[%s152 + $0x214] sm:%s145]
                %293 = vst [vmem:[%s153 + $0x114] sm:%s145] %v292
                %v294 = vld [vmem:[%s152 + $0x218] sm:%s145]
                %295 = vst [vmem:[%s153 + $0x118] sm:%s145] %v294
                %v296 = vld [vmem:[%s152 + $0x21c] sm:%s145]
                %297 = vst [vmem:[%s153 + $0x11c] sm:%s145] %v296
                %v298 = vld [vmem:[%s152 + $0x220] sm:%s145]
                %299 = vst [vmem:[%s153 + $0x120] sm:%s145] %v298
                %v300 = vld [vmem:[%s152 + $0x224] sm:%s145]
                %301 = vst [vmem:[%s153 + $0x124] sm:%s145] %v300
                %v302 = vld [vmem:[%s152 + $0x228] sm:%s145]
                %303 = vst [vmem:[%s153 + $0x128] sm:%s145] %v302
                %v304 = vld [vmem:[%s152 + $0x22c] sm:%s145]
                %305 = vst [vmem:[%s153 + $0x12c] sm:%s145] %v304
                %v306 = vld [vmem:[%s152 + $0x230] sm:%s145]
                %307 = vst [vmem:[%s153 + $0x130] sm:%s145] %v306
                %v308 = vld [vmem:[%s152 + $0x234] sm:%s145]
                %309 = vst [vmem:[%s153 + $0x134] sm:%s145] %v308
                %v310 = vld [vmem:[%s152 + $0x238] sm:%s145]
                %311 = vst [vmem:[%s153 + $0x138] sm:%s145] %v310
                %v312 = vld [vmem:[%s152 + $0x23c] sm:%s145]
                %313 = vst [vmem:[%s153 + $0x13c] sm:%s145] %v312
                %v314 = vld [vmem:[%s152 + $0x240] sm:%s145]
                %315 = vst [vmem:[%s153 + $0x140] sm:%s145] %v314
                %v316 = vld [vmem:[%s152 + $0x244] sm:%s145]
                %317 = vst [vmem:[%s153 + $0x144] sm:%s145] %v316
                %v318 = vld [vmem:[%s152 + $0x248] sm:%s145]
                %319 = vst [vmem:[%s153 + $0x148] sm:%s145] %v318
                %v320 = vld [vmem:[%s152 + $0x24c] sm:%s145]
                %321 = vst [vmem:[%s153 + $0x14c] sm:%s145] %v320
                %v322 = vld [vmem:[%s152 + $0x250] sm:%s145]
                %323 = vst [vmem:[%s153 + $0x150] sm:%s145] %v322
                %v324 = vld [vmem:[%s152 + $0x254] sm:%s145]
                %325 = vst [vmem:[%s153 + $0x154] sm:%s145] %v324
                %v326 = vld [vmem:[%s152 + $0x258] sm:%s145]
                %327 = vst [vmem:[%s153 + $0x158] sm:%s145] %v326
                %v328 = vld [vmem:[%s152 + $0x25c] sm:%s145]
                %329 = vst [vmem:[%s153 + $0x15c] sm:%s145] %v328
                %v330 = vld [vmem:[%s152 + $0x260] sm:%s145]
                %331 = vst [vmem:[%s153 + $0x160] sm:%s145] %v330
                %v332 = vld [vmem:[%s152 + $0x264] sm:%s145]
                %333 = vst [vmem:[%s153 + $0x164] sm:%s145] %v332
                %v334 = vld [vmem:[%s152 + $0x268] sm:%s145]
                %335 = vst [vmem:[%s153 + $0x168] sm:%s145] %v334
                %v336 = vld [vmem:[%s152 + $0x26c] sm:%s145]
                %337 = vst [vmem:[%s153 + $0x16c] sm:%s145] %v336
                %v338 = vld [vmem:[%s152 + $0x270] sm:%s145]
                %339 = vst [vmem:[%s153 + $0x170] sm:%s145] %v338
                %v340 = vld [vmem:[%s152 + $0x274] sm:%s145]
                %341 = vst [vmem:[%s153 + $0x174] sm:%s145] %v340
                %v342 = vld [vmem:[%s152 + $0x278] sm:%s145]
                %343 = vst [vmem:[%s153 + $0x178] sm:%s145] %v342
                %v344 = vld [vmem:[%s152 + $0x27c] sm:%s145]
                %345 = vst [vmem:[%s153 + $0x17c] sm:%s145] %v344
                %v346 = vld [vmem:[%s152 + $0x300] sm:%s145]
                %347 = vst [vmem:[%s153 + $0x180] sm:%s145] %v346
                %v348 = vld [vmem:[%s152 + $0x304] sm:%s145]
                %349 = vst [vmem:[%s153 + $0x184] sm:%s145] %v348
                %v350 = vld [vmem:[%s152 + $0x308] sm:%s145]
                %351 = vst [vmem:[%s153 + $0x188] sm:%s145] %v350
                %v352 = vld [vmem:[%s152 + $0x30c] sm:%s145]
                %353 = vst [vmem:[%s153 + $0x18c] sm:%s145] %v352
                %v354 = vld [vmem:[%s152 + $0x310] sm:%s145]
                %355 = vst [vmem:[%s153 + $0x190] sm:%s145] %v354
                %v356 = vld [vmem:[%s152 + $0x314] sm:%s145]
                %357 = vst [vmem:[%s153 + $0x194] sm:%s145] %v356
                %v358 = vld [vmem:[%s152 + $0x318] sm:%s145]
                %359 = vst [vmem:[%s153 + $0x198] sm:%s145] %v358
                %v360 = vld [vmem:[%s152 + $0x31c] sm:%s145]
                %361 = vst [vmem:[%s153 + $0x19c] sm:%s145] %v360
                %v362 = vld [vmem:[%s152 + $0x320] sm:%s145]
                %363 = vst [vmem:[%s153 + $0x1a0] sm:%s145] %v362
                %v364 = vld [vmem:[%s152 + $0x324] sm:%s145]
                %365 = vst [vmem:[%s153 + $0x1a4] sm:%s145] %v364
                %v366 = vld [vmem:[%s152 + $0x328] sm:%s145]
                %367 = vst [vmem:[%s153 + $0x1a8] sm:%s145] %v366
                %v368 = vld [vmem:[%s152 + $0x32c] sm:%s145]
                %369 = vst [vmem:[%s153 + $0x1ac] sm:%s145] %v368
                %v370 = vld [vmem:[%s152 + $0x330] sm:%s145]
                %371 = vst [vmem:[%s153 + $0x1b0] sm:%s145] %v370
                %v372 = vld [vmem:[%s152 + $0x334] sm:%s145]
                %373 = vst [vmem:[%s153 + $0x1b4] sm:%s145] %v372
                %v374 = vld [vmem:[%s152 + $0x338] sm:%s145]
                %375 = vst [vmem:[%s153 + $0x1b8] sm:%s145] %v374
                %v376 = vld [vmem:[%s152 + $0x33c] sm:%s145]
                %377 = vst [vmem:[%s153 + $0x1bc] sm:%s145] %v376
                %v378 = vld [vmem:[%s152 + $0x340] sm:%s145]
                %379 = vst [vmem:[%s153 + $0x1c0] sm:%s145] %v378
                %v380 = vld [vmem:[%s152 + $0x344] sm:%s145]
                %381 = vst [vmem:[%s153 + $0x1c4] sm:%s145] %v380
                %v382 = vld [vmem:[%s152 + $0x348] sm:%s145]
                %383 = vst [vmem:[%s153 + $0x1c8] sm:%s145] %v382
                %v384 = vld [vmem:[%s152 + $0x34c] sm:%s145]
                %385 = vst [vmem:[%s153 + $0x1cc] sm:%s145] %v384
                %v386 = vld [vmem:[%s152 + $0x350] sm:%s145]
                %387 = vst [vmem:[%s153 + $0x1d0] sm:%s145] %v386
                %v388 = vld [vmem:[%s152 + $0x354] sm:%s145]
                %389 = vst [vmem:[%s153 + $0x1d4] sm:%s145] %v388
                %v390 = vld [vmem:[%s152 + $0x358] sm:%s145]
                %391 = vst [vmem:[%s153 + $0x1d8] sm:%s145] %v390
                %v392 = vld [vmem:[%s152 + $0x35c] sm:%s145]
                %393 = vst [vmem:[%s153 + $0x1dc] sm:%s145] %v392
                %v394 = vld [vmem:[%s152 + $0x360] sm:%s145]
                %395 = vst [vmem:[%s153 + $0x1e0] sm:%s145] %v394
                %v396 = vld [vmem:[%s152 + $0x364] sm:%s145]
                %397 = vst [vmem:[%s153 + $0x1e4] sm:%s145] %v396
                %v398 = vld [vmem:[%s152 + $0x368] sm:%s145]
                %399 = vst [vmem:[%s153 + $0x1e8] sm:%s145] %v398
                %v400 = vld [vmem:[%s152 + $0x36c] sm:%s145]
                %401 = vst [vmem:[%s153 + $0x1ec] sm:%s145] %v400
                %v402 = vld [vmem:[%s152 + $0x370] sm:%s145]
                %403 = vst [vmem:[%s153 + $0x1f0] sm:%s145] %v402
                %v404 = vld [vmem:[%s152 + $0x374] sm:%s145]
                %405 = vst [vmem:[%s153 + $0x1f4] sm:%s145] %v404
                %v406 = vld [vmem:[%s152 + $0x378] sm:%s145]
                %407 = vst [vmem:[%s153 + $0x1f8] sm:%s145] %v406
                %v408 = vld [vmem:[%s152 + $0x37c] sm:%s145]
                %409 = vst [vmem:[%s153 + $0x1fc] sm:%s145] %v408
              $region45: #{my_cifar10_forward.3} parent=39 // loop_footer
                %s151 = sadd.s32 1, %s147
              $region46: #{my_cifar10_forward.3} parent=39 // loop_footer_branch
                %146 = sbr.rel target = $region42
              $region47: #{my_cifar10_forward.3} parent=39 // loop_exit
                _
            $region40: #{my_cifar10_forward.3} parent=31 // pred_fallthru
              _
          $region32: #{my_cifar10_forward.3} parent=27 // pred_fallthru
            _
          %686 = vnop
        $region28: #{my_cifar10_forward.3} parent=23 // pred_fallthru
          _
      $region24: #{my_cifar10_forward.3} parent=5 // pred_fallthru
        _
      %p687 = scmp.le.s32.totalorder 1, %s9
      %p688 = scmp.lt.s32.totalorder %s9, 3
      %p689 = pnand %p687, %p688
      %p690 = pneg %p689
      // Predicated region
      $region66: #{my_cifar10_forward.3} parent=5 // pred_check
        _
      $region67: #{my_cifar10_forward.3} parent=5 // pred_check_branch
        %692 = sbr.rel (%p689) target = $region69
      $region68: #{my_cifar10_forward.3} parent=5 // pred_region
        %s693 = ssub.s32 %s9, 1
        %s694 = sand.u32 %s22, 1
        %s695 = sand.u32 %s22, 1
        %s696 = smul.addr %s695, 512
        %s697 = scalar_lea.vmem [#allocation2], %s696
        // Predicated region
        $region70: #{my_cifar10_forward.3} parent=68 // pred_check
          %p698 = pneg %p35
        $region71: #{my_cifar10_forward.3} parent=68 // pred_check_branch
          %700 = sbr.rel (%p698) target = $region73
        $region72: #{my_cifar10_forward.3} parent=68 // pred_region
          _
        $region73: #{my_cifar10_forward.3} parent=68 // pred_fallthru
          _
        %s701 = sand.u32 %s22, 1
        %s702 = sand.u32 %s22, 1
        %s703 = smul.addr %s702, 512
        %s704 = scalar_lea.vmem [#allocation2], %s703
        %p705 = pneg %p35
        %p706 = pneg %p32
        %p707 = pneg %p56
        %p708 = pneg %p53
        %p709 = pneg %p77
        %p710 = pneg %p74
        %p711 = pneg %p103
        %p712 = pneg %p100
        %s713 = smul.u32 32, %s14
        %p714 = scmp.lt.s32.totalorder %s713, 63
        %s715 = scalar_select %p714, %s713, 63
        %s716 = smul.addr %s715, 4
        %s717 = scalar_lea.vmem %s3, %s716
        %s718 = smul.u32 32, %s14
        %s719 = smul.u32 32, %s14
        %p720 = scmp.lt.s32.totalorder %s719, 63
        %s721 = scalar_select %p720, %s719, 63
        %s722 = smul.addr %s721, 4
        %s723 = scalar_lea.vmem %s3, %s722
        %s724 = smul.u32 32, %s14
        %v726 = vld [vmem:[%s697] sm:$0xf]
        %v727 = vld [vmem:[%s697 + $0x4] sm:$0xf]
        %v728 = vld [vmem:[%s697 + $0x8] sm:$0xf]
        %v729 = vld [vmem:[%s697 + $0xc] sm:$0xf]
        %v730 = vld [vmem:[%s697 + $0x10] sm:$0xf]
        %v731 = vld [vmem:[%s697 + $0x14] sm:$0xf]
        %v732 = vld [vmem:[%s697 + $0x18] sm:$0xf]
        %v733 = vld [vmem:[%s697 + $0x1c] sm:$0xf]
        %v734 = vld [vmem:[%s697 + $0x20] sm:$0xf]
        %v735 = vld [vmem:[%s697 + $0x24] sm:$0xf]
        %v736 = vld [vmem:[%s697 + $0x28] sm:$0xf]
        %v737 = vld [vmem:[%s697 + $0x2c] sm:$0xf]
        %v738 = vld [vmem:[%s697 + $0x30] sm:$0xf]
        %v739 = vld [vmem:[%s697 + $0x34] sm:$0xf]
        %v740 = vld [vmem:[%s697 + $0x38] sm:$0xf]
        %v741 = vld [vmem:[%s697 + $0x3c] sm:$0xf]
        %v742 = vld [vmem:[%s697 + $0x40] sm:$0xf]
        %v743 = vld [vmem:[%s697 + $0x44] sm:$0xf]
        %v744 = vld [vmem:[%s697 + $0x48] sm:$0xf]
        %v745 = vld [vmem:[%s697 + $0x4c] sm:$0xf]
        %v746 = vld [vmem:[%s697 + $0x50] sm:$0xf]
        %v747 = vld [vmem:[%s697 + $0x54] sm:$0xf]
        %v748 = vld [vmem:[%s697 + $0x58] sm:$0xf]
        %v749 = vld [vmem:[%s697 + $0x5c] sm:$0xf]
        %v750 = vld [vmem:[%s697 + $0x60] sm:$0xf]
        %v751 = vld [vmem:[%s697 + $0x64] sm:$0xf]
        %v752 = vld [vmem:[%s697 + $0x68] sm:$0xf]
        %v753 = vld [vmem:[%s697 + $0x6c] sm:$0xf]
        %v754 = vld [vmem:[%s697 + $0x70] sm:$0xf]
        %v755 = vld [vmem:[%s697 + $0x74] sm:$0xf]
        %v756 = vld [vmem:[%s697 + $0x78] sm:$0xf]
        %v757 = vld [vmem:[%s697 + $0x7c] sm:$0xf]
        %v758 = vld [vmem:[%s697 + $0x80] sm:$0xf]
        %v759 = vld [vmem:[%s697 + $0x84] sm:$0xf]
        %v760 = vld [vmem:[%s697 + $0x88] sm:$0xf]
        %v761 = vld [vmem:[%s697 + $0x8c] sm:$0xf]
        %v762 = vld [vmem:[%s697 + $0x90] sm:$0xf]
        %v763 = vld [vmem:[%s697 + $0x94] sm:$0xf]
        %v764 = vld [vmem:[%s697 + $0x98] sm:$0xf]
        %v765 = vld [vmem:[%s697 + $0x9c] sm:$0xf]
        %v766 = vld [vmem:[%s697 + $0xa0] sm:$0xf]
        %v767 = vld [vmem:[%s697 + $0xa4] sm:$0xf]
        %v768 = vld [vmem:[%s697 + $0xa8] sm:$0xf]
        %v769 = vld [vmem:[%s697 + $0xac] sm:$0xf]
        %v770 = vld [vmem:[%s697 + $0xb0] sm:$0xf]
        %v771 = vld [vmem:[%s697 + $0xb4] sm:$0xf]
        %v772 = vld [vmem:[%s697 + $0xb8] sm:$0xf]
        %v773 = vld [vmem:[%s697 + $0xbc] sm:$0xf]
        %v774 = vld [vmem:[%s697 + $0xc0] sm:$0xf]
        %v775 = vld [vmem:[%s697 + $0xc4] sm:$0xf]
        %v776 = vld [vmem:[%s697 + $0xc8] sm:$0xf]
        %v777 = vld [vmem:[%s697 + $0xcc] sm:$0xf]
        %v778 = vld [vmem:[%s697 + $0xd0] sm:$0xf]
        %v779 = vld [vmem:[%s697 + $0xd4] sm:$0xf]
        %v780 = vld [vmem:[%s697 + $0xd8] sm:$0xf]
        %v781 = vld [vmem:[%s697 + $0xdc] sm:$0xf]
        %v782 = vld [vmem:[%s697 + $0xe0] sm:$0xf]
        %v783 = vld [vmem:[%s697 + $0xe4] sm:$0xf]
        %v784 = vld [vmem:[%s697 + $0xe8] sm:$0xf]
        %v785 = vld [vmem:[%s697 + $0xec] sm:$0xf]
        %v786 = vld [vmem:[%s697 + $0xf0] sm:$0xf]
        %v787 = vld [vmem:[%s697 + $0xf4] sm:$0xf]
        %v788 = vld [vmem:[%s697 + $0xf8] sm:$0xf]
        %v789 = vld [vmem:[%s697 + $0xfc] sm:$0xf]
        %v790 = vld [vmem:[%s697 + $0x100] sm:$0xf]
        %v791 = vld [vmem:[%s697 + $0x104] sm:$0xf]
        %v792 = vld [vmem:[%s697 + $0x108] sm:$0xf]
        %v793 = vld [vmem:[%s697 + $0x10c] sm:$0xf]
        %v794 = vld [vmem:[%s697 + $0x110] sm:$0xf]
        %v795 = vld [vmem:[%s697 + $0x114] sm:$0xf]
        %v796 = vld [vmem:[%s697 + $0x118] sm:$0xf]
        %v797 = vld [vmem:[%s697 + $0x11c] sm:$0xf]
        %v798 = vld [vmem:[%s697 + $0x120] sm:$0xf]
        %v799 = vld [vmem:[%s697 + $0x124] sm:$0xf]
        %v800 = vld [vmem:[%s697 + $0x128] sm:$0xf]
        %v801 = vld [vmem:[%s697 + $0x12c] sm:$0xf]
        %v802 = vld [vmem:[%s697 + $0x130] sm:$0xf]
        %v803 = vld [vmem:[%s697 + $0x134] sm:$0xf]
        %v804 = vld [vmem:[%s697 + $0x138] sm:$0xf]
        %v805 = vld [vmem:[%s697 + $0x13c] sm:$0xf]
        %v806 = vld [vmem:[%s697 + $0x140] sm:$0xf]
        %v807 = vld [vmem:[%s697 + $0x144] sm:$0xf]
        %v808 = vld [vmem:[%s697 + $0x148] sm:$0xf]
        %v809 = vld [vmem:[%s697 + $0x14c] sm:$0xf]
        %v810 = vld [vmem:[%s697 + $0x150] sm:$0xf]
        %v811 = vld [vmem:[%s697 + $0x154] sm:$0xf]
        %v812 = vld [vmem:[%s697 + $0x158] sm:$0xf]
        %v813 = vld [vmem:[%s697 + $0x15c] sm:$0xf]
        %v814 = vld [vmem:[%s697 + $0x160] sm:$0xf]
        %v815 = vld [vmem:[%s697 + $0x164] sm:$0xf]
        %v816 = vld [vmem:[%s697 + $0x168] sm:$0xf]
        %v817 = vld [vmem:[%s697 + $0x16c] sm:$0xf]
        %v818 = vld [vmem:[%s697 + $0x170] sm:$0xf]
        %v819 = vld [vmem:[%s697 + $0x174] sm:$0xf]
        %v820 = vld [vmem:[%s697 + $0x178] sm:$0xf]
        %v821 = vld [vmem:[%s697 + $0x17c] sm:$0xf]
        %v822 = vld [vmem:[%s697 + $0x180] sm:$0xf]
        %v823 = vld [vmem:[%s697 + $0x184] sm:$0xf]
        %v824 = vld [vmem:[%s697 + $0x188] sm:$0xf]
        %v825 = vld [vmem:[%s697 + $0x18c] sm:$0xf]
        %v826 = vld [vmem:[%s697 + $0x190] sm:$0xf]
        %v827 = vld [vmem:[%s697 + $0x194] sm:$0xf]
        %v828 = vld [vmem:[%s697 + $0x198] sm:$0xf]
        %v829 = vld [vmem:[%s697 + $0x19c] sm:$0xf]
        %v830 = vld [vmem:[%s697 + $0x1a0] sm:$0xf]
        %v831 = vld [vmem:[%s697 + $0x1a4] sm:$0xf]
        %v832 = vld [vmem:[%s697 + $0x1a8] sm:$0xf]
        %v833 = vld [vmem:[%s697 + $0x1ac] sm:$0xf]
        %v834 = vld [vmem:[%s697 + $0x1b0] sm:$0xf]
        %v835 = vld [vmem:[%s697 + $0x1b4] sm:$0xf]
        %v836 = vld [vmem:[%s697 + $0x1b8] sm:$0xf]
        %v837 = vld [vmem:[%s697 + $0x1bc] sm:$0xf]
        %v838 = vld [vmem:[%s697 + $0x1c0] sm:$0xf]
        %v839 = vld [vmem:[%s697 + $0x1c4] sm:$0xf]
        %v840 = vld [vmem:[%s697 + $0x1c8] sm:$0xf]
        %v841 = vld [vmem:[%s697 + $0x1cc] sm:$0xf]
        %v842 = vld [vmem:[%s697 + $0x1d0] sm:$0xf]
        %v843 = vld [vmem:[%s697 + $0x1d4] sm:$0xf]
        %v844 = vld [vmem:[%s697 + $0x1d8] sm:$0xf]
        %v845 = vld [vmem:[%s697 + $0x1dc] sm:$0xf]
        %v846 = vld [vmem:[%s697 + $0x1e0] sm:$0xf]
        %v847 = vld [vmem:[%s697 + $0x1e4] sm:$0xf]
        %v848 = vld [vmem:[%s697 + $0x1e8] sm:$0xf]
        %v849 = vld [vmem:[%s697 + $0x1ec] sm:$0xf]
        %v850 = vld [vmem:[%s697 + $0x1f0] sm:$0xf]
        %v851 = vld [vmem:[%s697 + $0x1f4] sm:$0xf]
        %v852 = vld [vmem:[%s697 + $0x1f8] sm:$0xf]
        %v853 = vld [vmem:[%s697 + $0x1fc] sm:$0xf]
        %v854 = vld [vmem:[%s1] sm:$0xf]
        %v855 = vld [vmem:[%s1 + $0x4] sm:$0xf]
        %v856 = vld [vmem:[%s1 + $0x8] sm:$0xf]
        %v857 = vld [vmem:[%s1 + $0xc] sm:$0xf]
        %v858 = vld [vmem:[%s1 + $0x10] sm:$0xf]
        %v859 = vld [vmem:[%s1 + $0x14] sm:$0xf]
        %v860 = vld [vmem:[%s1 + $0x18] sm:$0xf]
        %v861 = vld [vmem:[%s1 + $0x1c] sm:$0xf]
        %v862 = vld [vmem:[%s1 + $0x20] sm:$0xf]
        %v863 = vld [vmem:[%s1 + $0x24] sm:$0xf]
        %v992 = vunpack.c.l.b16 %v726
        %v993 = vunpack.c.l.b16 %v727
        %v994 = vunpack.c.l.b16 %v728
        %v995 = vunpack.c.l.b16 %v729
        %v996 = vunpack.c.l.b16 %v730
        %v997 = vunpack.c.l.b16 %v731
        %v998 = vunpack.c.l.b16 %v732
        %v999 = vunpack.c.l.b16 %v733
        %v1000 = vunpack.c.l.b16 %v734
        %v1001 = vunpack.c.l.b16 %v735
        %v1002 = vunpack.c.l.b16 %v736
        %v1003 = vunpack.c.l.b16 %v737
        %v1004 = vunpack.c.l.b16 %v738
        %v1005 = vunpack.c.l.b16 %v739
        %v1006 = vunpack.c.l.b16 %v740
        %v1007 = vunpack.c.l.b16 %v741
        %v1008 = vunpack.c.l.b16 %v742
        %v1009 = vunpack.c.l.b16 %v743
        %v1010 = vunpack.c.l.b16 %v744
        %v1011 = vunpack.c.l.b16 %v745
        %v1012 = vunpack.c.l.b16 %v746
        %v1013 = vunpack.c.l.b16 %v747
        %v1014 = vunpack.c.l.b16 %v748
        %v1015 = vunpack.c.l.b16 %v749
        %v1016 = vunpack.c.l.b16 %v750
        %v1017 = vunpack.c.l.b16 %v751
        %v1018 = vunpack.c.l.b16 %v752
        %v1019 = vunpack.c.l.b16 %v753
        %v1020 = vunpack.c.l.b16 %v754
        %v1021 = vunpack.c.l.b16 %v755
        %v1022 = vunpack.c.l.b16 %v756
        %v1023 = vunpack.c.l.b16 %v757
        %v1024 = vunpack.c.l.b16 %v758
        %v1025 = vunpack.c.l.b16 %v759
        %v1026 = vunpack.c.l.b16 %v760
        %v1027 = vunpack.c.l.b16 %v761
        %v1028 = vunpack.c.l.b16 %v762
        %v1029 = vunpack.c.l.b16 %v763
        %v1030 = vunpack.c.l.b16 %v764
        %v1031 = vunpack.c.l.b16 %v765
        %v1032 = vunpack.c.l.b16 %v766
        %v1033 = vunpack.c.l.b16 %v767
        %v1034 = vunpack.c.l.b16 %v768
        %v1035 = vunpack.c.l.b16 %v769
        %v1036 = vunpack.c.l.b16 %v770
        %v1037 = vunpack.c.l.b16 %v771
        %v1038 = vunpack.c.l.b16 %v772
        %v1039 = vunpack.c.l.b16 %v773
        %v1040 = vunpack.c.l.b16 %v774
        %v1041 = vunpack.c.l.b16 %v775
        %v1042 = vunpack.c.l.b16 %v776
        %v1043 = vunpack.c.l.b16 %v777
        %v1044 = vunpack.c.l.b16 %v778
        %v1045 = vunpack.c.l.b16 %v779
        %v1046 = vunpack.c.l.b16 %v780
        %v1047 = vunpack.c.l.b16 %v781
        %v1048 = vunpack.c.l.b16 %v782
        %v1049 = vunpack.c.l.b16 %v783
        %v1050 = vunpack.c.l.b16 %v784
        %v1051 = vunpack.c.l.b16 %v785
        %v1052 = vunpack.c.l.b16 %v786
        %v1053 = vunpack.c.l.b16 %v787
        %v1054 = vunpack.c.l.b16 %v788
        %v1055 = vunpack.c.l.b16 %v789
        %v1056 = vunpack.c.l.b16 %v790
        %v1057 = vunpack.c.l.b16 %v791
        %v1058 = vunpack.c.l.b16 %v792
        %v1059 = vunpack.c.l.b16 %v793
        %v1060 = vunpack.c.l.b16 %v794
        %v1061 = vunpack.c.l.b16 %v795
        %v1062 = vunpack.c.l.b16 %v796
        %v1063 = vunpack.c.l.b16 %v797
        %v1064 = vunpack.c.l.b16 %v798
        %v1065 = vunpack.c.l.b16 %v799
        %v1066 = vunpack.c.l.b16 %v800
        %v1067 = vunpack.c.l.b16 %v801
        %v1068 = vunpack.c.l.b16 %v802
        %v1069 = vunpack.c.l.b16 %v803
        %v1070 = vunpack.c.l.b16 %v804
        %v1071 = vunpack.c.l.b16 %v805
        %v1072 = vunpack.c.l.b16 %v806
        %v1073 = vunpack.c.l.b16 %v807
        %v1074 = vunpack.c.l.b16 %v808
        %v1075 = vunpack.c.l.b16 %v809
        %v1076 = vunpack.c.l.b16 %v810
        %v1077 = vunpack.c.l.b16 %v811
        %v1078 = vunpack.c.l.b16 %v812
        %v1079 = vunpack.c.l.b16 %v813
        %v1080 = vunpack.c.l.b16 %v814
        %v1081 = vunpack.c.l.b16 %v815
        %v1082 = vunpack.c.l.b16 %v816
        %v1083 = vunpack.c.l.b16 %v817
        %v1084 = vunpack.c.l.b16 %v818
        %v1085 = vunpack.c.l.b16 %v819
        %v1086 = vunpack.c.l.b16 %v820
        %v1087 = vunpack.c.l.b16 %v821
        %v1088 = vunpack.c.l.b16 %v822
        %v1089 = vunpack.c.l.b16 %v823
        %v1090 = vunpack.c.l.b16 %v824
        %v1091 = vunpack.c.l.b16 %v825
        %v1092 = vunpack.c.l.b16 %v826
        %v1093 = vunpack.c.l.b16 %v827
        %v1094 = vunpack.c.l.b16 %v828
        %v1095 = vunpack.c.l.b16 %v829
        %v1096 = vunpack.c.l.b16 %v830
        %v1097 = vunpack.c.l.b16 %v831
        %v1098 = vunpack.c.l.b16 %v832
        %v1099 = vunpack.c.l.b16 %v833
        %v1100 = vunpack.c.l.b16 %v834
        %v1101 = vunpack.c.l.b16 %v835
        %v1102 = vunpack.c.l.b16 %v836
        %v1103 = vunpack.c.l.b16 %v837
        %v1104 = vunpack.c.l.b16 %v838
        %v1105 = vunpack.c.l.b16 %v839
        %v1106 = vunpack.c.l.b16 %v840
        %v1107 = vunpack.c.l.b16 %v841
        %v1108 = vunpack.c.l.b16 %v842
        %v1109 = vunpack.c.l.b16 %v843
        %v1110 = vunpack.c.l.b16 %v844
        %v1111 = vunpack.c.l.b16 %v845
        %v1112 = vunpack.c.l.b16 %v846
        %v1113 = vunpack.c.l.b16 %v847
        %v1114 = vunpack.c.l.b16 %v848
        %v1115 = vunpack.c.l.b16 %v849
        %v1116 = vunpack.c.l.b16 %v850
        %v1117 = vunpack.c.l.b16 %v851
        %v1118 = vunpack.c.l.b16 %v852
        %v1119 = vunpack.c.l.b16 %v853
        %v1120 = vpack.c.b16 %v993, %v992
        %v1121 = vpack.c.b16 %v995, %v994
        %v1122 = vpack.c.b16 %v997, %v996
        %v1123 = vpack.c.b16 %v999, %v998
        %v1124 = vpack.c.b16 %v1001, %v1000
        %v1125 = vpack.c.b16 %v1003, %v1002
        %v1126 = vpack.c.b16 %v1005, %v1004
        %v1127 = vpack.c.b16 %v1007, %v1006
        %v1128 = vpack.c.b16 %v1009, %v1008
        %v1129 = vpack.c.b16 %v1011, %v1010
        %v1130 = vpack.c.b16 %v1013, %v1012
        %v1131 = vpack.c.b16 %v1015, %v1014
        %v1132 = vpack.c.b16 %v1017, %v1016
        %v1133 = vpack.c.b16 %v1019, %v1018
        %v1134 = vpack.c.b16 %v1021, %v1020
        %v1135 = vpack.c.b16 %v1023, %v1022
        %v1136 = vpack.c.b16 %v1025, %v1024
        %v1137 = vpack.c.b16 %v1027, %v1026
        %v1138 = vpack.c.b16 %v1029, %v1028
        %v1139 = vpack.c.b16 %v1031, %v1030
        %v1140 = vpack.c.b16 %v1033, %v1032
        %v1141 = vpack.c.b16 %v1035, %v1034
        %v1142 = vpack.c.b16 %v1037, %v1036
        %v1143 = vpack.c.b16 %v1039, %v1038
        %v1144 = vpack.c.b16 %v1041, %v1040
        %v1145 = vpack.c.b16 %v1043, %v1042
        %v1146 = vpack.c.b16 %v1045, %v1044
        %v1147 = vpack.c.b16 %v1047, %v1046
        %v1148 = vpack.c.b16 %v1049, %v1048
        %v1149 = vpack.c.b16 %v1051, %v1050
        %v1150 = vpack.c.b16 %v1053, %v1052
        %v1151 = vpack.c.b16 %v1055, %v1054
        %v1152 = vpack.c.b16 %v1057, %v1056
        %v1153 = vpack.c.b16 %v1059, %v1058
        %v1154 = vpack.c.b16 %v1061, %v1060
        %v1155 = vpack.c.b16 %v1063, %v1062
        %v1156 = vpack.c.b16 %v1065, %v1064
        %v1157 = vpack.c.b16 %v1067, %v1066
        %v1158 = vpack.c.b16 %v1069, %v1068
        %v1159 = vpack.c.b16 %v1071, %v1070
        %v1160 = vpack.c.b16 %v1073, %v1072
        %v1161 = vpack.c.b16 %v1075, %v1074
        %v1162 = vpack.c.b16 %v1077, %v1076
        %v1163 = vpack.c.b16 %v1079, %v1078
        %v1164 = vpack.c.b16 %v1081, %v1080
        %v1165 = vpack.c.b16 %v1083, %v1082
        %v1166 = vpack.c.b16 %v1085, %v1084
        %v1167 = vpack.c.b16 %v1087, %v1086
        %v1168 = vpack.c.b16 %v1089, %v1088
        %v1169 = vpack.c.b16 %v1091, %v1090
        %v1170 = vpack.c.b16 %v1093, %v1092
        %v1171 = vpack.c.b16 %v1095, %v1094
        %v1172 = vpack.c.b16 %v1097, %v1096
        %v1173 = vpack.c.b16 %v1099, %v1098
        %v1174 = vpack.c.b16 %v1101, %v1100
        %v1175 = vpack.c.b16 %v1103, %v1102
        %v1176 = vpack.c.b16 %v1105, %v1104
        %v1177 = vpack.c.b16 %v1107, %v1106
        %v1178 = vpack.c.b16 %v1109, %v1108
        %v1179 = vpack.c.b16 %v1111, %v1110
        %v1180 = vpack.c.b16 %v1113, %v1112
        %v1181 = vpack.c.b16 %v1115, %v1114
        %v1182 = vpack.c.b16 %v1117, %v1116
        %v1183 = vpack.c.b16 %v1119, %v1118
        %v1194 = vunpack.c.l.b16 %v854
        %v1195 = vunpack.c.l.b16 %v855
        %v1196 = vunpack.c.l.b16 %v856
        %v1197 = vunpack.c.l.b16 %v857
        %v1198 = vunpack.c.l.b16 %v858
        %v1199 = vunpack.c.l.b16 %v859
        %v1200 = vunpack.c.l.b16 %v860
        %v1201 = vunpack.c.l.b16 %v861
        %v1202 = vunpack.c.l.b16 %v862
        %v1203 = vunpack.c.l.b16 %v863
        %v1204 = vpack.c.b16 %v1195, %v1194
        %v1205 = vpack.c.b16 %v1197, %v1196
        %v1206 = vpack.c.b16 %v1199, %v1198
        %v1207 = vpack.c.b16 %v1201, %v1200
        %v1208 = vpack.c.b16 %v1203, %v1202
        %vm1214 = vcmask 654336
        %v1216 = vsel %vm1214, %v1120, 0
        %v1219 = vsel %vm1214, %v1121, 0
        %v1222 = vsel %vm1214, %v1122, 0
        %v1225 = vsel %vm1214, %v1123, 0
        %v1228 = vsel %vm1214, %v1124, 0
        %v1231 = vsel %vm1214, %v1125, 0
        %v1234 = vsel %vm1214, %v1126, 0
        %v1237 = vsel %vm1214, %v1127, 0
        %v1240 = vsel %vm1214, %v1128, 0
        %v1243 = vsel %vm1214, %v1129, 0
        %v1246 = vsel %vm1214, %v1130, 0
        %v1249 = vsel %vm1214, %v1131, 0
        %v1252 = vsel %vm1214, %v1132, 0
        %v1255 = vsel %vm1214, %v1133, 0
        %v1258 = vsel %vm1214, %v1134, 0
        %v1261 = vsel %vm1214, %v1135, 0
        %v1264 = vsel %vm1214, %v1136, 0
        %v1267 = vsel %vm1214, %v1137, 0
        %v1270 = vsel %vm1214, %v1138, 0
        %v1273 = vsel %vm1214, %v1139, 0
        %v1276 = vsel %vm1214, %v1140, 0
        %v1279 = vsel %vm1214, %v1141, 0
        %v1282 = vsel %vm1214, %v1142, 0
        %v1285 = vsel %vm1214, %v1143, 0
        %v1288 = vsel %vm1214, %v1144, 0
        %v1291 = vsel %vm1214, %v1145, 0
        %v1294 = vsel %vm1214, %v1146, 0
        %v1297 = vsel %vm1214, %v1147, 0
        %v1300 = vsel %vm1214, %v1148, 0
        %v1303 = vsel %vm1214, %v1149, 0
        %v1306 = vsel %vm1214, %v1150, 0
        %v1309 = vsel %vm1214, %v1151, 0
        %v1312 = vsel %vm1214, %v1152, 0
        %v1315 = vsel %vm1214, %v1153, 0
        %v1318 = vsel %vm1214, %v1154, 0
        %v1321 = vsel %vm1214, %v1155, 0
        %v1324 = vsel %vm1214, %v1156, 0
        %v1327 = vsel %vm1214, %v1157, 0
        %v1330 = vsel %vm1214, %v1158, 0
        %v1333 = vsel %vm1214, %v1159, 0
        %v1336 = vsel %vm1214, %v1160, 0
        %v1339 = vsel %vm1214, %v1161, 0
        %v1342 = vsel %vm1214, %v1162, 0
        %v1345 = vsel %vm1214, %v1163, 0
        %v1348 = vsel %vm1214, %v1164, 0
        %v1351 = vsel %vm1214, %v1165, 0
        %v1354 = vsel %vm1214, %v1166, 0
        %v1357 = vsel %vm1214, %v1167, 0
        %v1360 = vsel %vm1214, %v1168, 0
        %v1363 = vsel %vm1214, %v1169, 0
        %v1366 = vsel %vm1214, %v1170, 0
        %v1369 = vsel %vm1214, %v1171, 0
        %v1372 = vsel %vm1214, %v1172, 0
        %v1375 = vsel %vm1214, %v1173, 0
        %v1378 = vsel %vm1214, %v1174, 0
        %v1381 = vsel %vm1214, %v1175, 0
        %v1384 = vsel %vm1214, %v1176, 0
        %v1387 = vsel %vm1214, %v1177, 0
        %v1390 = vsel %vm1214, %v1178, 0
        %v1393 = vsel %vm1214, %v1179, 0
        %v1396 = vsel %vm1214, %v1180, 0
        %v1399 = vsel %vm1214, %v1181, 0
        %v1402 = vsel %vm1214, %v1182, 0
        %v1405 = vsel %vm1214, %v1183, 0
        %1407 = vmatpush.bf16.msra.mxu0 0
        %1408 = vmatpush.bf16.msra.mxu0 0
        %1409 = vmatpush.bf16.msra.mxu0 0
        %1410 = vmatpush.bf16.msra.mxu0 %v1208
        %1411 = vmatpush.bf16.msra.mxu0 %v1207
        %1412 = vmatpush.bf16.msra.mxu0 %v1206
        %1413 = vmatpush.bf16.msra.mxu0 %v1205
        %1414 = vmatpush.bf16.msra.mxu0 %v1204
        %1415 = vmatmul.bf16.gmra.mxu0 %v1216
        %v1416 = vpop.f32.mrf.mxu0
        %v1417 = vadd.f32 0.0, %v1416
        %v1418 = vpop.f32.mrf.mxu0
        %v1419 = vadd.f32 0.0, %v1418
        %1420 = vmatmul.bf16.gmra.mxu0 %v1219
        %v1421 = vpop.f32.mrf.mxu0
        %v1422 = vadd.f32 0.0, %v1421
        %v1423 = vpop.f32.mrf.mxu0
        %v1424 = vadd.f32 0.0, %v1423
        %1425 = vmatmul.bf16.gmra.mxu0 %v1222
        %v1426 = vpop.f32.mrf.mxu0
        %v1427 = vadd.f32 0.0, %v1426
        %v1428 = vpop.f32.mrf.mxu0
        %v1429 = vadd.f32 0.0, %v1428
        %1430 = vmatmul.bf16.gmra.mxu0 %v1225
        %v1431 = vpop.f32.mrf.mxu0
        %v1432 = vadd.f32 0.0, %v1431
        %v1433 = vpop.f32.mrf.mxu0
        %v1434 = vadd.f32 0.0, %v1433
        %1435 = vmatmul.bf16.gmra.mxu0 %v1228
        %v1436 = vpop.f32.mrf.mxu0
        %v1437 = vadd.f32 0.0, %v1436
        %v1438 = vpop.f32.mrf.mxu0
        %v1439 = vadd.f32 0.0, %v1438
        %1440 = vmatmul.bf16.gmra.mxu0 %v1231
        %v1441 = vpop.f32.mrf.mxu0
        %v1442 = vadd.f32 0.0, %v1441
        %v1443 = vpop.f32.mrf.mxu0
        %v1444 = vadd.f32 0.0, %v1443
        %1445 = vmatmul.bf16.gmra.mxu0 %v1234
        %v1446 = vpop.f32.mrf.mxu0
        %v1447 = vadd.f32 0.0, %v1446
        %v1448 = vpop.f32.mrf.mxu0
        %v1449 = vadd.f32 0.0, %v1448
        %1450 = vmatmul.bf16.gmra.mxu0 %v1237
        %v1451 = vpop.f32.mrf.mxu0
        %v1452 = vadd.f32 0.0, %v1451
        %v1453 = vpop.f32.mrf.mxu0
        %v1454 = vadd.f32 0.0, %v1453
        %1455 = vmatmul.bf16.gmra.mxu0 %v1240
        %v1456 = vpop.f32.mrf.mxu0
        %v1457 = vadd.f32 0.0, %v1456
        %v1458 = vpop.f32.mrf.mxu0
        %v1459 = vadd.f32 0.0, %v1458
        %1460 = vmatmul.bf16.gmra.mxu0 %v1243
        %v1461 = vpop.f32.mrf.mxu0
        %v1462 = vadd.f32 0.0, %v1461
        %v1463 = vpop.f32.mrf.mxu0
        %v1464 = vadd.f32 0.0, %v1463
        %1465 = vmatmul.bf16.gmra.mxu0 %v1246
        %v1466 = vpop.f32.mrf.mxu0
        %v1467 = vadd.f32 0.0, %v1466
        %v1468 = vpop.f32.mrf.mxu0
        %v1469 = vadd.f32 0.0, %v1468
        %1470 = vmatmul.bf16.gmra.mxu0 %v1249
        %v1471 = vpop.f32.mrf.mxu0
        %v1472 = vadd.f32 0.0, %v1471
        %v1473 = vpop.f32.mrf.mxu0
        %v1474 = vadd.f32 0.0, %v1473
        %1475 = vmatmul.bf16.gmra.mxu0 %v1252
        %v1476 = vpop.f32.mrf.mxu0
        %v1477 = vadd.f32 0.0, %v1476
        %v1478 = vpop.f32.mrf.mxu0
        %v1479 = vadd.f32 0.0, %v1478
        %1480 = vmatmul.bf16.gmra.mxu0 %v1255
        %v1481 = vpop.f32.mrf.mxu0
        %v1482 = vadd.f32 0.0, %v1481
        %v1483 = vpop.f32.mrf.mxu0
        %v1484 = vadd.f32 0.0, %v1483
        %1485 = vmatmul.bf16.gmra.mxu0 %v1258
        %v1486 = vpop.f32.mrf.mxu0
        %v1487 = vadd.f32 0.0, %v1486
        %v1488 = vpop.f32.mrf.mxu0
        %v1489 = vadd.f32 0.0, %v1488
        %1490 = vmatmul.bf16.gmra.mxu0 %v1261
        %v1491 = vpop.f32.mrf.mxu0
        %v1492 = vadd.f32 0.0, %v1491
        %v1493 = vpop.f32.mrf.mxu0
        %v1494 = vadd.f32 0.0, %v1493
        %1495 = vmatmul.bf16.gmra.mxu0 %v1264
        %v1496 = vpop.f32.mrf.mxu0
        %v1497 = vadd.f32 0.0, %v1496
        %v1498 = vpop.f32.mrf.mxu0
        %v1499 = vadd.f32 0.0, %v1498
        %1500 = vmatmul.bf16.gmra.mxu0 %v1267
        %v1501 = vpop.f32.mrf.mxu0
        %v1502 = vadd.f32 0.0, %v1501
        %v1503 = vpop.f32.mrf.mxu0
        %v1504 = vadd.f32 0.0, %v1503
        %1505 = vmatmul.bf16.gmra.mxu0 %v1270
        %v1506 = vpop.f32.mrf.mxu0
        %v1507 = vadd.f32 0.0, %v1506
        %v1508 = vpop.f32.mrf.mxu0
        %v1509 = vadd.f32 0.0, %v1508
        %1510 = vmatmul.bf16.gmra.mxu0 %v1273
        %v1511 = vpop.f32.mrf.mxu0
        %v1512 = vadd.f32 0.0, %v1511
        %v1513 = vpop.f32.mrf.mxu0
        %v1514 = vadd.f32 0.0, %v1513
        %1515 = vmatmul.bf16.gmra.mxu0 %v1276
        %v1516 = vpop.f32.mrf.mxu0
        %v1517 = vadd.f32 0.0, %v1516
        %v1518 = vpop.f32.mrf.mxu0
        %v1519 = vadd.f32 0.0, %v1518
        %1520 = vmatmul.bf16.gmra.mxu0 %v1279
        %v1521 = vpop.f32.mrf.mxu0
        %v1522 = vadd.f32 0.0, %v1521
        %v1523 = vpop.f32.mrf.mxu0
        %v1524 = vadd.f32 0.0, %v1523
        %1525 = vmatmul.bf16.gmra.mxu0 %v1282
        %v1526 = vpop.f32.mrf.mxu0
        %v1527 = vadd.f32 0.0, %v1526
        %v1528 = vpop.f32.mrf.mxu0
        %v1529 = vadd.f32 0.0, %v1528
        %1530 = vmatmul.bf16.gmra.mxu0 %v1285
        %v1531 = vpop.f32.mrf.mxu0
        %v1532 = vadd.f32 0.0, %v1531
        %v1533 = vpop.f32.mrf.mxu0
        %v1534 = vadd.f32 0.0, %v1533
        %1535 = vmatmul.bf16.gmra.mxu0 %v1288
        %v1536 = vpop.f32.mrf.mxu0
        %v1537 = vadd.f32 0.0, %v1536
        %v1538 = vpop.f32.mrf.mxu0
        %v1539 = vadd.f32 0.0, %v1538
        %1540 = vmatmul.bf16.gmra.mxu0 %v1291
        %v1541 = vpop.f32.mrf.mxu0
        %v1542 = vadd.f32 0.0, %v1541
        %v1543 = vpop.f32.mrf.mxu0
        %v1544 = vadd.f32 0.0, %v1543
        %1545 = vmatmul.bf16.gmra.mxu0 %v1294
        %v1546 = vpop.f32.mrf.mxu0
        %v1547 = vadd.f32 0.0, %v1546
        %v1548 = vpop.f32.mrf.mxu0
        %v1549 = vadd.f32 0.0, %v1548
        %1550 = vmatmul.bf16.gmra.mxu0 %v1297
        %v1551 = vpop.f32.mrf.mxu0
        %v1552 = vadd.f32 0.0, %v1551
        %v1553 = vpop.f32.mrf.mxu0
        %v1554 = vadd.f32 0.0, %v1553
        %1555 = vmatmul.bf16.gmra.mxu0 %v1300
        %v1556 = vpop.f32.mrf.mxu0
        %v1557 = vadd.f32 0.0, %v1556
        %v1558 = vpop.f32.mrf.mxu0
        %v1559 = vadd.f32 0.0, %v1558
        %1560 = vmatmul.bf16.gmra.mxu0 %v1303
        %v1561 = vpop.f32.mrf.mxu0
        %v1562 = vadd.f32 0.0, %v1561
        %v1563 = vpop.f32.mrf.mxu0
        %v1564 = vadd.f32 0.0, %v1563
        %1565 = vmatmul.bf16.gmra.mxu0 %v1306
        %v1566 = vpop.f32.mrf.mxu0
        %v1567 = vadd.f32 0.0, %v1566
        %v1568 = vpop.f32.mrf.mxu0
        %v1569 = vadd.f32 0.0, %v1568
        %1570 = vmatmul.bf16.gmra.mxu0 %v1309
        %v1571 = vpop.f32.mrf.mxu0
        %v1572 = vadd.f32 0.0, %v1571
        %v1573 = vpop.f32.mrf.mxu0
        %v1574 = vadd.f32 0.0, %v1573
        %1575 = vmatmul.bf16.gmra.mxu0 %v1312
        %v1576 = vpop.f32.mrf.mxu0
        %v1577 = vadd.f32 0.0, %v1576
        %v1578 = vpop.f32.mrf.mxu0
        %v1579 = vadd.f32 0.0, %v1578
        %1580 = vmatmul.bf16.gmra.mxu0 %v1315
        %v1581 = vpop.f32.mrf.mxu0
        %v1582 = vadd.f32 0.0, %v1581
        %v1583 = vpop.f32.mrf.mxu0
        %v1584 = vadd.f32 0.0, %v1583
        %1585 = vmatmul.bf16.gmra.mxu0 %v1318
        %v1586 = vpop.f32.mrf.mxu0
        %v1587 = vadd.f32 0.0, %v1586
        %v1588 = vpop.f32.mrf.mxu0
        %v1589 = vadd.f32 0.0, %v1588
        %1590 = vmatmul.bf16.gmra.mxu0 %v1321
        %v1591 = vpop.f32.mrf.mxu0
        %v1592 = vadd.f32 0.0, %v1591
        %v1593 = vpop.f32.mrf.mxu0
        %v1594 = vadd.f32 0.0, %v1593
        %1595 = vmatmul.bf16.gmra.mxu0 %v1324
        %v1596 = vpop.f32.mrf.mxu0
        %v1597 = vadd.f32 0.0, %v1596
        %v1598 = vpop.f32.mrf.mxu0
        %v1599 = vadd.f32 0.0, %v1598
        %1600 = vmatmul.bf16.gmra.mxu0 %v1327
        %v1601 = vpop.f32.mrf.mxu0
        %v1602 = vadd.f32 0.0, %v1601
        %v1603 = vpop.f32.mrf.mxu0
        %v1604 = vadd.f32 0.0, %v1603
        %1605 = vmatmul.bf16.gmra.mxu0 %v1330
        %v1606 = vpop.f32.mrf.mxu0
        %v1607 = vadd.f32 0.0, %v1606
        %v1608 = vpop.f32.mrf.mxu0
        %v1609 = vadd.f32 0.0, %v1608
        %1610 = vmatmul.bf16.gmra.mxu0 %v1333
        %v1611 = vpop.f32.mrf.mxu0
        %v1612 = vadd.f32 0.0, %v1611
        %v1613 = vpop.f32.mrf.mxu0
        %v1614 = vadd.f32 0.0, %v1613
        %1615 = vmatmul.bf16.gmra.mxu0 %v1336
        %v1616 = vpop.f32.mrf.mxu0
        %v1617 = vadd.f32 0.0, %v1616
        %v1618 = vpop.f32.mrf.mxu0
        %v1619 = vadd.f32 0.0, %v1618
        %1620 = vmatmul.bf16.gmra.mxu0 %v1339
        %v1621 = vpop.f32.mrf.mxu0
        %v1622 = vadd.f32 0.0, %v1621
        %v1623 = vpop.f32.mrf.mxu0
        %v1624 = vadd.f32 0.0, %v1623
        %1625 = vmatmul.bf16.gmra.mxu0 %v1342
        %v1626 = vpop.f32.mrf.mxu0
        %v1627 = vadd.f32 0.0, %v1626
        %v1628 = vpop.f32.mrf.mxu0
        %v1629 = vadd.f32 0.0, %v1628
        %1630 = vmatmul.bf16.gmra.mxu0 %v1345
        %v1631 = vpop.f32.mrf.mxu0
        %v1632 = vadd.f32 0.0, %v1631
        %v1633 = vpop.f32.mrf.mxu0
        %v1634 = vadd.f32 0.0, %v1633
        %1635 = vmatmul.bf16.gmra.mxu0 %v1348
        %v1636 = vpop.f32.mrf.mxu0
        %v1637 = vadd.f32 0.0, %v1636
        %v1638 = vpop.f32.mrf.mxu0
        %v1639 = vadd.f32 0.0, %v1638
        %1640 = vmatmul.bf16.gmra.mxu0 %v1351
        %v1641 = vpop.f32.mrf.mxu0
        %v1642 = vadd.f32 0.0, %v1641
        %v1643 = vpop.f32.mrf.mxu0
        %v1644 = vadd.f32 0.0, %v1643
        %1645 = vmatmul.bf16.gmra.mxu0 %v1354
        %v1646 = vpop.f32.mrf.mxu0
        %v1647 = vadd.f32 0.0, %v1646
        %v1648 = vpop.f32.mrf.mxu0
        %v1649 = vadd.f32 0.0, %v1648
        %1650 = vmatmul.bf16.gmra.mxu0 %v1357
        %v1651 = vpop.f32.mrf.mxu0
        %v1652 = vadd.f32 0.0, %v1651
        %v1653 = vpop.f32.mrf.mxu0
        %v1654 = vadd.f32 0.0, %v1653
        %1655 = vmatmul.bf16.gmra.mxu0 %v1360
        %v1656 = vpop.f32.mrf.mxu0
        %v1657 = vadd.f32 0.0, %v1656
        %v1658 = vpop.f32.mrf.mxu0
        %v1659 = vadd.f32 0.0, %v1658
        %1660 = vmatmul.bf16.gmra.mxu0 %v1363
        %v1661 = vpop.f32.mrf.mxu0
        %v1662 = vadd.f32 0.0, %v1661
        %v1663 = vpop.f32.mrf.mxu0
        %v1664 = vadd.f32 0.0, %v1663
        %1665 = vmatmul.bf16.gmra.mxu0 %v1366
        %v1666 = vpop.f32.mrf.mxu0
        %v1667 = vadd.f32 0.0, %v1666
        %v1668 = vpop.f32.mrf.mxu0
        %v1669 = vadd.f32 0.0, %v1668
        %1670 = vmatmul.bf16.gmra.mxu0 %v1369
        %v1671 = vpop.f32.mrf.mxu0
        %v1672 = vadd.f32 0.0, %v1671
        %v1673 = vpop.f32.mrf.mxu0
        %v1674 = vadd.f32 0.0, %v1673
        %1675 = vmatmul.bf16.gmra.mxu0 %v1372
        %v1676 = vpop.f32.mrf.mxu0
        %v1677 = vadd.f32 0.0, %v1676
        %v1678 = vpop.f32.mrf.mxu0
        %v1679 = vadd.f32 0.0, %v1678
        %1680 = vmatmul.bf16.gmra.mxu0 %v1375
        %v1681 = vpop.f32.mrf.mxu0
        %v1682 = vadd.f32 0.0, %v1681
        %v1683 = vpop.f32.mrf.mxu0
        %v1684 = vadd.f32 0.0, %v1683
        %1685 = vmatmul.bf16.gmra.mxu0 %v1378
        %v1686 = vpop.f32.mrf.mxu0
        %v1687 = vadd.f32 0.0, %v1686
        %v1688 = vpop.f32.mrf.mxu0
        %v1689 = vadd.f32 0.0, %v1688
        %1690 = vmatmul.bf16.gmra.mxu0 %v1381
        %v1691 = vpop.f32.mrf.mxu0
        %v1692 = vadd.f32 0.0, %v1691
        %v1693 = vpop.f32.mrf.mxu0
        %v1694 = vadd.f32 0.0, %v1693
        %1695 = vmatmul.bf16.gmra.mxu0 %v1384
        %v1696 = vpop.f32.mrf.mxu0
        %v1697 = vadd.f32 0.0, %v1696
        %v1698 = vpop.f32.mrf.mxu0
        %v1699 = vadd.f32 0.0, %v1698
        %1700 = vmatmul.bf16.gmra.mxu0 %v1387
        %v1701 = vpop.f32.mrf.mxu0
        %v1702 = vadd.f32 0.0, %v1701
        %v1703 = vpop.f32.mrf.mxu0
        %v1704 = vadd.f32 0.0, %v1703
        %1705 = vmatmul.bf16.gmra.mxu0 %v1390
        %v1706 = vpop.f32.mrf.mxu0
        %v1707 = vadd.f32 0.0, %v1706
        %v1708 = vpop.f32.mrf.mxu0
        %v1709 = vadd.f32 0.0, %v1708
        %1710 = vmatmul.bf16.gmra.mxu0 %v1393
        %v1711 = vpop.f32.mrf.mxu0
        %v1712 = vadd.f32 0.0, %v1711
        %v1713 = vpop.f32.mrf.mxu0
        %v1714 = vadd.f32 0.0, %v1713
        %1715 = vmatmul.bf16.gmra.mxu0 %v1396
        %v1716 = vpop.f32.mrf.mxu0
        %v1717 = vadd.f32 0.0, %v1716
        %v1718 = vpop.f32.mrf.mxu0
        %v1719 = vadd.f32 0.0, %v1718
        %1720 = vmatmul.bf16.gmra.mxu0 %v1399
        %v1721 = vpop.f32.mrf.mxu0
        %v1722 = vadd.f32 0.0, %v1721
        %v1723 = vpop.f32.mrf.mxu0
        %v1724 = vadd.f32 0.0, %v1723
        %1725 = vmatmul.bf16.gmra.mxu0 %v1402
        %v1726 = vpop.f32.mrf.mxu0
        %v1727 = vadd.f32 0.0, %v1726
        %v1728 = vpop.f32.mrf.mxu0
        %v1729 = vadd.f32 0.0, %v1728
        %1730 = vmatmul.bf16.gmra.mxu0 %v1405
        %v1731 = vpop.f32.mrf.mxu0
        %v1732 = vadd.f32 0.0, %v1731
        %v1733 = vpop.f32.mrf.mxu0
        %v1734 = vadd.f32 0.0, %v1733
        %1735 = vdwg.mxu0
        %v1736 = vmax.f32 %v1417, %v1497
        %v1737 = vmax.f32 %v1736, %v1577
        %v1738 = vmax.f32 %v1737, %v1657
        %v1739 = vmax.f32 %v1419, %v1499
        %v1740 = vmax.f32 %v1739, %v1579
        %v1741 = vmax.f32 %v1740, %v1659
        %v1742 = vmax.f32 %v1422, %v1502
        %v1743 = vmax.f32 %v1742, %v1582
        %v1744 = vmax.f32 %v1743, %v1662
        %v1745 = vmax.f32 %v1424, %v1504
        %v1746 = vmax.f32 %v1745, %v1584
        %v1747 = vmax.f32 %v1746, %v1664
        %v1748 = vmax.f32 %v1427, %v1507
        %v1749 = vmax.f32 %v1748, %v1587
        %v1750 = vmax.f32 %v1749, %v1667
        %v1751 = vmax.f32 %v1429, %v1509
        %v1752 = vmax.f32 %v1751, %v1589
        %v1753 = vmax.f32 %v1752, %v1669
        %v1754 = vmax.f32 %v1432, %v1512
        %v1755 = vmax.f32 %v1754, %v1592
        %v1756 = vmax.f32 %v1755, %v1672
        %v1757 = vmax.f32 %v1434, %v1514
        %v1758 = vmax.f32 %v1757, %v1594
        %v1759 = vmax.f32 %v1758, %v1674
        %v1760 = vmax.f32 %v1437, %v1517
        %v1761 = vmax.f32 %v1760, %v1597
        %v1762 = vmax.f32 %v1761, %v1677
        %v1763 = vmax.f32 %v1439, %v1519
        %v1764 = vmax.f32 %v1763, %v1599
        %v1765 = vmax.f32 %v1764, %v1679
        %v1766 = vmax.f32 %v1442, %v1522
        %v1767 = vmax.f32 %v1766, %v1602
        %v1768 = vmax.f32 %v1767, %v1682
        %v1769 = vmax.f32 %v1444, %v1524
        %v1770 = vmax.f32 %v1769, %v1604
        %v1771 = vmax.f32 %v1770, %v1684
        %v1772 = vmax.f32 %v1447, %v1527
        %v1773 = vmax.f32 %v1772, %v1607
        %v1774 = vmax.f32 %v1773, %v1687
        %v1775 = vmax.f32 %v1449, %v1529
        %v1776 = vmax.f32 %v1775, %v1609
        %v1777 = vmax.f32 %v1776, %v1689
        %v1778 = vmax.f32 %v1452, %v1532
        %v1779 = vmax.f32 %v1778, %v1612
        %v1780 = vmax.f32 %v1779, %v1692
        %v1781 = vmax.f32 %v1454, %v1534
        %v1782 = vmax.f32 %v1781, %v1614
        %v1783 = vmax.f32 %v1782, %v1694
        %v1784 = vmax.f32 %v1457, %v1537
        %v1785 = vmax.f32 %v1784, %v1617
        %v1786 = vmax.f32 %v1785, %v1697
        %v1787 = vmax.f32 %v1459, %v1539
        %v1788 = vmax.f32 %v1787, %v1619
        %v1789 = vmax.f32 %v1788, %v1699
        %v1790 = vmax.f32 %v1462, %v1542
        %v1791 = vmax.f32 %v1790, %v1622
        %v1792 = vmax.f32 %v1791, %v1702
        %v1793 = vmax.f32 %v1464, %v1544
        %v1794 = vmax.f32 %v1793, %v1624
        %v1795 = vmax.f32 %v1794, %v1704
        %v1796 = vmax.f32 %v1467, %v1547
        %v1797 = vmax.f32 %v1796, %v1627
        %v1798 = vmax.f32 %v1797, %v1707
        %v1799 = vmax.f32 %v1469, %v1549
        %v1800 = vmax.f32 %v1799, %v1629
        %v1801 = vmax.f32 %v1800, %v1709
        %v1802 = vmax.f32 %v1472, %v1552
        %v1803 = vmax.f32 %v1802, %v1632
        %v1804 = vmax.f32 %v1803, %v1712
        %v1805 = vmax.f32 %v1474, %v1554
        %v1806 = vmax.f32 %v1805, %v1634
        %v1807 = vmax.f32 %v1806, %v1714
        %v1808 = vmax.f32 %v1477, %v1557
        %v1809 = vmax.f32 %v1808, %v1637
        %v1810 = vmax.f32 %v1809, %v1717
        %v1811 = vmax.f32 %v1479, %v1559
        %v1812 = vmax.f32 %v1811, %v1639
        %v1813 = vmax.f32 %v1812, %v1719
        %v1814 = vmax.f32 %v1482, %v1562
        %v1815 = vmax.f32 %v1814, %v1642
        %v1816 = vmax.f32 %v1815, %v1722
        %v1817 = vmax.f32 %v1484, %v1564
        %v1818 = vmax.f32 %v1817, %v1644
        %v1819 = vmax.f32 %v1818, %v1724
        %v1820 = vmax.f32 %v1487, %v1567
        %v1821 = vmax.f32 %v1820, %v1647
        %v1822 = vmax.f32 %v1821, %v1727
        %v1823 = vmax.f32 %v1489, %v1569
        %v1824 = vmax.f32 %v1823, %v1649
        %v1825 = vmax.f32 %v1824, %v1729
        %v1826 = vmax.f32 %v1492, %v1572
        %v1827 = vmax.f32 %v1826, %v1652
        %v1828 = vmax.f32 %v1827, %v1732
        %v1829 = vmax.f32 %v1494, %v1574
        %v1830 = vmax.f32 %v1829, %v1654
        %v1831 = vmax.f32 %v1830, %v1734
        %v1832 = vld [vmem:[%s2] sm:$0x1]
        %v1834 = vperm.slane %v1832, 0
        %v1836 = vadd.f32 %v1738, %v1834
        %v1837 = vadd.f32 %v1741, %v1834
        %v1838 = vadd.f32 %v1744, %v1834
        %v1839 = vadd.f32 %v1747, %v1834
        %v1840 = vadd.f32 %v1750, %v1834
        %v1841 = vadd.f32 %v1753, %v1834
        %v1842 = vadd.f32 %v1756, %v1834
        %v1843 = vadd.f32 %v1759, %v1834
        %v1844 = vadd.f32 %v1762, %v1834
        %v1845 = vadd.f32 %v1765, %v1834
        %v1846 = vadd.f32 %v1768, %v1834
        %v1847 = vadd.f32 %v1771, %v1834
        %v1848 = vadd.f32 %v1774, %v1834
        %v1849 = vadd.f32 %v1777, %v1834
        %v1850 = vadd.f32 %v1780, %v1834
        %v1851 = vadd.f32 %v1783, %v1834
        %v1852 = vadd.f32 %v1786, %v1834
        %v1853 = vadd.f32 %v1789, %v1834
        %v1854 = vadd.f32 %v1792, %v1834
        %v1855 = vadd.f32 %v1795, %v1834
        %v1856 = vadd.f32 %v1798, %v1834
        %v1857 = vadd.f32 %v1801, %v1834
        %v1858 = vadd.f32 %v1804, %v1834
        %v1859 = vadd.f32 %v1807, %v1834
        %v1860 = vadd.f32 %v1810, %v1834
        %v1861 = vadd.f32 %v1813, %v1834
        %v1862 = vadd.f32 %v1816, %v1834
        %v1863 = vadd.f32 %v1819, %v1834
        %v1864 = vadd.f32 %v1822, %v1834
        %v1865 = vadd.f32 %v1825, %v1834
        %v1866 = vadd.f32 %v1828, %v1834
        %v1867 = vadd.f32 %v1831, %v1834
        %v1868 = vpack.c.bf16 %v1836, %v1836
        %v1869 = vpack.c.bf16 %v1837, %v1837
        %v1870 = vpack.c.bf16 %v1838, %v1838
        %v1871 = vpack.c.bf16 %v1839, %v1839
        %v1872 = vpack.c.bf16 %v1840, %v1840
        %v1873 = vpack.c.bf16 %v1841, %v1841
        %v1874 = vpack.c.bf16 %v1842, %v1842
        %v1875 = vpack.c.bf16 %v1843, %v1843
        %v1876 = vpack.c.bf16 %v1844, %v1844
        %v1877 = vpack.c.bf16 %v1845, %v1845
        %v1878 = vpack.c.bf16 %v1846, %v1846
        %v1879 = vpack.c.bf16 %v1847, %v1847
        %v1880 = vpack.c.bf16 %v1848, %v1848
        %v1881 = vpack.c.bf16 %v1849, %v1849
        %v1882 = vpack.c.bf16 %v1850, %v1850
        %v1883 = vpack.c.bf16 %v1851, %v1851
        %v1884 = vpack.c.bf16 %v1852, %v1852
        %v1885 = vpack.c.bf16 %v1853, %v1853
        %v1886 = vpack.c.bf16 %v1854, %v1854
        %v1887 = vpack.c.bf16 %v1855, %v1855
        %v1888 = vpack.c.bf16 %v1856, %v1856
        %v1889 = vpack.c.bf16 %v1857, %v1857
        %v1890 = vpack.c.bf16 %v1858, %v1858
        %v1891 = vpack.c.bf16 %v1859, %v1859
        %v1892 = vpack.c.bf16 %v1860, %v1860
        %v1893 = vpack.c.bf16 %v1861, %v1861
        %v1894 = vpack.c.bf16 %v1862, %v1862
        %v1895 = vpack.c.bf16 %v1863, %v1863
        %v1896 = vpack.c.bf16 %v1864, %v1864
        %v1897 = vpack.c.bf16 %v1865, %v1865
        %v1898 = vpack.c.bf16 %v1866, %v1866
        %v1899 = vpack.c.bf16 %v1867, %v1867
        %1900 = vst [vmem:[%s723] sm:$0xf] %v1868
        %1901 = vst [vmem:[%s723 + $0x4] sm:$0xf] %v1869
        %1902 = vst [vmem:[%s723 + $0x8] sm:$0xf] %v1870
        %1903 = vst [vmem:[%s723 + $0xc] sm:$0xf] %v1871
        %1904 = vst [vmem:[%s723 + $0x10] sm:$0xf] %v1872
        %1905 = vst [vmem:[%s723 + $0x14] sm:$0xf] %v1873
        %1906 = vst [vmem:[%s723 + $0x18] sm:$0xf] %v1874
        %1907 = vst [vmem:[%s723 + $0x1c] sm:$0xf] %v1875
        %1908 = vst [vmem:[%s723 + $0x20] sm:$0xf] %v1876
        %1909 = vst [vmem:[%s723 + $0x24] sm:$0xf] %v1877
        %1910 = vst [vmem:[%s723 + $0x28] sm:$0xf] %v1878
        %1911 = vst [vmem:[%s723 + $0x2c] sm:$0xf] %v1879
        %1912 = vst [vmem:[%s723 + $0x30] sm:$0xf] %v1880
        %1913 = vst [vmem:[%s723 + $0x34] sm:$0xf] %v1881
        %1914 = vst [vmem:[%s723 + $0x38] sm:$0xf] %v1882
        %1915 = vst [vmem:[%s723 + $0x3c] sm:$0xf] %v1883
        %1916 = vst [vmem:[%s723 + $0x40] sm:$0xf] %v1884
        %1917 = vst [vmem:[%s723 + $0x44] sm:$0xf] %v1885
        %1918 = vst [vmem:[%s723 + $0x48] sm:$0xf] %v1886
        %1919 = vst [vmem:[%s723 + $0x4c] sm:$0xf] %v1887
        %1920 = vst [vmem:[%s723 + $0x50] sm:$0xf] %v1888
        %1921 = vst [vmem:[%s723 + $0x54] sm:$0xf] %v1889
        %1922 = vst [vmem:[%s723 + $0x58] sm:$0xf] %v1890
        %1923 = vst [vmem:[%s723 + $0x5c] sm:$0xf] %v1891
        %1924 = vst [vmem:[%s723 + $0x60] sm:$0xf] %v1892
        %1925 = vst [vmem:[%s723 + $0x64] sm:$0xf] %v1893
        %1926 = vst [vmem:[%s723 + $0x68] sm:$0xf] %v1894
        %1927 = vst [vmem:[%s723 + $0x6c] sm:$0xf] %v1895
        %1928 = vst [vmem:[%s723 + $0x70] sm:$0xf] %v1896
        %1929 = vst [vmem:[%s723 + $0x74] sm:$0xf] %v1897
        %1930 = vst [vmem:[%s723 + $0x78] sm:$0xf] %v1898
        %1931 = vst [vmem:[%s723 + $0x7c] sm:$0xf] %v1899
        %s1932 = smul.u32 32, %s14
        %p1933 = scmp.lt.s32.totalorder %s1932, 63
        %s1934 = scalar_select %p1933, %s1932, 63
        %s1935 = smul.addr %s1934, 4
        %s1936 = scalar_lea.vmem %s3, %s1935
        // Predicated region
        $region74: #{my_cifar10_forward.3} parent=68 // pred_check
          %p1937 = pneg %p100
        $region75: #{my_cifar10_forward.3} parent=68 // pred_check_branch
          %1939 = sbr.rel (%p1937) target = $region77
        $region76: #{my_cifar10_forward.3} parent=68 // pred_region
          %s1940 = smul.u32 32, %s14
        $region77: #{my_cifar10_forward.3} parent=68 // pred_fallthru
          _
      $region69: #{my_cifar10_forward.3} parent=5 // pred_fallthru
        _
      %p1941 = scmp.le.s32.totalorder 2, %s9
      // Predicated region
      $region78: #{my_cifar10_forward.3} parent=5 // pred_check
        %p1942 = pneg %p1941
      $region79: #{my_cifar10_forward.3} parent=5 // pred_check_branch
        %1944 = sbr.rel (%p1942) target = $region81
      $region80: #{my_cifar10_forward.3} parent=5 // pred_region
        %s1945 = ssub.s32 %s9, 2
        // Predicated region
        $region82: #{my_cifar10_forward.3} parent=80 // pred_check
          %p1946 = pneg %p106
        $region83: #{my_cifar10_forward.3} parent=80 // pred_check_branch
          %1948 = sbr.rel (%p1946) target = $region85
        $region84: #{my_cifar10_forward.3} parent=80 // pred_region
          %s1949 = smul.u32 32, %s15
          %p1950 = scmp.lt.s32.totalorder %s1949, 63
          %s1951 = scalar_select %p1950, %s1949, 63
          %s1952 = smul.addr %s1951, 4
          %s1953 = scalar_lea.vmem %s3, %s1952
        $region85: #{my_cifar10_forward.3} parent=80 // pred_fallthru
          _
      $region81: #{my_cifar10_forward.3} parent=5 // pred_fallthru
        _
    $region6: #{my_cifar10_forward.3} parent=1 // loop_footer
      %s13 = sadd.s32 1, %s9
    $region7: #{my_cifar10_forward.3} parent=1 // loop_footer_branch
      %8 = sbr.rel target = $region3
    $region8: #{my_cifar10_forward.3} parent=1 // loop_exit
      _

// kernel: my_cifar10_forward.4
$region0: #{my_cifar10_forward.4}
  #allocation0 [shape = 'u32[]', space=smem, size = 0x4, offset = 0x4, fixed_abs, tag = 'smem constant byte address 0x4 - core index']
  #allocation1 [shape = 'u32[72,128]{1,0:T(1,128)}', space=vmem, size = 0x9000, scoped, tag = 'internal scratch']
  %s0 = inlined_call_operand.vmem [shape: bf16[4,128,800], index: 0, kind: input, shape index: {}]
  %s1 = inlined_call_operand.vmem [shape: bf16[800,128], index: 1, kind: input, shape index: {}]
  %s2 = inlined_call_operand.vmem [shape: f32[1,128], index: 2, kind: input, shape index: {}]
  %s3 = inlined_call_operand.vmem [shape: bf16[128,128], index: 3, kind: output, shape index: {}]
  %s4 = sld [smem:[#allocation0]]
  $region22: #{my_cifar10_forward.4} parent=0
    _
  %s6 = ssub.s32 1, %s4
  %s7 = scalar_select 0, %s6, %s4
  // Predicated region
  $region2: #{my_cifar10_forward.4} parent=0 // pred_check
    _
  $region3: #{my_cifar10_forward.4} parent=0 // pred_check_branch
    %9 = sbr.rel (0) target = $region5
  $region4: #{my_cifar10_forward.4} parent=0 // pred_region
    _
  $region5: #{my_cifar10_forward.4} parent=0 // pred_fallthru
    _
  // Predicated region
  $region6: #{my_cifar10_forward.4} parent=0 // pred_check
    _
  $region7: #{my_cifar10_forward.4} parent=0 // pred_check_branch
    %11 = sbr.rel (0) target = $region9
  $region8: #{my_cifar10_forward.4} parent=0 // pred_region
    _
  $region9: #{my_cifar10_forward.4} parent=0 // pred_fallthru
    _
  // Predicated region
  $region10: #{my_cifar10_forward.4} parent=0 // pred_check
    _
  $region11: #{my_cifar10_forward.4} parent=0 // pred_check_branch
    %13 = sbr.rel (0) target = $region13
  $region12: #{my_cifar10_forward.4} parent=0 // pred_region
    _
  $region13: #{my_cifar10_forward.4} parent=0 // pred_fallthru
    _
  %v15 = vld [vmem:[%s0] sm:$0xff]
  %v16 = vld [vmem:[%s0 + $0x8] sm:$0xff]
  %v17 = vld [vmem:[%s0 + $0x10] sm:$0xff]
  %v18 = vld [vmem:[%s0 + $0x18] sm:$0xf]
  %v19 = vld [vmem:[%s0 + $0x1c] sm:$0xff]
  %v20 = vld [vmem:[%s0 + $0x24] sm:$0xff]
  %v21 = vld [vmem:[%s0 + $0x2c] sm:$0xff]
  %v22 = vld [vmem:[%s0 + $0x34] sm:$0xf]
  %v23 = vld [vmem:[%s0 + $0x38] sm:$0xff]
  %v24 = vld [vmem:[%s0 + $0x40] sm:$0xff]
  %v25 = vld [vmem:[%s0 + $0x48] sm:$0xff]
  %v26 = vld [vmem:[%s0 + $0x50] sm:$0xf]
  %v27 = vld [vmem:[%s0 + $0x54] sm:$0xff]
  %v28 = vld [vmem:[%s0 + $0x5c] sm:$0xff]
  %v29 = vld [vmem:[%s0 + $0x64] sm:$0xff]
  %v30 = vld [vmem:[%s0 + $0x6c] sm:$0xf]
  %v31 = vld [vmem:[%s0 + $0x70] sm:$0xff]
  %v32 = vld [vmem:[%s0 + $0x78] sm:$0xff]
  %v33 = vld [vmem:[%s0 + $0x80] sm:$0xff]
  %v34 = vld [vmem:[%s0 + $0x88] sm:$0xf]
  %v35 = vld [vmem:[%s0 + $0x8c] sm:$0xff]
  %v36 = vld [vmem:[%s0 + $0x94] sm:$0xff]
  %v37 = vld [vmem:[%s0 + $0x9c] sm:$0xff]
  %v38 = vld [vmem:[%s0 + $0xa4] sm:$0xf]
  %v39 = vld [vmem:[%s0 + $0xa8] sm:$0xff]
  %v40 = vld [vmem:[%s0 + $0xb0] sm:$0xff]
  %v41 = vld [vmem:[%s0 + $0xb8] sm:$0xff]
  %v42 = vld [vmem:[%s0 + $0xc0] sm:$0xf]
  %v43 = vld [vmem:[%s0 + $0xc4] sm:$0xff]
  %v44 = vld [vmem:[%s0 + $0xcc] sm:$0xff]
  %v45 = vld [vmem:[%s0 + $0xd4] sm:$0xff]
  %v46 = vld [vmem:[%s0 + $0xdc] sm:$0xf]
  %v47 = vld [vmem:[%s0 + $0xe0] sm:$0xff]
  %v48 = vld [vmem:[%s0 + $0xe8] sm:$0xff]
  %v49 = vld [vmem:[%s0 + $0xf0] sm:$0xff]
  %v50 = vld [vmem:[%s0 + $0xf8] sm:$0xf]
  %v51 = vld [vmem:[%s0 + $0xfc] sm:$0xff]
  %v52 = vld [vmem:[%s0 + $0x104] sm:$0xff]
  %v53 = vld [vmem:[%s0 + $0x10c] sm:$0xff]
  %v54 = vld [vmem:[%s0 + $0x114] sm:$0xf]
  %v55 = vld [vmem:[%s0 + $0x118] sm:$0xff]
  %v56 = vld [vmem:[%s0 + $0x120] sm:$0xff]
  %v57 = vld [vmem:[%s0 + $0x128] sm:$0xff]
  %v58 = vld [vmem:[%s0 + $0x130] sm:$0xf]
  %v59 = vld [vmem:[%s0 + $0x134] sm:$0xff]
  %v60 = vld [vmem:[%s0 + $0x13c] sm:$0xff]
  %v61 = vld [vmem:[%s0 + $0x144] sm:$0xff]
  %v62 = vld [vmem:[%s0 + $0x14c] sm:$0xf]
  %v63 = vld [vmem:[%s0 + $0x150] sm:$0xff]
  %v64 = vld [vmem:[%s0 + $0x158] sm:$0xff]
  %v65 = vld [vmem:[%s0 + $0x160] sm:$0xff]
  %v66 = vld [vmem:[%s0 + $0x168] sm:$0xf]
  %v67 = vld [vmem:[%s0 + $0x16c] sm:$0xff]
  %v68 = vld [vmem:[%s0 + $0x174] sm:$0xff]
  %v69 = vld [vmem:[%s0 + $0x17c] sm:$0xff]
  %v70 = vld [vmem:[%s0 + $0x184] sm:$0xf]
  %v71 = vld [vmem:[%s0 + $0x188] sm:$0xff]
  %v72 = vld [vmem:[%s0 + $0x190] sm:$0xff]
  %v73 = vld [vmem:[%s0 + $0x198] sm:$0xff]
  %v74 = vld [vmem:[%s0 + $0x1a0] sm:$0xf]
  %v75 = vld [vmem:[%s0 + $0x1a4] sm:$0xff]
  %v76 = vld [vmem:[%s0 + $0x1ac] sm:$0xff]
  %v77 = vld [vmem:[%s0 + $0x1b4] sm:$0xff]
  %v78 = vld [vmem:[%s0 + $0x1bc] sm:$0xf]
  %v79 = vld [vmem:[%s0 + $0x1c0] sm:$0xff]
  %v80 = vld [vmem:[%s0 + $0x1c8] sm:$0xff]
  %v81 = vld [vmem:[%s0 + $0x1d0] sm:$0xff]
  %v82 = vld [vmem:[%s0 + $0x1d8] sm:$0xf]
  %v83 = vld [vmem:[%s0 + $0x1dc] sm:$0xff]
  %v84 = vld [vmem:[%s0 + $0x1e4] sm:$0xff]
  %v85 = vld [vmem:[%s0 + $0x1ec] sm:$0xff]
  %v86 = vld [vmem:[%s0 + $0x1f4] sm:$0xf]
  %v87 = vld [vmem:[%s0 + $0x1f8] sm:$0xff]
  %v88 = vld [vmem:[%s0 + $0x200] sm:$0xff]
  %v89 = vld [vmem:[%s0 + $0x208] sm:$0xff]
  %v90 = vld [vmem:[%s0 + $0x210] sm:$0xf]
  %v91 = vld [vmem:[%s0 + $0x214] sm:$0xff]
  %v92 = vld [vmem:[%s0 + $0x21c] sm:$0xff]
  %v93 = vld [vmem:[%s0 + $0x224] sm:$0xff]
  %v94 = vld [vmem:[%s0 + $0x22c] sm:$0xf]
  %v95 = vld [vmem:[%s0 + $0x230] sm:$0xff]
  %v96 = vld [vmem:[%s0 + $0x238] sm:$0xff]
  %v97 = vld [vmem:[%s0 + $0x240] sm:$0xff]
  %v98 = vld [vmem:[%s0 + $0x248] sm:$0xf]
  %v99 = vld [vmem:[%s0 + $0x24c] sm:$0xff]
  %v100 = vld [vmem:[%s0 + $0x254] sm:$0xff]
  %v101 = vld [vmem:[%s0 + $0x25c] sm:$0xff]
  %v102 = vld [vmem:[%s0 + $0x264] sm:$0xf]
  %v103 = vld [vmem:[%s0 + $0x268] sm:$0xff]
  %v104 = vld [vmem:[%s0 + $0x270] sm:$0xff]
  %v105 = vld [vmem:[%s0 + $0x278] sm:$0xff]
  %v106 = vld [vmem:[%s0 + $0x280] sm:$0xf]
  %v107 = vld [vmem:[%s0 + $0x284] sm:$0xff]
  %v108 = vld [vmem:[%s0 + $0x28c] sm:$0xff]
  %v109 = vld [vmem:[%s0 + $0x294] sm:$0xff]
  %v110 = vld [vmem:[%s0 + $0x29c] sm:$0xf]
  %v111 = vld [vmem:[%s0 + $0x2a0] sm:$0xff]
  %v112 = vld [vmem:[%s0 + $0x2a8] sm:$0xff]
  %v113 = vld [vmem:[%s0 + $0x2b0] sm:$0xff]
  %v114 = vld [vmem:[%s0 + $0x2b8] sm:$0xf]
  %v115 = vld [vmem:[%s0 + $0x2bc] sm:$0xff]
  %v116 = vld [vmem:[%s0 + $0x2c4] sm:$0xff]
  %v117 = vld [vmem:[%s0 + $0x2cc] sm:$0xff]
  %v118 = vld [vmem:[%s0 + $0x2d4] sm:$0xf]
  %v119 = vld [vmem:[%s0 + $0x2d8] sm:$0xff]
  %v120 = vld [vmem:[%s0 + $0x2e0] sm:$0xff]
  %v121 = vld [vmem:[%s0 + $0x2e8] sm:$0xff]
  %v122 = vld [vmem:[%s0 + $0x2f0] sm:$0xf]
  %v123 = vld [vmem:[%s0 + $0x2f4] sm:$0xff]
  %v124 = vld [vmem:[%s0 + $0x2fc] sm:$0xff]
  %v125 = vld [vmem:[%s0 + $0x304] sm:$0xff]
  %v126 = vld [vmem:[%s0 + $0x30c] sm:$0xf]
  %v127 = vld [vmem:[%s0 + $0x310] sm:$0xff]
  %v128 = vld [vmem:[%s0 + $0x318] sm:$0xff]
  %v129 = vld [vmem:[%s0 + $0x320] sm:$0xff]
  %v130 = vld [vmem:[%s0 + $0x328] sm:$0xf]
  %v131 = vld [vmem:[%s0 + $0x32c] sm:$0xff]
  %v132 = vld [vmem:[%s0 + $0x334] sm:$0xff]
  %v133 = vld [vmem:[%s0 + $0x33c] sm:$0xff]
  %v134 = vld [vmem:[%s0 + $0x344] sm:$0xf]
  %v135 = vld [vmem:[%s0 + $0x348] sm:$0xff]
  %v136 = vld [vmem:[%s0 + $0x350] sm:$0xff]
  %v137 = vld [vmem:[%s0 + $0x358] sm:$0xff]
  %v138 = vld [vmem:[%s0 + $0x360] sm:$0xf]
  %v139 = vld [vmem:[%s0 + $0x364] sm:$0xff]
  %v140 = vld [vmem:[%s0 + $0x36c] sm:$0xff]
  %v141 = vld [vmem:[%s0 + $0x374] sm:$0xff]
  %v142 = vld [vmem:[%s0 + $0x37c] sm:$0xf]
  %v143 = vld [vmem:[%s0 + $0x380] sm:$0xff]
  %v144 = vld [vmem:[%s0 + $0x388] sm:$0xff]
  %v145 = vld [vmem:[%s0 + $0x390] sm:$0xff]
  %v146 = vld [vmem:[%s0 + $0x398] sm:$0xf]
  %v147 = vld [vmem:[%s0 + $0x39c] sm:$0xff]
  %v148 = vld [vmem:[%s0 + $0x3a4] sm:$0xff]
  %v149 = vld [vmem:[%s0 + $0x3ac] sm:$0xff]
  %v150 = vld [vmem:[%s0 + $0x3b4] sm:$0xf]
  %v151 = vld [vmem:[%s0 + $0x3b8] sm:$0xff]
  %v152 = vld [vmem:[%s0 + $0x3c0] sm:$0xff]
  %v153 = vld [vmem:[%s0 + $0x3c8] sm:$0xff]
  %v154 = vld [vmem:[%s0 + $0x3d0] sm:$0xf]
  %v155 = vld [vmem:[%s0 + $0x3d4] sm:$0xff]
  %v156 = vld [vmem:[%s0 + $0x3dc] sm:$0xff]
  %v157 = vld [vmem:[%s0 + $0x3e4] sm:$0xff]
  %v158 = vld [vmem:[%s0 + $0x3ec] sm:$0xf]
  %v159 = vld [vmem:[%s0 + $0x3f0] sm:$0xff]
  %v160 = vld [vmem:[%s0 + $0x3f8] sm:$0xff]
  %v161 = vld [vmem:[%s0 + $0x400] sm:$0xff]
  %v162 = vld [vmem:[%s0 + $0x408] sm:$0xf]
  %v163 = vld [vmem:[%s0 + $0x40c] sm:$0xff]
  %v164 = vld [vmem:[%s0 + $0x414] sm:$0xff]
  %v165 = vld [vmem:[%s0 + $0x41c] sm:$0xff]
  %v166 = vld [vmem:[%s0 + $0x424] sm:$0xf]
  %v167 = vld [vmem:[%s0 + $0x428] sm:$0xff]
  %v168 = vld [vmem:[%s0 + $0x430] sm:$0xff]
  %v169 = vld [vmem:[%s0 + $0x438] sm:$0xff]
  %v170 = vld [vmem:[%s0 + $0x440] sm:$0xf]
  %v171 = vld [vmem:[%s0 + $0x444] sm:$0xff]
  %v172 = vld [vmem:[%s0 + $0x44c] sm:$0xff]
  %v173 = vld [vmem:[%s0 + $0x454] sm:$0xff]
  %v174 = vld [vmem:[%s0 + $0x45c] sm:$0xf]
  %v175 = vld [vmem:[%s0 + $0x460] sm:$0xff]
  %v176 = vld [vmem:[%s0 + $0x468] sm:$0xff]
  %v177 = vld [vmem:[%s0 + $0x470] sm:$0xff]
  %v178 = vld [vmem:[%s0 + $0x478] sm:$0xf]
  %v179 = vld [vmem:[%s0 + $0x47c] sm:$0xff]
  %v180 = vld [vmem:[%s0 + $0x484] sm:$0xff]
  %v181 = vld [vmem:[%s0 + $0x48c] sm:$0xff]
  %v182 = vld [vmem:[%s0 + $0x494] sm:$0xf]
  %v183 = vld [vmem:[%s0 + $0x498] sm:$0xff]
  %v184 = vld [vmem:[%s0 + $0x4a0] sm:$0xff]
  %v185 = vld [vmem:[%s0 + $0x4a8] sm:$0xff]
  %v186 = vld [vmem:[%s0 + $0x4b0] sm:$0xf]
  %v187 = vld [vmem:[%s0 + $0x4b4] sm:$0xff]
  %v188 = vld [vmem:[%s0 + $0x4bc] sm:$0xff]
  %v189 = vld [vmem:[%s0 + $0x4c4] sm:$0xff]
  %v190 = vld [vmem:[%s0 + $0x4cc] sm:$0xf]
  %v191 = vld [vmem:[%s0 + $0x4d0] sm:$0xff]
  %v192 = vld [vmem:[%s0 + $0x4d8] sm:$0xff]
  %v193 = vld [vmem:[%s0 + $0x4e0] sm:$0xff]
  %v194 = vld [vmem:[%s0 + $0x4e8] sm:$0xf]
  %v195 = vld [vmem:[%s0 + $0x4ec] sm:$0xff]
  %v196 = vld [vmem:[%s0 + $0x4f4] sm:$0xff]
  %v197 = vld [vmem:[%s0 + $0x4fc] sm:$0xff]
  %v198 = vld [vmem:[%s0 + $0x504] sm:$0xf]
  %v199 = vld [vmem:[%s0 + $0x508] sm:$0xff]
  %v200 = vld [vmem:[%s0 + $0x510] sm:$0xff]
  %v201 = vld [vmem:[%s0 + $0x518] sm:$0xff]
  %v202 = vld [vmem:[%s0 + $0x520] sm:$0xf]
  %v203 = vld [vmem:[%s0 + $0x524] sm:$0xff]
  %v204 = vld [vmem:[%s0 + $0x52c] sm:$0xff]
  %v205 = vld [vmem:[%s0 + $0x534] sm:$0xff]
  %v206 = vld [vmem:[%s0 + $0x53c] sm:$0xf]
  %v207 = vld [vmem:[%s0 + $0x540] sm:$0xff]
  %v208 = vld [vmem:[%s0 + $0x548] sm:$0xff]
  %v209 = vld [vmem:[%s0 + $0x550] sm:$0xff]
  %v210 = vld [vmem:[%s0 + $0x558] sm:$0xf]
  %v211 = vld [vmem:[%s0 + $0x55c] sm:$0xff]
  %v212 = vld [vmem:[%s0 + $0x564] sm:$0xff]
  %v213 = vld [vmem:[%s0 + $0x56c] sm:$0xff]
  %v214 = vld [vmem:[%s0 + $0x574] sm:$0xf]
  %v215 = vld [vmem:[%s0 + $0x578] sm:$0xff]
  %v216 = vld [vmem:[%s0 + $0x580] sm:$0xff]
  %v217 = vld [vmem:[%s0 + $0x588] sm:$0xff]
  %v218 = vld [vmem:[%s0 + $0x590] sm:$0xf]
  %v219 = vld [vmem:[%s0 + $0x594] sm:$0xff]
  %v220 = vld [vmem:[%s0 + $0x59c] sm:$0xff]
  %v221 = vld [vmem:[%s0 + $0x5a4] sm:$0xff]
  %v222 = vld [vmem:[%s0 + $0x5ac] sm:$0xf]
  %v223 = vld [vmem:[%s0 + $0x5b0] sm:$0xff]
  %v224 = vld [vmem:[%s0 + $0x5b8] sm:$0xff]
  %v225 = vld [vmem:[%s0 + $0x5c0] sm:$0xff]
  %v226 = vld [vmem:[%s0 + $0x5c8] sm:$0xf]
  %v227 = vld [vmem:[%s0 + $0x5cc] sm:$0xff]
  %v228 = vld [vmem:[%s0 + $0x5d4] sm:$0xff]
  %v229 = vld [vmem:[%s0 + $0x5dc] sm:$0xff]
  %v230 = vld [vmem:[%s0 + $0x5e4] sm:$0xf]
  %v231 = vld [vmem:[%s0 + $0x5e8] sm:$0xff]
  %v232 = vld [vmem:[%s0 + $0x5f0] sm:$0xff]
  %v233 = vld [vmem:[%s0 + $0x5f8] sm:$0xff]
  %v234 = vld [vmem:[%s0 + $0x600] sm:$0xf]
  %v235 = vld [vmem:[%s0 + $0x604] sm:$0xff]
  %v236 = vld [vmem:[%s0 + $0x60c] sm:$0xff]
  %v237 = vld [vmem:[%s0 + $0x614] sm:$0xff]
  %v238 = vld [vmem:[%s0 + $0x61c] sm:$0xf]
  %v239 = vld [vmem:[%s0 + $0x620] sm:$0xff]
  %v240 = vld [vmem:[%s0 + $0x628] sm:$0xff]
  %v241 = vld [vmem:[%s0 + $0x630] sm:$0xff]
  %v242 = vld [vmem:[%s0 + $0x638] sm:$0xf]
  %v243 = vld [vmem:[%s0 + $0x63c] sm:$0xff]
  %v244 = vld [vmem:[%s0 + $0x644] sm:$0xff]
  %v245 = vld [vmem:[%s0 + $0x64c] sm:$0xff]
  %v246 = vld [vmem:[%s0 + $0x654] sm:$0xf]
  %v247 = vld [vmem:[%s0 + $0x658] sm:$0xff]
  %v248 = vld [vmem:[%s0 + $0x660] sm:$0xff]
  %v249 = vld [vmem:[%s0 + $0x668] sm:$0xff]
  %v250 = vld [vmem:[%s0 + $0x670] sm:$0xf]
  %v251 = vld [vmem:[%s0 + $0x674] sm:$0xff]
  %v252 = vld [vmem:[%s0 + $0x67c] sm:$0xff]
  %v253 = vld [vmem:[%s0 + $0x684] sm:$0xff]
  %v254 = vld [vmem:[%s0 + $0x68c] sm:$0xf]
  %v255 = vld [vmem:[%s0 + $0x690] sm:$0xff]
  %v256 = vld [vmem:[%s0 + $0x698] sm:$0xff]
  %v257 = vld [vmem:[%s0 + $0x6a0] sm:$0xff]
  %v258 = vld [vmem:[%s0 + $0x6a8] sm:$0xf]
  %v259 = vld [vmem:[%s0 + $0x6ac] sm:$0xff]
  %v260 = vld [vmem:[%s0 + $0x6b4] sm:$0xff]
  %v261 = vld [vmem:[%s0 + $0x6bc] sm:$0xff]
  %v262 = vld [vmem:[%s0 + $0x6c4] sm:$0xf]
  %v263 = vld [vmem:[%s0 + $0x6c8] sm:$0xff]
  %v264 = vld [vmem:[%s0 + $0x6d0] sm:$0xff]
  %v265 = vld [vmem:[%s0 + $0x6d8] sm:$0xff]
  %v266 = vld [vmem:[%s0 + $0x6e0] sm:$0xf]
  %v267 = vld [vmem:[%s0 + $0x6e4] sm:$0xff]
  %v268 = vld [vmem:[%s0 + $0x6ec] sm:$0xff]
  %v269 = vld [vmem:[%s0 + $0x6f4] sm:$0xff]
  %v270 = vld [vmem:[%s0 + $0x6fc] sm:$0xf]
  %v271 = vld [vmem:[%s1] sm:$0xf]
  %v272 = vld [vmem:[%s1 + $0x4] sm:$0xf]
  %v273 = vld [vmem:[%s1 + $0x8] sm:$0xf]
  %v274 = vld [vmem:[%s1 + $0xc] sm:$0xf]
  %v275 = vld [vmem:[%s1 + $0x10] sm:$0xf]
  %v276 = vld [vmem:[%s1 + $0x14] sm:$0xf]
  %v277 = vld [vmem:[%s1 + $0x18] sm:$0xf]
  %v278 = vld [vmem:[%s1 + $0x1c] sm:$0xf]
  %v279 = vld [vmem:[%s1 + $0x20] sm:$0xf]
  %v280 = vld [vmem:[%s1 + $0x24] sm:$0xf]
  %v281 = vld [vmem:[%s1 + $0x28] sm:$0xf]
  %v282 = vld [vmem:[%s1 + $0x2c] sm:$0xf]
  %v283 = vld [vmem:[%s1 + $0x30] sm:$0xf]
  %v284 = vld [vmem:[%s1 + $0x34] sm:$0xf]
  %v285 = vld [vmem:[%s1 + $0x38] sm:$0xf]
  %v286 = vld [vmem:[%s1 + $0x3c] sm:$0xf]
  %v287 = vld [vmem:[%s1 + $0x40] sm:$0xf]
  %v288 = vld [vmem:[%s1 + $0x44] sm:$0xf]
  %v289 = vld [vmem:[%s1 + $0x48] sm:$0xf]
  %v290 = vld [vmem:[%s1 + $0x4c] sm:$0xf]
  %v291 = vld [vmem:[%s1 + $0x50] sm:$0xf]
  %v292 = vld [vmem:[%s1 + $0x54] sm:$0xf]
  %v293 = vld [vmem:[%s1 + $0x58] sm:$0xf]
  %v294 = vld [vmem:[%s1 + $0x5c] sm:$0xf]
  %v295 = vld [vmem:[%s1 + $0x60] sm:$0xf]
  %v296 = vld [vmem:[%s1 + $0x64] sm:$0xf]
  %v297 = vld [vmem:[%s1 + $0x68] sm:$0xf]
  %v298 = vld [vmem:[%s1 + $0x6c] sm:$0xf]
  %v299 = vld [vmem:[%s1 + $0x70] sm:$0xf]
  %v300 = vld [vmem:[%s1 + $0x74] sm:$0xf]
  %v301 = vld [vmem:[%s1 + $0x78] sm:$0xf]
  %v302 = vld [vmem:[%s1 + $0x7c] sm:$0xf]
  %v303 = vld [vmem:[%s1 + $0x80] sm:$0xf]
  %v304 = vld [vmem:[%s1 + $0x84] sm:$0xf]
  %v305 = vld [vmem:[%s1 + $0x88] sm:$0xf]
  %v306 = vld [vmem:[%s1 + $0x8c] sm:$0xf]
  %v307 = vld [vmem:[%s1 + $0x90] sm:$0xf]
  %v308 = vld [vmem:[%s1 + $0x94] sm:$0xf]
  %v309 = vld [vmem:[%s1 + $0x98] sm:$0xf]
  %v310 = vld [vmem:[%s1 + $0x9c] sm:$0xf]
  %v311 = vld [vmem:[%s1 + $0xa0] sm:$0xf]
  %v312 = vld [vmem:[%s1 + $0xa4] sm:$0xf]
  %v313 = vld [vmem:[%s1 + $0xa8] sm:$0xf]
  %v314 = vld [vmem:[%s1 + $0xac] sm:$0xf]
  %v315 = vld [vmem:[%s1 + $0xb0] sm:$0xf]
  %v316 = vld [vmem:[%s1 + $0xb4] sm:$0xf]
  %v317 = vld [vmem:[%s1 + $0xb8] sm:$0xf]
  %v318 = vld [vmem:[%s1 + $0xbc] sm:$0xf]
  %v319 = vld [vmem:[%s1 + $0xc0] sm:$0xf]
  %v320 = vld [vmem:[%s1 + $0xc4] sm:$0xf]
  %v321 = vld [vmem:[%s1 + $0xc8] sm:$0xf]
  %v322 = vld [vmem:[%s1 + $0xcc] sm:$0xf]
  %v323 = vld [vmem:[%s1 + $0xd0] sm:$0xf]
  %v324 = vld [vmem:[%s1 + $0xd4] sm:$0xf]
  %v325 = vld [vmem:[%s1 + $0xd8] sm:$0xf]
  %v326 = vld [vmem:[%s1 + $0xdc] sm:$0xf]
  %v327 = vld [vmem:[%s1 + $0xe0] sm:$0xf]
  %v328 = vld [vmem:[%s1 + $0xe4] sm:$0xf]
  %v329 = vld [vmem:[%s1 + $0xe8] sm:$0xf]
  %v330 = vld [vmem:[%s1 + $0xec] sm:$0xf]
  %v331 = vld [vmem:[%s1 + $0xf0] sm:$0xf]
  %v332 = vld [vmem:[%s1 + $0xf4] sm:$0xf]
  %v333 = vld [vmem:[%s1 + $0xf8] sm:$0xf]
  %v334 = vld [vmem:[%s1 + $0xfc] sm:$0xf]
  %v335 = vld [vmem:[%s1 + $0x100] sm:$0xf]
  %v336 = vld [vmem:[%s1 + $0x104] sm:$0xf]
  %v337 = vld [vmem:[%s1 + $0x108] sm:$0xf]
  %v338 = vld [vmem:[%s1 + $0x10c] sm:$0xf]
  %v339 = vld [vmem:[%s1 + $0x110] sm:$0xf]
  %v340 = vld [vmem:[%s1 + $0x114] sm:$0xf]
  %v341 = vld [vmem:[%s1 + $0x118] sm:$0xf]
  %v342 = vld [vmem:[%s1 + $0x11c] sm:$0xf]
  %v343 = vld [vmem:[%s1 + $0x120] sm:$0xf]
  %v344 = vld [vmem:[%s1 + $0x124] sm:$0xf]
  %v345 = vld [vmem:[%s1 + $0x128] sm:$0xf]
  %v346 = vld [vmem:[%s1 + $0x12c] sm:$0xf]
  %v347 = vld [vmem:[%s1 + $0x130] sm:$0xf]
  %v348 = vld [vmem:[%s1 + $0x134] sm:$0xf]
  %v349 = vld [vmem:[%s1 + $0x138] sm:$0xf]
  %v350 = vld [vmem:[%s1 + $0x13c] sm:$0xf]
  %v351 = vld [vmem:[%s1 + $0x140] sm:$0xf]
  %v352 = vld [vmem:[%s1 + $0x144] sm:$0xf]
  %v353 = vld [vmem:[%s1 + $0x148] sm:$0xf]
  %v354 = vld [vmem:[%s1 + $0x14c] sm:$0xf]
  %v355 = vld [vmem:[%s1 + $0x150] sm:$0xf]
  %v356 = vld [vmem:[%s1 + $0x154] sm:$0xf]
  %v357 = vld [vmem:[%s1 + $0x158] sm:$0xf]
  %v358 = vld [vmem:[%s1 + $0x15c] sm:$0xf]
  %v359 = vld [vmem:[%s1 + $0x160] sm:$0xf]
  %v360 = vld [vmem:[%s1 + $0x164] sm:$0xf]
  %v361 = vld [vmem:[%s1 + $0x168] sm:$0xf]
  %v362 = vld [vmem:[%s1 + $0x16c] sm:$0xf]
  %v363 = vld [vmem:[%s1 + $0x170] sm:$0xf]
  %v364 = vld [vmem:[%s1 + $0x174] sm:$0xf]
  %v365 = vld [vmem:[%s1 + $0x178] sm:$0xf]
  %v366 = vld [vmem:[%s1 + $0x17c] sm:$0xf]
  %v367 = vld [vmem:[%s1 + $0x180] sm:$0xf]
  %v368 = vld [vmem:[%s1 + $0x184] sm:$0xf]
  %v369 = vld [vmem:[%s1 + $0x188] sm:$0xf]
  %v370 = vld [vmem:[%s1 + $0x18c] sm:$0xf]
  %v627 = vunpack.c.l.b16 %v15
  %v628 = vunpack.c.h.b16 %v15
  %v629 = vunpack.c.l.b16 %v16
  %v630 = vunpack.c.h.b16 %v16
  %v631 = vunpack.c.l.b16 %v17
  %v632 = vunpack.c.h.b16 %v17
  %v633 = vunpack.c.l.b16 %v18
  %v634 = vunpack.c.l.b16 %v19
  %v635 = vunpack.c.h.b16 %v19
  %v636 = vunpack.c.l.b16 %v20
  %v637 = vunpack.c.h.b16 %v20
  %v638 = vunpack.c.l.b16 %v21
  %v639 = vunpack.c.h.b16 %v21
  %v640 = vunpack.c.l.b16 %v22
  %v641 = vunpack.c.l.b16 %v23
  %v642 = vunpack.c.h.b16 %v23
  %v643 = vunpack.c.l.b16 %v24
  %v644 = vunpack.c.h.b16 %v24
  %v645 = vunpack.c.l.b16 %v25
  %v646 = vunpack.c.h.b16 %v25
  %v647 = vunpack.c.l.b16 %v26
  %v648 = vunpack.c.l.b16 %v27
  %v649 = vunpack.c.h.b16 %v27
  %v650 = vunpack.c.l.b16 %v28
  %v651 = vunpack.c.h.b16 %v28
  %v652 = vunpack.c.l.b16 %v29
  %v653 = vunpack.c.h.b16 %v29
  %v654 = vunpack.c.l.b16 %v30
  %v655 = vunpack.c.l.b16 %v31
  %v656 = vunpack.c.h.b16 %v31
  %v657 = vunpack.c.l.b16 %v32
  %v658 = vunpack.c.h.b16 %v32
  %v659 = vunpack.c.l.b16 %v33
  %v660 = vunpack.c.h.b16 %v33
  %v661 = vunpack.c.l.b16 %v34
  %v662 = vunpack.c.l.b16 %v35
  %v663 = vunpack.c.h.b16 %v35
  %v664 = vunpack.c.l.b16 %v36
  %v665 = vunpack.c.h.b16 %v36
  %v666 = vunpack.c.l.b16 %v37
  %v667 = vunpack.c.h.b16 %v37
  %v668 = vunpack.c.l.b16 %v38
  %v669 = vunpack.c.l.b16 %v39
  %v670 = vunpack.c.h.b16 %v39
  %v671 = vunpack.c.l.b16 %v40
  %v672 = vunpack.c.h.b16 %v40
  %v673 = vunpack.c.l.b16 %v41
  %v674 = vunpack.c.h.b16 %v41
  %v675 = vunpack.c.l.b16 %v42
  %v676 = vunpack.c.l.b16 %v43
  %v677 = vunpack.c.h.b16 %v43
  %v678 = vunpack.c.l.b16 %v44
  %v679 = vunpack.c.h.b16 %v44
  %v680 = vunpack.c.l.b16 %v45
  %v681 = vunpack.c.h.b16 %v45
  %v682 = vunpack.c.l.b16 %v46
  %v683 = vunpack.c.l.b16 %v47
  %v684 = vunpack.c.h.b16 %v47
  %v685 = vunpack.c.l.b16 %v48
  %v686 = vunpack.c.h.b16 %v48
  %v687 = vunpack.c.l.b16 %v49
  %v688 = vunpack.c.h.b16 %v49
  %v689 = vunpack.c.l.b16 %v50
  %v690 = vunpack.c.l.b16 %v51
  %v691 = vunpack.c.h.b16 %v51
  %v692 = vunpack.c.l.b16 %v52
  %v693 = vunpack.c.h.b16 %v52
  %v694 = vunpack.c.l.b16 %v53
  %v695 = vunpack.c.h.b16 %v53
  %v696 = vunpack.c.l.b16 %v54
  %v697 = vunpack.c.l.b16 %v55
  %v698 = vunpack.c.h.b16 %v55
  %v699 = vunpack.c.l.b16 %v56
  %v700 = vunpack.c.h.b16 %v56
  %v701 = vunpack.c.l.b16 %v57
  %v702 = vunpack.c.h.b16 %v57
  %v703 = vunpack.c.l.b16 %v58
  %v704 = vunpack.c.l.b16 %v59
  %v705 = vunpack.c.h.b16 %v59
  %v706 = vunpack.c.l.b16 %v60
  %v707 = vunpack.c.h.b16 %v60
  %v708 = vunpack.c.l.b16 %v61
  %v709 = vunpack.c.h.b16 %v61
  %v710 = vunpack.c.l.b16 %v62
  %v711 = vunpack.c.l.b16 %v63
  %v712 = vunpack.c.h.b16 %v63
  %v713 = vunpack.c.l.b16 %v64
  %v714 = vunpack.c.h.b16 %v64
  %v715 = vunpack.c.l.b16 %v65
  %v716 = vunpack.c.h.b16 %v65
  %v717 = vunpack.c.l.b16 %v66
  %v718 = vunpack.c.l.b16 %v67
  %v719 = vunpack.c.h.b16 %v67
  %v720 = vunpack.c.l.b16 %v68
  %v721 = vunpack.c.h.b16 %v68
  %v722 = vunpack.c.l.b16 %v69
  %v723 = vunpack.c.h.b16 %v69
  %v724 = vunpack.c.l.b16 %v70
  %v725 = vunpack.c.l.b16 %v71
  %v726 = vunpack.c.h.b16 %v71
  %v727 = vunpack.c.l.b16 %v72
  %v728 = vunpack.c.h.b16 %v72
  %v729 = vunpack.c.l.b16 %v73
  %v730 = vunpack.c.h.b16 %v73
  %v731 = vunpack.c.l.b16 %v74
  %v732 = vunpack.c.l.b16 %v75
  %v733 = vunpack.c.h.b16 %v75
  %v734 = vunpack.c.l.b16 %v76
  %v735 = vunpack.c.h.b16 %v76
  %v736 = vunpack.c.l.b16 %v77
  %v737 = vunpack.c.h.b16 %v77
  %v738 = vunpack.c.l.b16 %v78
  %v739 = vunpack.c.l.b16 %v79
  %v740 = vunpack.c.h.b16 %v79
  %v741 = vunpack.c.l.b16 %v80
  %v742 = vunpack.c.h.b16 %v80
  %v743 = vunpack.c.l.b16 %v81
  %v744 = vunpack.c.h.b16 %v81
  %v745 = vunpack.c.l.b16 %v82
  %v746 = vunpack.c.l.b16 %v83
  %v747 = vunpack.c.h.b16 %v83
  %v748 = vunpack.c.l.b16 %v84
  %v749 = vunpack.c.h.b16 %v84
  %v750 = vunpack.c.l.b16 %v85
  %v751 = vunpack.c.h.b16 %v85
  %v752 = vunpack.c.l.b16 %v86
  %v753 = vunpack.c.l.b16 %v87
  %v754 = vunpack.c.h.b16 %v87
  %v755 = vunpack.c.l.b16 %v88
  %v756 = vunpack.c.h.b16 %v88
  %v757 = vunpack.c.l.b16 %v89
  %v758 = vunpack.c.h.b16 %v89
  %v759 = vunpack.c.l.b16 %v90
  %v760 = vunpack.c.l.b16 %v91
  %v761 = vunpack.c.h.b16 %v91
  %v762 = vunpack.c.l.b16 %v92
  %v763 = vunpack.c.h.b16 %v92
  %v764 = vunpack.c.l.b16 %v93
  %v765 = vunpack.c.h.b16 %v93
  %v766 = vunpack.c.l.b16 %v94
  %v767 = vunpack.c.l.b16 %v95
  %v768 = vunpack.c.h.b16 %v95
  %v769 = vunpack.c.l.b16 %v96
  %v770 = vunpack.c.h.b16 %v96
  %v771 = vunpack.c.l.b16 %v97
  %v772 = vunpack.c.h.b16 %v97
  %v773 = vunpack.c.l.b16 %v98
  %v774 = vunpack.c.l.b16 %v99
  %v775 = vunpack.c.h.b16 %v99
  %v776 = vunpack.c.l.b16 %v100
  %v777 = vunpack.c.h.b16 %v100
  %v778 = vunpack.c.l.b16 %v101
  %v779 = vunpack.c.h.b16 %v101
  %v780 = vunpack.c.l.b16 %v102
  %v781 = vunpack.c.l.b16 %v103
  %v782 = vunpack.c.h.b16 %v103
  %v783 = vunpack.c.l.b16 %v104
  %v784 = vunpack.c.h.b16 %v104
  %v785 = vunpack.c.l.b16 %v105
  %v786 = vunpack.c.h.b16 %v105
  %v787 = vunpack.c.l.b16 %v106
  %v788 = vunpack.c.l.b16 %v107
  %v789 = vunpack.c.h.b16 %v107
  %v790 = vunpack.c.l.b16 %v108
  %v791 = vunpack.c.h.b16 %v108
  %v792 = vunpack.c.l.b16 %v109
  %v793 = vunpack.c.h.b16 %v109
  %v794 = vunpack.c.l.b16 %v110
  %v795 = vunpack.c.l.b16 %v111
  %v796 = vunpack.c.h.b16 %v111
  %v797 = vunpack.c.l.b16 %v112
  %v798 = vunpack.c.h.b16 %v112
  %v799 = vunpack.c.l.b16 %v113
  %v800 = vunpack.c.h.b16 %v113
  %v801 = vunpack.c.l.b16 %v114
  %v802 = vunpack.c.l.b16 %v115
  %v803 = vunpack.c.h.b16 %v115
  %v804 = vunpack.c.l.b16 %v116
  %v805 = vunpack.c.h.b16 %v116
  %v806 = vunpack.c.l.b16 %v117
  %v807 = vunpack.c.h.b16 %v117
  %v808 = vunpack.c.l.b16 %v118
  %v809 = vunpack.c.l.b16 %v119
  %v810 = vunpack.c.h.b16 %v119
  %v811 = vunpack.c.l.b16 %v120
  %v812 = vunpack.c.h.b16 %v120
  %v813 = vunpack.c.l.b16 %v121
  %v814 = vunpack.c.h.b16 %v121
  %v815 = vunpack.c.l.b16 %v122
  %v816 = vunpack.c.l.b16 %v123
  %v817 = vunpack.c.h.b16 %v123
  %v818 = vunpack.c.l.b16 %v124
  %v819 = vunpack.c.h.b16 %v124
  %v820 = vunpack.c.l.b16 %v125
  %v821 = vunpack.c.h.b16 %v125
  %v822 = vunpack.c.l.b16 %v126
  %v823 = vunpack.c.l.b16 %v127
  %v824 = vunpack.c.h.b16 %v127
  %v825 = vunpack.c.l.b16 %v128
  %v826 = vunpack.c.h.b16 %v128
  %v827 = vunpack.c.l.b16 %v129
  %v828 = vunpack.c.h.b16 %v129
  %v829 = vunpack.c.l.b16 %v130
  %v830 = vunpack.c.l.b16 %v131
  %v831 = vunpack.c.h.b16 %v131
  %v832 = vunpack.c.l.b16 %v132
  %v833 = vunpack.c.h.b16 %v132
  %v834 = vunpack.c.l.b16 %v133
  %v835 = vunpack.c.h.b16 %v133
  %v836 = vunpack.c.l.b16 %v134
  %v837 = vunpack.c.l.b16 %v135
  %v838 = vunpack.c.h.b16 %v135
  %v839 = vunpack.c.l.b16 %v136
  %v840 = vunpack.c.h.b16 %v136
  %v841 = vunpack.c.l.b16 %v137
  %v842 = vunpack.c.h.b16 %v137
  %v843 = vunpack.c.l.b16 %v138
  %v844 = vunpack.c.l.b16 %v139
  %v845 = vunpack.c.h.b16 %v139
  %v846 = vunpack.c.l.b16 %v140
  %v847 = vunpack.c.h.b16 %v140
  %v848 = vunpack.c.l.b16 %v141
  %v849 = vunpack.c.h.b16 %v141
  %v850 = vunpack.c.l.b16 %v142
  %v851 = vunpack.c.l.b16 %v143
  %v852 = vunpack.c.h.b16 %v143
  %v853 = vunpack.c.l.b16 %v144
  %v854 = vunpack.c.h.b16 %v144
  %v855 = vunpack.c.l.b16 %v145
  %v856 = vunpack.c.h.b16 %v145
  %v857 = vunpack.c.l.b16 %v146
  %v858 = vunpack.c.l.b16 %v147
  %v859 = vunpack.c.h.b16 %v147
  %v860 = vunpack.c.l.b16 %v148
  %v861 = vunpack.c.h.b16 %v148
  %v862 = vunpack.c.l.b16 %v149
  %v863 = vunpack.c.h.b16 %v149
  %v864 = vunpack.c.l.b16 %v150
  %v865 = vunpack.c.l.b16 %v151
  %v866 = vunpack.c.h.b16 %v151
  %v867 = vunpack.c.l.b16 %v152
  %v868 = vunpack.c.h.b16 %v152
  %v869 = vunpack.c.l.b16 %v153
  %v870 = vunpack.c.h.b16 %v153
  %v871 = vunpack.c.l.b16 %v154
  %v872 = vunpack.c.l.b16 %v155
  %v873 = vunpack.c.h.b16 %v155
  %v874 = vunpack.c.l.b16 %v156
  %v875 = vunpack.c.h.b16 %v156
  %v876 = vunpack.c.l.b16 %v157
  %v877 = vunpack.c.h.b16 %v157
  %v878 = vunpack.c.l.b16 %v158
  %v879 = vunpack.c.l.b16 %v159
  %v880 = vunpack.c.h.b16 %v159
  %v881 = vunpack.c.l.b16 %v160
  %v882 = vunpack.c.h.b16 %v160
  %v883 = vunpack.c.l.b16 %v161
  %v884 = vunpack.c.h.b16 %v161
  %v885 = vunpack.c.l.b16 %v162
  %v886 = vunpack.c.l.b16 %v163
  %v887 = vunpack.c.h.b16 %v163
  %v888 = vunpack.c.l.b16 %v164
  %v889 = vunpack.c.h.b16 %v164
  %v890 = vunpack.c.l.b16 %v165
  %v891 = vunpack.c.h.b16 %v165
  %v892 = vunpack.c.l.b16 %v166
  %v893 = vunpack.c.l.b16 %v167
  %v894 = vunpack.c.h.b16 %v167
  %v895 = vunpack.c.l.b16 %v168
  %v896 = vunpack.c.h.b16 %v168
  %v897 = vunpack.c.l.b16 %v169
  %v898 = vunpack.c.h.b16 %v169
  %v899 = vunpack.c.l.b16 %v170
  %v900 = vunpack.c.l.b16 %v171
  %v901 = vunpack.c.h.b16 %v171
  %v902 = vunpack.c.l.b16 %v172
  %v903 = vunpack.c.h.b16 %v172
  %v904 = vunpack.c.l.b16 %v173
  %v905 = vunpack.c.h.b16 %v173
  %v906 = vunpack.c.l.b16 %v174
  %v907 = vunpack.c.l.b16 %v175
  %v908 = vunpack.c.h.b16 %v175
  %v909 = vunpack.c.l.b16 %v176
  %v910 = vunpack.c.h.b16 %v176
  %v911 = vunpack.c.l.b16 %v177
  %v912 = vunpack.c.h.b16 %v177
  %v913 = vunpack.c.l.b16 %v178
  %v914 = vunpack.c.l.b16 %v179
  %v915 = vunpack.c.h.b16 %v179
  %v916 = vunpack.c.l.b16 %v180
  %v917 = vunpack.c.h.b16 %v180
  %v918 = vunpack.c.l.b16 %v181
  %v919 = vunpack.c.h.b16 %v181
  %v920 = vunpack.c.l.b16 %v182
  %v921 = vunpack.c.l.b16 %v183
  %v922 = vunpack.c.h.b16 %v183
  %v923 = vunpack.c.l.b16 %v184
  %v924 = vunpack.c.h.b16 %v184
  %v925 = vunpack.c.l.b16 %v185
  %v926 = vunpack.c.h.b16 %v185
  %v927 = vunpack.c.l.b16 %v186
  %v928 = vunpack.c.l.b16 %v187
  %v929 = vunpack.c.h.b16 %v187
  %v930 = vunpack.c.l.b16 %v188
  %v931 = vunpack.c.h.b16 %v188
  %v932 = vunpack.c.l.b16 %v189
  %v933 = vunpack.c.h.b16 %v189
  %v934 = vunpack.c.l.b16 %v190
  %v935 = vunpack.c.l.b16 %v191
  %v936 = vunpack.c.h.b16 %v191
  %v937 = vunpack.c.l.b16 %v192
  %v938 = vunpack.c.h.b16 %v192
  %v939 = vunpack.c.l.b16 %v193
  %v940 = vunpack.c.h.b16 %v193
  %v941 = vunpack.c.l.b16 %v194
  %v942 = vunpack.c.l.b16 %v195
  %v943 = vunpack.c.h.b16 %v195
  %v944 = vunpack.c.l.b16 %v196
  %v945 = vunpack.c.h.b16 %v196
  %v946 = vunpack.c.l.b16 %v197
  %v947 = vunpack.c.h.b16 %v197
  %v948 = vunpack.c.l.b16 %v198
  %v949 = vunpack.c.l.b16 %v199
  %v950 = vunpack.c.h.b16 %v199
  %v951 = vunpack.c.l.b16 %v200
  %v952 = vunpack.c.h.b16 %v200
  %v953 = vunpack.c.l.b16 %v201
  %v954 = vunpack.c.h.b16 %v201
  %v955 = vunpack.c.l.b16 %v202
  %v956 = vunpack.c.l.b16 %v203
  %v957 = vunpack.c.h.b16 %v203
  %v958 = vunpack.c.l.b16 %v204
  %v959 = vunpack.c.h.b16 %v204
  %v960 = vunpack.c.l.b16 %v205
  %v961 = vunpack.c.h.b16 %v205
  %v962 = vunpack.c.l.b16 %v206
  %v963 = vunpack.c.l.b16 %v207
  %v964 = vunpack.c.h.b16 %v207
  %v965 = vunpack.c.l.b16 %v208
  %v966 = vunpack.c.h.b16 %v208
  %v967 = vunpack.c.l.b16 %v209
  %v968 = vunpack.c.h.b16 %v209
  %v969 = vunpack.c.l.b16 %v210
  %v970 = vunpack.c.l.b16 %v211
  %v971 = vunpack.c.h.b16 %v211
  %v972 = vunpack.c.l.b16 %v212
  %v973 = vunpack.c.h.b16 %v212
  %v974 = vunpack.c.l.b16 %v213
  %v975 = vunpack.c.h.b16 %v213
  %v976 = vunpack.c.l.b16 %v214
  %v977 = vunpack.c.l.b16 %v215
  %v978 = vunpack.c.h.b16 %v215
  %v979 = vunpack.c.l.b16 %v216
  %v980 = vunpack.c.h.b16 %v216
  %v981 = vunpack.c.l.b16 %v217
  %v982 = vunpack.c.h.b16 %v217
  %v983 = vunpack.c.l.b16 %v218
  %v984 = vunpack.c.l.b16 %v219
  %v985 = vunpack.c.h.b16 %v219
  %v986 = vunpack.c.l.b16 %v220
  %v987 = vunpack.c.h.b16 %v220
  %v988 = vunpack.c.l.b16 %v221
  %v989 = vunpack.c.h.b16 %v221
  %v990 = vunpack.c.l.b16 %v222
  %v991 = vunpack.c.l.b16 %v223
  %v992 = vunpack.c.h.b16 %v223
  %v993 = vunpack.c.l.b16 %v224
  %v994 = vunpack.c.h.b16 %v224
  %v995 = vunpack.c.l.b16 %v225
  %v996 = vunpack.c.h.b16 %v225
  %v997 = vunpack.c.l.b16 %v226
  %v998 = vunpack.c.l.b16 %v227
  %v999 = vunpack.c.h.b16 %v227
  %v1000 = vunpack.c.l.b16 %v228
  %v1001 = vunpack.c.h.b16 %v228
  %v1002 = vunpack.c.l.b16 %v229
  %v1003 = vunpack.c.h.b16 %v229
  %v1004 = vunpack.c.l.b16 %v230
  %v1005 = vunpack.c.l.b16 %v231
  %v1006 = vunpack.c.h.b16 %v231
  %v1007 = vunpack.c.l.b16 %v232
  %v1008 = vunpack.c.h.b16 %v232
  %v1009 = vunpack.c.l.b16 %v233
  %v1010 = vunpack.c.h.b16 %v233
  %v1011 = vunpack.c.l.b16 %v234
  %v1012 = vunpack.c.l.b16 %v235
  %v1013 = vunpack.c.h.b16 %v235
  %v1014 = vunpack.c.l.b16 %v236
  %v1015 = vunpack.c.h.b16 %v236
  %v1016 = vunpack.c.l.b16 %v237
  %v1017 = vunpack.c.h.b16 %v237
  %v1018 = vunpack.c.l.b16 %v238
  %v1019 = vunpack.c.l.b16 %v239
  %v1020 = vunpack.c.h.b16 %v239
  %v1021 = vunpack.c.l.b16 %v240
  %v1022 = vunpack.c.h.b16 %v240
  %v1023 = vunpack.c.l.b16 %v241
  %v1024 = vunpack.c.h.b16 %v241
  %v1025 = vunpack.c.l.b16 %v242
  %v1026 = vunpack.c.l.b16 %v243
  %v1027 = vunpack.c.h.b16 %v243
  %v1028 = vunpack.c.l.b16 %v244
  %v1029 = vunpack.c.h.b16 %v244
  %v1030 = vunpack.c.l.b16 %v245
  %v1031 = vunpack.c.h.b16 %v245
  %v1032 = vunpack.c.l.b16 %v246
  %v1033 = vunpack.c.l.b16 %v247
  %v1034 = vunpack.c.h.b16 %v247
  %v1035 = vunpack.c.l.b16 %v248
  %v1036 = vunpack.c.h.b16 %v248
  %v1037 = vunpack.c.l.b16 %v249
  %v1038 = vunpack.c.h.b16 %v249
  %v1039 = vunpack.c.l.b16 %v250
  %v1040 = vunpack.c.l.b16 %v251
  %v1041 = vunpack.c.h.b16 %v251
  %v1042 = vunpack.c.l.b16 %v252
  %v1043 = vunpack.c.h.b16 %v252
  %v1044 = vunpack.c.l.b16 %v253
  %v1045 = vunpack.c.h.b16 %v253
  %v1046 = vunpack.c.l.b16 %v254
  %v1047 = vunpack.c.l.b16 %v255
  %v1048 = vunpack.c.h.b16 %v255
  %v1049 = vunpack.c.l.b16 %v256
  %v1050 = vunpack.c.h.b16 %v256
  %v1051 = vunpack.c.l.b16 %v257
  %v1052 = vunpack.c.h.b16 %v257
  %v1053 = vunpack.c.l.b16 %v258
  %v1054 = vunpack.c.l.b16 %v259
  %v1055 = vunpack.c.h.b16 %v259
  %v1056 = vunpack.c.l.b16 %v260
  %v1057 = vunpack.c.h.b16 %v260
  %v1058 = vunpack.c.l.b16 %v261
  %v1059 = vunpack.c.h.b16 %v261
  %v1060 = vunpack.c.l.b16 %v262
  %v1061 = vunpack.c.l.b16 %v263
  %v1062 = vunpack.c.h.b16 %v263
  %v1063 = vunpack.c.l.b16 %v264
  %v1064 = vunpack.c.h.b16 %v264
  %v1065 = vunpack.c.l.b16 %v265
  %v1066 = vunpack.c.h.b16 %v265
  %v1067 = vunpack.c.l.b16 %v266
  %v1068 = vunpack.c.l.b16 %v267
  %v1069 = vunpack.c.h.b16 %v267
  %v1070 = vunpack.c.l.b16 %v268
  %v1071 = vunpack.c.h.b16 %v268
  %v1072 = vunpack.c.l.b16 %v269
  %v1073 = vunpack.c.h.b16 %v269
  %v1074 = vunpack.c.l.b16 %v270
  %v1075 = vpack.c.b16 %v634, %v627
  %v1076 = vpack.c.b16 %v635, %v628
  %v1077 = vpack.c.b16 %v636, %v629
  %v1078 = vpack.c.b16 %v637, %v630
  %v1079 = vpack.c.b16 %v638, %v631
  %v1080 = vpack.c.b16 %v639, %v632
  %v1081 = vpack.c.b16 %v640, %v633
  %v1082 = vpack.c.b16 %v648, %v641
  %v1083 = vpack.c.b16 %v649, %v642
  %v1084 = vpack.c.b16 %v650, %v643
  %v1085 = vpack.c.b16 %v651, %v644
  %v1086 = vpack.c.b16 %v652, %v645
  %v1087 = vpack.c.b16 %v653, %v646
  %v1088 = vpack.c.b16 %v654, %v647
  %v1089 = vpack.c.b16 %v662, %v655
  %v1090 = vpack.c.b16 %v663, %v656
  %v1091 = vpack.c.b16 %v664, %v657
  %v1092 = vpack.c.b16 %v665, %v658
  %v1093 = vpack.c.b16 %v666, %v659
  %v1094 = vpack.c.b16 %v667, %v660
  %v1095 = vpack.c.b16 %v668, %v661
  %v1096 = vpack.c.b16 %v676, %v669
  %v1097 = vpack.c.b16 %v677, %v670
  %v1098 = vpack.c.b16 %v678, %v671
  %v1099 = vpack.c.b16 %v679, %v672
  %v1100 = vpack.c.b16 %v680, %v673
  %v1101 = vpack.c.b16 %v681, %v674
  %v1102 = vpack.c.b16 %v682, %v675
  %v1103 = vpack.c.b16 %v690, %v683
  %v1104 = vpack.c.b16 %v691, %v684
  %v1105 = vpack.c.b16 %v692, %v685
  %v1106 = vpack.c.b16 %v693, %v686
  %v1107 = vpack.c.b16 %v694, %v687
  %v1108 = vpack.c.b16 %v695, %v688
  %v1109 = vpack.c.b16 %v696, %v689
  %v1110 = vpack.c.b16 %v704, %v697
  %v1111 = vpack.c.b16 %v705, %v698
  %v1112 = vpack.c.b16 %v706, %v699
  %v1113 = vpack.c.b16 %v707, %v700
  %v1114 = vpack.c.b16 %v708, %v701
  %v1115 = vpack.c.b16 %v709, %v702
  %v1116 = vpack.c.b16 %v710, %v703
  %v1117 = vpack.c.b16 %v718, %v711
  %v1118 = vpack.c.b16 %v719, %v712
  %v1119 = vpack.c.b16 %v720, %v713
  %v1120 = vpack.c.b16 %v721, %v714
  %v1121 = vpack.c.b16 %v722, %v715
  %v1122 = vpack.c.b16 %v723, %v716
  %v1123 = vpack.c.b16 %v724, %v717
  %v1124 = vpack.c.b16 %v732, %v725
  %v1125 = vpack.c.b16 %v733, %v726
  %v1126 = vpack.c.b16 %v734, %v727
  %v1127 = vpack.c.b16 %v735, %v728
  %v1128 = vpack.c.b16 %v736, %v729
  %v1129 = vpack.c.b16 %v737, %v730
  %v1130 = vpack.c.b16 %v738, %v731
  %v1131 = vpack.c.b16 %v746, %v739
  %v1132 = vpack.c.b16 %v747, %v740
  %v1133 = vpack.c.b16 %v748, %v741
  %v1134 = vpack.c.b16 %v749, %v742
  %v1135 = vpack.c.b16 %v750, %v743
  %v1136 = vpack.c.b16 %v751, %v744
  %v1137 = vpack.c.b16 %v752, %v745
  %v1138 = vpack.c.b16 %v760, %v753
  %v1139 = vpack.c.b16 %v761, %v754
  %v1140 = vpack.c.b16 %v762, %v755
  %v1141 = vpack.c.b16 %v763, %v756
  %v1142 = vpack.c.b16 %v764, %v757
  %v1143 = vpack.c.b16 %v765, %v758
  %v1144 = vpack.c.b16 %v766, %v759
  %v1145 = vpack.c.b16 %v774, %v767
  %v1146 = vpack.c.b16 %v775, %v768
  %v1147 = vpack.c.b16 %v776, %v769
  %v1148 = vpack.c.b16 %v777, %v770
  %v1149 = vpack.c.b16 %v778, %v771
  %v1150 = vpack.c.b16 %v779, %v772
  %v1151 = vpack.c.b16 %v780, %v773
  %v1152 = vpack.c.b16 %v788, %v781
  %v1153 = vpack.c.b16 %v789, %v782
  %v1154 = vpack.c.b16 %v790, %v783
  %v1155 = vpack.c.b16 %v791, %v784
  %v1156 = vpack.c.b16 %v792, %v785
  %v1157 = vpack.c.b16 %v793, %v786
  %v1158 = vpack.c.b16 %v794, %v787
  %v1159 = vpack.c.b16 %v802, %v795
  %v1160 = vpack.c.b16 %v803, %v796
  %v1161 = vpack.c.b16 %v804, %v797
  %v1162 = vpack.c.b16 %v805, %v798
  %v1163 = vpack.c.b16 %v806, %v799
  %v1164 = vpack.c.b16 %v807, %v800
  %v1165 = vpack.c.b16 %v808, %v801
  %v1166 = vpack.c.b16 %v816, %v809
  %v1167 = vpack.c.b16 %v817, %v810
  %v1168 = vpack.c.b16 %v818, %v811
  %v1169 = vpack.c.b16 %v819, %v812
  %v1170 = vpack.c.b16 %v820, %v813
  %v1171 = vpack.c.b16 %v821, %v814
  %v1172 = vpack.c.b16 %v822, %v815
  %v1173 = vpack.c.b16 %v830, %v823
  %v1174 = vpack.c.b16 %v831, %v824
  %v1175 = vpack.c.b16 %v832, %v825
  %v1176 = vpack.c.b16 %v833, %v826
  %v1177 = vpack.c.b16 %v834, %v827
  %v1178 = vpack.c.b16 %v835, %v828
  %v1179 = vpack.c.b16 %v836, %v829
  %v1180 = vpack.c.b16 %v844, %v837
  %v1181 = vpack.c.b16 %v845, %v838
  %v1182 = vpack.c.b16 %v846, %v839
  %v1183 = vpack.c.b16 %v847, %v840
  %v1184 = vpack.c.b16 %v848, %v841
  %v1185 = vpack.c.b16 %v849, %v842
  %v1186 = vpack.c.b16 %v850, %v843
  %v1187 = vpack.c.b16 %v858, %v851
  %v1188 = vpack.c.b16 %v859, %v852
  %v1189 = vpack.c.b16 %v860, %v853
  %v1190 = vpack.c.b16 %v861, %v854
  %v1191 = vpack.c.b16 %v862, %v855
  %v1192 = vpack.c.b16 %v863, %v856
  %v1193 = vpack.c.b16 %v864, %v857
  %v1194 = vpack.c.b16 %v872, %v865
  %v1195 = vpack.c.b16 %v873, %v866
  %v1196 = vpack.c.b16 %v874, %v867
  %v1197 = vpack.c.b16 %v875, %v868
  %v1198 = vpack.c.b16 %v876, %v869
  %v1199 = vpack.c.b16 %v877, %v870
  %v1200 = vpack.c.b16 %v878, %v871
  %v1201 = vpack.c.b16 %v886, %v879
  %v1202 = vpack.c.b16 %v887, %v880
  %v1203 = vpack.c.b16 %v888, %v881
  %v1204 = vpack.c.b16 %v889, %v882
  %v1205 = vpack.c.b16 %v890, %v883
  %v1206 = vpack.c.b16 %v891, %v884
  %v1207 = vpack.c.b16 %v892, %v885
  %v1208 = vpack.c.b16 %v900, %v893
  %v1209 = vpack.c.b16 %v901, %v894
  %v1210 = vpack.c.b16 %v902, %v895
  %v1211 = vpack.c.b16 %v903, %v896
  %v1212 = vpack.c.b16 %v904, %v897
  %v1213 = vpack.c.b16 %v905, %v898
  %v1214 = vpack.c.b16 %v906, %v899
  %v1215 = vpack.c.b16 %v914, %v907
  %v1216 = vpack.c.b16 %v915, %v908
  %v1217 = vpack.c.b16 %v916, %v909
  %v1218 = vpack.c.b16 %v917, %v910
  %v1219 = vpack.c.b16 %v918, %v911
  %v1220 = vpack.c.b16 %v919, %v912
  %v1221 = vpack.c.b16 %v920, %v913
  %v1222 = vpack.c.b16 %v928, %v921
  %v1223 = vpack.c.b16 %v929, %v922
  %v1224 = vpack.c.b16 %v930, %v923
  %v1225 = vpack.c.b16 %v931, %v924
  %v1226 = vpack.c.b16 %v932, %v925
  %v1227 = vpack.c.b16 %v933, %v926
  %v1228 = vpack.c.b16 %v934, %v927
  %v1229 = vpack.c.b16 %v942, %v935
  %v1230 = vpack.c.b16 %v943, %v936
  %v1231 = vpack.c.b16 %v944, %v937
  %v1232 = vpack.c.b16 %v945, %v938
  %v1233 = vpack.c.b16 %v946, %v939
  %v1234 = vpack.c.b16 %v947, %v940
  %v1235 = vpack.c.b16 %v948, %v941
  %v1236 = vpack.c.b16 %v956, %v949
  %v1237 = vpack.c.b16 %v957, %v950
  %v1238 = vpack.c.b16 %v958, %v951
  %v1239 = vpack.c.b16 %v959, %v952
  %v1240 = vpack.c.b16 %v960, %v953
  %v1241 = vpack.c.b16 %v961, %v954
  %v1242 = vpack.c.b16 %v962, %v955
  %v1243 = vpack.c.b16 %v970, %v963
  %v1244 = vpack.c.b16 %v971, %v964
  %v1245 = vpack.c.b16 %v972, %v965
  %v1246 = vpack.c.b16 %v973, %v966
  %v1247 = vpack.c.b16 %v974, %v967
  %v1248 = vpack.c.b16 %v975, %v968
  %v1249 = vpack.c.b16 %v976, %v969
  %v1250 = vpack.c.b16 %v984, %v977
  %v1251 = vpack.c.b16 %v985, %v978
  %v1252 = vpack.c.b16 %v986, %v979
  %v1253 = vpack.c.b16 %v987, %v980
  %v1254 = vpack.c.b16 %v988, %v981
  %v1255 = vpack.c.b16 %v989, %v982
  %v1256 = vpack.c.b16 %v990, %v983
  %v1257 = vpack.c.b16 %v998, %v991
  %v1258 = vpack.c.b16 %v999, %v992
  %v1259 = vpack.c.b16 %v1000, %v993
  %v1260 = vpack.c.b16 %v1001, %v994
  %v1261 = vpack.c.b16 %v1002, %v995
  %v1262 = vpack.c.b16 %v1003, %v996
  %v1263 = vpack.c.b16 %v1004, %v997
  %v1264 = vpack.c.b16 %v1012, %v1005
  %v1265 = vpack.c.b16 %v1013, %v1006
  %v1266 = vpack.c.b16 %v1014, %v1007
  %v1267 = vpack.c.b16 %v1015, %v1008
  %v1268 = vpack.c.b16 %v1016, %v1009
  %v1269 = vpack.c.b16 %v1017, %v1010
  %v1270 = vpack.c.b16 %v1018, %v1011
  %v1271 = vpack.c.b16 %v1026, %v1019
  %v1272 = vpack.c.b16 %v1027, %v1020
  %v1273 = vpack.c.b16 %v1028, %v1021
  %v1274 = vpack.c.b16 %v1029, %v1022
  %v1275 = vpack.c.b16 %v1030, %v1023
  %v1276 = vpack.c.b16 %v1031, %v1024
  %v1277 = vpack.c.b16 %v1032, %v1025
  %v1278 = vpack.c.b16 %v1040, %v1033
  %v1279 = vpack.c.b16 %v1041, %v1034
  %v1280 = vpack.c.b16 %v1042, %v1035
  %v1281 = vpack.c.b16 %v1043, %v1036
  %v1282 = vpack.c.b16 %v1044, %v1037
  %v1283 = vpack.c.b16 %v1045, %v1038
  %v1284 = vpack.c.b16 %v1046, %v1039
  %v1285 = vpack.c.b16 %v1054, %v1047
  %v1286 = vpack.c.b16 %v1055, %v1048
  %v1287 = vpack.c.b16 %v1056, %v1049
  %v1288 = vpack.c.b16 %v1057, %v1050
  %v1289 = vpack.c.b16 %v1058, %v1051
  %v1290 = vpack.c.b16 %v1059, %v1052
  %v1291 = vpack.c.b16 %v1060, %v1053
  %v1292 = vpack.c.b16 %v1068, %v1061
  %v1293 = vpack.c.b16 %v1069, %v1062
  %v1294 = vpack.c.b16 %v1070, %v1063
  %v1295 = vpack.c.b16 %v1071, %v1064
  %v1296 = vpack.c.b16 %v1072, %v1065
  %v1297 = vpack.c.b16 %v1073, %v1066
  %v1298 = vpack.c.b16 %v1074, %v1067
  %v1591 = vunpack.c.l.b16 %v271
  %v1592 = vunpack.c.l.b16 %v272
  %v1593 = vunpack.c.l.b16 %v273
  %v1594 = vunpack.c.l.b16 %v274
  %v1595 = vunpack.c.l.b16 %v275
  %v1596 = vunpack.c.l.b16 %v276
  %v1597 = vunpack.c.l.b16 %v277
  %v1598 = vunpack.c.l.b16 %v278
  %v1599 = vunpack.c.l.b16 %v279
  %v1600 = vunpack.c.l.b16 %v280
  %v1601 = vunpack.c.l.b16 %v281
  %v1602 = vunpack.c.l.b16 %v282
  %v1603 = vunpack.c.l.b16 %v283
  %v1604 = vunpack.c.l.b16 %v284
  %v1605 = vunpack.c.l.b16 %v285
  %v1606 = vunpack.c.l.b16 %v286
  %v1607 = vunpack.c.l.b16 %v287
  %v1608 = vunpack.c.l.b16 %v288
  %v1609 = vunpack.c.l.b16 %v289
  %v1610 = vunpack.c.l.b16 %v290
  %v1611 = vunpack.c.l.b16 %v291
  %v1612 = vunpack.c.l.b16 %v292
  %v1613 = vunpack.c.l.b16 %v293
  %v1614 = vunpack.c.l.b16 %v294
  %v1615 = vunpack.c.l.b16 %v295
  %v1616 = vunpack.c.l.b16 %v296
  %v1617 = vunpack.c.l.b16 %v297
  %v1618 = vunpack.c.l.b16 %v298
  %v1619 = vunpack.c.l.b16 %v299
  %v1620 = vunpack.c.l.b16 %v300
  %v1621 = vunpack.c.l.b16 %v301
  %v1622 = vunpack.c.l.b16 %v302
  %v1623 = vunpack.c.l.b16 %v303
  %v1624 = vunpack.c.l.b16 %v304
  %v1625 = vunpack.c.l.b16 %v305
  %v1626 = vunpack.c.l.b16 %v306
  %v1627 = vunpack.c.l.b16 %v307
  %v1628 = vunpack.c.l.b16 %v308
  %v1629 = vunpack.c.l.b16 %v309
  %v1630 = vunpack.c.l.b16 %v310
  %v1631 = vunpack.c.l.b16 %v311
  %v1632 = vunpack.c.l.b16 %v312
  %v1633 = vunpack.c.l.b16 %v313
  %v1634 = vunpack.c.l.b16 %v314
  %v1635 = vunpack.c.l.b16 %v315
  %v1636 = vunpack.c.l.b16 %v316
  %v1637 = vunpack.c.l.b16 %v317
  %v1638 = vunpack.c.l.b16 %v318
  %v1639 = vunpack.c.l.b16 %v319
  %v1640 = vunpack.c.l.b16 %v320
  %v1641 = vunpack.c.l.b16 %v321
  %v1642 = vunpack.c.l.b16 %v322
  %v1643 = vunpack.c.l.b16 %v323
  %v1644 = vunpack.c.l.b16 %v324
  %v1645 = vunpack.c.l.b16 %v325
  %v1646 = vunpack.c.l.b16 %v326
  %v1647 = vunpack.c.l.b16 %v327
  %v1648 = vunpack.c.l.b16 %v328
  %v1649 = vunpack.c.l.b16 %v329
  %v1650 = vunpack.c.l.b16 %v330
  %v1651 = vunpack.c.l.b16 %v331
  %v1652 = vunpack.c.l.b16 %v332
  %v1653 = vunpack.c.l.b16 %v333
  %v1654 = vunpack.c.l.b16 %v334
  %v1655 = vunpack.c.l.b16 %v335
  %v1656 = vunpack.c.l.b16 %v336
  %v1657 = vunpack.c.l.b16 %v337
  %v1658 = vunpack.c.l.b16 %v338
  %v1659 = vunpack.c.l.b16 %v339
  %v1660 = vunpack.c.l.b16 %v340
  %v1661 = vunpack.c.l.b16 %v341
  %v1662 = vunpack.c.l.b16 %v342
  %v1663 = vunpack.c.l.b16 %v343
  %v1664 = vunpack.c.l.b16 %v344
  %v1665 = vunpack.c.l.b16 %v345
  %v1666 = vunpack.c.l.b16 %v346
  %v1667 = vunpack.c.l.b16 %v347
  %v1668 = vunpack.c.l.b16 %v348
  %v1669 = vunpack.c.l.b16 %v349
  %v1670 = vunpack.c.l.b16 %v350
  %v1671 = vunpack.c.l.b16 %v351
  %v1672 = vunpack.c.l.b16 %v352
  %v1673 = vunpack.c.l.b16 %v353
  %v1674 = vunpack.c.l.b16 %v354
  %v1675 = vunpack.c.l.b16 %v355
  %v1676 = vunpack.c.l.b16 %v356
  %v1677 = vunpack.c.l.b16 %v357
  %v1678 = vunpack.c.l.b16 %v358
  %v1679 = vunpack.c.l.b16 %v359
  %v1680 = vunpack.c.l.b16 %v360
  %v1681 = vunpack.c.l.b16 %v361
  %v1682 = vunpack.c.l.b16 %v362
  %v1683 = vunpack.c.l.b16 %v363
  %v1684 = vunpack.c.l.b16 %v364
  %v1685 = vunpack.c.l.b16 %v365
  %v1686 = vunpack.c.l.b16 %v366
  %v1687 = vunpack.c.l.b16 %v367
  %v1688 = vunpack.c.l.b16 %v368
  %v1689 = vunpack.c.l.b16 %v369
  %v1690 = vunpack.c.l.b16 %v370
  %v1691 = vpack.c.b16 %v1592, %v1591
  %v1692 = vpack.c.b16 %v1594, %v1593
  %v1693 = vpack.c.b16 %v1596, %v1595
  %v1694 = vpack.c.b16 %v1598, %v1597
  %v1695 = vpack.c.b16 %v1600, %v1599
  %v1696 = vpack.c.b16 %v1602, %v1601
  %v1697 = vpack.c.b16 %v1604, %v1603
  %v1698 = vpack.c.b16 %v1606, %v1605
  %v1699 = vpack.c.b16 %v1608, %v1607
  %v1700 = vpack.c.b16 %v1610, %v1609
  %v1701 = vpack.c.b16 %v1612, %v1611
  %v1702 = vpack.c.b16 %v1614, %v1613
  %v1703 = vpack.c.b16 %v1616, %v1615
  %v1704 = vpack.c.b16 %v1618, %v1617
  %v1705 = vpack.c.b16 %v1620, %v1619
  %v1706 = vpack.c.b16 %v1622, %v1621
  %v1707 = vpack.c.b16 %v1624, %v1623
  %v1708 = vpack.c.b16 %v1626, %v1625
  %v1709 = vpack.c.b16 %v1628, %v1627
  %v1710 = vpack.c.b16 %v1630, %v1629
  %v1711 = vpack.c.b16 %v1632, %v1631
  %v1712 = vpack.c.b16 %v1634, %v1633
  %v1713 = vpack.c.b16 %v1636, %v1635
  %v1714 = vpack.c.b16 %v1638, %v1637
  %v1715 = vpack.c.b16 %v1640, %v1639
  %v1716 = vpack.c.b16 %v1642, %v1641
  %v1717 = vpack.c.b16 %v1644, %v1643
  %v1718 = vpack.c.b16 %v1646, %v1645
  %v1719 = vpack.c.b16 %v1648, %v1647
  %v1720 = vpack.c.b16 %v1650, %v1649
  %v1721 = vpack.c.b16 %v1652, %v1651
  %v1722 = vpack.c.b16 %v1654, %v1653
  %v1723 = vpack.c.b16 %v1656, %v1655
  %v1724 = vpack.c.b16 %v1658, %v1657
  %v1725 = vpack.c.b16 %v1660, %v1659
  %v1726 = vpack.c.b16 %v1662, %v1661
  %v1727 = vpack.c.b16 %v1664, %v1663
  %v1728 = vpack.c.b16 %v1666, %v1665
  %v1729 = vpack.c.b16 %v1668, %v1667
  %v1730 = vpack.c.b16 %v1670, %v1669
  %v1731 = vpack.c.b16 %v1672, %v1671
  %v1732 = vpack.c.b16 %v1674, %v1673
  %v1733 = vpack.c.b16 %v1676, %v1675
  %v1734 = vpack.c.b16 %v1678, %v1677
  %v1735 = vpack.c.b16 %v1680, %v1679
  %v1736 = vpack.c.b16 %v1682, %v1681
  %v1737 = vpack.c.b16 %v1684, %v1683
  %v1738 = vpack.c.b16 %v1686, %v1685
  %v1739 = vpack.c.b16 %v1688, %v1687
  %v1740 = vpack.c.b16 %v1690, %v1689
  %vm1791 = vcmask 261120
  %v1793 = vsel %vm1791, %v1081, 0
  %v1796 = vsel %vm1791, %v1088, 0
  %v1799 = vsel %vm1791, %v1095, 0
  %v1802 = vsel %vm1791, %v1102, 0
  %v1805 = vsel %vm1791, %v1109, 0
  %v1808 = vsel %vm1791, %v1116, 0
  %v1811 = vsel %vm1791, %v1123, 0
  %v1814 = vsel %vm1791, %v1130, 0
  %v1817 = vsel %vm1791, %v1137, 0
  %v1820 = vsel %vm1791, %v1144, 0
  %v1823 = vsel %vm1791, %v1151, 0
  %v1826 = vsel %vm1791, %v1158, 0
  %v1829 = vsel %vm1791, %v1165, 0
  %v1832 = vsel %vm1791, %v1172, 0
  %v1835 = vsel %vm1791, %v1179, 0
  %v1838 = vsel %vm1791, %v1186, 0
  %v1841 = vsel %vm1791, %v1193, 0
  %v1844 = vsel %vm1791, %v1200, 0
  %v1847 = vsel %vm1791, %v1207, 0
  %v1850 = vsel %vm1791, %v1214, 0
  %v1853 = vsel %vm1791, %v1221, 0
  %v1856 = vsel %vm1791, %v1228, 0
  %v1859 = vsel %vm1791, %v1235, 0
  %v1862 = vsel %vm1791, %v1242, 0
  %v1865 = vsel %vm1791, %v1249, 0
  %v1868 = vsel %vm1791, %v1256, 0
  %v1871 = vsel %vm1791, %v1263, 0
  %v1874 = vsel %vm1791, %v1270, 0
  %v1877 = vsel %vm1791, %v1277, 0
  %v1880 = vsel %vm1791, %v1284, 0
  %v1883 = vsel %vm1791, %v1291, 0
  %v1886 = vsel %vm1791, %v1298, 0
  %1888 = vmatpush.bf16.msra.mxu0 %v1698
  %1889 = vmatpush.bf16.msra.mxu0 %v1697
  %1890 = vmatpush.bf16.msra.mxu0 %v1696
  %1891 = vmatpush.bf16.msra.mxu0 %v1695
  %1892 = vmatpush.bf16.msra.mxu0 %v1694
  %1893 = vmatpush.bf16.msra.mxu0 %v1693
  %1894 = vmatpush.bf16.msra.mxu0 %v1692
  %1895 = vmatpush.bf16.msra.mxu0 %v1691
  %1896 = vmatmul.bf16.gmra.mxu0 %v1075
  %v1897 = vpop.f32.mrf.mxu0
  %v1898 = vadd.f32 0.0, %v1897
  %v1899 = vpop.f32.mrf.mxu0
  %v1900 = vadd.f32 0.0, %v1899
  %1901 = vmatmul.bf16.gmra.mxu0 %v1082
  %v1902 = vpop.f32.mrf.mxu0
  %v1903 = vadd.f32 0.0, %v1902
  %v1904 = vpop.f32.mrf.mxu0
  %v1905 = vadd.f32 0.0, %v1904
  %1906 = vmatmul.bf16.gmra.mxu0 %v1089
  %v1907 = vpop.f32.mrf.mxu0
  %v1908 = vadd.f32 0.0, %v1907
  %v1909 = vpop.f32.mrf.mxu0
  %v1910 = vadd.f32 0.0, %v1909
  %1911 = vmatmul.bf16.gmra.mxu0 %v1096
  %v1912 = vpop.f32.mrf.mxu0
  %v1913 = vadd.f32 0.0, %v1912
  %v1914 = vpop.f32.mrf.mxu0
  %v1915 = vadd.f32 0.0, %v1914
  %1916 = vmatmul.bf16.gmra.mxu0 %v1103
  %v1917 = vpop.f32.mrf.mxu0
  %v1918 = vadd.f32 0.0, %v1917
  %v1919 = vpop.f32.mrf.mxu0
  %v1920 = vadd.f32 0.0, %v1919
  %1921 = vmatmul.bf16.gmra.mxu0 %v1110
  %v1922 = vpop.f32.mrf.mxu0
  %v1923 = vadd.f32 0.0, %v1922
  %v1924 = vpop.f32.mrf.mxu0
  %v1925 = vadd.f32 0.0, %v1924
  %1926 = vmatmul.bf16.gmra.mxu0 %v1117
  %v1927 = vpop.f32.mrf.mxu0
  %v1928 = vadd.f32 0.0, %v1927
  %v1929 = vpop.f32.mrf.mxu0
  %v1930 = vadd.f32 0.0, %v1929
  %1931 = vmatmul.bf16.gmra.mxu0 %v1124
  %v1932 = vpop.f32.mrf.mxu0
  %v1933 = vadd.f32 0.0, %v1932
  %v1934 = vpop.f32.mrf.mxu0
  %v1935 = vadd.f32 0.0, %v1934
  %1936 = vmatmul.bf16.gmra.mxu0 %v1131
  %v1937 = vpop.f32.mrf.mxu0
  %v1938 = vadd.f32 0.0, %v1937
  %v1939 = vpop.f32.mrf.mxu0
  %v1940 = vadd.f32 0.0, %v1939
  %1941 = vmatmul.bf16.gmra.mxu0 %v1138
  %v1942 = vpop.f32.mrf.mxu0
  %v1943 = vadd.f32 0.0, %v1942
  %v1944 = vpop.f32.mrf.mxu0
  %v1945 = vadd.f32 0.0, %v1944
  %1946 = vmatmul.bf16.gmra.mxu0 %v1145
  %v1947 = vpop.f32.mrf.mxu0
  %v1948 = vadd.f32 0.0, %v1947
  %v1949 = vpop.f32.mrf.mxu0
  %v1950 = vadd.f32 0.0, %v1949
  %1951 = vmatmul.bf16.gmra.mxu0 %v1152
  %v1952 = vpop.f32.mrf.mxu0
  %v1953 = vadd.f32 0.0, %v1952
  %v1954 = vpop.f32.mrf.mxu0
  %v1955 = vadd.f32 0.0, %v1954
  %1956 = vmatmul.bf16.gmra.mxu0 %v1159
  %v1957 = vpop.f32.mrf.mxu0
  %v1958 = vadd.f32 0.0, %v1957
  %v1959 = vpop.f32.mrf.mxu0
  %v1960 = vadd.f32 0.0, %v1959
  %1961 = vmatmul.bf16.gmra.mxu0 %v1166
  %v1962 = vpop.f32.mrf.mxu0
  %v1963 = vadd.f32 0.0, %v1962
  %v1964 = vpop.f32.mrf.mxu0
  %v1965 = vadd.f32 0.0, %v1964
  %1966 = vmatmul.bf16.gmra.mxu0 %v1173
  %v1967 = vpop.f32.mrf.mxu0
  %v1968 = vadd.f32 0.0, %v1967
  %v1969 = vpop.f32.mrf.mxu0
  %v1970 = vadd.f32 0.0, %v1969
  %1971 = vmatmul.bf16.gmra.mxu0 %v1180
  %v1972 = vpop.f32.mrf.mxu0
  %v1973 = vadd.f32 0.0, %v1972
  %v1974 = vpop.f32.mrf.mxu0
  %v1975 = vadd.f32 0.0, %v1974
  %1976 = vmatmul.bf16.gmra.mxu0 %v1187
  %v1977 = vpop.f32.mrf.mxu0
  %v1978 = vadd.f32 0.0, %v1977
  %v1979 = vpop.f32.mrf.mxu0
  %v1980 = vadd.f32 0.0, %v1979
  %1981 = vmatmul.bf16.gmra.mxu0 %v1194
  %v1982 = vpop.f32.mrf.mxu0
  %v1983 = vadd.f32 0.0, %v1982
  %v1984 = vpop.f32.mrf.mxu0
  %v1985 = vadd.f32 0.0, %v1984
  %1986 = vmatmul.bf16.gmra.mxu0 %v1201
  %v1987 = vpop.f32.mrf.mxu0
  %v1988 = vadd.f32 0.0, %v1987
  %v1989 = vpop.f32.mrf.mxu0
  %v1990 = vadd.f32 0.0, %v1989
  %1991 = vmatmul.bf16.gmra.mxu0 %v1208
  %v1992 = vpop.f32.mrf.mxu0
  %v1993 = vadd.f32 0.0, %v1992
  %v1994 = vpop.f32.mrf.mxu0
  %v1995 = vadd.f32 0.0, %v1994
  %1996 = vmatmul.bf16.gmra.mxu0 %v1215
  %v1997 = vpop.f32.mrf.mxu0
  %v1998 = vadd.f32 0.0, %v1997
  %v1999 = vpop.f32.mrf.mxu0
  %v2000 = vadd.f32 0.0, %v1999
  %2001 = vmatmul.bf16.gmra.mxu0 %v1222
  %v2002 = vpop.f32.mrf.mxu0
  %v2003 = vadd.f32 0.0, %v2002
  %v2004 = vpop.f32.mrf.mxu0
  %v2005 = vadd.f32 0.0, %v2004
  %2006 = vmatmul.bf16.gmra.mxu0 %v1229
  %v2007 = vpop.f32.mrf.mxu0
  %v2008 = vadd.f32 0.0, %v2007
  %v2009 = vpop.f32.mrf.mxu0
  %v2010 = vadd.f32 0.0, %v2009
  %2011 = vmatmul.bf16.gmra.mxu0 %v1236
  %v2012 = vpop.f32.mrf.mxu0
  %v2013 = vadd.f32 0.0, %v2012
  %v2014 = vpop.f32.mrf.mxu0
  %v2015 = vadd.f32 0.0, %v2014
  %2016 = vmatmul.bf16.gmra.mxu0 %v1243
  %v2017 = vpop.f32.mrf.mxu0
  %v2018 = vadd.f32 0.0, %v2017
  %v2019 = vpop.f32.mrf.mxu0
  %v2020 = vadd.f32 0.0, %v2019
  %2021 = vmatmul.bf16.gmra.mxu0 %v1250
  %v2022 = vpop.f32.mrf.mxu0
  %v2023 = vadd.f32 0.0, %v2022
  %v2024 = vpop.f32.mrf.mxu0
  %v2025 = vadd.f32 0.0, %v2024
  %2026 = vmatmul.bf16.gmra.mxu0 %v1257
  %v2027 = vpop.f32.mrf.mxu0
  %v2028 = vadd.f32 0.0, %v2027
  %v2029 = vpop.f32.mrf.mxu0
  %v2030 = vadd.f32 0.0, %v2029
  %2031 = vmatmul.bf16.gmra.mxu0 %v1264
  %v2032 = vpop.f32.mrf.mxu0
  %v2033 = vadd.f32 0.0, %v2032
  %v2034 = vpop.f32.mrf.mxu0
  %v2035 = vadd.f32 0.0, %v2034
  %2036 = vmatmul.bf16.gmra.mxu0 %v1271
  %v2037 = vpop.f32.mrf.mxu0
  %v2038 = vadd.f32 0.0, %v2037
  %v2039 = vpop.f32.mrf.mxu0
  %v2040 = vadd.f32 0.0, %v2039
  %2041 = vmatmul.bf16.gmra.mxu0 %v1278
  %v2042 = vpop.f32.mrf.mxu0
  %v2043 = vadd.f32 0.0, %v2042
  %v2044 = vpop.f32.mrf.mxu0
  %v2045 = vadd.f32 0.0, %v2044
  %2046 = vmatmul.bf16.gmra.mxu0 %v1285
  %v2047 = vpop.f32.mrf.mxu0
  %v2048 = vadd.f32 0.0, %v2047
  %v2049 = vpop.f32.mrf.mxu0
  %v2050 = vadd.f32 0.0, %v2049
  %2051 = vmatmul.bf16.gmra.mxu0 %v1292
  %v2052 = vpop.f32.mrf.mxu0
  %v2053 = vadd.f32 0.0, %v2052
  %v2054 = vpop.f32.mrf.mxu0
  %v2055 = vadd.f32 0.0, %v2054
  %2056 = vdwg.mxu0
  %2057 = vmatpush.bf16.msra.mxu0 %v1706
  %2058 = vmatpush.bf16.msra.mxu0 %v1705
  %2059 = vmatpush.bf16.msra.mxu0 %v1704
  %2060 = vmatpush.bf16.msra.mxu0 %v1703
  %2061 = vmatpush.bf16.msra.mxu0 %v1702
  %2062 = vmatpush.bf16.msra.mxu0 %v1701
  %2063 = vmatpush.bf16.msra.mxu0 %v1700
  %2064 = vmatpush.bf16.msra.mxu0 %v1699
  %2065 = vmatmul.bf16.gmra.mxu0 %v1076
  %v2066 = vpop.f32.mrf.mxu0
  %v2067 = vadd.f32 %v1898, %v2066
  %v2068 = vpop.f32.mrf.mxu0
  %v2069 = vadd.f32 %v1900, %v2068
  %2070 = vmatmul.bf16.gmra.mxu0 %v1083
  %v2071 = vpop.f32.mrf.mxu0
  %v2072 = vadd.f32 %v1903, %v2071
  %v2073 = vpop.f32.mrf.mxu0
  %v2074 = vadd.f32 %v1905, %v2073
  %2075 = vmatmul.bf16.gmra.mxu0 %v1090
  %v2076 = vpop.f32.mrf.mxu0
  %v2077 = vadd.f32 %v1908, %v2076
  %v2078 = vpop.f32.mrf.mxu0
  %v2079 = vadd.f32 %v1910, %v2078
  %2080 = vmatmul.bf16.gmra.mxu0 %v1097
  %v2081 = vpop.f32.mrf.mxu0
  %v2082 = vadd.f32 %v1913, %v2081
  %v2083 = vpop.f32.mrf.mxu0
  %v2084 = vadd.f32 %v1915, %v2083
  %2085 = vmatmul.bf16.gmra.mxu0 %v1104
  %v2086 = vpop.f32.mrf.mxu0
  %v2087 = vadd.f32 %v1918, %v2086
  %v2088 = vpop.f32.mrf.mxu0
  %v2089 = vadd.f32 %v1920, %v2088
  %2090 = vmatmul.bf16.gmra.mxu0 %v1111
  %v2091 = vpop.f32.mrf.mxu0
  %v2092 = vadd.f32 %v1923, %v2091
  %v2093 = vpop.f32.mrf.mxu0
  %v2094 = vadd.f32 %v1925, %v2093
  %2095 = vmatmul.bf16.gmra.mxu0 %v1118
  %v2096 = vpop.f32.mrf.mxu0
  %v2097 = vadd.f32 %v1928, %v2096
  %v2098 = vpop.f32.mrf.mxu0
  %v2099 = vadd.f32 %v1930, %v2098
  %2100 = vmatmul.bf16.gmra.mxu0 %v1125
  %v2101 = vpop.f32.mrf.mxu0
  %v2102 = vadd.f32 %v1933, %v2101
  %v2103 = vpop.f32.mrf.mxu0
  %v2104 = vadd.f32 %v1935, %v2103
  %2105 = vmatmul.bf16.gmra.mxu0 %v1132
  %v2106 = vpop.f32.mrf.mxu0
  %v2107 = vadd.f32 %v1938, %v2106
  %v2108 = vpop.f32.mrf.mxu0
  %v2109 = vadd.f32 %v1940, %v2108
  %2110 = vmatmul.bf16.gmra.mxu0 %v1139
  %v2111 = vpop.f32.mrf.mxu0
  %v2112 = vadd.f32 %v1943, %v2111
  %v2113 = vpop.f32.mrf.mxu0
  %v2114 = vadd.f32 %v1945, %v2113
  %2115 = vmatmul.bf16.gmra.mxu0 %v1146
  %v2116 = vpop.f32.mrf.mxu0
  %v2117 = vadd.f32 %v1948, %v2116
  %v2118 = vpop.f32.mrf.mxu0
  %v2119 = vadd.f32 %v1950, %v2118
  %2120 = vmatmul.bf16.gmra.mxu0 %v1153
  %v2121 = vpop.f32.mrf.mxu0
  %v2122 = vadd.f32 %v1953, %v2121
  %v2123 = vpop.f32.mrf.mxu0
  %v2124 = vadd.f32 %v1955, %v2123
  %2125 = vmatmul.bf16.gmra.mxu0 %v1160
  %v2126 = vpop.f32.mrf.mxu0
  %v2127 = vadd.f32 %v1958, %v2126
  %v2128 = vpop.f32.mrf.mxu0
  %v2129 = vadd.f32 %v1960, %v2128
  %2130 = vmatmul.bf16.gmra.mxu0 %v1167
  %v2131 = vpop.f32.mrf.mxu0
  %v2132 = vadd.f32 %v1963, %v2131
  %v2133 = vpop.f32.mrf.mxu0
  %v2134 = vadd.f32 %v1965, %v2133
  %2135 = vmatmul.bf16.gmra.mxu0 %v1174
  %v2136 = vpop.f32.mrf.mxu0
  %v2137 = vadd.f32 %v1968, %v2136
  %v2138 = vpop.f32.mrf.mxu0
  %v2139 = vadd.f32 %v1970, %v2138
  %2140 = vmatmul.bf16.gmra.mxu0 %v1181
  %v2141 = vpop.f32.mrf.mxu0
  %v2142 = vadd.f32 %v1973, %v2141
  %v2143 = vpop.f32.mrf.mxu0
  %v2144 = vadd.f32 %v1975, %v2143
  %2145 = vmatmul.bf16.gmra.mxu0 %v1188
  %v2146 = vpop.f32.mrf.mxu0
  %v2147 = vadd.f32 %v1978, %v2146
  %v2148 = vpop.f32.mrf.mxu0
  %v2149 = vadd.f32 %v1980, %v2148
  %2150 = vmatmul.bf16.gmra.mxu0 %v1195
  %v2151 = vpop.f32.mrf.mxu0
  %v2152 = vadd.f32 %v1983, %v2151
  %v2153 = vpop.f32.mrf.mxu0
  %v2154 = vadd.f32 %v1985, %v2153
  %2155 = vmatmul.bf16.gmra.mxu0 %v1202
  %v2156 = vpop.f32.mrf.mxu0
  %v2157 = vadd.f32 %v1988, %v2156
  %v2158 = vpop.f32.mrf.mxu0
  %v2159 = vadd.f32 %v1990, %v2158
  %2160 = vmatmul.bf16.gmra.mxu0 %v1209
  %v2161 = vpop.f32.mrf.mxu0
  %v2162 = vadd.f32 %v1993, %v2161
  %v2163 = vpop.f32.mrf.mxu0
  %v2164 = vadd.f32 %v1995, %v2163
  %2165 = vmatmul.bf16.gmra.mxu0 %v1216
  %v2166 = vpop.f32.mrf.mxu0
  %v2167 = vadd.f32 %v1998, %v2166
  %v2168 = vpop.f32.mrf.mxu0
  %v2169 = vadd.f32 %v2000, %v2168
  %2170 = vmatmul.bf16.gmra.mxu0 %v1223
  %v2171 = vpop.f32.mrf.mxu0
  %v2172 = vadd.f32 %v2003, %v2171
  %v2173 = vpop.f32.mrf.mxu0
  %v2174 = vadd.f32 %v2005, %v2173
  %2175 = vmatmul.bf16.gmra.mxu0 %v1230
  %v2176 = vpop.f32.mrf.mxu0
  %v2177 = vadd.f32 %v2008, %v2176
  %v2178 = vpop.f32.mrf.mxu0
  %v2179 = vadd.f32 %v2010, %v2178
  %2180 = vmatmul.bf16.gmra.mxu0 %v1237
  %v2181 = vpop.f32.mrf.mxu0
  %v2182 = vadd.f32 %v2013, %v2181
  %v2183 = vpop.f32.mrf.mxu0
  %v2184 = vadd.f32 %v2015, %v2183
  %2185 = vmatmul.bf16.gmra.mxu0 %v1244
  %v2186 = vpop.f32.mrf.mxu0
  %v2187 = vadd.f32 %v2018, %v2186
  %v2188 = vpop.f32.mrf.mxu0
  %v2189 = vadd.f32 %v2020, %v2188
  %2190 = vmatmul.bf16.gmra.mxu0 %v1251
  %v2191 = vpop.f32.mrf.mxu0
  %v2192 = vadd.f32 %v2023, %v2191
  %v2193 = vpop.f32.mrf.mxu0
  %v2194 = vadd.f32 %v2025, %v2193
  %2195 = vmatmul.bf16.gmra.mxu0 %v1258
  %v2196 = vpop.f32.mrf.mxu0
  %v2197 = vadd.f32 %v2028, %v2196
  %v2198 = vpop.f32.mrf.mxu0
  %v2199 = vadd.f32 %v2030, %v2198
  %2200 = vmatmul.bf16.gmra.mxu0 %v1265
  %v2201 = vpop.f32.mrf.mxu0
  %v2202 = vadd.f32 %v2033, %v2201
  %v2203 = vpop.f32.mrf.mxu0
  %v2204 = vadd.f32 %v2035, %v2203
  %2205 = vmatmul.bf16.gmra.mxu0 %v1272
  %v2206 = vpop.f32.mrf.mxu0
  %v2207 = vadd.f32 %v2038, %v2206
  %v2208 = vpop.f32.mrf.mxu0
  %v2209 = vadd.f32 %v2040, %v2208
  %2210 = vmatmul.bf16.gmra.mxu0 %v1279
  %v2211 = vpop.f32.mrf.mxu0
  %v2212 = vadd.f32 %v2043, %v2211
  %v2213 = vpop.f32.mrf.mxu0
  %v2214 = vadd.f32 %v2045, %v2213
  %2215 = vmatmul.bf16.gmra.mxu0 %v1286
  %v2216 = vpop.f32.mrf.mxu0
  %v2217 = vadd.f32 %v2048, %v2216
  %v2218 = vpop.f32.mrf.mxu0
  %v2219 = vadd.f32 %v2050, %v2218
  %2220 = vmatmul.bf16.gmra.mxu0 %v1293
  %v2221 = vpop.f32.mrf.mxu0
  %v2222 = vadd.f32 %v2053, %v2221
  %v2223 = vpop.f32.mrf.mxu0
  %v2224 = vadd.f32 %v2055, %v2223
  %2225 = vdwg.mxu0
  %2226 = vmatpush.bf16.msra.mxu0 %v1714
  %2227 = vmatpush.bf16.msra.mxu0 %v1713
  %2228 = vmatpush.bf16.msra.mxu0 %v1712
  %2229 = vmatpush.bf16.msra.mxu0 %v1711
  %2230 = vmatpush.bf16.msra.mxu0 %v1710
  %2231 = vmatpush.bf16.msra.mxu0 %v1709
  %2232 = vmatpush.bf16.msra.mxu0 %v1708
  %2233 = vmatpush.bf16.msra.mxu0 %v1707
  %2234 = vmatmul.bf16.gmra.mxu0 %v1077
  %v2235 = vpop.f32.mrf.mxu0
  %v2236 = vadd.f32 %v2067, %v2235
  %v2237 = vpop.f32.mrf.mxu0
  %v2238 = vadd.f32 %v2069, %v2237
  %2239 = vmatmul.bf16.gmra.mxu0 %v1084
  %v2240 = vpop.f32.mrf.mxu0
  %v2241 = vadd.f32 %v2072, %v2240
  %v2242 = vpop.f32.mrf.mxu0
  %v2243 = vadd.f32 %v2074, %v2242
  %2244 = vmatmul.bf16.gmra.mxu0 %v1091
  %v2245 = vpop.f32.mrf.mxu0
  %v2246 = vadd.f32 %v2077, %v2245
  %v2247 = vpop.f32.mrf.mxu0
  %v2248 = vadd.f32 %v2079, %v2247
  %2249 = vmatmul.bf16.gmra.mxu0 %v1098
  %v2250 = vpop.f32.mrf.mxu0
  %v2251 = vadd.f32 %v2082, %v2250
  %v2252 = vpop.f32.mrf.mxu0
  %v2253 = vadd.f32 %v2084, %v2252
  %2254 = vmatmul.bf16.gmra.mxu0 %v1105
  %v2255 = vpop.f32.mrf.mxu0
  %v2256 = vadd.f32 %v2087, %v2255
  %v2257 = vpop.f32.mrf.mxu0
  %v2258 = vadd.f32 %v2089, %v2257
  %2259 = vmatmul.bf16.gmra.mxu0 %v1112
  %v2260 = vpop.f32.mrf.mxu0
  %v2261 = vadd.f32 %v2092, %v2260
  %v2262 = vpop.f32.mrf.mxu0
  %v2263 = vadd.f32 %v2094, %v2262
  %2264 = vmatmul.bf16.gmra.mxu0 %v1119
  %v2265 = vpop.f32.mrf.mxu0
  %v2266 = vadd.f32 %v2097, %v2265
  %v2267 = vpop.f32.mrf.mxu0
  %v2268 = vadd.f32 %v2099, %v2267
  %2269 = vmatmul.bf16.gmra.mxu0 %v1126
  %v2270 = vpop.f32.mrf.mxu0
  %v2271 = vadd.f32 %v2102, %v2270
  %v2272 = vpop.f32.mrf.mxu0
  %v2273 = vadd.f32 %v2104, %v2272
  %2274 = vmatmul.bf16.gmra.mxu0 %v1133
  %v2275 = vpop.f32.mrf.mxu0
  %v2276 = vadd.f32 %v2107, %v2275
  %v2277 = vpop.f32.mrf.mxu0
  %v2278 = vadd.f32 %v2109, %v2277
  %2279 = vmatmul.bf16.gmra.mxu0 %v1140
  %v2280 = vpop.f32.mrf.mxu0
  %v2281 = vadd.f32 %v2112, %v2280
  %v2282 = vpop.f32.mrf.mxu0
  %v2283 = vadd.f32 %v2114, %v2282
  %2284 = vmatmul.bf16.gmra.mxu0 %v1147
  %v2285 = vpop.f32.mrf.mxu0
  %v2286 = vadd.f32 %v2117, %v2285
  %v2287 = vpop.f32.mrf.mxu0
  %v2288 = vadd.f32 %v2119, %v2287
  %2289 = vmatmul.bf16.gmra.mxu0 %v1154
  %v2290 = vpop.f32.mrf.mxu0
  %v2291 = vadd.f32 %v2122, %v2290
  %v2292 = vpop.f32.mrf.mxu0
  %v2293 = vadd.f32 %v2124, %v2292
  %2294 = vmatmul.bf16.gmra.mxu0 %v1161
  %v2295 = vpop.f32.mrf.mxu0
  %v2296 = vadd.f32 %v2127, %v2295
  %v2297 = vpop.f32.mrf.mxu0
  %v2298 = vadd.f32 %v2129, %v2297
  %2299 = vmatmul.bf16.gmra.mxu0 %v1168
  %v2300 = vpop.f32.mrf.mxu0
  %v2301 = vadd.f32 %v2132, %v2300
  %v2302 = vpop.f32.mrf.mxu0
  %v2303 = vadd.f32 %v2134, %v2302
  %2304 = vmatmul.bf16.gmra.mxu0 %v1175
  %v2305 = vpop.f32.mrf.mxu0
  %v2306 = vadd.f32 %v2137, %v2305
  %v2307 = vpop.f32.mrf.mxu0
  %v2308 = vadd.f32 %v2139, %v2307
  %2309 = vmatmul.bf16.gmra.mxu0 %v1182
  %v2310 = vpop.f32.mrf.mxu0
  %v2311 = vadd.f32 %v2142, %v2310
  %v2312 = vpop.f32.mrf.mxu0
  %v2313 = vadd.f32 %v2144, %v2312
  %2314 = vmatmul.bf16.gmra.mxu0 %v1189
  %v2315 = vpop.f32.mrf.mxu0
  %v2316 = vadd.f32 %v2147, %v2315
  %v2317 = vpop.f32.mrf.mxu0
  %v2318 = vadd.f32 %v2149, %v2317
  %2319 = vmatmul.bf16.gmra.mxu0 %v1196
  %v2320 = vpop.f32.mrf.mxu0
  %v2321 = vadd.f32 %v2152, %v2320
  %v2322 = vpop.f32.mrf.mxu0
  %v2323 = vadd.f32 %v2154, %v2322
  %2324 = vmatmul.bf16.gmra.mxu0 %v1203
  %v2325 = vpop.f32.mrf.mxu0
  %v2326 = vadd.f32 %v2157, %v2325
  %v2327 = vpop.f32.mrf.mxu0
  %v2328 = vadd.f32 %v2159, %v2327
  %2329 = vmatmul.bf16.gmra.mxu0 %v1210
  %v2330 = vpop.f32.mrf.mxu0
  %v2331 = vadd.f32 %v2162, %v2330
  %v2332 = vpop.f32.mrf.mxu0
  %v2333 = vadd.f32 %v2164, %v2332
  %2334 = vmatmul.bf16.gmra.mxu0 %v1217
  %v2335 = vpop.f32.mrf.mxu0
  %v2336 = vadd.f32 %v2167, %v2335
  %v2337 = vpop.f32.mrf.mxu0
  %v2338 = vadd.f32 %v2169, %v2337
  %2339 = vmatmul.bf16.gmra.mxu0 %v1224
  %v2340 = vpop.f32.mrf.mxu0
  %v2341 = vadd.f32 %v2172, %v2340
  %v2342 = vpop.f32.mrf.mxu0
  %v2343 = vadd.f32 %v2174, %v2342
  %2344 = vmatmul.bf16.gmra.mxu0 %v1231
  %v2345 = vpop.f32.mrf.mxu0
  %v2346 = vadd.f32 %v2177, %v2345
  %v2347 = vpop.f32.mrf.mxu0
  %v2348 = vadd.f32 %v2179, %v2347
  %2349 = vmatmul.bf16.gmra.mxu0 %v1238
  %v2350 = vpop.f32.mrf.mxu0
  %v2351 = vadd.f32 %v2182, %v2350
  %v2352 = vpop.f32.mrf.mxu0
  %v2353 = vadd.f32 %v2184, %v2352
  %2354 = vmatmul.bf16.gmra.mxu0 %v1245
  %v2355 = vpop.f32.mrf.mxu0
  %v2356 = vadd.f32 %v2187, %v2355
  %v2357 = vpop.f32.mrf.mxu0
  %v2358 = vadd.f32 %v2189, %v2357
  %2359 = vmatmul.bf16.gmra.mxu0 %v1252
  %v2360 = vpop.f32.mrf.mxu0
  %v2361 = vadd.f32 %v2192, %v2360
  %v2362 = vpop.f32.mrf.mxu0
  %v2363 = vadd.f32 %v2194, %v2362
  %2364 = vmatmul.bf16.gmra.mxu0 %v1259
  %v2365 = vpop.f32.mrf.mxu0
  %v2366 = vadd.f32 %v2197, %v2365
  %v2367 = vpop.f32.mrf.mxu0
  %v2368 = vadd.f32 %v2199, %v2367
  %2369 = vmatmul.bf16.gmra.mxu0 %v1266
  %v2370 = vpop.f32.mrf.mxu0
  %v2371 = vadd.f32 %v2202, %v2370
  %v2372 = vpop.f32.mrf.mxu0
  %v2373 = vadd.f32 %v2204, %v2372
  %2374 = vmatmul.bf16.gmra.mxu0 %v1273
  %v2375 = vpop.f32.mrf.mxu0
  %v2376 = vadd.f32 %v2207, %v2375
  %v2377 = vpop.f32.mrf.mxu0
  %v2378 = vadd.f32 %v2209, %v2377
  %2379 = vmatmul.bf16.gmra.mxu0 %v1280
  %v2380 = vpop.f32.mrf.mxu0
  %v2381 = vadd.f32 %v2212, %v2380
  %v2382 = vpop.f32.mrf.mxu0
  %v2383 = vadd.f32 %v2214, %v2382
  %2384 = vmatmul.bf16.gmra.mxu0 %v1287
  %v2385 = vpop.f32.mrf.mxu0
  %v2386 = vadd.f32 %v2217, %v2385
  %v2387 = vpop.f32.mrf.mxu0
  %v2388 = vadd.f32 %v2219, %v2387
  %2389 = vmatmul.bf16.gmra.mxu0 %v1294
  %v2390 = vpop.f32.mrf.mxu0
  %v2391 = vadd.f32 %v2222, %v2390
  %v2392 = vpop.f32.mrf.mxu0
  %v2393 = vadd.f32 %v2224, %v2392
  %2394 = vdwg.mxu0
  %2395 = vmatpush.bf16.msra.mxu0 %v1722
  %2396 = vmatpush.bf16.msra.mxu0 %v1721
  %2397 = vmatpush.bf16.msra.mxu0 %v1720
  %2398 = vmatpush.bf16.msra.mxu0 %v1719
  %2399 = vmatpush.bf16.msra.mxu0 %v1718
  %2400 = vmatpush.bf16.msra.mxu0 %v1717
  %2401 = vmatpush.bf16.msra.mxu0 %v1716
  %2402 = vmatpush.bf16.msra.mxu0 %v1715
  %2403 = vmatmul.bf16.gmra.mxu0 %v1078
  %v2404 = vpop.f32.mrf.mxu0
  %v2405 = vadd.f32 %v2236, %v2404
  %v2406 = vpop.f32.mrf.mxu0
  %v2407 = vadd.f32 %v2238, %v2406
  %2408 = vmatmul.bf16.gmra.mxu0 %v1085
  %v2409 = vpop.f32.mrf.mxu0
  %v2410 = vadd.f32 %v2241, %v2409
  %v2411 = vpop.f32.mrf.mxu0
  %v2412 = vadd.f32 %v2243, %v2411
  %2413 = vmatmul.bf16.gmra.mxu0 %v1092
  %v2414 = vpop.f32.mrf.mxu0
  %v2415 = vadd.f32 %v2246, %v2414
  %v2416 = vpop.f32.mrf.mxu0
  %v2417 = vadd.f32 %v2248, %v2416
  %2418 = vmatmul.bf16.gmra.mxu0 %v1099
  %v2419 = vpop.f32.mrf.mxu0
  %v2420 = vadd.f32 %v2251, %v2419
  %v2421 = vpop.f32.mrf.mxu0
  %v2422 = vadd.f32 %v2253, %v2421
  %2423 = vmatmul.bf16.gmra.mxu0 %v1106
  %v2424 = vpop.f32.mrf.mxu0
  %v2425 = vadd.f32 %v2256, %v2424
  %v2426 = vpop.f32.mrf.mxu0
  %v2427 = vadd.f32 %v2258, %v2426
  %2428 = vmatmul.bf16.gmra.mxu0 %v1113
  %v2429 = vpop.f32.mrf.mxu0
  %v2430 = vadd.f32 %v2261, %v2429
  %v2431 = vpop.f32.mrf.mxu0
  %v2432 = vadd.f32 %v2263, %v2431
  %2433 = vmatmul.bf16.gmra.mxu0 %v1120
  %v2434 = vpop.f32.mrf.mxu0
  %v2435 = vadd.f32 %v2266, %v2434
  %v2436 = vpop.f32.mrf.mxu0
  %v2437 = vadd.f32 %v2268, %v2436
  %2438 = vmatmul.bf16.gmra.mxu0 %v1127
  %v2439 = vpop.f32.mrf.mxu0
  %v2440 = vadd.f32 %v2271, %v2439
  %v2441 = vpop.f32.mrf.mxu0
  %v2442 = vadd.f32 %v2273, %v2441
  %2443 = vmatmul.bf16.gmra.mxu0 %v1134
  %v2444 = vpop.f32.mrf.mxu0
  %v2445 = vadd.f32 %v2276, %v2444
  %v2446 = vpop.f32.mrf.mxu0
  %v2447 = vadd.f32 %v2278, %v2446
  %2448 = vmatmul.bf16.gmra.mxu0 %v1141
  %v2449 = vpop.f32.mrf.mxu0
  %v2450 = vadd.f32 %v2281, %v2449
  %v2451 = vpop.f32.mrf.mxu0
  %v2452 = vadd.f32 %v2283, %v2451
  %2453 = vmatmul.bf16.gmra.mxu0 %v1148
  %v2454 = vpop.f32.mrf.mxu0
  %v2455 = vadd.f32 %v2286, %v2454
  %v2456 = vpop.f32.mrf.mxu0
  %v2457 = vadd.f32 %v2288, %v2456
  %2458 = vmatmul.bf16.gmra.mxu0 %v1155
  %v2459 = vpop.f32.mrf.mxu0
  %v2460 = vadd.f32 %v2291, %v2459
  %v2461 = vpop.f32.mrf.mxu0
  %v2462 = vadd.f32 %v2293, %v2461
  %2463 = vmatmul.bf16.gmra.mxu0 %v1162
  %v2464 = vpop.f32.mrf.mxu0
  %v2465 = vadd.f32 %v2296, %v2464
  %v2466 = vpop.f32.mrf.mxu0
  %v2467 = vadd.f32 %v2298, %v2466
  %2468 = vmatmul.bf16.gmra.mxu0 %v1169
  %v2469 = vpop.f32.mrf.mxu0
  %v2470 = vadd.f32 %v2301, %v2469
  %v2471 = vpop.f32.mrf.mxu0
  %v2472 = vadd.f32 %v2303, %v2471
  %2473 = vmatmul.bf16.gmra.mxu0 %v1176
  %v2474 = vpop.f32.mrf.mxu0
  %v2475 = vadd.f32 %v2306, %v2474
  %v2476 = vpop.f32.mrf.mxu0
  %v2477 = vadd.f32 %v2308, %v2476
  %2478 = vmatmul.bf16.gmra.mxu0 %v1183
  %v2479 = vpop.f32.mrf.mxu0
  %v2480 = vadd.f32 %v2311, %v2479
  %v2481 = vpop.f32.mrf.mxu0
  %v2482 = vadd.f32 %v2313, %v2481
  %2483 = vmatmul.bf16.gmra.mxu0 %v1190
  %v2484 = vpop.f32.mrf.mxu0
  %v2485 = vadd.f32 %v2316, %v2484
  %v2486 = vpop.f32.mrf.mxu0
  %v2487 = vadd.f32 %v2318, %v2486
  %2488 = vmatmul.bf16.gmra.mxu0 %v1197
  %v2489 = vpop.f32.mrf.mxu0
  %v2490 = vadd.f32 %v2321, %v2489
  %v2491 = vpop.f32.mrf.mxu0
  %v2492 = vadd.f32 %v2323, %v2491
  %2493 = vmatmul.bf16.gmra.mxu0 %v1204
  %v2494 = vpop.f32.mrf.mxu0
  %v2495 = vadd.f32 %v2326, %v2494
  %v2496 = vpop.f32.mrf.mxu0
  %v2497 = vadd.f32 %v2328, %v2496
  %2498 = vmatmul.bf16.gmra.mxu0 %v1211
  %v2499 = vpop.f32.mrf.mxu0
  %v2500 = vadd.f32 %v2331, %v2499
  %v2501 = vpop.f32.mrf.mxu0
  %v2502 = vadd.f32 %v2333, %v2501
  %2503 = vmatmul.bf16.gmra.mxu0 %v1218
  %v2504 = vpop.f32.mrf.mxu0
  %v2505 = vadd.f32 %v2336, %v2504
  %v2506 = vpop.f32.mrf.mxu0
  %v2507 = vadd.f32 %v2338, %v2506
  %2508 = vmatmul.bf16.gmra.mxu0 %v1225
  %v2509 = vpop.f32.mrf.mxu0
  %v2510 = vadd.f32 %v2341, %v2509
  %v2511 = vpop.f32.mrf.mxu0
  %v2512 = vadd.f32 %v2343, %v2511
  %2513 = vmatmul.bf16.gmra.mxu0 %v1232
  %v2514 = vpop.f32.mrf.mxu0
  %v2515 = vadd.f32 %v2346, %v2514
  %v2516 = vpop.f32.mrf.mxu0
  %v2517 = vadd.f32 %v2348, %v2516
  %2518 = vmatmul.bf16.gmra.mxu0 %v1239
  %v2519 = vpop.f32.mrf.mxu0
  %v2520 = vadd.f32 %v2351, %v2519
  %v2521 = vpop.f32.mrf.mxu0
  %v2522 = vadd.f32 %v2353, %v2521
  %2523 = vmatmul.bf16.gmra.mxu0 %v1246
  %v2524 = vpop.f32.mrf.mxu0
  %v2525 = vadd.f32 %v2356, %v2524
  %v2526 = vpop.f32.mrf.mxu0
  %v2527 = vadd.f32 %v2358, %v2526
  %2528 = vmatmul.bf16.gmra.mxu0 %v1253
  %v2529 = vpop.f32.mrf.mxu0
  %v2530 = vadd.f32 %v2361, %v2529
  %v2531 = vpop.f32.mrf.mxu0
  %v2532 = vadd.f32 %v2363, %v2531
  %2533 = vmatmul.bf16.gmra.mxu0 %v1260
  %v2534 = vpop.f32.mrf.mxu0
  %v2535 = vadd.f32 %v2366, %v2534
  %v2536 = vpop.f32.mrf.mxu0
  %v2537 = vadd.f32 %v2368, %v2536
  %2538 = vmatmul.bf16.gmra.mxu0 %v1267
  %v2539 = vpop.f32.mrf.mxu0
  %v2540 = vadd.f32 %v2371, %v2539
  %v2541 = vpop.f32.mrf.mxu0
  %v2542 = vadd.f32 %v2373, %v2541
  %2543 = vmatmul.bf16.gmra.mxu0 %v1274
  %v2544 = vpop.f32.mrf.mxu0
  %v2545 = vadd.f32 %v2376, %v2544
  %v2546 = vpop.f32.mrf.mxu0
  %v2547 = vadd.f32 %v2378, %v2546
  %2548 = vmatmul.bf16.gmra.mxu0 %v1281
  %v2549 = vpop.f32.mrf.mxu0
  %v2550 = vadd.f32 %v2381, %v2549
  %v2551 = vpop.f32.mrf.mxu0
  %v2552 = vadd.f32 %v2383, %v2551
  %2553 = vmatmul.bf16.gmra.mxu0 %v1288
  %v2554 = vpop.f32.mrf.mxu0
  %v2555 = vadd.f32 %v2386, %v2554
  %v2556 = vpop.f32.mrf.mxu0
  %v2557 = vadd.f32 %v2388, %v2556
  %2558 = vmatmul.bf16.gmra.mxu0 %v1295
  %v2559 = vpop.f32.mrf.mxu0
  %v2560 = vadd.f32 %v2391, %v2559
  %v2561 = vpop.f32.mrf.mxu0
  %v2562 = vadd.f32 %v2393, %v2561
  %2563 = vdwg.mxu0
  %2564 = vmatpush.bf16.msra.mxu0 %v1730
  %2565 = vmatpush.bf16.msra.mxu0 %v1729
  %2566 = vmatpush.bf16.msra.mxu0 %v1728
  %2567 = vmatpush.bf16.msra.mxu0 %v1727
  %2568 = vmatpush.bf16.msra.mxu0 %v1726
  %2569 = vmatpush.bf16.msra.mxu0 %v1725
  %2570 = vmatpush.bf16.msra.mxu0 %v1724
  %2571 = vmatpush.bf16.msra.mxu0 %v1723
  %2572 = vmatmul.bf16.gmra.mxu0 %v1079
  %v2573 = vpop.f32.mrf.mxu0
  %v2574 = vadd.f32 %v2405, %v2573
  %v2575 = vpop.f32.mrf.mxu0
  %v2576 = vadd.f32 %v2407, %v2575
  %2577 = vmatmul.bf16.gmra.mxu0 %v1086
  %v2578 = vpop.f32.mrf.mxu0
  %v2579 = vadd.f32 %v2410, %v2578
  %v2580 = vpop.f32.mrf.mxu0
  %v2581 = vadd.f32 %v2412, %v2580
  %2582 = vmatmul.bf16.gmra.mxu0 %v1093
  %v2583 = vpop.f32.mrf.mxu0
  %v2584 = vadd.f32 %v2415, %v2583
  %v2585 = vpop.f32.mrf.mxu0
  %v2586 = vadd.f32 %v2417, %v2585
  %2587 = vmatmul.bf16.gmra.mxu0 %v1100
  %v2588 = vpop.f32.mrf.mxu0
  %v2589 = vadd.f32 %v2420, %v2588
  %v2590 = vpop.f32.mrf.mxu0
  %v2591 = vadd.f32 %v2422, %v2590
  %2592 = vmatmul.bf16.gmra.mxu0 %v1107
  %v2593 = vpop.f32.mrf.mxu0
  %v2594 = vadd.f32 %v2425, %v2593
  %v2595 = vpop.f32.mrf.mxu0
  %v2596 = vadd.f32 %v2427, %v2595
  %2597 = vmatmul.bf16.gmra.mxu0 %v1114
  %v2598 = vpop.f32.mrf.mxu0
  %v2599 = vadd.f32 %v2430, %v2598
  %v2600 = vpop.f32.mrf.mxu0
  %v2601 = vadd.f32 %v2432, %v2600
  %2602 = vmatmul.bf16.gmra.mxu0 %v1121
  %v2603 = vpop.f32.mrf.mxu0
  %v2604 = vadd.f32 %v2435, %v2603
  %v2605 = vpop.f32.mrf.mxu0
  %v2606 = vadd.f32 %v2437, %v2605
  %2607 = vmatmul.bf16.gmra.mxu0 %v1128
  %v2608 = vpop.f32.mrf.mxu0
  %v2609 = vadd.f32 %v2440, %v2608
  %v2610 = vpop.f32.mrf.mxu0
  %v2611 = vadd.f32 %v2442, %v2610
  %2612 = vmatmul.bf16.gmra.mxu0 %v1135
  %v2613 = vpop.f32.mrf.mxu0
  %v2614 = vadd.f32 %v2445, %v2613
  %v2615 = vpop.f32.mrf.mxu0
  %v2616 = vadd.f32 %v2447, %v2615
  %2617 = vmatmul.bf16.gmra.mxu0 %v1142
  %v2618 = vpop.f32.mrf.mxu0
  %v2619 = vadd.f32 %v2450, %v2618
  %v2620 = vpop.f32.mrf.mxu0
  %v2621 = vadd.f32 %v2452, %v2620
  %2622 = vmatmul.bf16.gmra.mxu0 %v1149
  %v2623 = vpop.f32.mrf.mxu0
  %v2624 = vadd.f32 %v2455, %v2623
  %v2625 = vpop.f32.mrf.mxu0
  %v2626 = vadd.f32 %v2457, %v2625
  %2627 = vmatmul.bf16.gmra.mxu0 %v1156
  %v2628 = vpop.f32.mrf.mxu0
  %v2629 = vadd.f32 %v2460, %v2628
  %v2630 = vpop.f32.mrf.mxu0
  %v2631 = vadd.f32 %v2462, %v2630
  %2632 = vmatmul.bf16.gmra.mxu0 %v1163
  %v2633 = vpop.f32.mrf.mxu0
  %v2634 = vadd.f32 %v2465, %v2633
  %v2635 = vpop.f32.mrf.mxu0
  %v2636 = vadd.f32 %v2467, %v2635
  %2637 = vmatmul.bf16.gmra.mxu0 %v1170
  %v2638 = vpop.f32.mrf.mxu0
  %v2639 = vadd.f32 %v2470, %v2638
  %v2640 = vpop.f32.mrf.mxu0
  %v2641 = vadd.f32 %v2472, %v2640
  %2642 = vmatmul.bf16.gmra.mxu0 %v1177
  %v2643 = vpop.f32.mrf.mxu0
  %v2644 = vadd.f32 %v2475, %v2643
  %v2645 = vpop.f32.mrf.mxu0
  %v2646 = vadd.f32 %v2477, %v2645
  %2647 = vmatmul.bf16.gmra.mxu0 %v1184
  %v2648 = vpop.f32.mrf.mxu0
  %v2649 = vadd.f32 %v2480, %v2648
  %v2650 = vpop.f32.mrf.mxu0
  %v2651 = vadd.f32 %v2482, %v2650
  %2652 = vmatmul.bf16.gmra.mxu0 %v1191
  %v2653 = vpop.f32.mrf.mxu0
  %v2654 = vadd.f32 %v2485, %v2653
  %v2655 = vpop.f32.mrf.mxu0
  %v2656 = vadd.f32 %v2487, %v2655
  %2657 = vmatmul.bf16.gmra.mxu0 %v1198
  %v2658 = vpop.f32.mrf.mxu0
  %v2659 = vadd.f32 %v2490, %v2658
  %v2660 = vpop.f32.mrf.mxu0
  %v2661 = vadd.f32 %v2492, %v2660
  %2662 = vmatmul.bf16.gmra.mxu0 %v1205
  %v2663 = vpop.f32.mrf.mxu0
  %v2664 = vadd.f32 %v2495, %v2663
  %v2665 = vpop.f32.mrf.mxu0
  %v2666 = vadd.f32 %v2497, %v2665
  %2667 = vmatmul.bf16.gmra.mxu0 %v1212
  %v2668 = vpop.f32.mrf.mxu0
  %v2669 = vadd.f32 %v2500, %v2668
  %v2670 = vpop.f32.mrf.mxu0
  %v2671 = vadd.f32 %v2502, %v2670
  %2672 = vmatmul.bf16.gmra.mxu0 %v1219
  %v2673 = vpop.f32.mrf.mxu0
  %v2674 = vadd.f32 %v2505, %v2673
  %v2675 = vpop.f32.mrf.mxu0
  %v2676 = vadd.f32 %v2507, %v2675
  %2677 = vmatmul.bf16.gmra.mxu0 %v1226
  %v2678 = vpop.f32.mrf.mxu0
  %v2679 = vadd.f32 %v2510, %v2678
  %v2680 = vpop.f32.mrf.mxu0
  %v2681 = vadd.f32 %v2512, %v2680
  %2682 = vmatmul.bf16.gmra.mxu0 %v1233
  %v2683 = vpop.f32.mrf.mxu0
  %v2684 = vadd.f32 %v2515, %v2683
  %v2685 = vpop.f32.mrf.mxu0
  %v2686 = vadd.f32 %v2517, %v2685
  %2687 = vmatmul.bf16.gmra.mxu0 %v1240
  %v2688 = vpop.f32.mrf.mxu0
  %v2689 = vadd.f32 %v2520, %v2688
  %v2690 = vpop.f32.mrf.mxu0
  %v2691 = vadd.f32 %v2522, %v2690
  %2692 = vmatmul.bf16.gmra.mxu0 %v1247
  %v2693 = vpop.f32.mrf.mxu0
  %v2694 = vadd.f32 %v2525, %v2693
  %v2695 = vpop.f32.mrf.mxu0
  %v2696 = vadd.f32 %v2527, %v2695
  %2697 = vmatmul.bf16.gmra.mxu0 %v1254
  %v2698 = vpop.f32.mrf.mxu0
  %v2699 = vadd.f32 %v2530, %v2698
  %v2700 = vpop.f32.mrf.mxu0
  %v2701 = vadd.f32 %v2532, %v2700
  %2702 = vmatmul.bf16.gmra.mxu0 %v1261
  %v2703 = vpop.f32.mrf.mxu0
  %v2704 = vadd.f32 %v2535, %v2703
  %v2705 = vpop.f32.mrf.mxu0
  %v2706 = vadd.f32 %v2537, %v2705
  %2707 = vmatmul.bf16.gmra.mxu0 %v1268
  %v2708 = vpop.f32.mrf.mxu0
  %v2709 = vadd.f32 %v2540, %v2708
  %v2710 = vpop.f32.mrf.mxu0
  %v2711 = vadd.f32 %v2542, %v2710
  %2712 = vmatmul.bf16.gmra.mxu0 %v1275
  %v2713 = vpop.f32.mrf.mxu0
  %v2714 = vadd.f32 %v2545, %v2713
  %v2715 = vpop.f32.mrf.mxu0
  %v2716 = vadd.f32 %v2547, %v2715
  %2717 = vmatmul.bf16.gmra.mxu0 %v1282
  %v2718 = vpop.f32.mrf.mxu0
  %v2719 = vadd.f32 %v2550, %v2718
  %v2720 = vpop.f32.mrf.mxu0
  %v2721 = vadd.f32 %v2552, %v2720
  %2722 = vmatmul.bf16.gmra.mxu0 %v1289
  %v2723 = vpop.f32.mrf.mxu0
  %v2724 = vadd.f32 %v2555, %v2723
  %v2725 = vpop.f32.mrf.mxu0
  %v2726 = vadd.f32 %v2557, %v2725
  %2727 = vmatmul.bf16.gmra.mxu0 %v1296
  %v2728 = vpop.f32.mrf.mxu0
  %v2729 = vadd.f32 %v2560, %v2728
  %v2730 = vpop.f32.mrf.mxu0
  %v2731 = vadd.f32 %v2562, %v2730
  %2732 = vdwg.mxu0
  %2733 = vmatpush.bf16.msra.mxu0 %v1738
  %2734 = vmatpush.bf16.msra.mxu0 %v1737
  %2735 = vmatpush.bf16.msra.mxu0 %v1736
  %2736 = vmatpush.bf16.msra.mxu0 %v1735
  %2737 = vmatpush.bf16.msra.mxu0 %v1734
  %2738 = vmatpush.bf16.msra.mxu0 %v1733
  %2739 = vmatpush.bf16.msra.mxu0 %v1732
  %2740 = vmatpush.bf16.msra.mxu0 %v1731
  %2741 = vmatmul.bf16.gmra.mxu0 %v1080
  %v2742 = vpop.f32.mrf.mxu0
  %v2743 = vadd.f32 %v2574, %v2742
  %v2744 = vpop.f32.mrf.mxu0
  %v2745 = vadd.f32 %v2576, %v2744
  %2746 = vmatmul.bf16.gmra.mxu0 %v1087
  %v2747 = vpop.f32.mrf.mxu0
  %v2748 = vadd.f32 %v2579, %v2747
  %v2749 = vpop.f32.mrf.mxu0
  %v2750 = vadd.f32 %v2581, %v2749
  %2751 = vmatmul.bf16.gmra.mxu0 %v1094
  %v2752 = vpop.f32.mrf.mxu0
  %v2753 = vadd.f32 %v2584, %v2752
  %v2754 = vpop.f32.mrf.mxu0
  %v2755 = vadd.f32 %v2586, %v2754
  %2756 = vmatmul.bf16.gmra.mxu0 %v1101
  %v2757 = vpop.f32.mrf.mxu0
  %v2758 = vadd.f32 %v2589, %v2757
  %v2759 = vpop.f32.mrf.mxu0
  %v2760 = vadd.f32 %v2591, %v2759
  %2761 = vmatmul.bf16.gmra.mxu0 %v1108
  %v2762 = vpop.f32.mrf.mxu0
  %v2763 = vadd.f32 %v2594, %v2762
  %v2764 = vpop.f32.mrf.mxu0
  %v2765 = vadd.f32 %v2596, %v2764
  %2766 = vmatmul.bf16.gmra.mxu0 %v1115
  %v2767 = vpop.f32.mrf.mxu0
  %v2768 = vadd.f32 %v2599, %v2767
  %v2769 = vpop.f32.mrf.mxu0
  %v2770 = vadd.f32 %v2601, %v2769
  %2771 = vmatmul.bf16.gmra.mxu0 %v1122
  %v2772 = vpop.f32.mrf.mxu0
  %v2773 = vadd.f32 %v2604, %v2772
  %v2774 = vpop.f32.mrf.mxu0
  %v2775 = vadd.f32 %v2606, %v2774
  %2776 = vmatmul.bf16.gmra.mxu0 %v1129
  %v2777 = vpop.f32.mrf.mxu0
  %v2778 = vadd.f32 %v2609, %v2777
  %v2779 = vpop.f32.mrf.mxu0
  %v2780 = vadd.f32 %v2611, %v2779
  %2781 = vmatmul.bf16.gmra.mxu0 %v1136
  %v2782 = vpop.f32.mrf.mxu0
  %v2783 = vadd.f32 %v2614, %v2782
  %v2784 = vpop.f32.mrf.mxu0
  %v2785 = vadd.f32 %v2616, %v2784
  %2786 = vmatmul.bf16.gmra.mxu0 %v1143
  %v2787 = vpop.f32.mrf.mxu0
  %v2788 = vadd.f32 %v2619, %v2787
  %v2789 = vpop.f32.mrf.mxu0
  %v2790 = vadd.f32 %v2621, %v2789
  %2791 = vmatmul.bf16.gmra.mxu0 %v1150
  %v2792 = vpop.f32.mrf.mxu0
  %v2793 = vadd.f32 %v2624, %v2792
  %v2794 = vpop.f32.mrf.mxu0
  %v2795 = vadd.f32 %v2626, %v2794
  %2796 = vmatmul.bf16.gmra.mxu0 %v1157
  %v2797 = vpop.f32.mrf.mxu0
  %v2798 = vadd.f32 %v2629, %v2797
  %v2799 = vpop.f32.mrf.mxu0
  %v2800 = vadd.f32 %v2631, %v2799
  %2801 = vmatmul.bf16.gmra.mxu0 %v1164
  %v2802 = vpop.f32.mrf.mxu0
  %v2803 = vadd.f32 %v2634, %v2802
  %v2804 = vpop.f32.mrf.mxu0
  %v2805 = vadd.f32 %v2636, %v2804
  %2806 = vmatmul.bf16.gmra.mxu0 %v1171
  %v2807 = vpop.f32.mrf.mxu0
  %v2808 = vadd.f32 %v2639, %v2807
  %v2809 = vpop.f32.mrf.mxu0
  %v2810 = vadd.f32 %v2641, %v2809
  %2811 = vmatmul.bf16.gmra.mxu0 %v1178
  %v2812 = vpop.f32.mrf.mxu0
  %v2813 = vadd.f32 %v2644, %v2812
  %v2814 = vpop.f32.mrf.mxu0
  %v2815 = vadd.f32 %v2646, %v2814
  %2816 = vmatmul.bf16.gmra.mxu0 %v1185
  %v2817 = vpop.f32.mrf.mxu0
  %v2818 = vadd.f32 %v2649, %v2817
  %v2819 = vpop.f32.mrf.mxu0
  %v2820 = vadd.f32 %v2651, %v2819
  %2821 = vmatmul.bf16.gmra.mxu0 %v1192
  %v2822 = vpop.f32.mrf.mxu0
  %v2823 = vadd.f32 %v2654, %v2822
  %v2824 = vpop.f32.mrf.mxu0
  %v2825 = vadd.f32 %v2656, %v2824
  %2826 = vmatmul.bf16.gmra.mxu0 %v1199
  %v2827 = vpop.f32.mrf.mxu0
  %v2828 = vadd.f32 %v2659, %v2827
  %v2829 = vpop.f32.mrf.mxu0
  %v2830 = vadd.f32 %v2661, %v2829
  %2831 = vmatmul.bf16.gmra.mxu0 %v1206
  %v2832 = vpop.f32.mrf.mxu0
  %v2833 = vadd.f32 %v2664, %v2832
  %v2834 = vpop.f32.mrf.mxu0
  %v2835 = vadd.f32 %v2666, %v2834
  %2836 = vmatmul.bf16.gmra.mxu0 %v1213
  %v2837 = vpop.f32.mrf.mxu0
  %v2838 = vadd.f32 %v2669, %v2837
  %v2839 = vpop.f32.mrf.mxu0
  %v2840 = vadd.f32 %v2671, %v2839
  %2841 = vmatmul.bf16.gmra.mxu0 %v1220
  %v2842 = vpop.f32.mrf.mxu0
  %v2843 = vadd.f32 %v2674, %v2842
  %v2844 = vpop.f32.mrf.mxu0
  %v2845 = vadd.f32 %v2676, %v2844
  %2846 = vmatmul.bf16.gmra.mxu0 %v1227
  %v2847 = vpop.f32.mrf.mxu0
  %v2848 = vadd.f32 %v2679, %v2847
  %v2849 = vpop.f32.mrf.mxu0
  %v2850 = vadd.f32 %v2681, %v2849
  %2851 = vmatmul.bf16.gmra.mxu0 %v1234
  %v2852 = vpop.f32.mrf.mxu0
  %v2853 = vadd.f32 %v2684, %v2852
  %v2854 = vpop.f32.mrf.mxu0
  %v2855 = vadd.f32 %v2686, %v2854
  %2856 = vmatmul.bf16.gmra.mxu0 %v1241
  %v2857 = vpop.f32.mrf.mxu0
  %v2858 = vadd.f32 %v2689, %v2857
  %v2859 = vpop.f32.mrf.mxu0
  %v2860 = vadd.f32 %v2691, %v2859
  %2861 = vmatmul.bf16.gmra.mxu0 %v1248
  %v2862 = vpop.f32.mrf.mxu0
  %v2863 = vadd.f32 %v2694, %v2862
  %v2864 = vpop.f32.mrf.mxu0
  %v2865 = vadd.f32 %v2696, %v2864
  %2866 = vmatmul.bf16.gmra.mxu0 %v1255
  %v2867 = vpop.f32.mrf.mxu0
  %v2868 = vadd.f32 %v2699, %v2867
  %v2869 = vpop.f32.mrf.mxu0
  %v2870 = vadd.f32 %v2701, %v2869
  %2871 = vmatmul.bf16.gmra.mxu0 %v1262
  %v2872 = vpop.f32.mrf.mxu0
  %v2873 = vadd.f32 %v2704, %v2872
  %v2874 = vpop.f32.mrf.mxu0
  %v2875 = vadd.f32 %v2706, %v2874
  %2876 = vmatmul.bf16.gmra.mxu0 %v1269
  %v2877 = vpop.f32.mrf.mxu0
  %v2878 = vadd.f32 %v2709, %v2877
  %v2879 = vpop.f32.mrf.mxu0
  %v2880 = vadd.f32 %v2711, %v2879
  %2881 = vmatmul.bf16.gmra.mxu0 %v1276
  %v2882 = vpop.f32.mrf.mxu0
  %v2883 = vadd.f32 %v2714, %v2882
  %v2884 = vpop.f32.mrf.mxu0
  %v2885 = vadd.f32 %v2716, %v2884
  %2886 = vmatmul.bf16.gmra.mxu0 %v1283
  %v2887 = vpop.f32.mrf.mxu0
  %v2888 = vadd.f32 %v2719, %v2887
  %v2889 = vpop.f32.mrf.mxu0
  %v2890 = vadd.f32 %v2721, %v2889
  %2891 = vmatmul.bf16.gmra.mxu0 %v1290
  %v2892 = vpop.f32.mrf.mxu0
  %v2893 = vadd.f32 %v2724, %v2892
  %v2894 = vpop.f32.mrf.mxu0
  %v2895 = vadd.f32 %v2726, %v2894
  %2896 = vmatmul.bf16.gmra.mxu0 %v1297
  %v2897 = vpop.f32.mrf.mxu0
  %v2898 = vadd.f32 %v2729, %v2897
  %v2899 = vpop.f32.mrf.mxu0
  %v2900 = vadd.f32 %v2731, %v2899
  %2901 = vdwg.mxu0
  %2902 = vmatpush.bf16.msra.mxu0 0
  %2903 = vmatpush.bf16.msra.mxu0 0
  %2904 = vmatpush.bf16.msra.mxu0 0
  %2905 = vmatpush.bf16.msra.mxu0 0
  %2906 = vmatpush.bf16.msra.mxu0 0
  %2907 = vmatpush.bf16.msra.mxu0 0
  %2908 = vmatpush.bf16.msra.mxu0 %v1740
  %2909 = vmatpush.bf16.msra.mxu0 %v1739
  %2910 = vmatmul.bf16.gmra.mxu0 %v1793
  %v2911 = vpop.f32.mrf.mxu0
  %v2912 = vadd.f32 %v2743, %v2911
  %v2913 = vpop.f32.mrf.mxu0
  %v2914 = vadd.f32 %v2745, %v2913
  %2915 = vmatmul.bf16.gmra.mxu0 %v1796
  %v2916 = vpop.f32.mrf.mxu0
  %v2917 = vadd.f32 %v2748, %v2916
  %v2918 = vpop.f32.mrf.mxu0
  %v2919 = vadd.f32 %v2750, %v2918
  %2920 = vmatmul.bf16.gmra.mxu0 %v1799
  %v2921 = vpop.f32.mrf.mxu0
  %v2922 = vadd.f32 %v2753, %v2921
  %v2923 = vpop.f32.mrf.mxu0
  %v2924 = vadd.f32 %v2755, %v2923
  %2925 = vmatmul.bf16.gmra.mxu0 %v1802
  %v2926 = vpop.f32.mrf.mxu0
  %v2927 = vadd.f32 %v2758, %v2926
  %v2928 = vpop.f32.mrf.mxu0
  %v2929 = vadd.f32 %v2760, %v2928
  %2930 = vmatmul.bf16.gmra.mxu0 %v1805
  %v2931 = vpop.f32.mrf.mxu0
  %v2932 = vadd.f32 %v2763, %v2931
  %v2933 = vpop.f32.mrf.mxu0
  %v2934 = vadd.f32 %v2765, %v2933
  %2935 = vmatmul.bf16.gmra.mxu0 %v1808
  %v2936 = vpop.f32.mrf.mxu0
  %v2937 = vadd.f32 %v2768, %v2936
  %v2938 = vpop.f32.mrf.mxu0
  %v2939 = vadd.f32 %v2770, %v2938
  %2940 = vmatmul.bf16.gmra.mxu0 %v1811
  %v2941 = vpop.f32.mrf.mxu0
  %v2942 = vadd.f32 %v2773, %v2941
  %v2943 = vpop.f32.mrf.mxu0
  %v2944 = vadd.f32 %v2775, %v2943
  %2945 = vmatmul.bf16.gmra.mxu0 %v1814
  %v2946 = vpop.f32.mrf.mxu0
  %v2947 = vadd.f32 %v2778, %v2946
  %v2948 = vpop.f32.mrf.mxu0
  %v2949 = vadd.f32 %v2780, %v2948
  %2950 = vmatmul.bf16.gmra.mxu0 %v1817
  %v2951 = vpop.f32.mrf.mxu0
  %v2952 = vadd.f32 %v2783, %v2951
  %v2953 = vpop.f32.mrf.mxu0
  %v2954 = vadd.f32 %v2785, %v2953
  %2955 = vmatmul.bf16.gmra.mxu0 %v1820
  %v2956 = vpop.f32.mrf.mxu0
  %v2957 = vadd.f32 %v2788, %v2956
  %v2958 = vpop.f32.mrf.mxu0
  %v2959 = vadd.f32 %v2790, %v2958
  %2960 = vmatmul.bf16.gmra.mxu0 %v1823
  %v2961 = vpop.f32.mrf.mxu0
  %v2962 = vadd.f32 %v2793, %v2961
  %v2963 = vpop.f32.mrf.mxu0
  %v2964 = vadd.f32 %v2795, %v2963
  %2965 = vmatmul.bf16.gmra.mxu0 %v1826
  %v2966 = vpop.f32.mrf.mxu0
  %v2967 = vadd.f32 %v2798, %v2966
  %v2968 = vpop.f32.mrf.mxu0
  %v2969 = vadd.f32 %v2800, %v2968
  %2970 = vmatmul.bf16.gmra.mxu0 %v1829
  %v2971 = vpop.f32.mrf.mxu0
  %v2972 = vadd.f32 %v2803, %v2971
  %v2973 = vpop.f32.mrf.mxu0
  %v2974 = vadd.f32 %v2805, %v2973
  %2975 = vmatmul.bf16.gmra.mxu0 %v1832
  %v2976 = vpop.f32.mrf.mxu0
  %v2977 = vadd.f32 %v2808, %v2976
  %v2978 = vpop.f32.mrf.mxu0
  %v2979 = vadd.f32 %v2810, %v2978
  %2980 = vmatmul.bf16.gmra.mxu0 %v1835
  %v2981 = vpop.f32.mrf.mxu0
  %v2982 = vadd.f32 %v2813, %v2981
  %v2983 = vpop.f32.mrf.mxu0
  %v2984 = vadd.f32 %v2815, %v2983
  %2985 = vmatmul.bf16.gmra.mxu0 %v1838
  %v2986 = vpop.f32.mrf.mxu0
  %v2987 = vadd.f32 %v2818, %v2986
  %v2988 = vpop.f32.mrf.mxu0
  %v2989 = vadd.f32 %v2820, %v2988
  %2990 = vmatmul.bf16.gmra.mxu0 %v1841
  %v2991 = vpop.f32.mrf.mxu0
  %v2992 = vadd.f32 %v2823, %v2991
  %v2993 = vpop.f32.mrf.mxu0
  %v2994 = vadd.f32 %v2825, %v2993
  %2995 = vmatmul.bf16.gmra.mxu0 %v1844
  %v2996 = vpop.f32.mrf.mxu0
  %v2997 = vadd.f32 %v2828, %v2996
  %v2998 = vpop.f32.mrf.mxu0
  %v2999 = vadd.f32 %v2830, %v2998
  %3000 = vmatmul.bf16.gmra.mxu0 %v1847
  %v3001 = vpop.f32.mrf.mxu0
  %v3002 = vadd.f32 %v2833, %v3001
  %v3003 = vpop.f32.mrf.mxu0
  %v3004 = vadd.f32 %v2835, %v3003
  %3005 = vmatmul.bf16.gmra.mxu0 %v1850
  %v3006 = vpop.f32.mrf.mxu0
  %v3007 = vadd.f32 %v2838, %v3006
  %v3008 = vpop.f32.mrf.mxu0
  %v3009 = vadd.f32 %v2840, %v3008
  %3010 = vmatmul.bf16.gmra.mxu0 %v1853
  %v3011 = vpop.f32.mrf.mxu0
  %v3012 = vadd.f32 %v2843, %v3011
  %v3013 = vpop.f32.mrf.mxu0
  %v3014 = vadd.f32 %v2845, %v3013
  %3015 = vmatmul.bf16.gmra.mxu0 %v1856
  %v3016 = vpop.f32.mrf.mxu0
  %v3017 = vadd.f32 %v2848, %v3016
  %v3018 = vpop.f32.mrf.mxu0
  %v3019 = vadd.f32 %v2850, %v3018
  %3020 = vmatmul.bf16.gmra.mxu0 %v1859
  %v3021 = vpop.f32.mrf.mxu0
  %v3022 = vadd.f32 %v2853, %v3021
  %v3023 = vpop.f32.mrf.mxu0
  %v3024 = vadd.f32 %v2855, %v3023
  %3025 = vmatmul.bf16.gmra.mxu0 %v1862
  %v3026 = vpop.f32.mrf.mxu0
  %v3027 = vadd.f32 %v2858, %v3026
  %v3028 = vpop.f32.mrf.mxu0
  %v3029 = vadd.f32 %v2860, %v3028
  %3030 = vmatmul.bf16.gmra.mxu0 %v1865
  %v3031 = vpop.f32.mrf.mxu0
  %v3032 = vadd.f32 %v2863, %v3031
  %v3033 = vpop.f32.mrf.mxu0
  %v3034 = vadd.f32 %v2865, %v3033
  %3035 = vmatmul.bf16.gmra.mxu0 %v1868
  %v3036 = vpop.f32.mrf.mxu0
  %v3037 = vadd.f32 %v2868, %v3036
  %v3038 = vpop.f32.mrf.mxu0
  %v3039 = vadd.f32 %v2870, %v3038
  %3040 = vmatmul.bf16.gmra.mxu0 %v1871
  %v3041 = vpop.f32.mrf.mxu0
  %v3042 = vadd.f32 %v2873, %v3041
  %v3043 = vpop.f32.mrf.mxu0
  %v3044 = vadd.f32 %v2875, %v3043
  %3045 = vmatmul.bf16.gmra.mxu0 %v1874
  %v3046 = vpop.f32.mrf.mxu0
  %v3047 = vadd.f32 %v2878, %v3046
  %v3048 = vpop.f32.mrf.mxu0
  %v3049 = vadd.f32 %v2880, %v3048
  %3050 = vmatmul.bf16.gmra.mxu0 %v1877
  %v3051 = vpop.f32.mrf.mxu0
  %v3052 = vadd.f32 %v2883, %v3051
  %v3053 = vpop.f32.mrf.mxu0
  %v3054 = vadd.f32 %v2885, %v3053
  %3055 = vmatmul.bf16.gmra.mxu0 %v1880
  %v3056 = vpop.f32.mrf.mxu0
  %v3057 = vadd.f32 %v2888, %v3056
  %v3058 = vpop.f32.mrf.mxu0
  %v3059 = vadd.f32 %v2890, %v3058
  %3060 = vmatmul.bf16.gmra.mxu0 %v1883
  %v3061 = vpop.f32.mrf.mxu0
  %v3062 = vadd.f32 %v2893, %v3061
  %v3063 = vpop.f32.mrf.mxu0
  %v3064 = vadd.f32 %v2895, %v3063
  %3065 = vmatmul.bf16.gmra.mxu0 %v1886
  %v3066 = vpop.f32.mrf.mxu0
  %v3067 = vadd.f32 %v2898, %v3066
  %v3068 = vpop.f32.mrf.mxu0
  %v3069 = vadd.f32 %v2900, %v3068
  %3070 = vdwg.mxu0
  %v3071 = vmax.f32 %v2912, %v2952
  %v3072 = vmax.f32 %v3071, %v2992
  %v3073 = vmax.f32 %v3072, %v3032
  %v3074 = vmax.f32 %v2914, %v2954
  %v3075 = vmax.f32 %v3074, %v2994
  %v3076 = vmax.f32 %v3075, %v3034
  %v3077 = vmax.f32 %v2917, %v2957
  %v3078 = vmax.f32 %v3077, %v2997
  %v3079 = vmax.f32 %v3078, %v3037
  %v3080 = vmax.f32 %v2919, %v2959
  %v3081 = vmax.f32 %v3080, %v2999
  %v3082 = vmax.f32 %v3081, %v3039
  %v3083 = vmax.f32 %v2922, %v2962
  %v3084 = vmax.f32 %v3083, %v3002
  %v3085 = vmax.f32 %v3084, %v3042
  %v3086 = vmax.f32 %v2924, %v2964
  %v3087 = vmax.f32 %v3086, %v3004
  %v3088 = vmax.f32 %v3087, %v3044
  %v3089 = vmax.f32 %v2927, %v2967
  %v3090 = vmax.f32 %v3089, %v3007
  %v3091 = vmax.f32 %v3090, %v3047
  %v3092 = vmax.f32 %v2929, %v2969
  %v3093 = vmax.f32 %v3092, %v3009
  %v3094 = vmax.f32 %v3093, %v3049
  %v3095 = vmax.f32 %v2932, %v2972
  %v3096 = vmax.f32 %v3095, %v3012
  %v3097 = vmax.f32 %v3096, %v3052
  %v3098 = vmax.f32 %v2934, %v2974
  %v3099 = vmax.f32 %v3098, %v3014
  %v3100 = vmax.f32 %v3099, %v3054
  %v3101 = vmax.f32 %v2937, %v2977
  %v3102 = vmax.f32 %v3101, %v3017
  %v3103 = vmax.f32 %v3102, %v3057
  %v3104 = vmax.f32 %v2939, %v2979
  %v3105 = vmax.f32 %v3104, %v3019
  %v3106 = vmax.f32 %v3105, %v3059
  %v3107 = vmax.f32 %v2942, %v2982
  %v3108 = vmax.f32 %v3107, %v3022
  %v3109 = vmax.f32 %v3108, %v3062
  %v3110 = vmax.f32 %v2944, %v2984
  %v3111 = vmax.f32 %v3110, %v3024
  %v3112 = vmax.f32 %v3111, %v3064
  %v3113 = vmax.f32 %v2947, %v2987
  %v3114 = vmax.f32 %v3113, %v3027
  %v3115 = vmax.f32 %v3114, %v3067
  %v3116 = vmax.f32 %v2949, %v2989
  %v3117 = vmax.f32 %v3116, %v3029
  %v3118 = vmax.f32 %v3117, %v3069
  %v3119 = vld [vmem:[%s2] sm:$0x1]
  %v3121 = vperm.slane %v3119, 0
  %v3123 = vadd.f32 %v3073, %v3121
  %v3124 = vadd.f32 %v3076, %v3121
  %v3125 = vadd.f32 %v3079, %v3121
  %v3126 = vadd.f32 %v3082, %v3121
  %v3127 = vadd.f32 %v3085, %v3121
  %v3128 = vadd.f32 %v3088, %v3121
  %v3129 = vadd.f32 %v3091, %v3121
  %v3130 = vadd.f32 %v3094, %v3121
  %v3131 = vadd.f32 %v3097, %v3121
  %v3132 = vadd.f32 %v3100, %v3121
  %v3133 = vadd.f32 %v3103, %v3121
  %v3134 = vadd.f32 %v3106, %v3121
  %v3135 = vadd.f32 %v3109, %v3121
  %v3136 = vadd.f32 %v3112, %v3121
  %v3137 = vadd.f32 %v3115, %v3121
  %v3138 = vadd.f32 %v3118, %v3121
  %v3139 = vpack.c.bf16 %v3123, %v3123
  %v3140 = vpack.c.bf16 %v3124, %v3124
  %v3141 = vpack.c.bf16 %v3125, %v3125
  %v3142 = vpack.c.bf16 %v3126, %v3126
  %v3143 = vpack.c.bf16 %v3127, %v3127
  %v3144 = vpack.c.bf16 %v3128, %v3128
  %v3145 = vpack.c.bf16 %v3129, %v3129
  %v3146 = vpack.c.bf16 %v3130, %v3130
  %v3147 = vpack.c.bf16 %v3131, %v3131
  %v3148 = vpack.c.bf16 %v3132, %v3132
  %v3149 = vpack.c.bf16 %v3133, %v3133
  %v3150 = vpack.c.bf16 %v3134, %v3134
  %v3151 = vpack.c.bf16 %v3135, %v3135
  %v3152 = vpack.c.bf16 %v3136, %v3136
  %v3153 = vpack.c.bf16 %v3137, %v3137
  %v3154 = vpack.c.bf16 %v3138, %v3138
  %3155 = vst [vmem:[%s3] sm:$0xf] %v3139
  %3156 = vst [vmem:[%s3 + $0x4] sm:$0xf] %v3140
  %3157 = vst [vmem:[%s3 + $0x8] sm:$0xf] %v3141
  %3158 = vst [vmem:[%s3 + $0xc] sm:$0xf] %v3142
  %3159 = vst [vmem:[%s3 + $0x10] sm:$0xf] %v3143
  %3160 = vst [vmem:[%s3 + $0x14] sm:$0xf] %v3144
  %3161 = vst [vmem:[%s3 + $0x18] sm:$0xf] %v3145
  %3162 = vst [vmem:[%s3 + $0x1c] sm:$0xf] %v3146
  %3163 = vst [vmem:[%s3 + $0x20] sm:$0xf] %v3147
  %3164 = vst [vmem:[%s3 + $0x24] sm:$0xf] %v3148
  %3165 = vst [vmem:[%s3 + $0x28] sm:$0xf] %v3149
  %3166 = vst [vmem:[%s3 + $0x2c] sm:$0xf] %v3150
  %3167 = vst [vmem:[%s3 + $0x30] sm:$0xf] %v3151
  %3168 = vst [vmem:[%s3 + $0x34] sm:$0xf] %v3152
  %3169 = vst [vmem:[%s3 + $0x38] sm:$0xf] %v3153
  %3170 = vst [vmem:[%s3 + $0x3c] sm:$0xf] %v3154
  // Predicated region
  $region14: #{my_cifar10_forward.4} parent=0 // pred_check
    _
  $region15: #{my_cifar10_forward.4} parent=0 // pred_check_branch
    %3172 = sbr.rel (0) target = $region17
  $region16: #{my_cifar10_forward.4} parent=0 // pred_region
    _
  $region17: #{my_cifar10_forward.4} parent=0 // pred_fallthru
    _
  // Predicated region
  $region18: #{my_cifar10_forward.4} parent=0 // pred_check
    _
  $region19: #{my_cifar10_forward.4} parent=0 // pred_check_branch
    %3174 = sbr.rel (0) target = $region21
  $region20: #{my_cifar10_forward.4} parent=0 // pred_region
    _
  $region21: #{my_cifar10_forward.4} parent=0 // pred_fallthru
    _

// kernel: my_cifar10_forward.5
$region0: #{my_cifar10_forward.5}
  #allocation0 [shape = 'u32[]', space=smem, size = 0x4, offset = 0x4, fixed_abs, tag = 'smem constant byte address 0x4 - core index']
  #allocation1 [shape = 'u32[72,128]{1,0:T(1,128)}', space=vmem, size = 0x9000, scoped, tag = 'internal scratch']
  %s0 = inlined_call_operand.vmem [shape: bf16[4,32,800], index: 0, kind: input, shape index: {}]
  %s1 = inlined_call_operand.vmem [shape: bf16[800,128], index: 1, kind: input, shape index: {}]
  %s2 = inlined_call_operand.vmem [shape: f32[1,128], index: 2, kind: input, shape index: {}]
  %s3 = inlined_call_operand.vmem [shape: bf16[2048,128], index: 3, kind: input, shape index: {}]
  %s4 = inlined_call_operand.vmem [shape: f32[1,128], index: 4, kind: input, shape index: {}]
  %s5 = inlined_call_operand.vmem [shape: bf16[128,128], index: 5, kind: input, shape index: {}]
  %s6 = inlined_call_operand.vmem [shape: f32[1,128], index: 6, kind: input, shape index: {}]
  %s7 = inlined_call_operand.hbm [shape: f32[2,128], index: 7, kind: output, shape index: {}]
  %s8 = sld [smem:[#allocation0]]
  $region38: #{my_cifar10_forward.5} parent=0
    _
  %s10 = ssub.s32 1, %s8
  %s11 = scalar_select 0, %s10, %s8
  $region1: #{my_cifar10_forward.5} parent=0
    #allocation2 [shape = 'u8[1024]{0}', space=vmem, size = 0x400, scoped, tag = 'output window, operand 0, single buffered']
    #allocation3 [shape = 's32[1]{0}', space=sflag, size = 0x4, scoped, tag = 'scoped memory for my_cifar10_forward.5']
    %12 = vsyncpa [#allocation3], 0
    // Predicated region
    $region2: #{my_cifar10_forward.5} parent=1 // pred_check
      _
    $region3: #{my_cifar10_forward.5} parent=1 // pred_check_branch
      %14 = sbr.rel (0) target = $region5
    $region4: #{my_cifar10_forward.5} parent=1 // pred_region
      _
    $region5: #{my_cifar10_forward.5} parent=1 // pred_fallthru
      _
    // Predicated region
    $region6: #{my_cifar10_forward.5} parent=1 // pred_check
      _
    $region7: #{my_cifar10_forward.5} parent=1 // pred_check_branch
      %16 = sbr.rel (0) target = $region9
    $region8: #{my_cifar10_forward.5} parent=1 // pred_region
      _
    $region9: #{my_cifar10_forward.5} parent=1 // pred_fallthru
      _
    // Predicated region
    $region10: #{my_cifar10_forward.5} parent=1 // pred_check
      _
    $region11: #{my_cifar10_forward.5} parent=1 // pred_check_branch
      %18 = sbr.rel (0) target = $region13
    $region12: #{my_cifar10_forward.5} parent=1 // pred_region
      _
    $region13: #{my_cifar10_forward.5} parent=1 // pred_fallthru
      _
    // Predicated region
    $region14: #{my_cifar10_forward.5} parent=1 // pred_check
      _
    $region15: #{my_cifar10_forward.5} parent=1 // pred_check_branch
      %20 = sbr.rel (0) target = $region17
    $region16: #{my_cifar10_forward.5} parent=1 // pred_region
      _
    $region17: #{my_cifar10_forward.5} parent=1 // pred_fallthru
      _
    // Predicated region
    $region18: #{my_cifar10_forward.5} parent=1 // pred_check
      _
    $region19: #{my_cifar10_forward.5} parent=1 // pred_check_branch
      %22 = sbr.rel (0) target = $region21
    $region20: #{my_cifar10_forward.5} parent=1 // pred_region
      _
    $region21: #{my_cifar10_forward.5} parent=1 // pred_fallthru
      _
    // Predicated region
    $region22: #{my_cifar10_forward.5} parent=1 // pred_check
      _
    $region23: #{my_cifar10_forward.5} parent=1 // pred_check_branch
      %24 = sbr.rel (0) target = $region25
    $region24: #{my_cifar10_forward.5} parent=1 // pred_region
      _
    $region25: #{my_cifar10_forward.5} parent=1 // pred_fallthru
      _
    // Predicated region
    $region26: #{my_cifar10_forward.5} parent=1 // pred_check
      _
    $region27: #{my_cifar10_forward.5} parent=1 // pred_check_branch
      %26 = sbr.rel (0) target = $region29
    $region28: #{my_cifar10_forward.5} parent=1 // pred_region
      _
    $region29: #{my_cifar10_forward.5} parent=1 // pred_fallthru
      _
    %v28 = vld [vmem:[%s0] sm:$0xff]
    %v29 = vld [vmem:[%s0 + $0x8] sm:$0xff]
    %v30 = vld [vmem:[%s0 + $0x10] sm:$0xff]
    %v31 = vld [vmem:[%s0 + $0x18] sm:$0xf]
    %v32 = vld [vmem:[%s0 + $0x1c] sm:$0xff]
    %v33 = vld [vmem:[%s0 + $0x24] sm:$0xff]
    %v34 = vld [vmem:[%s0 + $0x2c] sm:$0xff]
    %v35 = vld [vmem:[%s0 + $0x34] sm:$0xf]
    %v36 = vld [vmem:[%s0 + $0x38] sm:$0xff]
    %v37 = vld [vmem:[%s0 + $0x40] sm:$0xff]
    %v38 = vld [vmem:[%s0 + $0x48] sm:$0xff]
    %v39 = vld [vmem:[%s0 + $0x50] sm:$0xf]
    %v40 = vld [vmem:[%s0 + $0x54] sm:$0xff]
    %v41 = vld [vmem:[%s0 + $0x5c] sm:$0xff]
    %v42 = vld [vmem:[%s0 + $0x64] sm:$0xff]
    %v43 = vld [vmem:[%s0 + $0x6c] sm:$0xf]
    %v44 = vld [vmem:[%s0 + $0x70] sm:$0xff]
    %v45 = vld [vmem:[%s0 + $0x78] sm:$0xff]
    %v46 = vld [vmem:[%s0 + $0x80] sm:$0xff]
    %v47 = vld [vmem:[%s0 + $0x88] sm:$0xf]
    %v48 = vld [vmem:[%s0 + $0x8c] sm:$0xff]
    %v49 = vld [vmem:[%s0 + $0x94] sm:$0xff]
    %v50 = vld [vmem:[%s0 + $0x9c] sm:$0xff]
    %v51 = vld [vmem:[%s0 + $0xa4] sm:$0xf]
    %v52 = vld [vmem:[%s0 + $0xa8] sm:$0xff]
    %v53 = vld [vmem:[%s0 + $0xb0] sm:$0xff]
    %v54 = vld [vmem:[%s0 + $0xb8] sm:$0xff]
    %v55 = vld [vmem:[%s0 + $0xc0] sm:$0xf]
    %v56 = vld [vmem:[%s0 + $0xc4] sm:$0xff]
    %v57 = vld [vmem:[%s0 + $0xcc] sm:$0xff]
    %v58 = vld [vmem:[%s0 + $0xd4] sm:$0xff]
    %v59 = vld [vmem:[%s0 + $0xdc] sm:$0xf]
    %v60 = vld [vmem:[%s0 + $0xe0] sm:$0xff]
    %v61 = vld [vmem:[%s0 + $0xe8] sm:$0xff]
    %v62 = vld [vmem:[%s0 + $0xf0] sm:$0xff]
    %v63 = vld [vmem:[%s0 + $0xf8] sm:$0xf]
    %v64 = vld [vmem:[%s0 + $0xfc] sm:$0xff]
    %v65 = vld [vmem:[%s0 + $0x104] sm:$0xff]
    %v66 = vld [vmem:[%s0 + $0x10c] sm:$0xff]
    %v67 = vld [vmem:[%s0 + $0x114] sm:$0xf]
    %v68 = vld [vmem:[%s0 + $0x118] sm:$0xff]
    %v69 = vld [vmem:[%s0 + $0x120] sm:$0xff]
    %v70 = vld [vmem:[%s0 + $0x128] sm:$0xff]
    %v71 = vld [vmem:[%s0 + $0x130] sm:$0xf]
    %v72 = vld [vmem:[%s0 + $0x134] sm:$0xff]
    %v73 = vld [vmem:[%s0 + $0x13c] sm:$0xff]
    %v74 = vld [vmem:[%s0 + $0x144] sm:$0xff]
    %v75 = vld [vmem:[%s0 + $0x14c] sm:$0xf]
    %v76 = vld [vmem:[%s0 + $0x150] sm:$0xff]
    %v77 = vld [vmem:[%s0 + $0x158] sm:$0xff]
    %v78 = vld [vmem:[%s0 + $0x160] sm:$0xff]
    %v79 = vld [vmem:[%s0 + $0x168] sm:$0xf]
    %v80 = vld [vmem:[%s0 + $0x16c] sm:$0xff]
    %v81 = vld [vmem:[%s0 + $0x174] sm:$0xff]
    %v82 = vld [vmem:[%s0 + $0x17c] sm:$0xff]
    %v83 = vld [vmem:[%s0 + $0x184] sm:$0xf]
    %v84 = vld [vmem:[%s0 + $0x188] sm:$0xff]
    %v85 = vld [vmem:[%s0 + $0x190] sm:$0xff]
    %v86 = vld [vmem:[%s0 + $0x198] sm:$0xff]
    %v87 = vld [vmem:[%s0 + $0x1a0] sm:$0xf]
    %v88 = vld [vmem:[%s0 + $0x1a4] sm:$0xff]
    %v89 = vld [vmem:[%s0 + $0x1ac] sm:$0xff]
    %v90 = vld [vmem:[%s0 + $0x1b4] sm:$0xff]
    %v91 = vld [vmem:[%s0 + $0x1bc] sm:$0xf]
    %v92 = vld [vmem:[%s1] sm:$0xf]
    %v93 = vld [vmem:[%s1 + $0x4] sm:$0xf]
    %v94 = vld [vmem:[%s1 + $0x8] sm:$0xf]
    %v95 = vld [vmem:[%s1 + $0xc] sm:$0xf]
    %v96 = vld [vmem:[%s1 + $0x10] sm:$0xf]
    %v97 = vld [vmem:[%s1 + $0x14] sm:$0xf]
    %v98 = vld [vmem:[%s1 + $0x18] sm:$0xf]
    %v99 = vld [vmem:[%s1 + $0x1c] sm:$0xf]
    %v100 = vld [vmem:[%s1 + $0x20] sm:$0xf]
    %v101 = vld [vmem:[%s1 + $0x24] sm:$0xf]
    %v102 = vld [vmem:[%s1 + $0x28] sm:$0xf]
    %v103 = vld [vmem:[%s1 + $0x2c] sm:$0xf]
    %v104 = vld [vmem:[%s1 + $0x30] sm:$0xf]
    %v105 = vld [vmem:[%s1 + $0x34] sm:$0xf]
    %v106 = vld [vmem:[%s1 + $0x38] sm:$0xf]
    %v107 = vld [vmem:[%s1 + $0x3c] sm:$0xf]
    %v108 = vld [vmem:[%s1 + $0x40] sm:$0xf]
    %v109 = vld [vmem:[%s1 + $0x44] sm:$0xf]
    %v110 = vld [vmem:[%s1 + $0x48] sm:$0xf]
    %v111 = vld [vmem:[%s1 + $0x4c] sm:$0xf]
    %v112 = vld [vmem:[%s1 + $0x50] sm:$0xf]
    %v113 = vld [vmem:[%s1 + $0x54] sm:$0xf]
    %v114 = vld [vmem:[%s1 + $0x58] sm:$0xf]
    %v115 = vld [vmem:[%s1 + $0x5c] sm:$0xf]
    %v116 = vld [vmem:[%s1 + $0x60] sm:$0xf]
    %v117 = vld [vmem:[%s1 + $0x64] sm:$0xf]
    %v118 = vld [vmem:[%s1 + $0x68] sm:$0xf]
    %v119 = vld [vmem:[%s1 + $0x6c] sm:$0xf]
    %v120 = vld [vmem:[%s1 + $0x70] sm:$0xf]
    %v121 = vld [vmem:[%s1 + $0x74] sm:$0xf]
    %v122 = vld [vmem:[%s1 + $0x78] sm:$0xf]
    %v123 = vld [vmem:[%s1 + $0x7c] sm:$0xf]
    %v124 = vld [vmem:[%s1 + $0x80] sm:$0xf]
    %v125 = vld [vmem:[%s1 + $0x84] sm:$0xf]
    %v126 = vld [vmem:[%s1 + $0x88] sm:$0xf]
    %v127 = vld [vmem:[%s1 + $0x8c] sm:$0xf]
    %v128 = vld [vmem:[%s1 + $0x90] sm:$0xf]
    %v129 = vld [vmem:[%s1 + $0x94] sm:$0xf]
    %v130 = vld [vmem:[%s1 + $0x98] sm:$0xf]
    %v131 = vld [vmem:[%s1 + $0x9c] sm:$0xf]
    %v132 = vld [vmem:[%s1 + $0xa0] sm:$0xf]
    %v133 = vld [vmem:[%s1 + $0xa4] sm:$0xf]
    %v134 = vld [vmem:[%s1 + $0xa8] sm:$0xf]
    %v135 = vld [vmem:[%s1 + $0xac] sm:$0xf]
    %v136 = vld [vmem:[%s1 + $0xb0] sm:$0xf]
    %v137 = vld [vmem:[%s1 + $0xb4] sm:$0xf]
    %v138 = vld [vmem:[%s1 + $0xb8] sm:$0xf]
    %v139 = vld [vmem:[%s1 + $0xbc] sm:$0xf]
    %v140 = vld [vmem:[%s1 + $0xc0] sm:$0xf]
    %v141 = vld [vmem:[%s1 + $0xc4] sm:$0xf]
    %v142 = vld [vmem:[%s1 + $0xc8] sm:$0xf]
    %v143 = vld [vmem:[%s1 + $0xcc] sm:$0xf]
    %v144 = vld [vmem:[%s1 + $0xd0] sm:$0xf]
    %v145 = vld [vmem:[%s1 + $0xd4] sm:$0xf]
    %v146 = vld [vmem:[%s1 + $0xd8] sm:$0xf]
    %v147 = vld [vmem:[%s1 + $0xdc] sm:$0xf]
    %v148 = vld [vmem:[%s1 + $0xe0] sm:$0xf]
    %v149 = vld [vmem:[%s1 + $0xe4] sm:$0xf]
    %v150 = vld [vmem:[%s1 + $0xe8] sm:$0xf]
    %v151 = vld [vmem:[%s1 + $0xec] sm:$0xf]
    %v152 = vld [vmem:[%s1 + $0xf0] sm:$0xf]
    %v153 = vld [vmem:[%s1 + $0xf4] sm:$0xf]
    %v154 = vld [vmem:[%s1 + $0xf8] sm:$0xf]
    %v155 = vld [vmem:[%s1 + $0xfc] sm:$0xf]
    %v156 = vld [vmem:[%s1 + $0x100] sm:$0xf]
    %v157 = vld [vmem:[%s1 + $0x104] sm:$0xf]
    %v158 = vld [vmem:[%s1 + $0x108] sm:$0xf]
    %v159 = vld [vmem:[%s1 + $0x10c] sm:$0xf]
    %v160 = vld [vmem:[%s1 + $0x110] sm:$0xf]
    %v161 = vld [vmem:[%s1 + $0x114] sm:$0xf]
    %v162 = vld [vmem:[%s1 + $0x118] sm:$0xf]
    %v163 = vld [vmem:[%s1 + $0x11c] sm:$0xf]
    %v164 = vld [vmem:[%s1 + $0x120] sm:$0xf]
    %v165 = vld [vmem:[%s1 + $0x124] sm:$0xf]
    %v166 = vld [vmem:[%s1 + $0x128] sm:$0xf]
    %v167 = vld [vmem:[%s1 + $0x12c] sm:$0xf]
    %v168 = vld [vmem:[%s1 + $0x130] sm:$0xf]
    %v169 = vld [vmem:[%s1 + $0x134] sm:$0xf]
    %v170 = vld [vmem:[%s1 + $0x138] sm:$0xf]
    %v171 = vld [vmem:[%s1 + $0x13c] sm:$0xf]
    %v172 = vld [vmem:[%s1 + $0x140] sm:$0xf]
    %v173 = vld [vmem:[%s1 + $0x144] sm:$0xf]
    %v174 = vld [vmem:[%s1 + $0x148] sm:$0xf]
    %v175 = vld [vmem:[%s1 + $0x14c] sm:$0xf]
    %v176 = vld [vmem:[%s1 + $0x150] sm:$0xf]
    %v177 = vld [vmem:[%s1 + $0x154] sm:$0xf]
    %v178 = vld [vmem:[%s1 + $0x158] sm:$0xf]
    %v179 = vld [vmem:[%s1 + $0x15c] sm:$0xf]
    %v180 = vld [vmem:[%s1 + $0x160] sm:$0xf]
    %v181 = vld [vmem:[%s1 + $0x164] sm:$0xf]
    %v182 = vld [vmem:[%s1 + $0x168] sm:$0xf]
    %v183 = vld [vmem:[%s1 + $0x16c] sm:$0xf]
    %v184 = vld [vmem:[%s1 + $0x170] sm:$0xf]
    %v185 = vld [vmem:[%s1 + $0x174] sm:$0xf]
    %v186 = vld [vmem:[%s1 + $0x178] sm:$0xf]
    %v187 = vld [vmem:[%s1 + $0x17c] sm:$0xf]
    %v188 = vld [vmem:[%s1 + $0x180] sm:$0xf]
    %v189 = vld [vmem:[%s1 + $0x184] sm:$0xf]
    %v190 = vld [vmem:[%s1 + $0x188] sm:$0xf]
    %v191 = vld [vmem:[%s1 + $0x18c] sm:$0xf]
    %v256 = vunpack.c.l.b16 %v28
    %v257 = vunpack.c.h.b16 %v28
    %v258 = vunpack.c.l.b16 %v29
    %v259 = vunpack.c.h.b16 %v29
    %v260 = vunpack.c.l.b16 %v30
    %v261 = vunpack.c.h.b16 %v30
    %v262 = vunpack.c.l.b16 %v31
    %v263 = vunpack.c.l.b16 %v32
    %v264 = vunpack.c.h.b16 %v32
    %v265 = vunpack.c.l.b16 %v33
    %v266 = vunpack.c.h.b16 %v33
    %v267 = vunpack.c.l.b16 %v34
    %v268 = vunpack.c.h.b16 %v34
    %v269 = vunpack.c.l.b16 %v35
    %v270 = vunpack.c.l.b16 %v36
    %v271 = vunpack.c.h.b16 %v36
    %v272 = vunpack.c.l.b16 %v37
    %v273 = vunpack.c.h.b16 %v37
    %v274 = vunpack.c.l.b16 %v38
    %v275 = vunpack.c.h.b16 %v38
    %v276 = vunpack.c.l.b16 %v39
    %v277 = vunpack.c.l.b16 %v40
    %v278 = vunpack.c.h.b16 %v40
    %v279 = vunpack.c.l.b16 %v41
    %v280 = vunpack.c.h.b16 %v41
    %v281 = vunpack.c.l.b16 %v42
    %v282 = vunpack.c.h.b16 %v42
    %v283 = vunpack.c.l.b16 %v43
    %v284 = vunpack.c.l.b16 %v44
    %v285 = vunpack.c.h.b16 %v44
    %v286 = vunpack.c.l.b16 %v45
    %v287 = vunpack.c.h.b16 %v45
    %v288 = vunpack.c.l.b16 %v46
    %v289 = vunpack.c.h.b16 %v46
    %v290 = vunpack.c.l.b16 %v47
    %v291 = vunpack.c.l.b16 %v48
    %v292 = vunpack.c.h.b16 %v48
    %v293 = vunpack.c.l.b16 %v49
    %v294 = vunpack.c.h.b16 %v49
    %v295 = vunpack.c.l.b16 %v50
    %v296 = vunpack.c.h.b16 %v50
    %v297 = vunpack.c.l.b16 %v51
    %v298 = vunpack.c.l.b16 %v52
    %v299 = vunpack.c.h.b16 %v52
    %v300 = vunpack.c.l.b16 %v53
    %v301 = vunpack.c.h.b16 %v53
    %v302 = vunpack.c.l.b16 %v54
    %v303 = vunpack.c.h.b16 %v54
    %v304 = vunpack.c.l.b16 %v55
    %v305 = vunpack.c.l.b16 %v56
    %v306 = vunpack.c.h.b16 %v56
    %v307 = vunpack.c.l.b16 %v57
    %v308 = vunpack.c.h.b16 %v57
    %v309 = vunpack.c.l.b16 %v58
    %v310 = vunpack.c.h.b16 %v58
    %v311 = vunpack.c.l.b16 %v59
    %v312 = vunpack.c.l.b16 %v60
    %v313 = vunpack.c.h.b16 %v60
    %v314 = vunpack.c.l.b16 %v61
    %v315 = vunpack.c.h.b16 %v61
    %v316 = vunpack.c.l.b16 %v62
    %v317 = vunpack.c.h.b16 %v62
    %v318 = vunpack.c.l.b16 %v63
    %v319 = vunpack.c.l.b16 %v64
    %v320 = vunpack.c.h.b16 %v64
    %v321 = vunpack.c.l.b16 %v65
    %v322 = vunpack.c.h.b16 %v65
    %v323 = vunpack.c.l.b16 %v66
    %v324 = vunpack.c.h.b16 %v66
    %v325 = vunpack.c.l.b16 %v67
    %v326 = vunpack.c.l.b16 %v68
    %v327 = vunpack.c.h.b16 %v68
    %v328 = vunpack.c.l.b16 %v69
    %v329 = vunpack.c.h.b16 %v69
    %v330 = vunpack.c.l.b16 %v70
    %v331 = vunpack.c.h.b16 %v70
    %v332 = vunpack.c.l.b16 %v71
    %v333 = vunpack.c.l.b16 %v72
    %v334 = vunpack.c.h.b16 %v72
    %v335 = vunpack.c.l.b16 %v73
    %v336 = vunpack.c.h.b16 %v73
    %v337 = vunpack.c.l.b16 %v74
    %v338 = vunpack.c.h.b16 %v74
    %v339 = vunpack.c.l.b16 %v75
    %v340 = vunpack.c.l.b16 %v76
    %v341 = vunpack.c.h.b16 %v76
    %v342 = vunpack.c.l.b16 %v77
    %v343 = vunpack.c.h.b16 %v77
    %v344 = vunpack.c.l.b16 %v78
    %v345 = vunpack.c.h.b16 %v78
    %v346 = vunpack.c.l.b16 %v79
    %v347 = vunpack.c.l.b16 %v80
    %v348 = vunpack.c.h.b16 %v80
    %v349 = vunpack.c.l.b16 %v81
    %v350 = vunpack.c.h.b16 %v81
    %v351 = vunpack.c.l.b16 %v82
    %v352 = vunpack.c.h.b16 %v82
    %v353 = vunpack.c.l.b16 %v83
    %v354 = vunpack.c.l.b16 %v84
    %v355 = vunpack.c.h.b16 %v84
    %v356 = vunpack.c.l.b16 %v85
    %v357 = vunpack.c.h.b16 %v85
    %v358 = vunpack.c.l.b16 %v86
    %v359 = vunpack.c.h.b16 %v86
    %v360 = vunpack.c.l.b16 %v87
    %v361 = vunpack.c.l.b16 %v88
    %v362 = vunpack.c.h.b16 %v88
    %v363 = vunpack.c.l.b16 %v89
    %v364 = vunpack.c.h.b16 %v89
    %v365 = vunpack.c.l.b16 %v90
    %v366 = vunpack.c.h.b16 %v90
    %v367 = vunpack.c.l.b16 %v91
    %v368 = vpack.c.b16 %v263, %v256
    %v369 = vpack.c.b16 %v264, %v257
    %v370 = vpack.c.b16 %v265, %v258
    %v371 = vpack.c.b16 %v266, %v259
    %v372 = vpack.c.b16 %v267, %v260
    %v373 = vpack.c.b16 %v268, %v261
    %v374 = vpack.c.b16 %v269, %v262
    %v375 = vpack.c.b16 %v277, %v270
    %v376 = vpack.c.b16 %v278, %v271
    %v377 = vpack.c.b16 %v279, %v272
    %v378 = vpack.c.b16 %v280, %v273
    %v379 = vpack.c.b16 %v281, %v274
    %v380 = vpack.c.b16 %v282, %v275
    %v381 = vpack.c.b16 %v283, %v276
    %v382 = vpack.c.b16 %v291, %v284
    %v383 = vpack.c.b16 %v292, %v285
    %v384 = vpack.c.b16 %v293, %v286
    %v385 = vpack.c.b16 %v294, %v287
    %v386 = vpack.c.b16 %v295, %v288
    %v387 = vpack.c.b16 %v296, %v289
    %v388 = vpack.c.b16 %v297, %v290
    %v389 = vpack.c.b16 %v305, %v298
    %v390 = vpack.c.b16 %v306, %v299
    %v391 = vpack.c.b16 %v307, %v300
    %v392 = vpack.c.b16 %v308, %v301
    %v393 = vpack.c.b16 %v309, %v302
    %v394 = vpack.c.b16 %v310, %v303
    %v395 = vpack.c.b16 %v311, %v304
    %v396 = vpack.c.b16 %v319, %v312
    %v397 = vpack.c.b16 %v320, %v313
    %v398 = vpack.c.b16 %v321, %v314
    %v399 = vpack.c.b16 %v322, %v315
    %v400 = vpack.c.b16 %v323, %v316
    %v401 = vpack.c.b16 %v324, %v317
    %v402 = vpack.c.b16 %v325, %v318
    %v403 = vpack.c.b16 %v333, %v326
    %v404 = vpack.c.b16 %v334, %v327
    %v405 = vpack.c.b16 %v335, %v328
    %v406 = vpack.c.b16 %v336, %v329
    %v407 = vpack.c.b16 %v337, %v330
    %v408 = vpack.c.b16 %v338, %v331
    %v409 = vpack.c.b16 %v339, %v332
    %v410 = vpack.c.b16 %v347, %v340
    %v411 = vpack.c.b16 %v348, %v341
    %v412 = vpack.c.b16 %v349, %v342
    %v413 = vpack.c.b16 %v350, %v343
    %v414 = vpack.c.b16 %v351, %v344
    %v415 = vpack.c.b16 %v352, %v345
    %v416 = vpack.c.b16 %v353, %v346
    %v417 = vpack.c.b16 %v361, %v354
    %v418 = vpack.c.b16 %v362, %v355
    %v419 = vpack.c.b16 %v363, %v356
    %v420 = vpack.c.b16 %v364, %v357
    %v421 = vpack.c.b16 %v365, %v358
    %v422 = vpack.c.b16 %v366, %v359
    %v423 = vpack.c.b16 %v367, %v360
    %v572 = vunpack.c.l.b16 %v92
    %v573 = vunpack.c.l.b16 %v93
    %v574 = vunpack.c.l.b16 %v94
    %v575 = vunpack.c.l.b16 %v95
    %v576 = vunpack.c.l.b16 %v96
    %v577 = vunpack.c.l.b16 %v97
    %v578 = vunpack.c.l.b16 %v98
    %v579 = vunpack.c.l.b16 %v99
    %v580 = vunpack.c.l.b16 %v100
    %v581 = vunpack.c.l.b16 %v101
    %v582 = vunpack.c.l.b16 %v102
    %v583 = vunpack.c.l.b16 %v103
    %v584 = vunpack.c.l.b16 %v104
    %v585 = vunpack.c.l.b16 %v105
    %v586 = vunpack.c.l.b16 %v106
    %v587 = vunpack.c.l.b16 %v107
    %v588 = vunpack.c.l.b16 %v108
    %v589 = vunpack.c.l.b16 %v109
    %v590 = vunpack.c.l.b16 %v110
    %v591 = vunpack.c.l.b16 %v111
    %v592 = vunpack.c.l.b16 %v112
    %v593 = vunpack.c.l.b16 %v113
    %v594 = vunpack.c.l.b16 %v114
    %v595 = vunpack.c.l.b16 %v115
    %v596 = vunpack.c.l.b16 %v116
    %v597 = vunpack.c.l.b16 %v117
    %v598 = vunpack.c.l.b16 %v118
    %v599 = vunpack.c.l.b16 %v119
    %v600 = vunpack.c.l.b16 %v120
    %v601 = vunpack.c.l.b16 %v121
    %v602 = vunpack.c.l.b16 %v122
    %v603 = vunpack.c.l.b16 %v123
    %v604 = vunpack.c.l.b16 %v124
    %v605 = vunpack.c.l.b16 %v125
    %v606 = vunpack.c.l.b16 %v126
    %v607 = vunpack.c.l.b16 %v127
    %v608 = vunpack.c.l.b16 %v128
    %v609 = vunpack.c.l.b16 %v129
    %v610 = vunpack.c.l.b16 %v130
    %v611 = vunpack.c.l.b16 %v131
    %v612 = vunpack.c.l.b16 %v132
    %v613 = vunpack.c.l.b16 %v133
    %v614 = vunpack.c.l.b16 %v134
    %v615 = vunpack.c.l.b16 %v135
    %v616 = vunpack.c.l.b16 %v136
    %v617 = vunpack.c.l.b16 %v137
    %v618 = vunpack.c.l.b16 %v138
    %v619 = vunpack.c.l.b16 %v139
    %v620 = vunpack.c.l.b16 %v140
    %v621 = vunpack.c.l.b16 %v141
    %v622 = vunpack.c.l.b16 %v142
    %v623 = vunpack.c.l.b16 %v143
    %v624 = vunpack.c.l.b16 %v144
    %v625 = vunpack.c.l.b16 %v145
    %v626 = vunpack.c.l.b16 %v146
    %v627 = vunpack.c.l.b16 %v147
    %v628 = vunpack.c.l.b16 %v148
    %v629 = vunpack.c.l.b16 %v149
    %v630 = vunpack.c.l.b16 %v150
    %v631 = vunpack.c.l.b16 %v151
    %v632 = vunpack.c.l.b16 %v152
    %v633 = vunpack.c.l.b16 %v153
    %v634 = vunpack.c.l.b16 %v154
    %v635 = vunpack.c.l.b16 %v155
    %v636 = vunpack.c.l.b16 %v156
    %v637 = vunpack.c.l.b16 %v157
    %v638 = vunpack.c.l.b16 %v158
    %v639 = vunpack.c.l.b16 %v159
    %v640 = vunpack.c.l.b16 %v160
    %v641 = vunpack.c.l.b16 %v161
    %v642 = vunpack.c.l.b16 %v162
    %v643 = vunpack.c.l.b16 %v163
    %v644 = vunpack.c.l.b16 %v164
    %v645 = vunpack.c.l.b16 %v165
    %v646 = vunpack.c.l.b16 %v166
    %v647 = vunpack.c.l.b16 %v167
    %v648 = vunpack.c.l.b16 %v168
    %v649 = vunpack.c.l.b16 %v169
    %v650 = vunpack.c.l.b16 %v170
    %v651 = vunpack.c.l.b16 %v171
    %v652 = vunpack.c.l.b16 %v172
    %v653 = vunpack.c.l.b16 %v173
    %v654 = vunpack.c.l.b16 %v174
    %v655 = vunpack.c.l.b16 %v175
    %v656 = vunpack.c.l.b16 %v176
    %v657 = vunpack.c.l.b16 %v177
    %v658 = vunpack.c.l.b16 %v178
    %v659 = vunpack.c.l.b16 %v179
    %v660 = vunpack.c.l.b16 %v180
    %v661 = vunpack.c.l.b16 %v181
    %v662 = vunpack.c.l.b16 %v182
    %v663 = vunpack.c.l.b16 %v183
    %v664 = vunpack.c.l.b16 %v184
    %v665 = vunpack.c.l.b16 %v185
    %v666 = vunpack.c.l.b16 %v186
    %v667 = vunpack.c.l.b16 %v187
    %v668 = vunpack.c.l.b16 %v188
    %v669 = vunpack.c.l.b16 %v189
    %v670 = vunpack.c.l.b16 %v190
    %v671 = vunpack.c.l.b16 %v191
    %v672 = vpack.c.b16 %v573, %v572
    %v673 = vpack.c.b16 %v575, %v574
    %v674 = vpack.c.b16 %v577, %v576
    %v675 = vpack.c.b16 %v579, %v578
    %v676 = vpack.c.b16 %v581, %v580
    %v677 = vpack.c.b16 %v583, %v582
    %v678 = vpack.c.b16 %v585, %v584
    %v679 = vpack.c.b16 %v587, %v586
    %v680 = vpack.c.b16 %v589, %v588
    %v681 = vpack.c.b16 %v591, %v590
    %v682 = vpack.c.b16 %v593, %v592
    %v683 = vpack.c.b16 %v595, %v594
    %v684 = vpack.c.b16 %v597, %v596
    %v685 = vpack.c.b16 %v599, %v598
    %v686 = vpack.c.b16 %v601, %v600
    %v687 = vpack.c.b16 %v603, %v602
    %v688 = vpack.c.b16 %v605, %v604
    %v689 = vpack.c.b16 %v607, %v606
    %v690 = vpack.c.b16 %v609, %v608
    %v691 = vpack.c.b16 %v611, %v610
    %v692 = vpack.c.b16 %v613, %v612
    %v693 = vpack.c.b16 %v615, %v614
    %v694 = vpack.c.b16 %v617, %v616
    %v695 = vpack.c.b16 %v619, %v618
    %v696 = vpack.c.b16 %v621, %v620
    %v697 = vpack.c.b16 %v623, %v622
    %v698 = vpack.c.b16 %v625, %v624
    %v699 = vpack.c.b16 %v627, %v626
    %v700 = vpack.c.b16 %v629, %v628
    %v701 = vpack.c.b16 %v631, %v630
    %v702 = vpack.c.b16 %v633, %v632
    %v703 = vpack.c.b16 %v635, %v634
    %v704 = vpack.c.b16 %v637, %v636
    %v705 = vpack.c.b16 %v639, %v638
    %v706 = vpack.c.b16 %v641, %v640
    %v707 = vpack.c.b16 %v643, %v642
    %v708 = vpack.c.b16 %v645, %v644
    %v709 = vpack.c.b16 %v647, %v646
    %v710 = vpack.c.b16 %v649, %v648
    %v711 = vpack.c.b16 %v651, %v650
    %v712 = vpack.c.b16 %v653, %v652
    %v713 = vpack.c.b16 %v655, %v654
    %v714 = vpack.c.b16 %v657, %v656
    %v715 = vpack.c.b16 %v659, %v658
    %v716 = vpack.c.b16 %v661, %v660
    %v717 = vpack.c.b16 %v663, %v662
    %v718 = vpack.c.b16 %v665, %v664
    %v719 = vpack.c.b16 %v667, %v666
    %v720 = vpack.c.b16 %v669, %v668
    %v721 = vpack.c.b16 %v671, %v670
    %vm772 = vcmask 261120
    %v774 = vsel %vm772, %v374, 0
    %v777 = vsel %vm772, %v381, 0
    %v780 = vsel %vm772, %v388, 0
    %v783 = vsel %vm772, %v395, 0
    %v786 = vsel %vm772, %v402, 0
    %v789 = vsel %vm772, %v409, 0
    %v792 = vsel %vm772, %v416, 0
    %v795 = vsel %vm772, %v423, 0
    %797 = vmatpush.bf16.msra.mxu0 %v679
    %798 = vmatpush.bf16.msra.mxu0 %v678
    %799 = vmatpush.bf16.msra.mxu0 %v677
    %800 = vmatpush.bf16.msra.mxu0 %v676
    %801 = vmatpush.bf16.msra.mxu0 %v675
    %802 = vmatpush.bf16.msra.mxu0 %v674
    %803 = vmatpush.bf16.msra.mxu0 %v673
    %804 = vmatpush.bf16.msra.mxu0 %v672
    %805 = vmatmul.bf16.gmra.mxu0 %v368
    %v806 = vpop.f32.mrf.mxu0
    %v807 = vadd.f32 0.0, %v806
    %v808 = vpop.f32.mrf.mxu0
    %v809 = vadd.f32 0.0, %v808
    %810 = vmatmul.bf16.gmra.mxu0 %v375
    %v811 = vpop.f32.mrf.mxu0
    %v812 = vadd.f32 0.0, %v811
    %v813 = vpop.f32.mrf.mxu0
    %v814 = vadd.f32 0.0, %v813
    %815 = vmatmul.bf16.gmra.mxu0 %v382
    %v816 = vpop.f32.mrf.mxu0
    %v817 = vadd.f32 0.0, %v816
    %v818 = vpop.f32.mrf.mxu0
    %v819 = vadd.f32 0.0, %v818
    %820 = vmatmul.bf16.gmra.mxu0 %v389
    %v821 = vpop.f32.mrf.mxu0
    %v822 = vadd.f32 0.0, %v821
    %v823 = vpop.f32.mrf.mxu0
    %v824 = vadd.f32 0.0, %v823
    %825 = vmatmul.bf16.gmra.mxu0 %v396
    %v826 = vpop.f32.mrf.mxu0
    %v827 = vadd.f32 0.0, %v826
    %v828 = vpop.f32.mrf.mxu0
    %v829 = vadd.f32 0.0, %v828
    %830 = vmatmul.bf16.gmra.mxu0 %v403
    %v831 = vpop.f32.mrf.mxu0
    %v832 = vadd.f32 0.0, %v831
    %v833 = vpop.f32.mrf.mxu0
    %v834 = vadd.f32 0.0, %v833
    %835 = vmatmul.bf16.gmra.mxu0 %v410
    %v836 = vpop.f32.mrf.mxu0
    %v837 = vadd.f32 0.0, %v836
    %v838 = vpop.f32.mrf.mxu0
    %v839 = vadd.f32 0.0, %v838
    %840 = vmatmul.bf16.gmra.mxu0 %v417
    %v841 = vpop.f32.mrf.mxu0
    %v842 = vadd.f32 0.0, %v841
    %v843 = vpop.f32.mrf.mxu0
    %v844 = vadd.f32 0.0, %v843
    %845 = vdwg.mxu0
    %846 = vmatpush.bf16.msra.mxu0 %v687
    %847 = vmatpush.bf16.msra.mxu0 %v686
    %848 = vmatpush.bf16.msra.mxu0 %v685
    %849 = vmatpush.bf16.msra.mxu0 %v684
    %850 = vmatpush.bf16.msra.mxu0 %v683
    %851 = vmatpush.bf16.msra.mxu0 %v682
    %852 = vmatpush.bf16.msra.mxu0 %v681
    %853 = vmatpush.bf16.msra.mxu0 %v680
    %854 = vmatmul.bf16.gmra.mxu0 %v369
    %v855 = vpop.f32.mrf.mxu0
    %v856 = vadd.f32 %v807, %v855
    %v857 = vpop.f32.mrf.mxu0
    %v858 = vadd.f32 %v809, %v857
    %859 = vmatmul.bf16.gmra.mxu0 %v376
    %v860 = vpop.f32.mrf.mxu0
    %v861 = vadd.f32 %v812, %v860
    %v862 = vpop.f32.mrf.mxu0
    %v863 = vadd.f32 %v814, %v862
    %864 = vmatmul.bf16.gmra.mxu0 %v383
    %v865 = vpop.f32.mrf.mxu0
    %v866 = vadd.f32 %v817, %v865
    %v867 = vpop.f32.mrf.mxu0
    %v868 = vadd.f32 %v819, %v867
    %869 = vmatmul.bf16.gmra.mxu0 %v390
    %v870 = vpop.f32.mrf.mxu0
    %v871 = vadd.f32 %v822, %v870
    %v872 = vpop.f32.mrf.mxu0
    %v873 = vadd.f32 %v824, %v872
    %874 = vmatmul.bf16.gmra.mxu0 %v397
    %v875 = vpop.f32.mrf.mxu0
    %v876 = vadd.f32 %v827, %v875
    %v877 = vpop.f32.mrf.mxu0
    %v878 = vadd.f32 %v829, %v877
    %879 = vmatmul.bf16.gmra.mxu0 %v404
    %v880 = vpop.f32.mrf.mxu0
    %v881 = vadd.f32 %v832, %v880
    %v882 = vpop.f32.mrf.mxu0
    %v883 = vadd.f32 %v834, %v882
    %884 = vmatmul.bf16.gmra.mxu0 %v411
    %v885 = vpop.f32.mrf.mxu0
    %v886 = vadd.f32 %v837, %v885
    %v887 = vpop.f32.mrf.mxu0
    %v888 = vadd.f32 %v839, %v887
    %889 = vmatmul.bf16.gmra.mxu0 %v418
    %v890 = vpop.f32.mrf.mxu0
    %v891 = vadd.f32 %v842, %v890
    %v892 = vpop.f32.mrf.mxu0
    %v893 = vadd.f32 %v844, %v892
    %894 = vdwg.mxu0
    %895 = vmatpush.bf16.msra.mxu0 %v695
    %896 = vmatpush.bf16.msra.mxu0 %v694
    %897 = vmatpush.bf16.msra.mxu0 %v693
    %898 = vmatpush.bf16.msra.mxu0 %v692
    %899 = vmatpush.bf16.msra.mxu0 %v691
    %900 = vmatpush.bf16.msra.mxu0 %v690
    %901 = vmatpush.bf16.msra.mxu0 %v689
    %902 = vmatpush.bf16.msra.mxu0 %v688
    %903 = vmatmul.bf16.gmra.mxu0 %v370
    %v904 = vpop.f32.mrf.mxu0
    %v905 = vadd.f32 %v856, %v904
    %v906 = vpop.f32.mrf.mxu0
    %v907 = vadd.f32 %v858, %v906
    %908 = vmatmul.bf16.gmra.mxu0 %v377
    %v909 = vpop.f32.mrf.mxu0
    %v910 = vadd.f32 %v861, %v909
    %v911 = vpop.f32.mrf.mxu0
    %v912 = vadd.f32 %v863, %v911
    %913 = vmatmul.bf16.gmra.mxu0 %v384
    %v914 = vpop.f32.mrf.mxu0
    %v915 = vadd.f32 %v866, %v914
    %v916 = vpop.f32.mrf.mxu0
    %v917 = vadd.f32 %v868, %v916
    %918 = vmatmul.bf16.gmra.mxu0 %v391
    %v919 = vpop.f32.mrf.mxu0
    %v920 = vadd.f32 %v871, %v919
    %v921 = vpop.f32.mrf.mxu0
    %v922 = vadd.f32 %v873, %v921
    %923 = vmatmul.bf16.gmra.mxu0 %v398
    %v924 = vpop.f32.mrf.mxu0
    %v925 = vadd.f32 %v876, %v924
    %v926 = vpop.f32.mrf.mxu0
    %v927 = vadd.f32 %v878, %v926
    %928 = vmatmul.bf16.gmra.mxu0 %v405
    %v929 = vpop.f32.mrf.mxu0
    %v930 = vadd.f32 %v881, %v929
    %v931 = vpop.f32.mrf.mxu0
    %v932 = vadd.f32 %v883, %v931
    %933 = vmatmul.bf16.gmra.mxu0 %v412
    %v934 = vpop.f32.mrf.mxu0
    %v935 = vadd.f32 %v886, %v934
    %v936 = vpop.f32.mrf.mxu0
    %v937 = vadd.f32 %v888, %v936
    %938 = vmatmul.bf16.gmra.mxu0 %v419
    %v939 = vpop.f32.mrf.mxu0
    %v940 = vadd.f32 %v891, %v939
    %v941 = vpop.f32.mrf.mxu0
    %v942 = vadd.f32 %v893, %v941
    %943 = vdwg.mxu0
    %944 = vmatpush.bf16.msra.mxu0 %v703
    %945 = vmatpush.bf16.msra.mxu0 %v702
    %946 = vmatpush.bf16.msra.mxu0 %v701
    %947 = vmatpush.bf16.msra.mxu0 %v700
    %948 = vmatpush.bf16.msra.mxu0 %v699
    %949 = vmatpush.bf16.msra.mxu0 %v698
    %950 = vmatpush.bf16.msra.mxu0 %v697
    %951 = vmatpush.bf16.msra.mxu0 %v696
    %952 = vmatmul.bf16.gmra.mxu0 %v371
    %v953 = vpop.f32.mrf.mxu0
    %v954 = vadd.f32 %v905, %v953
    %v955 = vpop.f32.mrf.mxu0
    %v956 = vadd.f32 %v907, %v955
    %957 = vmatmul.bf16.gmra.mxu0 %v378
    %v958 = vpop.f32.mrf.mxu0
    %v959 = vadd.f32 %v910, %v958
    %v960 = vpop.f32.mrf.mxu0
    %v961 = vadd.f32 %v912, %v960
    %962 = vmatmul.bf16.gmra.mxu0 %v385
    %v963 = vpop.f32.mrf.mxu0
    %v964 = vadd.f32 %v915, %v963
    %v965 = vpop.f32.mrf.mxu0
    %v966 = vadd.f32 %v917, %v965
    %967 = vmatmul.bf16.gmra.mxu0 %v392
    %v968 = vpop.f32.mrf.mxu0
    %v969 = vadd.f32 %v920, %v968
    %v970 = vpop.f32.mrf.mxu0
    %v971 = vadd.f32 %v922, %v970
    %972 = vmatmul.bf16.gmra.mxu0 %v399
    %v973 = vpop.f32.mrf.mxu0
    %v974 = vadd.f32 %v925, %v973
    %v975 = vpop.f32.mrf.mxu0
    %v976 = vadd.f32 %v927, %v975
    %977 = vmatmul.bf16.gmra.mxu0 %v406
    %v978 = vpop.f32.mrf.mxu0
    %v979 = vadd.f32 %v930, %v978
    %v980 = vpop.f32.mrf.mxu0
    %v981 = vadd.f32 %v932, %v980
    %982 = vmatmul.bf16.gmra.mxu0 %v413
    %v983 = vpop.f32.mrf.mxu0
    %v984 = vadd.f32 %v935, %v983
    %v985 = vpop.f32.mrf.mxu0
    %v986 = vadd.f32 %v937, %v985
    %987 = vmatmul.bf16.gmra.mxu0 %v420
    %v988 = vpop.f32.mrf.mxu0
    %v989 = vadd.f32 %v940, %v988
    %v990 = vpop.f32.mrf.mxu0
    %v991 = vadd.f32 %v942, %v990
    %992 = vdwg.mxu0
    %993 = vmatpush.bf16.msra.mxu0 %v711
    %994 = vmatpush.bf16.msra.mxu0 %v710
    %995 = vmatpush.bf16.msra.mxu0 %v709
    %996 = vmatpush.bf16.msra.mxu0 %v708
    %997 = vmatpush.bf16.msra.mxu0 %v707
    %998 = vmatpush.bf16.msra.mxu0 %v706
    %999 = vmatpush.bf16.msra.mxu0 %v705
    %1000 = vmatpush.bf16.msra.mxu0 %v704
    %1001 = vmatmul.bf16.gmra.mxu0 %v372
    %v1002 = vpop.f32.mrf.mxu0
    %v1003 = vadd.f32 %v954, %v1002
    %v1004 = vpop.f32.mrf.mxu0
    %v1005 = vadd.f32 %v956, %v1004
    %1006 = vmatmul.bf16.gmra.mxu0 %v379
    %v1007 = vpop.f32.mrf.mxu0
    %v1008 = vadd.f32 %v959, %v1007
    %v1009 = vpop.f32.mrf.mxu0
    %v1010 = vadd.f32 %v961, %v1009
    %1011 = vmatmul.bf16.gmra.mxu0 %v386
    %v1012 = vpop.f32.mrf.mxu0
    %v1013 = vadd.f32 %v964, %v1012
    %v1014 = vpop.f32.mrf.mxu0
    %v1015 = vadd.f32 %v966, %v1014
    %1016 = vmatmul.bf16.gmra.mxu0 %v393
    %v1017 = vpop.f32.mrf.mxu0
    %v1018 = vadd.f32 %v969, %v1017
    %v1019 = vpop.f32.mrf.mxu0
    %v1020 = vadd.f32 %v971, %v1019
    %1021 = vmatmul.bf16.gmra.mxu0 %v400
    %v1022 = vpop.f32.mrf.mxu0
    %v1023 = vadd.f32 %v974, %v1022
    %v1024 = vpop.f32.mrf.mxu0
    %v1025 = vadd.f32 %v976, %v1024
    %1026 = vmatmul.bf16.gmra.mxu0 %v407
    %v1027 = vpop.f32.mrf.mxu0
    %v1028 = vadd.f32 %v979, %v1027
    %v1029 = vpop.f32.mrf.mxu0
    %v1030 = vadd.f32 %v981, %v1029
    %1031 = vmatmul.bf16.gmra.mxu0 %v414
    %v1032 = vpop.f32.mrf.mxu0
    %v1033 = vadd.f32 %v984, %v1032
    %v1034 = vpop.f32.mrf.mxu0
    %v1035 = vadd.f32 %v986, %v1034
    %1036 = vmatmul.bf16.gmra.mxu0 %v421
    %v1037 = vpop.f32.mrf.mxu0
    %v1038 = vadd.f32 %v989, %v1037
    %v1039 = vpop.f32.mrf.mxu0
    %v1040 = vadd.f32 %v991, %v1039
    %1041 = vdwg.mxu0
    %1042 = vmatpush.bf16.msra.mxu0 %v719
    %1043 = vmatpush.bf16.msra.mxu0 %v718
    %1044 = vmatpush.bf16.msra.mxu0 %v717
    %1045 = vmatpush.bf16.msra.mxu0 %v716
    %1046 = vmatpush.bf16.msra.mxu0 %v715
    %1047 = vmatpush.bf16.msra.mxu0 %v714
    %1048 = vmatpush.bf16.msra.mxu0 %v713
    %1049 = vmatpush.bf16.msra.mxu0 %v712
    %1050 = vmatmul.bf16.gmra.mxu0 %v373
    %v1051 = vpop.f32.mrf.mxu0
    %v1052 = vadd.f32 %v1003, %v1051
    %v1053 = vpop.f32.mrf.mxu0
    %v1054 = vadd.f32 %v1005, %v1053
    %1055 = vmatmul.bf16.gmra.mxu0 %v380
    %v1056 = vpop.f32.mrf.mxu0
    %v1057 = vadd.f32 %v1008, %v1056
    %v1058 = vpop.f32.mrf.mxu0
    %v1059 = vadd.f32 %v1010, %v1058
    %1060 = vmatmul.bf16.gmra.mxu0 %v387
    %v1061 = vpop.f32.mrf.mxu0
    %v1062 = vadd.f32 %v1013, %v1061
    %v1063 = vpop.f32.mrf.mxu0
    %v1064 = vadd.f32 %v1015, %v1063
    %1065 = vmatmul.bf16.gmra.mxu0 %v394
    %v1066 = vpop.f32.mrf.mxu0
    %v1067 = vadd.f32 %v1018, %v1066
    %v1068 = vpop.f32.mrf.mxu0
    %v1069 = vadd.f32 %v1020, %v1068
    %1070 = vmatmul.bf16.gmra.mxu0 %v401
    %v1071 = vpop.f32.mrf.mxu0
    %v1072 = vadd.f32 %v1023, %v1071
    %v1073 = vpop.f32.mrf.mxu0
    %v1074 = vadd.f32 %v1025, %v1073
    %1075 = vmatmul.bf16.gmra.mxu0 %v408
    %v1076 = vpop.f32.mrf.mxu0
    %v1077 = vadd.f32 %v1028, %v1076
    %v1078 = vpop.f32.mrf.mxu0
    %v1079 = vadd.f32 %v1030, %v1078
    %1080 = vmatmul.bf16.gmra.mxu0 %v415
    %v1081 = vpop.f32.mrf.mxu0
    %v1082 = vadd.f32 %v1033, %v1081
    %v1083 = vpop.f32.mrf.mxu0
    %v1084 = vadd.f32 %v1035, %v1083
    %1085 = vmatmul.bf16.gmra.mxu0 %v422
    %v1086 = vpop.f32.mrf.mxu0
    %v1087 = vadd.f32 %v1038, %v1086
    %v1088 = vpop.f32.mrf.mxu0
    %v1089 = vadd.f32 %v1040, %v1088
    %1090 = vdwg.mxu0
    %1091 = vmatpush.bf16.msra.mxu0 0
    %1092 = vmatpush.bf16.msra.mxu0 0
    %1093 = vmatpush.bf16.msra.mxu0 0
    %1094 = vmatpush.bf16.msra.mxu0 0
    %1095 = vmatpush.bf16.msra.mxu0 0
    %1096 = vmatpush.bf16.msra.mxu0 0
    %1097 = vmatpush.bf16.msra.mxu0 %v721
    %1098 = vmatpush.bf16.msra.mxu0 %v720
    %1099 = vmatmul.bf16.gmra.mxu0 %v774
    %v1100 = vpop.f32.mrf.mxu0
    %v1101 = vadd.f32 %v1052, %v1100
    %v1102 = vpop.f32.mrf.mxu0
    %v1103 = vadd.f32 %v1054, %v1102
    %1104 = vmatmul.bf16.gmra.mxu0 %v777
    %v1105 = vpop.f32.mrf.mxu0
    %v1106 = vadd.f32 %v1057, %v1105
    %v1107 = vpop.f32.mrf.mxu0
    %v1108 = vadd.f32 %v1059, %v1107
    %1109 = vmatmul.bf16.gmra.mxu0 %v780
    %v1110 = vpop.f32.mrf.mxu0
    %v1111 = vadd.f32 %v1062, %v1110
    %v1112 = vpop.f32.mrf.mxu0
    %v1113 = vadd.f32 %v1064, %v1112
    %1114 = vmatmul.bf16.gmra.mxu0 %v783
    %v1115 = vpop.f32.mrf.mxu0
    %v1116 = vadd.f32 %v1067, %v1115
    %v1117 = vpop.f32.mrf.mxu0
    %v1118 = vadd.f32 %v1069, %v1117
    %1119 = vmatmul.bf16.gmra.mxu0 %v786
    %v1120 = vpop.f32.mrf.mxu0
    %v1121 = vadd.f32 %v1072, %v1120
    %v1122 = vpop.f32.mrf.mxu0
    %v1123 = vadd.f32 %v1074, %v1122
    %1124 = vmatmul.bf16.gmra.mxu0 %v789
    %v1125 = vpop.f32.mrf.mxu0
    %v1126 = vadd.f32 %v1077, %v1125
    %v1127 = vpop.f32.mrf.mxu0
    %v1128 = vadd.f32 %v1079, %v1127
    %1129 = vmatmul.bf16.gmra.mxu0 %v792
    %v1130 = vpop.f32.mrf.mxu0
    %v1131 = vadd.f32 %v1082, %v1130
    %v1132 = vpop.f32.mrf.mxu0
    %v1133 = vadd.f32 %v1084, %v1132
    %1134 = vmatmul.bf16.gmra.mxu0 %v795
    %v1135 = vpop.f32.mrf.mxu0
    %v1136 = vadd.f32 %v1087, %v1135
    %v1137 = vpop.f32.mrf.mxu0
    %v1138 = vadd.f32 %v1089, %v1137
    %1139 = vdwg.mxu0
    %v1140 = vmax.f32 %v1101, %v1111
    %v1141 = vmax.f32 %v1140, %v1121
    %v1142 = vmax.f32 %v1141, %v1131
    %v1143 = vmax.f32 %v1103, %v1113
    %v1144 = vmax.f32 %v1143, %v1123
    %v1145 = vmax.f32 %v1144, %v1133
    %v1146 = vmax.f32 %v1106, %v1116
    %v1147 = vmax.f32 %v1146, %v1126
    %v1148 = vmax.f32 %v1147, %v1136
    %v1149 = vmax.f32 %v1108, %v1118
    %v1150 = vmax.f32 %v1149, %v1128
    %v1151 = vmax.f32 %v1150, %v1138
    %v1152 = vld [vmem:[%s2] sm:$0x1]
    %v1154 = vperm.slane %v1152, 0
    %v1156 = vadd.f32 %v1142, %v1154
    %v1157 = vadd.f32 %v1145, %v1154
    %v1158 = vadd.f32 %v1148, %v1154
    %v1159 = vadd.f32 %v1151, %v1154
    %v1160 = vpack.c.bf16 %v1156, %v1156
    %v1161 = vpack.c.bf16 %v1157, %v1157
    %v1162 = vpack.c.bf16 %v1158, %v1158
    %v1163 = vpack.c.bf16 %v1159, %v1159
    %v1166 = vunpack.c.l.b16 %v1160
    %v1167 = vunpack.c.l.b16 %v1162
    %v1168 = vpack.c.b16 %v1166, %v1166
    %v1169 = vpack.c.b16 %v1167, %v1167
    %v1170 = vunpack.c.l.b16 %v1168
    %v1171 = vunpack.c.l.b16 %v1169
    %v1172 = vrot.slane %v1171, 7
    %vm1173 = vcmask 1041409
    %v1174 = vsel %vm1173, %v1172, %v1170
    %v1175 = vpack.c.b16 %v1174, %v1174
    %v1177 = vrot.slane %v1170, 1
    %v1178 = vsel %vm1173, %v1171, %v1177
    %v1179 = vpack.c.b16 %v1178, %v1178
    %v1181 = vrot.slane %v1170, 2
    %v1182 = vrot.slane %v1171, 1
    %v1183 = vsel %vm1173, %v1182, %v1181
    %v1184 = vpack.c.b16 %v1183, %v1183
    %v1186 = vrot.slane %v1170, 3
    %v1187 = vrot.slane %v1171, 2
    %v1188 = vsel %vm1173, %v1187, %v1186
    %v1189 = vpack.c.b16 %v1188, %v1188
    %v1191 = vrot.slane %v1170, 4
    %v1192 = vrot.slane %v1171, 3
    %v1193 = vsel %vm1173, %v1192, %v1191
    %v1194 = vpack.c.b16 %v1193, %v1193
    %v1196 = vrot.slane %v1170, 5
    %v1197 = vrot.slane %v1171, 4
    %v1198 = vsel %vm1173, %v1197, %v1196
    %v1199 = vpack.c.b16 %v1198, %v1198
    %v1201 = vrot.slane %v1170, 6
    %v1202 = vrot.slane %v1171, 5
    %v1203 = vsel %vm1173, %v1202, %v1201
    %v1204 = vpack.c.b16 %v1203, %v1203
    %v1206 = vrot.slane %v1170, 7
    %v1207 = vrot.slane %v1171, 6
    %v1208 = vsel %vm1173, %v1207, %v1206
    %v1209 = vpack.c.b16 %v1208, %v1208
    %v1213 = vunpack.c.l.b16 %v1161
    %v1214 = vunpack.c.l.b16 %v1163
    %v1215 = vpack.c.b16 %v1213, %v1213
    %v1216 = vpack.c.b16 %v1214, %v1214
    %v1217 = vunpack.c.l.b16 %v1215
    %v1218 = vunpack.c.l.b16 %v1216
    %v1219 = vrot.slane %v1218, 7
    %v1220 = vsel %vm1173, %v1219, %v1217
    %v1221 = vpack.c.b16 %v1220, %v1220
    %v1223 = vrot.slane %v1217, 1
    %v1224 = vsel %vm1173, %v1218, %v1223
    %v1225 = vpack.c.b16 %v1224, %v1224
    %v1227 = vrot.slane %v1217, 2
    %v1228 = vrot.slane %v1218, 1
    %v1229 = vsel %vm1173, %v1228, %v1227
    %v1230 = vpack.c.b16 %v1229, %v1229
    %v1232 = vrot.slane %v1217, 3
    %v1233 = vrot.slane %v1218, 2
    %v1234 = vsel %vm1173, %v1233, %v1232
    %v1235 = vpack.c.b16 %v1234, %v1234
    %v1237 = vrot.slane %v1217, 4
    %v1238 = vrot.slane %v1218, 3
    %v1239 = vsel %vm1173, %v1238, %v1237
    %v1240 = vpack.c.b16 %v1239, %v1239
    %v1242 = vrot.slane %v1217, 5
    %v1243 = vrot.slane %v1218, 4
    %v1244 = vsel %vm1173, %v1243, %v1242
    %v1245 = vpack.c.b16 %v1244, %v1244
    %v1247 = vrot.slane %v1217, 6
    %v1248 = vrot.slane %v1218, 5
    %v1249 = vsel %vm1173, %v1248, %v1247
    %v1250 = vpack.c.b16 %v1249, %v1249
    %v1252 = vrot.slane %v1217, 7
    %v1253 = vrot.slane %v1218, 6
    %v1254 = vsel %vm1173, %v1253, %v1252
    %v1255 = vpack.c.b16 %v1254, %v1254
    %v1257 = vld [vmem:[%s3] sm:$0xf]
    %v1258 = vld [vmem:[%s3 + $0x4] sm:$0xf]
    %v1259 = vld [vmem:[%s3 + $0x8] sm:$0xf]
    %v1260 = vld [vmem:[%s3 + $0xc] sm:$0xf]
    %v1261 = vld [vmem:[%s3 + $0x10] sm:$0xf]
    %v1262 = vld [vmem:[%s3 + $0x14] sm:$0xf]
    %v1263 = vld [vmem:[%s3 + $0x18] sm:$0xf]
    %v1264 = vld [vmem:[%s3 + $0x1c] sm:$0xf]
    %v1265 = vld [vmem:[%s3 + $0x20] sm:$0xf]
    %v1266 = vld [vmem:[%s3 + $0x24] sm:$0xf]
    %v1267 = vld [vmem:[%s3 + $0x28] sm:$0xf]
    %v1268 = vld [vmem:[%s3 + $0x2c] sm:$0xf]
    %v1269 = vld [vmem:[%s3 + $0x30] sm:$0xf]
    %v1270 = vld [vmem:[%s3 + $0x34] sm:$0xf]
    %v1271 = vld [vmem:[%s3 + $0x38] sm:$0xf]
    %v1272 = vld [vmem:[%s3 + $0x3c] sm:$0xf]
    %v1273 = vld [vmem:[%s3 + $0x40] sm:$0xf]
    %v1274 = vld [vmem:[%s3 + $0x44] sm:$0xf]
    %v1275 = vld [vmem:[%s3 + $0x48] sm:$0xf]
    %v1276 = vld [vmem:[%s3 + $0x4c] sm:$0xf]
    %v1277 = vld [vmem:[%s3 + $0x50] sm:$0xf]
    %v1278 = vld [vmem:[%s3 + $0x54] sm:$0xf]
    %v1279 = vld [vmem:[%s3 + $0x58] sm:$0xf]
    %v1280 = vld [vmem:[%s3 + $0x5c] sm:$0xf]
    %v1281 = vld [vmem:[%s3 + $0x60] sm:$0xf]
    %v1282 = vld [vmem:[%s3 + $0x64] sm:$0xf]
    %v1283 = vld [vmem:[%s3 + $0x68] sm:$0xf]
    %v1284 = vld [vmem:[%s3 + $0x6c] sm:$0xf]
    %v1285 = vld [vmem:[%s3 + $0x70] sm:$0xf]
    %v1286 = vld [vmem:[%s3 + $0x74] sm:$0xf]
    %v1287 = vld [vmem:[%s3 + $0x78] sm:$0xf]
    %v1288 = vld [vmem:[%s3 + $0x7c] sm:$0xf]
    %v1289 = vld [vmem:[%s3 + $0x80] sm:$0xf]
    %v1290 = vld [vmem:[%s3 + $0x84] sm:$0xf]
    %v1291 = vld [vmem:[%s3 + $0x88] sm:$0xf]
    %v1292 = vld [vmem:[%s3 + $0x8c] sm:$0xf]
    %v1293 = vld [vmem:[%s3 + $0x90] sm:$0xf]
    %v1294 = vld [vmem:[%s3 + $0x94] sm:$0xf]
    %v1295 = vld [vmem:[%s3 + $0x98] sm:$0xf]
    %v1296 = vld [vmem:[%s3 + $0x9c] sm:$0xf]
    %v1297 = vld [vmem:[%s3 + $0xa0] sm:$0xf]
    %v1298 = vld [vmem:[%s3 + $0xa4] sm:$0xf]
    %v1299 = vld [vmem:[%s3 + $0xa8] sm:$0xf]
    %v1300 = vld [vmem:[%s3 + $0xac] sm:$0xf]
    %v1301 = vld [vmem:[%s3 + $0xb0] sm:$0xf]
    %v1302 = vld [vmem:[%s3 + $0xb4] sm:$0xf]
    %v1303 = vld [vmem:[%s3 + $0xb8] sm:$0xf]
    %v1304 = vld [vmem:[%s3 + $0xbc] sm:$0xf]
    %v1305 = vld [vmem:[%s3 + $0xc0] sm:$0xf]
    %v1306 = vld [vmem:[%s3 + $0xc4] sm:$0xf]
    %v1307 = vld [vmem:[%s3 + $0xc8] sm:$0xf]
    %v1308 = vld [vmem:[%s3 + $0xcc] sm:$0xf]
    %v1309 = vld [vmem:[%s3 + $0xd0] sm:$0xf]
    %v1310 = vld [vmem:[%s3 + $0xd4] sm:$0xf]
    %v1311 = vld [vmem:[%s3 + $0xd8] sm:$0xf]
    %v1312 = vld [vmem:[%s3 + $0xdc] sm:$0xf]
    %v1313 = vld [vmem:[%s3 + $0xe0] sm:$0xf]
    %v1314 = vld [vmem:[%s3 + $0xe4] sm:$0xf]
    %v1315 = vld [vmem:[%s3 + $0xe8] sm:$0xf]
    %v1316 = vld [vmem:[%s3 + $0xec] sm:$0xf]
    %v1317 = vld [vmem:[%s3 + $0xf0] sm:$0xf]
    %v1318 = vld [vmem:[%s3 + $0xf4] sm:$0xf]
    %v1319 = vld [vmem:[%s3 + $0xf8] sm:$0xf]
    %v1320 = vld [vmem:[%s3 + $0xfc] sm:$0xf]
    %v1321 = vld [vmem:[%s3 + $0x100] sm:$0xf]
    %v1322 = vld [vmem:[%s3 + $0x104] sm:$0xf]
    %v1323 = vld [vmem:[%s3 + $0x108] sm:$0xf]
    %v1324 = vld [vmem:[%s3 + $0x10c] sm:$0xf]
    %v1325 = vld [vmem:[%s3 + $0x110] sm:$0xf]
    %v1326 = vld [vmem:[%s3 + $0x114] sm:$0xf]
    %v1327 = vld [vmem:[%s3 + $0x118] sm:$0xf]
    %v1328 = vld [vmem:[%s3 + $0x11c] sm:$0xf]
    %v1329 = vld [vmem:[%s3 + $0x120] sm:$0xf]
    %v1330 = vld [vmem:[%s3 + $0x124] sm:$0xf]
    %v1331 = vld [vmem:[%s3 + $0x128] sm:$0xf]
    %v1332 = vld [vmem:[%s3 + $0x12c] sm:$0xf]
    %v1333 = vld [vmem:[%s3 + $0x130] sm:$0xf]
    %v1334 = vld [vmem:[%s3 + $0x134] sm:$0xf]
    %v1335 = vld [vmem:[%s3 + $0x138] sm:$0xf]
    %v1336 = vld [vmem:[%s3 + $0x13c] sm:$0xf]
    %v1337 = vld [vmem:[%s3 + $0x140] sm:$0xf]
    %v1338 = vld [vmem:[%s3 + $0x144] sm:$0xf]
    %v1339 = vld [vmem:[%s3 + $0x148] sm:$0xf]
    %v1340 = vld [vmem:[%s3 + $0x14c] sm:$0xf]
    %v1341 = vld [vmem:[%s3 + $0x150] sm:$0xf]
    %v1342 = vld [vmem:[%s3 + $0x154] sm:$0xf]
    %v1343 = vld [vmem:[%s3 + $0x158] sm:$0xf]
    %v1344 = vld [vmem:[%s3 + $0x15c] sm:$0xf]
    %v1345 = vld [vmem:[%s3 + $0x160] sm:$0xf]
    %v1346 = vld [vmem:[%s3 + $0x164] sm:$0xf]
    %v1347 = vld [vmem:[%s3 + $0x168] sm:$0xf]
    %v1348 = vld [vmem:[%s3 + $0x16c] sm:$0xf]
    %v1349 = vld [vmem:[%s3 + $0x170] sm:$0xf]
    %v1350 = vld [vmem:[%s3 + $0x174] sm:$0xf]
    %v1351 = vld [vmem:[%s3 + $0x178] sm:$0xf]
    %v1352 = vld [vmem:[%s3 + $0x17c] sm:$0xf]
    %v1353 = vld [vmem:[%s3 + $0x180] sm:$0xf]
    %v1354 = vld [vmem:[%s3 + $0x184] sm:$0xf]
    %v1355 = vld [vmem:[%s3 + $0x188] sm:$0xf]
    %v1356 = vld [vmem:[%s3 + $0x18c] sm:$0xf]
    %v1357 = vld [vmem:[%s3 + $0x190] sm:$0xf]
    %v1358 = vld [vmem:[%s3 + $0x194] sm:$0xf]
    %v1359 = vld [vmem:[%s3 + $0x198] sm:$0xf]
    %v1360 = vld [vmem:[%s3 + $0x19c] sm:$0xf]
    %v1361 = vld [vmem:[%s3 + $0x1a0] sm:$0xf]
    %v1362 = vld [vmem:[%s3 + $0x1a4] sm:$0xf]
    %v1363 = vld [vmem:[%s3 + $0x1a8] sm:$0xf]
    %v1364 = vld [vmem:[%s3 + $0x1ac] sm:$0xf]
    %v1365 = vld [vmem:[%s3 + $0x1b0] sm:$0xf]
    %v1366 = vld [vmem:[%s3 + $0x1b4] sm:$0xf]
    %v1367 = vld [vmem:[%s3 + $0x1b8] sm:$0xf]
    %v1368 = vld [vmem:[%s3 + $0x1bc] sm:$0xf]
    %v1369 = vld [vmem:[%s3 + $0x1c0] sm:$0xf]
    %v1370 = vld [vmem:[%s3 + $0x1c4] sm:$0xf]
    %v1371 = vld [vmem:[%s3 + $0x1c8] sm:$0xf]
    %v1372 = vld [vmem:[%s3 + $0x1cc] sm:$0xf]
    %v1373 = vld [vmem:[%s3 + $0x1d0] sm:$0xf]
    %v1374 = vld [vmem:[%s3 + $0x1d4] sm:$0xf]
    %v1375 = vld [vmem:[%s3 + $0x1d8] sm:$0xf]
    %v1376 = vld [vmem:[%s3 + $0x1dc] sm:$0xf]
    %v1377 = vld [vmem:[%s3 + $0x1e0] sm:$0xf]
    %v1378 = vld [vmem:[%s3 + $0x1e4] sm:$0xf]
    %v1379 = vld [vmem:[%s3 + $0x1e8] sm:$0xf]
    %v1380 = vld [vmem:[%s3 + $0x1ec] sm:$0xf]
    %v1381 = vld [vmem:[%s3 + $0x1f0] sm:$0xf]
    %v1382 = vld [vmem:[%s3 + $0x1f4] sm:$0xf]
    %v1383 = vld [vmem:[%s3 + $0x1f8] sm:$0xf]
    %v1384 = vld [vmem:[%s3 + $0x1fc] sm:$0xf]
    %v1385 = vld [vmem:[%s3 + $0x200] sm:$0xf]
    %v1386 = vld [vmem:[%s3 + $0x204] sm:$0xf]
    %v1387 = vld [vmem:[%s3 + $0x208] sm:$0xf]
    %v1388 = vld [vmem:[%s3 + $0x20c] sm:$0xf]
    %v1389 = vld [vmem:[%s3 + $0x210] sm:$0xf]
    %v1390 = vld [vmem:[%s3 + $0x214] sm:$0xf]
    %v1391 = vld [vmem:[%s3 + $0x218] sm:$0xf]
    %v1392 = vld [vmem:[%s3 + $0x21c] sm:$0xf]
    %v1393 = vld [vmem:[%s3 + $0x220] sm:$0xf]
    %v1394 = vld [vmem:[%s3 + $0x224] sm:$0xf]
    %v1395 = vld [vmem:[%s3 + $0x228] sm:$0xf]
    %v1396 = vld [vmem:[%s3 + $0x22c] sm:$0xf]
    %v1397 = vld [vmem:[%s3 + $0x230] sm:$0xf]
    %v1398 = vld [vmem:[%s3 + $0x234] sm:$0xf]
    %v1399 = vld [vmem:[%s3 + $0x238] sm:$0xf]
    %v1400 = vld [vmem:[%s3 + $0x23c] sm:$0xf]
    %v1401 = vld [vmem:[%s3 + $0x240] sm:$0xf]
    %v1402 = vld [vmem:[%s3 + $0x244] sm:$0xf]
    %v1403 = vld [vmem:[%s3 + $0x248] sm:$0xf]
    %v1404 = vld [vmem:[%s3 + $0x24c] sm:$0xf]
    %v1405 = vld [vmem:[%s3 + $0x250] sm:$0xf]
    %v1406 = vld [vmem:[%s3 + $0x254] sm:$0xf]
    %v1407 = vld [vmem:[%s3 + $0x258] sm:$0xf]
    %v1408 = vld [vmem:[%s3 + $0x25c] sm:$0xf]
    %v1409 = vld [vmem:[%s3 + $0x260] sm:$0xf]
    %v1410 = vld [vmem:[%s3 + $0x264] sm:$0xf]
    %v1411 = vld [vmem:[%s3 + $0x268] sm:$0xf]
    %v1412 = vld [vmem:[%s3 + $0x26c] sm:$0xf]
    %v1413 = vld [vmem:[%s3 + $0x270] sm:$0xf]
    %v1414 = vld [vmem:[%s3 + $0x274] sm:$0xf]
    %v1415 = vld [vmem:[%s3 + $0x278] sm:$0xf]
    %v1416 = vld [vmem:[%s3 + $0x27c] sm:$0xf]
    %v1417 = vld [vmem:[%s3 + $0x280] sm:$0xf]
    %v1418 = vld [vmem:[%s3 + $0x284] sm:$0xf]
    %v1419 = vld [vmem:[%s3 + $0x288] sm:$0xf]
    %v1420 = vld [vmem:[%s3 + $0x28c] sm:$0xf]
    %v1421 = vld [vmem:[%s3 + $0x290] sm:$0xf]
    %v1422 = vld [vmem:[%s3 + $0x294] sm:$0xf]
    %v1423 = vld [vmem:[%s3 + $0x298] sm:$0xf]
    %v1424 = vld [vmem:[%s3 + $0x29c] sm:$0xf]
    %v1425 = vld [vmem:[%s3 + $0x2a0] sm:$0xf]
    %v1426 = vld [vmem:[%s3 + $0x2a4] sm:$0xf]
    %v1427 = vld [vmem:[%s3 + $0x2a8] sm:$0xf]
    %v1428 = vld [vmem:[%s3 + $0x2ac] sm:$0xf]
    %v1429 = vld [vmem:[%s3 + $0x2b0] sm:$0xf]
    %v1430 = vld [vmem:[%s3 + $0x2b4] sm:$0xf]
    %v1431 = vld [vmem:[%s3 + $0x2b8] sm:$0xf]
    %v1432 = vld [vmem:[%s3 + $0x2bc] sm:$0xf]
    %v1433 = vld [vmem:[%s3 + $0x2c0] sm:$0xf]
    %v1434 = vld [vmem:[%s3 + $0x2c4] sm:$0xf]
    %v1435 = vld [vmem:[%s3 + $0x2c8] sm:$0xf]
    %v1436 = vld [vmem:[%s3 + $0x2cc] sm:$0xf]
    %v1437 = vld [vmem:[%s3 + $0x2d0] sm:$0xf]
    %v1438 = vld [vmem:[%s3 + $0x2d4] sm:$0xf]
    %v1439 = vld [vmem:[%s3 + $0x2d8] sm:$0xf]
    %v1440 = vld [vmem:[%s3 + $0x2dc] sm:$0xf]
    %v1441 = vld [vmem:[%s3 + $0x2e0] sm:$0xf]
    %v1442 = vld [vmem:[%s3 + $0x2e4] sm:$0xf]
    %v1443 = vld [vmem:[%s3 + $0x2e8] sm:$0xf]
    %v1444 = vld [vmem:[%s3 + $0x2ec] sm:$0xf]
    %v1445 = vld [vmem:[%s3 + $0x2f0] sm:$0xf]
    %v1446 = vld [vmem:[%s3 + $0x2f4] sm:$0xf]
    %v1447 = vld [vmem:[%s3 + $0x2f8] sm:$0xf]
    %v1448 = vld [vmem:[%s3 + $0x2fc] sm:$0xf]
    %v1449 = vld [vmem:[%s3 + $0x300] sm:$0xf]
    %v1450 = vld [vmem:[%s3 + $0x304] sm:$0xf]
    %v1451 = vld [vmem:[%s3 + $0x308] sm:$0xf]
    %v1452 = vld [vmem:[%s3 + $0x30c] sm:$0xf]
    %v1453 = vld [vmem:[%s3 + $0x310] sm:$0xf]
    %v1454 = vld [vmem:[%s3 + $0x314] sm:$0xf]
    %v1455 = vld [vmem:[%s3 + $0x318] sm:$0xf]
    %v1456 = vld [vmem:[%s3 + $0x31c] sm:$0xf]
    %v1457 = vld [vmem:[%s3 + $0x320] sm:$0xf]
    %v1458 = vld [vmem:[%s3 + $0x324] sm:$0xf]
    %v1459 = vld [vmem:[%s3 + $0x328] sm:$0xf]
    %v1460 = vld [vmem:[%s3 + $0x32c] sm:$0xf]
    %v1461 = vld [vmem:[%s3 + $0x330] sm:$0xf]
    %v1462 = vld [vmem:[%s3 + $0x334] sm:$0xf]
    %v1463 = vld [vmem:[%s3 + $0x338] sm:$0xf]
    %v1464 = vld [vmem:[%s3 + $0x33c] sm:$0xf]
    %v1465 = vld [vmem:[%s3 + $0x340] sm:$0xf]
    %v1466 = vld [vmem:[%s3 + $0x344] sm:$0xf]
    %v1467 = vld [vmem:[%s3 + $0x348] sm:$0xf]
    %v1468 = vld [vmem:[%s3 + $0x34c] sm:$0xf]
    %v1469 = vld [vmem:[%s3 + $0x350] sm:$0xf]
    %v1470 = vld [vmem:[%s3 + $0x354] sm:$0xf]
    %v1471 = vld [vmem:[%s3 + $0x358] sm:$0xf]
    %v1472 = vld [vmem:[%s3 + $0x35c] sm:$0xf]
    %v1473 = vld [vmem:[%s3 + $0x360] sm:$0xf]
    %v1474 = vld [vmem:[%s3 + $0x364] sm:$0xf]
    %v1475 = vld [vmem:[%s3 + $0x368] sm:$0xf]
    %v1476 = vld [vmem:[%s3 + $0x36c] sm:$0xf]
    %v1477 = vld [vmem:[%s3 + $0x370] sm:$0xf]
    %v1478 = vld [vmem:[%s3 + $0x374] sm:$0xf]
    %v1479 = vld [vmem:[%s3 + $0x378] sm:$0xf]
    %v1480 = vld [vmem:[%s3 + $0x37c] sm:$0xf]
    %v1481 = vld [vmem:[%s3 + $0x380] sm:$0xf]
    %v1482 = vld [vmem:[%s3 + $0x384] sm:$0xf]
    %v1483 = vld [vmem:[%s3 + $0x388] sm:$0xf]
    %v1484 = vld [vmem:[%s3 + $0x38c] sm:$0xf]
    %v1485 = vld [vmem:[%s3 + $0x390] sm:$0xf]
    %v1486 = vld [vmem:[%s3 + $0x394] sm:$0xf]
    %v1487 = vld [vmem:[%s3 + $0x398] sm:$0xf]
    %v1488 = vld [vmem:[%s3 + $0x39c] sm:$0xf]
    %v1489 = vld [vmem:[%s3 + $0x3a0] sm:$0xf]
    %v1490 = vld [vmem:[%s3 + $0x3a4] sm:$0xf]
    %v1491 = vld [vmem:[%s3 + $0x3a8] sm:$0xf]
    %v1492 = vld [vmem:[%s3 + $0x3ac] sm:$0xf]
    %v1493 = vld [vmem:[%s3 + $0x3b0] sm:$0xf]
    %v1494 = vld [vmem:[%s3 + $0x3b4] sm:$0xf]
    %v1495 = vld [vmem:[%s3 + $0x3b8] sm:$0xf]
    %v1496 = vld [vmem:[%s3 + $0x3bc] sm:$0xf]
    %v1497 = vld [vmem:[%s3 + $0x3c0] sm:$0xf]
    %v1498 = vld [vmem:[%s3 + $0x3c4] sm:$0xf]
    %v1499 = vld [vmem:[%s3 + $0x3c8] sm:$0xf]
    %v1500 = vld [vmem:[%s3 + $0x3cc] sm:$0xf]
    %v1501 = vld [vmem:[%s3 + $0x3d0] sm:$0xf]
    %v1502 = vld [vmem:[%s3 + $0x3d4] sm:$0xf]
    %v1503 = vld [vmem:[%s3 + $0x3d8] sm:$0xf]
    %v1504 = vld [vmem:[%s3 + $0x3dc] sm:$0xf]
    %v1505 = vld [vmem:[%s3 + $0x3e0] sm:$0xf]
    %v1506 = vld [vmem:[%s3 + $0x3e4] sm:$0xf]
    %v1507 = vld [vmem:[%s3 + $0x3e8] sm:$0xf]
    %v1508 = vld [vmem:[%s3 + $0x3ec] sm:$0xf]
    %v1509 = vld [vmem:[%s3 + $0x3f0] sm:$0xf]
    %v1510 = vld [vmem:[%s3 + $0x3f4] sm:$0xf]
    %v1511 = vld [vmem:[%s3 + $0x3f8] sm:$0xf]
    %v1512 = vld [vmem:[%s3 + $0x3fc] sm:$0xf]
    %v1513 = vld [vmem:[%s4] sm:$0x1]
    %v1515 = vperm.slane %v1513, 0
    %v1773 = vunpack.c.l.b16 %v1257
    %v1774 = vunpack.c.l.b16 %v1258
    %v1775 = vunpack.c.l.b16 %v1259
    %v1776 = vunpack.c.l.b16 %v1260
    %v1777 = vunpack.c.l.b16 %v1261
    %v1778 = vunpack.c.l.b16 %v1262
    %v1779 = vunpack.c.l.b16 %v1263
    %v1780 = vunpack.c.l.b16 %v1264
    %v1781 = vunpack.c.l.b16 %v1265
    %v1782 = vunpack.c.l.b16 %v1266
    %v1783 = vunpack.c.l.b16 %v1267
    %v1784 = vunpack.c.l.b16 %v1268
    %v1785 = vunpack.c.l.b16 %v1269
    %v1786 = vunpack.c.l.b16 %v1270
    %v1787 = vunpack.c.l.b16 %v1271
    %v1788 = vunpack.c.l.b16 %v1272
    %v1789 = vunpack.c.l.b16 %v1273
    %v1790 = vunpack.c.l.b16 %v1274
    %v1791 = vunpack.c.l.b16 %v1275
    %v1792 = vunpack.c.l.b16 %v1276
    %v1793 = vunpack.c.l.b16 %v1277
    %v1794 = vunpack.c.l.b16 %v1278
    %v1795 = vunpack.c.l.b16 %v1279
    %v1796 = vunpack.c.l.b16 %v1280
    %v1797 = vunpack.c.l.b16 %v1281
    %v1798 = vunpack.c.l.b16 %v1282
    %v1799 = vunpack.c.l.b16 %v1283
    %v1800 = vunpack.c.l.b16 %v1284
    %v1801 = vunpack.c.l.b16 %v1285
    %v1802 = vunpack.c.l.b16 %v1286
    %v1803 = vunpack.c.l.b16 %v1287
    %v1804 = vunpack.c.l.b16 %v1288
    %v1805 = vunpack.c.l.b16 %v1289
    %v1806 = vunpack.c.l.b16 %v1290
    %v1807 = vunpack.c.l.b16 %v1291
    %v1808 = vunpack.c.l.b16 %v1292
    %v1809 = vunpack.c.l.b16 %v1293
    %v1810 = vunpack.c.l.b16 %v1294
    %v1811 = vunpack.c.l.b16 %v1295
    %v1812 = vunpack.c.l.b16 %v1296
    %v1813 = vunpack.c.l.b16 %v1297
    %v1814 = vunpack.c.l.b16 %v1298
    %v1815 = vunpack.c.l.b16 %v1299
    %v1816 = vunpack.c.l.b16 %v1300
    %v1817 = vunpack.c.l.b16 %v1301
    %v1818 = vunpack.c.l.b16 %v1302
    %v1819 = vunpack.c.l.b16 %v1303
    %v1820 = vunpack.c.l.b16 %v1304
    %v1821 = vunpack.c.l.b16 %v1305
    %v1822 = vunpack.c.l.b16 %v1306
    %v1823 = vunpack.c.l.b16 %v1307
    %v1824 = vunpack.c.l.b16 %v1308
    %v1825 = vunpack.c.l.b16 %v1309
    %v1826 = vunpack.c.l.b16 %v1310
    %v1827 = vunpack.c.l.b16 %v1311
    %v1828 = vunpack.c.l.b16 %v1312
    %v1829 = vunpack.c.l.b16 %v1313
    %v1830 = vunpack.c.l.b16 %v1314
    %v1831 = vunpack.c.l.b16 %v1315
    %v1832 = vunpack.c.l.b16 %v1316
    %v1833 = vunpack.c.l.b16 %v1317
    %v1834 = vunpack.c.l.b16 %v1318
    %v1835 = vunpack.c.l.b16 %v1319
    %v1836 = vunpack.c.l.b16 %v1320
    %v1837 = vunpack.c.l.b16 %v1321
    %v1838 = vunpack.c.l.b16 %v1322
    %v1839 = vunpack.c.l.b16 %v1323
    %v1840 = vunpack.c.l.b16 %v1324
    %v1841 = vunpack.c.l.b16 %v1325
    %v1842 = vunpack.c.l.b16 %v1326
    %v1843 = vunpack.c.l.b16 %v1327
    %v1844 = vunpack.c.l.b16 %v1328
    %v1845 = vunpack.c.l.b16 %v1329
    %v1846 = vunpack.c.l.b16 %v1330
    %v1847 = vunpack.c.l.b16 %v1331
    %v1848 = vunpack.c.l.b16 %v1332
    %v1849 = vunpack.c.l.b16 %v1333
    %v1850 = vunpack.c.l.b16 %v1334
    %v1851 = vunpack.c.l.b16 %v1335
    %v1852 = vunpack.c.l.b16 %v1336
    %v1853 = vunpack.c.l.b16 %v1337
    %v1854 = vunpack.c.l.b16 %v1338
    %v1855 = vunpack.c.l.b16 %v1339
    %v1856 = vunpack.c.l.b16 %v1340
    %v1857 = vunpack.c.l.b16 %v1341
    %v1858 = vunpack.c.l.b16 %v1342
    %v1859 = vunpack.c.l.b16 %v1343
    %v1860 = vunpack.c.l.b16 %v1344
    %v1861 = vunpack.c.l.b16 %v1345
    %v1862 = vunpack.c.l.b16 %v1346
    %v1863 = vunpack.c.l.b16 %v1347
    %v1864 = vunpack.c.l.b16 %v1348
    %v1865 = vunpack.c.l.b16 %v1349
    %v1866 = vunpack.c.l.b16 %v1350
    %v1867 = vunpack.c.l.b16 %v1351
    %v1868 = vunpack.c.l.b16 %v1352
    %v1869 = vunpack.c.l.b16 %v1353
    %v1870 = vunpack.c.l.b16 %v1354
    %v1871 = vunpack.c.l.b16 %v1355
    %v1872 = vunpack.c.l.b16 %v1356
    %v1873 = vunpack.c.l.b16 %v1357
    %v1874 = vunpack.c.l.b16 %v1358
    %v1875 = vunpack.c.l.b16 %v1359
    %v1876 = vunpack.c.l.b16 %v1360
    %v1877 = vunpack.c.l.b16 %v1361
    %v1878 = vunpack.c.l.b16 %v1362
    %v1879 = vunpack.c.l.b16 %v1363
    %v1880 = vunpack.c.l.b16 %v1364
    %v1881 = vunpack.c.l.b16 %v1365
    %v1882 = vunpack.c.l.b16 %v1366
    %v1883 = vunpack.c.l.b16 %v1367
    %v1884 = vunpack.c.l.b16 %v1368
    %v1885 = vunpack.c.l.b16 %v1369
    %v1886 = vunpack.c.l.b16 %v1370
    %v1887 = vunpack.c.l.b16 %v1371
    %v1888 = vunpack.c.l.b16 %v1372
    %v1889 = vunpack.c.l.b16 %v1373
    %v1890 = vunpack.c.l.b16 %v1374
    %v1891 = vunpack.c.l.b16 %v1375
    %v1892 = vunpack.c.l.b16 %v1376
    %v1893 = vunpack.c.l.b16 %v1377
    %v1894 = vunpack.c.l.b16 %v1378
    %v1895 = vunpack.c.l.b16 %v1379
    %v1896 = vunpack.c.l.b16 %v1380
    %v1897 = vunpack.c.l.b16 %v1381
    %v1898 = vunpack.c.l.b16 %v1382
    %v1899 = vunpack.c.l.b16 %v1383
    %v1900 = vunpack.c.l.b16 %v1384
    %v1901 = vunpack.c.l.b16 %v1385
    %v1902 = vunpack.c.l.b16 %v1386
    %v1903 = vunpack.c.l.b16 %v1387
    %v1904 = vunpack.c.l.b16 %v1388
    %v1905 = vunpack.c.l.b16 %v1389
    %v1906 = vunpack.c.l.b16 %v1390
    %v1907 = vunpack.c.l.b16 %v1391
    %v1908 = vunpack.c.l.b16 %v1392
    %v1909 = vunpack.c.l.b16 %v1393
    %v1910 = vunpack.c.l.b16 %v1394
    %v1911 = vunpack.c.l.b16 %v1395
    %v1912 = vunpack.c.l.b16 %v1396
    %v1913 = vunpack.c.l.b16 %v1397
    %v1914 = vunpack.c.l.b16 %v1398
    %v1915 = vunpack.c.l.b16 %v1399
    %v1916 = vunpack.c.l.b16 %v1400
    %v1917 = vunpack.c.l.b16 %v1401
    %v1918 = vunpack.c.l.b16 %v1402
    %v1919 = vunpack.c.l.b16 %v1403
    %v1920 = vunpack.c.l.b16 %v1404
    %v1921 = vunpack.c.l.b16 %v1405
    %v1922 = vunpack.c.l.b16 %v1406
    %v1923 = vunpack.c.l.b16 %v1407
    %v1924 = vunpack.c.l.b16 %v1408
    %v1925 = vunpack.c.l.b16 %v1409
    %v1926 = vunpack.c.l.b16 %v1410
    %v1927 = vunpack.c.l.b16 %v1411
    %v1928 = vunpack.c.l.b16 %v1412
    %v1929 = vunpack.c.l.b16 %v1413
    %v1930 = vunpack.c.l.b16 %v1414
    %v1931 = vunpack.c.l.b16 %v1415
    %v1932 = vunpack.c.l.b16 %v1416
    %v1933 = vunpack.c.l.b16 %v1417
    %v1934 = vunpack.c.l.b16 %v1418
    %v1935 = vunpack.c.l.b16 %v1419
    %v1936 = vunpack.c.l.b16 %v1420
    %v1937 = vunpack.c.l.b16 %v1421
    %v1938 = vunpack.c.l.b16 %v1422
    %v1939 = vunpack.c.l.b16 %v1423
    %v1940 = vunpack.c.l.b16 %v1424
    %v1941 = vunpack.c.l.b16 %v1425
    %v1942 = vunpack.c.l.b16 %v1426
    %v1943 = vunpack.c.l.b16 %v1427
    %v1944 = vunpack.c.l.b16 %v1428
    %v1945 = vunpack.c.l.b16 %v1429
    %v1946 = vunpack.c.l.b16 %v1430
    %v1947 = vunpack.c.l.b16 %v1431
    %v1948 = vunpack.c.l.b16 %v1432
    %v1949 = vunpack.c.l.b16 %v1433
    %v1950 = vunpack.c.l.b16 %v1434
    %v1951 = vunpack.c.l.b16 %v1435
    %v1952 = vunpack.c.l.b16 %v1436
    %v1953 = vunpack.c.l.b16 %v1437
    %v1954 = vunpack.c.l.b16 %v1438
    %v1955 = vunpack.c.l.b16 %v1439
    %v1956 = vunpack.c.l.b16 %v1440
    %v1957 = vunpack.c.l.b16 %v1441
    %v1958 = vunpack.c.l.b16 %v1442
    %v1959 = vunpack.c.l.b16 %v1443
    %v1960 = vunpack.c.l.b16 %v1444
    %v1961 = vunpack.c.l.b16 %v1445
    %v1962 = vunpack.c.l.b16 %v1446
    %v1963 = vunpack.c.l.b16 %v1447
    %v1964 = vunpack.c.l.b16 %v1448
    %v1965 = vunpack.c.l.b16 %v1449
    %v1966 = vunpack.c.l.b16 %v1450
    %v1967 = vunpack.c.l.b16 %v1451
    %v1968 = vunpack.c.l.b16 %v1452
    %v1969 = vunpack.c.l.b16 %v1453
    %v1970 = vunpack.c.l.b16 %v1454
    %v1971 = vunpack.c.l.b16 %v1455
    %v1972 = vunpack.c.l.b16 %v1456
    %v1973 = vunpack.c.l.b16 %v1457
    %v1974 = vunpack.c.l.b16 %v1458
    %v1975 = vunpack.c.l.b16 %v1459
    %v1976 = vunpack.c.l.b16 %v1460
    %v1977 = vunpack.c.l.b16 %v1461
    %v1978 = vunpack.c.l.b16 %v1462
    %v1979 = vunpack.c.l.b16 %v1463
    %v1980 = vunpack.c.l.b16 %v1464
    %v1981 = vunpack.c.l.b16 %v1465
    %v1982 = vunpack.c.l.b16 %v1466
    %v1983 = vunpack.c.l.b16 %v1467
    %v1984 = vunpack.c.l.b16 %v1468
    %v1985 = vunpack.c.l.b16 %v1469
    %v1986 = vunpack.c.l.b16 %v1470
    %v1987 = vunpack.c.l.b16 %v1471
    %v1988 = vunpack.c.l.b16 %v1472
    %v1989 = vunpack.c.l.b16 %v1473
    %v1990 = vunpack.c.l.b16 %v1474
    %v1991 = vunpack.c.l.b16 %v1475
    %v1992 = vunpack.c.l.b16 %v1476
    %v1993 = vunpack.c.l.b16 %v1477
    %v1994 = vunpack.c.l.b16 %v1478
    %v1995 = vunpack.c.l.b16 %v1479
    %v1996 = vunpack.c.l.b16 %v1480
    %v1997 = vunpack.c.l.b16 %v1481
    %v1998 = vunpack.c.l.b16 %v1482
    %v1999 = vunpack.c.l.b16 %v1483
    %v2000 = vunpack.c.l.b16 %v1484
    %v2001 = vunpack.c.l.b16 %v1485
    %v2002 = vunpack.c.l.b16 %v1486
    %v2003 = vunpack.c.l.b16 %v1487
    %v2004 = vunpack.c.l.b16 %v1488
    %v2005 = vunpack.c.l.b16 %v1489
    %v2006 = vunpack.c.l.b16 %v1490
    %v2007 = vunpack.c.l.b16 %v1491
    %v2008 = vunpack.c.l.b16 %v1492
    %v2009 = vunpack.c.l.b16 %v1493
    %v2010 = vunpack.c.l.b16 %v1494
    %v2011 = vunpack.c.l.b16 %v1495
    %v2012 = vunpack.c.l.b16 %v1496
    %v2013 = vunpack.c.l.b16 %v1497
    %v2014 = vunpack.c.l.b16 %v1498
    %v2015 = vunpack.c.l.b16 %v1499
    %v2016 = vunpack.c.l.b16 %v1500
    %v2017 = vunpack.c.l.b16 %v1501
    %v2018 = vunpack.c.l.b16 %v1502
    %v2019 = vunpack.c.l.b16 %v1503
    %v2020 = vunpack.c.l.b16 %v1504
    %v2021 = vunpack.c.l.b16 %v1505
    %v2022 = vunpack.c.l.b16 %v1506
    %v2023 = vunpack.c.l.b16 %v1507
    %v2024 = vunpack.c.l.b16 %v1508
    %v2025 = vunpack.c.l.b16 %v1509
    %v2026 = vunpack.c.l.b16 %v1510
    %v2027 = vunpack.c.l.b16 %v1511
    %v2028 = vunpack.c.l.b16 %v1512
    %v2029 = vpack.c.b16 %v1774, %v1773
    %v2030 = vpack.c.b16 %v1776, %v1775
    %v2031 = vpack.c.b16 %v1778, %v1777
    %v2032 = vpack.c.b16 %v1780, %v1779
    %v2033 = vpack.c.b16 %v1782, %v1781
    %v2034 = vpack.c.b16 %v1784, %v1783
    %v2035 = vpack.c.b16 %v1786, %v1785
    %v2036 = vpack.c.b16 %v1788, %v1787
    %v2037 = vpack.c.b16 %v1790, %v1789
    %v2038 = vpack.c.b16 %v1792, %v1791
    %v2039 = vpack.c.b16 %v1794, %v1793
    %v2040 = vpack.c.b16 %v1796, %v1795
    %v2041 = vpack.c.b16 %v1798, %v1797
    %v2042 = vpack.c.b16 %v1800, %v1799
    %v2043 = vpack.c.b16 %v1802, %v1801
    %v2044 = vpack.c.b16 %v1804, %v1803
    %v2045 = vpack.c.b16 %v1806, %v1805
    %v2046 = vpack.c.b16 %v1808, %v1807
    %v2047 = vpack.c.b16 %v1810, %v1809
    %v2048 = vpack.c.b16 %v1812, %v1811
    %v2049 = vpack.c.b16 %v1814, %v1813
    %v2050 = vpack.c.b16 %v1816, %v1815
    %v2051 = vpack.c.b16 %v1818, %v1817
    %v2052 = vpack.c.b16 %v1820, %v1819
    %v2053 = vpack.c.b16 %v1822, %v1821
    %v2054 = vpack.c.b16 %v1824, %v1823
    %v2055 = vpack.c.b16 %v1826, %v1825
    %v2056 = vpack.c.b16 %v1828, %v1827
    %v2057 = vpack.c.b16 %v1830, %v1829
    %v2058 = vpack.c.b16 %v1832, %v1831
    %v2059 = vpack.c.b16 %v1834, %v1833
    %v2060 = vpack.c.b16 %v1836, %v1835
    %v2061 = vpack.c.b16 %v1838, %v1837
    %v2062 = vpack.c.b16 %v1840, %v1839
    %v2063 = vpack.c.b16 %v1842, %v1841
    %v2064 = vpack.c.b16 %v1844, %v1843
    %v2065 = vpack.c.b16 %v1846, %v1845
    %v2066 = vpack.c.b16 %v1848, %v1847
    %v2067 = vpack.c.b16 %v1850, %v1849
    %v2068 = vpack.c.b16 %v1852, %v1851
    %v2069 = vpack.c.b16 %v1854, %v1853
    %v2070 = vpack.c.b16 %v1856, %v1855
    %v2071 = vpack.c.b16 %v1858, %v1857
    %v2072 = vpack.c.b16 %v1860, %v1859
    %v2073 = vpack.c.b16 %v1862, %v1861
    %v2074 = vpack.c.b16 %v1864, %v1863
    %v2075 = vpack.c.b16 %v1866, %v1865
    %v2076 = vpack.c.b16 %v1868, %v1867
    %v2077 = vpack.c.b16 %v1870, %v1869
    %v2078 = vpack.c.b16 %v1872, %v1871
    %v2079 = vpack.c.b16 %v1874, %v1873
    %v2080 = vpack.c.b16 %v1876, %v1875
    %v2081 = vpack.c.b16 %v1878, %v1877
    %v2082 = vpack.c.b16 %v1880, %v1879
    %v2083 = vpack.c.b16 %v1882, %v1881
    %v2084 = vpack.c.b16 %v1884, %v1883
    %v2085 = vpack.c.b16 %v1886, %v1885
    %v2086 = vpack.c.b16 %v1888, %v1887
    %v2087 = vpack.c.b16 %v1890, %v1889
    %v2088 = vpack.c.b16 %v1892, %v1891
    %v2089 = vpack.c.b16 %v1894, %v1893
    %v2090 = vpack.c.b16 %v1896, %v1895
    %v2091 = vpack.c.b16 %v1898, %v1897
    %v2092 = vpack.c.b16 %v1900, %v1899
    %v2093 = vpack.c.b16 %v1902, %v1901
    %v2094 = vpack.c.b16 %v1904, %v1903
    %v2095 = vpack.c.b16 %v1906, %v1905
    %v2096 = vpack.c.b16 %v1908, %v1907
    %v2097 = vpack.c.b16 %v1910, %v1909
    %v2098 = vpack.c.b16 %v1912, %v1911
    %v2099 = vpack.c.b16 %v1914, %v1913
    %v2100 = vpack.c.b16 %v1916, %v1915
    %v2101 = vpack.c.b16 %v1918, %v1917
    %v2102 = vpack.c.b16 %v1920, %v1919
    %v2103 = vpack.c.b16 %v1922, %v1921
    %v2104 = vpack.c.b16 %v1924, %v1923
    %v2105 = vpack.c.b16 %v1926, %v1925
    %v2106 = vpack.c.b16 %v1928, %v1927
    %v2107 = vpack.c.b16 %v1930, %v1929
    %v2108 = vpack.c.b16 %v1932, %v1931
    %v2109 = vpack.c.b16 %v1934, %v1933
    %v2110 = vpack.c.b16 %v1936, %v1935
    %v2111 = vpack.c.b16 %v1938, %v1937
    %v2112 = vpack.c.b16 %v1940, %v1939
    %v2113 = vpack.c.b16 %v1942, %v1941
    %v2114 = vpack.c.b16 %v1944, %v1943
    %v2115 = vpack.c.b16 %v1946, %v1945
    %v2116 = vpack.c.b16 %v1948, %v1947
    %v2117 = vpack.c.b16 %v1950, %v1949
    %v2118 = vpack.c.b16 %v1952, %v1951
    %v2119 = vpack.c.b16 %v1954, %v1953
    %v2120 = vpack.c.b16 %v1956, %v1955
    %v2121 = vpack.c.b16 %v1958, %v1957
    %v2122 = vpack.c.b16 %v1960, %v1959
    %v2123 = vpack.c.b16 %v1962, %v1961
    %v2124 = vpack.c.b16 %v1964, %v1963
    %v2125 = vpack.c.b16 %v1966, %v1965
    %v2126 = vpack.c.b16 %v1968, %v1967
    %v2127 = vpack.c.b16 %v1970, %v1969
    %v2128 = vpack.c.b16 %v1972, %v1971
    %v2129 = vpack.c.b16 %v1974, %v1973
    %v2130 = vpack.c.b16 %v1976, %v1975
    %v2131 = vpack.c.b16 %v1978, %v1977
    %v2132 = vpack.c.b16 %v1980, %v1979
    %v2133 = vpack.c.b16 %v1982, %v1981
    %v2134 = vpack.c.b16 %v1984, %v1983
    %v2135 = vpack.c.b16 %v1986, %v1985
    %v2136 = vpack.c.b16 %v1988, %v1987
    %v2137 = vpack.c.b16 %v1990, %v1989
    %v2138 = vpack.c.b16 %v1992, %v1991
    %v2139 = vpack.c.b16 %v1994, %v1993
    %v2140 = vpack.c.b16 %v1996, %v1995
    %v2141 = vpack.c.b16 %v1998, %v1997
    %v2142 = vpack.c.b16 %v2000, %v1999
    %v2143 = vpack.c.b16 %v2002, %v2001
    %v2144 = vpack.c.b16 %v2004, %v2003
    %v2145 = vpack.c.b16 %v2006, %v2005
    %v2146 = vpack.c.b16 %v2008, %v2007
    %v2147 = vpack.c.b16 %v2010, %v2009
    %v2148 = vpack.c.b16 %v2012, %v2011
    %v2149 = vpack.c.b16 %v2014, %v2013
    %v2150 = vpack.c.b16 %v2016, %v2015
    %v2151 = vpack.c.b16 %v2018, %v2017
    %v2152 = vpack.c.b16 %v2020, %v2019
    %v2153 = vpack.c.b16 %v2022, %v2021
    %v2154 = vpack.c.b16 %v2024, %v2023
    %v2155 = vpack.c.b16 %v2026, %v2025
    %v2156 = vpack.c.b16 %v2028, %v2027
    %2285 = vmatpush.bf16.msra.mxu0 %v2036
    %2286 = vmatpush.bf16.msra.mxu0 %v2035
    %2287 = vmatpush.bf16.msra.mxu0 %v2034
    %2288 = vmatpush.bf16.msra.mxu0 %v2033
    %2289 = vmatpush.bf16.msra.mxu0 %v2032
    %2290 = vmatpush.bf16.msra.mxu0 %v2031
    %2291 = vmatpush.bf16.msra.mxu0 %v2030
    %2292 = vmatpush.bf16.msra.mxu0 %v2029
    %2293 = vmatmul.bf16.gmra.mxu0 %v1175
    %v2294 = vpop.f32.mrf.mxu0
    %v2295 = vadd.f32 %v1515, %v2294
    %v2296 = vpop.f32.mrf.mxu0
    %2297 = vdwg.mxu0
    %2298 = vmatpush.bf16.msra.mxu0 %v2044
    %2299 = vmatpush.bf16.msra.mxu0 %v2043
    %2300 = vmatpush.bf16.msra.mxu0 %v2042
    %2301 = vmatpush.bf16.msra.mxu0 %v2041
    %2302 = vmatpush.bf16.msra.mxu0 %v2040
    %2303 = vmatpush.bf16.msra.mxu0 %v2039
    %2304 = vmatpush.bf16.msra.mxu0 %v2038
    %2305 = vmatpush.bf16.msra.mxu0 %v2037
    %2306 = vmatmul.bf16.gmra.mxu0 %v1179
    %v2307 = vpop.f32.mrf.mxu0
    %v2308 = vadd.f32 %v2295, %v2307
    %v2309 = vpop.f32.mrf.mxu0
    %2310 = vdwg.mxu0
    %2311 = vmatpush.bf16.msra.mxu0 %v2052
    %2312 = vmatpush.bf16.msra.mxu0 %v2051
    %2313 = vmatpush.bf16.msra.mxu0 %v2050
    %2314 = vmatpush.bf16.msra.mxu0 %v2049
    %2315 = vmatpush.bf16.msra.mxu0 %v2048
    %2316 = vmatpush.bf16.msra.mxu0 %v2047
    %2317 = vmatpush.bf16.msra.mxu0 %v2046
    %2318 = vmatpush.bf16.msra.mxu0 %v2045
    %2319 = vmatmul.bf16.gmra.mxu0 %v1184
    %v2320 = vpop.f32.mrf.mxu0
    %v2321 = vadd.f32 %v2308, %v2320
    %v2322 = vpop.f32.mrf.mxu0
    %2323 = vdwg.mxu0
    %2324 = vmatpush.bf16.msra.mxu0 %v2060
    %2325 = vmatpush.bf16.msra.mxu0 %v2059
    %2326 = vmatpush.bf16.msra.mxu0 %v2058
    %2327 = vmatpush.bf16.msra.mxu0 %v2057
    %2328 = vmatpush.bf16.msra.mxu0 %v2056
    %2329 = vmatpush.bf16.msra.mxu0 %v2055
    %2330 = vmatpush.bf16.msra.mxu0 %v2054
    %2331 = vmatpush.bf16.msra.mxu0 %v2053
    %2332 = vmatmul.bf16.gmra.mxu0 %v1189
    %v2333 = vpop.f32.mrf.mxu0
    %v2334 = vadd.f32 %v2321, %v2333
    %v2335 = vpop.f32.mrf.mxu0
    %2336 = vdwg.mxu0
    %2337 = vmatpush.bf16.msra.mxu0 %v2068
    %2338 = vmatpush.bf16.msra.mxu0 %v2067
    %2339 = vmatpush.bf16.msra.mxu0 %v2066
    %2340 = vmatpush.bf16.msra.mxu0 %v2065
    %2341 = vmatpush.bf16.msra.mxu0 %v2064
    %2342 = vmatpush.bf16.msra.mxu0 %v2063
    %2343 = vmatpush.bf16.msra.mxu0 %v2062
    %2344 = vmatpush.bf16.msra.mxu0 %v2061
    %2345 = vmatmul.bf16.gmra.mxu0 %v1194
    %v2346 = vpop.f32.mrf.mxu0
    %v2347 = vadd.f32 %v2334, %v2346
    %v2348 = vpop.f32.mrf.mxu0
    %2349 = vdwg.mxu0
    %2350 = vmatpush.bf16.msra.mxu0 %v2076
    %2351 = vmatpush.bf16.msra.mxu0 %v2075
    %2352 = vmatpush.bf16.msra.mxu0 %v2074
    %2353 = vmatpush.bf16.msra.mxu0 %v2073
    %2354 = vmatpush.bf16.msra.mxu0 %v2072
    %2355 = vmatpush.bf16.msra.mxu0 %v2071
    %2356 = vmatpush.bf16.msra.mxu0 %v2070
    %2357 = vmatpush.bf16.msra.mxu0 %v2069
    %2358 = vmatmul.bf16.gmra.mxu0 %v1199
    %v2359 = vpop.f32.mrf.mxu0
    %v2360 = vadd.f32 %v2347, %v2359
    %v2361 = vpop.f32.mrf.mxu0
    %2362 = vdwg.mxu0
    %2363 = vmatpush.bf16.msra.mxu0 %v2084
    %2364 = vmatpush.bf16.msra.mxu0 %v2083
    %2365 = vmatpush.bf16.msra.mxu0 %v2082
    %2366 = vmatpush.bf16.msra.mxu0 %v2081
    %2367 = vmatpush.bf16.msra.mxu0 %v2080
    %2368 = vmatpush.bf16.msra.mxu0 %v2079
    %2369 = vmatpush.bf16.msra.mxu0 %v2078
    %2370 = vmatpush.bf16.msra.mxu0 %v2077
    %2371 = vmatmul.bf16.gmra.mxu0 %v1204
    %v2372 = vpop.f32.mrf.mxu0
    %v2373 = vadd.f32 %v2360, %v2372
    %v2374 = vpop.f32.mrf.mxu0
    %2375 = vdwg.mxu0
    %2376 = vmatpush.bf16.msra.mxu0 %v2092
    %2377 = vmatpush.bf16.msra.mxu0 %v2091
    %2378 = vmatpush.bf16.msra.mxu0 %v2090
    %2379 = vmatpush.bf16.msra.mxu0 %v2089
    %2380 = vmatpush.bf16.msra.mxu0 %v2088
    %2381 = vmatpush.bf16.msra.mxu0 %v2087
    %2382 = vmatpush.bf16.msra.mxu0 %v2086
    %2383 = vmatpush.bf16.msra.mxu0 %v2085
    %2384 = vmatmul.bf16.gmra.mxu0 %v1209
    %v2385 = vpop.f32.mrf.mxu0
    %v2386 = vadd.f32 %v2373, %v2385
    %v2387 = vpop.f32.mrf.mxu0
    %2388 = vdwg.mxu0
    %2389 = vmatpush.bf16.msra.mxu0 %v2100
    %2390 = vmatpush.bf16.msra.mxu0 %v2099
    %2391 = vmatpush.bf16.msra.mxu0 %v2098
    %2392 = vmatpush.bf16.msra.mxu0 %v2097
    %2393 = vmatpush.bf16.msra.mxu0 %v2096
    %2394 = vmatpush.bf16.msra.mxu0 %v2095
    %2395 = vmatpush.bf16.msra.mxu0 %v2094
    %2396 = vmatpush.bf16.msra.mxu0 %v2093
    %2397 = vmatmul.bf16.gmra.mxu0 %v1221
    %v2398 = vpop.f32.mrf.mxu0
    %v2399 = vadd.f32 %v2386, %v2398
    %v2400 = vpop.f32.mrf.mxu0
    %2401 = vdwg.mxu0
    %2402 = vmatpush.bf16.msra.mxu0 %v2108
    %2403 = vmatpush.bf16.msra.mxu0 %v2107
    %2404 = vmatpush.bf16.msra.mxu0 %v2106
    %2405 = vmatpush.bf16.msra.mxu0 %v2105
    %2406 = vmatpush.bf16.msra.mxu0 %v2104
    %2407 = vmatpush.bf16.msra.mxu0 %v2103
    %2408 = vmatpush.bf16.msra.mxu0 %v2102
    %2409 = vmatpush.bf16.msra.mxu0 %v2101
    %2410 = vmatmul.bf16.gmra.mxu0 %v1225
    %v2411 = vpop.f32.mrf.mxu0
    %v2412 = vadd.f32 %v2399, %v2411
    %v2413 = vpop.f32.mrf.mxu0
    %2414 = vdwg.mxu0
    %2415 = vmatpush.bf16.msra.mxu0 %v2116
    %2416 = vmatpush.bf16.msra.mxu0 %v2115
    %2417 = vmatpush.bf16.msra.mxu0 %v2114
    %2418 = vmatpush.bf16.msra.mxu0 %v2113
    %2419 = vmatpush.bf16.msra.mxu0 %v2112
    %2420 = vmatpush.bf16.msra.mxu0 %v2111
    %2421 = vmatpush.bf16.msra.mxu0 %v2110
    %2422 = vmatpush.bf16.msra.mxu0 %v2109
    %2423 = vmatmul.bf16.gmra.mxu0 %v1230
    %v2424 = vpop.f32.mrf.mxu0
    %v2425 = vadd.f32 %v2412, %v2424
    %v2426 = vpop.f32.mrf.mxu0
    %2427 = vdwg.mxu0
    %2428 = vmatpush.bf16.msra.mxu0 %v2124
    %2429 = vmatpush.bf16.msra.mxu0 %v2123
    %2430 = vmatpush.bf16.msra.mxu0 %v2122
    %2431 = vmatpush.bf16.msra.mxu0 %v2121
    %2432 = vmatpush.bf16.msra.mxu0 %v2120
    %2433 = vmatpush.bf16.msra.mxu0 %v2119
    %2434 = vmatpush.bf16.msra.mxu0 %v2118
    %2435 = vmatpush.bf16.msra.mxu0 %v2117
    %2436 = vmatmul.bf16.gmra.mxu0 %v1235
    %v2437 = vpop.f32.mrf.mxu0
    %v2438 = vadd.f32 %v2425, %v2437
    %v2439 = vpop.f32.mrf.mxu0
    %2440 = vdwg.mxu0
    %2441 = vmatpush.bf16.msra.mxu0 %v2132
    %2442 = vmatpush.bf16.msra.mxu0 %v2131
    %2443 = vmatpush.bf16.msra.mxu0 %v2130
    %2444 = vmatpush.bf16.msra.mxu0 %v2129
    %2445 = vmatpush.bf16.msra.mxu0 %v2128
    %2446 = vmatpush.bf16.msra.mxu0 %v2127
    %2447 = vmatpush.bf16.msra.mxu0 %v2126
    %2448 = vmatpush.bf16.msra.mxu0 %v2125
    %2449 = vmatmul.bf16.gmra.mxu0 %v1240
    %v2450 = vpop.f32.mrf.mxu0
    %v2451 = vadd.f32 %v2438, %v2450
    %v2452 = vpop.f32.mrf.mxu0
    %2453 = vdwg.mxu0
    %2454 = vmatpush.bf16.msra.mxu0 %v2140
    %2455 = vmatpush.bf16.msra.mxu0 %v2139
    %2456 = vmatpush.bf16.msra.mxu0 %v2138
    %2457 = vmatpush.bf16.msra.mxu0 %v2137
    %2458 = vmatpush.bf16.msra.mxu0 %v2136
    %2459 = vmatpush.bf16.msra.mxu0 %v2135
    %2460 = vmatpush.bf16.msra.mxu0 %v2134
    %2461 = vmatpush.bf16.msra.mxu0 %v2133
    %2462 = vmatmul.bf16.gmra.mxu0 %v1245
    %v2463 = vpop.f32.mrf.mxu0
    %v2464 = vadd.f32 %v2451, %v2463
    %v2465 = vpop.f32.mrf.mxu0
    %2466 = vdwg.mxu0
    %2467 = vmatpush.bf16.msra.mxu0 %v2148
    %2468 = vmatpush.bf16.msra.mxu0 %v2147
    %2469 = vmatpush.bf16.msra.mxu0 %v2146
    %2470 = vmatpush.bf16.msra.mxu0 %v2145
    %2471 = vmatpush.bf16.msra.mxu0 %v2144
    %2472 = vmatpush.bf16.msra.mxu0 %v2143
    %2473 = vmatpush.bf16.msra.mxu0 %v2142
    %2474 = vmatpush.bf16.msra.mxu0 %v2141
    %2475 = vmatmul.bf16.gmra.mxu0 %v1250
    %v2476 = vpop.f32.mrf.mxu0
    %v2477 = vadd.f32 %v2464, %v2476
    %v2478 = vpop.f32.mrf.mxu0
    %2479 = vdwg.mxu0
    %2480 = vmatpush.bf16.msra.mxu0 %v2156
    %2481 = vmatpush.bf16.msra.mxu0 %v2155
    %2482 = vmatpush.bf16.msra.mxu0 %v2154
    %2483 = vmatpush.bf16.msra.mxu0 %v2153
    %2484 = vmatpush.bf16.msra.mxu0 %v2152
    %2485 = vmatpush.bf16.msra.mxu0 %v2151
    %2486 = vmatpush.bf16.msra.mxu0 %v2150
    %2487 = vmatpush.bf16.msra.mxu0 %v2149
    %2488 = vmatmul.bf16.gmra.mxu0 %v1255
    %v2489 = vpop.f32.mrf.mxu0
    %v2490 = vadd.f32 %v2477, %v2489
    %v2491 = vpop.f32.mrf.mxu0
    %2492 = vdwg.mxu0
    %v2493 = vpack.c.bf16 %v2490, %v2490
    %v2494 = vld [vmem:[%s5] sm:$0xf]
    %v2495 = vld [vmem:[%s5 + $0x4] sm:$0xf]
    %v2496 = vld [vmem:[%s5 + $0x8] sm:$0xf]
    %v2497 = vld [vmem:[%s5 + $0xc] sm:$0xf]
    %v2498 = vld [vmem:[%s5 + $0x10] sm:$0xf]
    %v2499 = vld [vmem:[%s5 + $0x14] sm:$0xf]
    %v2500 = vld [vmem:[%s5 + $0x18] sm:$0xf]
    %v2501 = vld [vmem:[%s5 + $0x1c] sm:$0xf]
    %v2502 = vld [vmem:[%s5 + $0x20] sm:$0xf]
    %v2503 = vld [vmem:[%s5 + $0x24] sm:$0xf]
    %v2504 = vld [vmem:[%s5 + $0x28] sm:$0xf]
    %v2505 = vld [vmem:[%s5 + $0x2c] sm:$0xf]
    %v2506 = vld [vmem:[%s5 + $0x30] sm:$0xf]
    %v2507 = vld [vmem:[%s5 + $0x34] sm:$0xf]
    %v2508 = vld [vmem:[%s5 + $0x38] sm:$0xf]
    %v2509 = vld [vmem:[%s5 + $0x3c] sm:$0xf]
    %v2510 = vld [vmem:[%s6] sm:$0x1]
    %v2512 = vperm.slane %v2510, 0
    %v2530 = vunpack.c.l.b16 %v2494
    %v2531 = vunpack.c.l.b16 %v2495
    %v2532 = vunpack.c.l.b16 %v2496
    %v2533 = vunpack.c.l.b16 %v2497
    %v2534 = vunpack.c.l.b16 %v2498
    %v2535 = vunpack.c.l.b16 %v2499
    %v2536 = vunpack.c.l.b16 %v2500
    %v2537 = vunpack.c.l.b16 %v2501
    %v2538 = vunpack.c.l.b16 %v2502
    %v2539 = vunpack.c.l.b16 %v2503
    %v2540 = vunpack.c.l.b16 %v2504
    %v2541 = vunpack.c.l.b16 %v2505
    %v2542 = vunpack.c.l.b16 %v2506
    %v2543 = vunpack.c.l.b16 %v2507
    %v2544 = vunpack.c.l.b16 %v2508
    %v2545 = vunpack.c.l.b16 %v2509
    %v2546 = vpack.c.b16 %v2531, %v2530
    %v2547 = vpack.c.b16 %v2533, %v2532
    %v2548 = vpack.c.b16 %v2535, %v2534
    %v2549 = vpack.c.b16 %v2537, %v2536
    %v2550 = vpack.c.b16 %v2539, %v2538
    %v2551 = vpack.c.b16 %v2541, %v2540
    %v2552 = vpack.c.b16 %v2543, %v2542
    %v2553 = vpack.c.b16 %v2545, %v2544
    %2562 = vmatpush.bf16.msra.mxu0 %v2553
    %2563 = vmatpush.bf16.msra.mxu0 %v2552
    %2564 = vmatpush.bf16.msra.mxu0 %v2551
    %2565 = vmatpush.bf16.msra.mxu0 %v2550
    %2566 = vmatpush.bf16.msra.mxu0 %v2549
    %2567 = vmatpush.bf16.msra.mxu0 %v2548
    %2568 = vmatpush.bf16.msra.mxu0 %v2547
    %2569 = vmatpush.bf16.msra.mxu0 %v2546
    %2570 = vmatmul.bf16.gmra.mxu0 %v2493
    %v2571 = vpop.f32.mrf.mxu0
    %v2572 = vadd.f32 %v2512, %v2571
    %v2573 = vpop.f32.mrf.mxu0
    %2574 = vdwg.mxu0
    %2575 = vst [vmem:[#allocation2] sm:$0x3] %v2572
    // Predicated region
    $region30: #{my_cifar10_forward.5} parent=1 // pred_check
      _
    $region31: #{my_cifar10_forward.5} parent=1 // pred_check_branch
      %2577 = sbr.rel (0) target = $region33
    $region32: #{my_cifar10_forward.5} parent=1 // pred_region
      %2579 = vsyncadd [#allocation3], 0
      %s2581 = sshll.u32 [#allocation2], 4
      %s2582 = int_to_ptr.vmem [resolvable:$true] %s2581
      %s2583 = sshll.u32 %s7, 4
      %s2584 = int_to_ptr.hbm [resolvable:$true] %s2583
      %2586 = dma.vmem_to_hbm [thread:$0]  %s2582, 32, %s2584, [#allocation3]
    $region33: #{my_cifar10_forward.5} parent=1 // pred_fallthru
      _
    // Predicated region
    $region34: #{my_cifar10_forward.5} parent=1 // pred_check
      _
    $region35: #{my_cifar10_forward.5} parent=1 // pred_check_branch
      %2588 = sbr.rel (0) target = $region37
    $region36: #{my_cifar10_forward.5} parent=1 // pred_region
      %2590 = dma.done [#allocation3], 32
    $region37: #{my_cifar10_forward.5} parent=1 // pred_fallthru
      _
    %2591 = vsyncpa [#allocation3], 1

</llo_original>
